<compile_context>
chip_gen: v6e
topology: v6e:2x2x1
jax: 0.10.0
libtpu: 0.0.40
codegen_flags: <defaults>
</compile_context>

<pallas_src>
import functools

import jax
import jax.numpy as jnp
from jax import lax
from jax.experimental import pallas as pl
from jax.experimental.pallas import tpu as pltpu


# ----------------------------------------------------------------------------
# Helpers
# ----------------------------------------------------------------------------
def _circular_shift(x, shift, axis):
    """shifted[i] = x[(i - shift) mod L] along `axis` (static shift)."""
    size = x.shape[axis]
    s = shift % size
    if s == 0:
        return x
    lo = lax.slice_in_dim(x, size - s, size, axis=axis)
    hi = lax.slice_in_dim(x, 0, size - s, axis=axis)
    return lax.concatenate([lo, hi], dimension=axis)


# ----------------------------------------------------------------------------
# Fused whole-network kernel (one grid step = TN images, weights VMEM-resident)
# ----------------------------------------------------------------------------
def _convnet_kernel(x_ref,
                    w1_ref, a1_ref, w2_ref, a2_ref,
                    w3_ref, a3_ref, w4_ref, a4_ref,
                    w5_ref, b5_ref, w6_ref, b6_ref,
                    o_ref):

    def conv_block(x4, w_ref, a_ref):
        # x4: (TN, H, W, Cin) f32.  w_ref: (9, Cin, Cout) bf16 per-tap slabs,
        # tap t = dy*3 + dx.  a_ref: (3, Cout) f32 rows = (bias, BN scale, BN shift).
        tn, hh, ww, cin = x4.shape
        m = tn * hh * ww
        acc = None
        # dx outer: only 2 non-trivial sublane (W-axis) shifts per layer; the
        # dy (H-axis) shifts inside are vreg-granular slab moves.
        for dx in range(3):
            xw = _circular_shift(x4, 1 - dx, axis=2)
            for dy in range(3):
                xs = _circular_shift(xw, 1 - dy, axis=1)
                tap = xs.reshape(m, cin).astype(jnp.bfloat16)   # row-preserving reshape
                part = jnp.dot(tap, w_ref[dy * 3 + dx],
                               preferred_element_type=jnp.float32)
                acc = part if acc is None else acc + part
        aff = a_ref[...]
        y = jnp.maximum(acc + aff[0:1, :], 0.0)      # conv bias + ReLU (f32)
        y = y * aff[1:2, :] + aff[2:3, :]            # BatchNorm2d (eval), after ReLU
        # Dropout(p=0.1) is identity at inference time.
        return y.reshape(tn, hh, ww, -1)

    h = conv_block(x_ref[...], w1_ref, a1_ref)
    h = conv_block(h, w2_ref, a2_ref)
    h = conv_block(h, w3_ref, a3_ref)
    h = conv_block(h, w4_ref, a4_ref)

    # Flatten to (TN, H*W*C) in (h, w, c) order.  fc5's rows were permuted at
    # init from PyTorch's (C, H, W) flatten order to this order, so no runtime
    # transpose is needed.
    tn, hh, ww, _ = h.shape
    rows = jnp.concatenate([h[:, :, j, :] for j in range(ww)], axis=-1)    # (TN, H, W*C)
    hflat = jnp.concatenate([rows[:, i, :] for i in range(hh)], axis=-1)   # (TN, H*W*C)

    h5 = jnp.dot(hflat.astype(jnp.bfloat16), w5_ref[...],
                 preferred_element_type=jnp.float32) + b5_ref[...]
    h5 = jnp.maximum(h5, 0.0)                                   # layer5 ReLU
    q = jnp.dot(h5.astype(jnp.bfloat16), w6_ref[...],
                preferred_element_type=jnp.float32) + b6_ref[...]
    o_ref[...] = q


@functools.partial(jax.jit, static_argnames=("tn",))
def forward_pallas(params, state_nchw, *, tn=1):
    """Fused Pallas forward.  state_nchw: (N, C, H, W) as in the PyTorch module."""
    # NCHW -> NHWC (tiny XLA op; could be folded into the kernel at large batch).
    x = jnp.transpose(state_nchw, (0, 2, 3, 1)).astype(jnp.float32)
    n, hh, ww, cin = x.shape
    if n % tn != 0:
        raise ValueError("batch must be divisible by the batch tile tn")
    nb = n // tn
    num_actions = params["fc6"]["w_bf16"].shape[1]

    args = [x]
    for i in range(1, 5):
        p = params[f"conv{i}"]
        args += [p["w_taps"], p["affine"]]
    args += [params["fc5"]["w_hwc_bf16"], params["fc5"]["b2d"],
             params["fc6"]["w_bf16"], params["fc6"]["b2d"]]

    def resident_spec(arr):
        # Whole array as one block, same block every grid step -> fetched once,
        # stays resident in VMEM.
        nd = arr.ndim
        return pl.BlockSpec(arr.shape, lambda i: (0,) * nd)

    in_specs = [pl.BlockSpec((tn, hh, ww, cin), lambda i: (i, 0, 0, 0))]
    in_specs += [resident_spec(a) for a in args[1:]]

    out = pl.pallas_call(
        _convnet_kernel,
        grid=(nb,),
        out_shape=jax.ShapeDtypeStruct((nb, tn, num_actions), jnp.float32),
        in_specs=in_specs,
        # 3-D output so the per-step block covers full trailing dims (tile-safe);
        # the leading block dim is squeezed out of the kernel ref.
        out_specs=pl.BlockSpec((None, tn, num_actions), lambda i: (i, 0, 0)),
        compiler_params=pltpu.CompilerParams(
            dimension_semantics=("parallel",),          # v7x: split batch across TCs
            vmem_limit_bytes=32 * 1024 * 1024),         # explicit; safe on v5e/v6e/v7x
    )(*args)
    return out.reshape(n, num_actions)


# ----------------------------------------------------------------------------
# Parameter construction (deterministic); matches the nn.Module shapes.
# ----------------------------------------------------------------------------
def init_params(key, num_states, num_actions, num_channels, out_channels=32):
    H, W = num_states
    keys = iter(jax.random.split(key, 20))      # 4 conv layers * 4 + 4 fc tensors
    eps = 1e-5
    params = {}
    cin = num_channels
    for i in range(1, 5):
        # NOTE: real PyTorch Conv2d weights are OIHW; transpose to HWIO before
        # the reshape below if ever loading a checkpoint.
        w_hwio = jax.random.normal(next(keys), (3, 3, cin, out_channels), jnp.float32) * 0.1
        b = jax.random.normal(next(keys), (out_channels,), jnp.float32) * 0.05
        gamma = 1.0 + 0.1 * jax.random.normal(next(keys), (out_channels,), jnp.float32)
        beta = 0.05 * jax.random.normal(next(keys), (out_channels,), jnp.float32)
        run_mean = jnp.zeros((out_channels,), jnp.float32)
        run_var = jnp.ones((out_channels,), jnp.float32)
        scale = gamma / jnp.sqrt(run_var + eps)          # BN (eval) -> scale/shift
        shift = beta - run_mean * scale
        params[f"conv{i}"] = dict(
            w_hwio=w_hwio, b=b, scale=scale, shift=shift,
            # per-tap weight slabs (tap t = dy*3 + dx), bf16 for the MXU
            w_taps=w_hwio.reshape(9, cin, out_channels).astype(jnp.bfloat16),
            affine=jnp.stack([b, scale, shift], axis=0))  # (3, Cout) f32
        cin = out_channels

    d_in = H * W * out_channels
    d_mid = H * W
    # fc5 weight rows follow PyTorch's flatten order (C, H, W); w5_hwc is the
    # same matrix with rows permuted to (H, W, C) order so the kernel flattens
    # NHWC directly (flatten transpose folded into the weights at init).
    w5 = jax.random.normal(next(keys), (d_in, d_mid), jnp.float32) * 0.02
    b5 = jax.random.normal(next(keys), (d_mid,), jnp.float32) * 0.05
    w5_hwc = (w5.reshape(out_channels, H, W, d_mid)
              .transpose(1, 2, 0, 3)
              .reshape(d_in, d_mid))
    w6 = jax.random.normal(next(keys), (d_mid, num_actions), jnp.float32) * 0.05
    b6 = jax.random.normal(next(keys), (num_actions,), jnp.float32) * 0.05
    params["fc5"] = dict(w=w5, b=b5,
                         w_hwc_bf16=w5_hwc.astype(jnp.bfloat16),
                         b2d=b5[None, :])
    params["fc6"] = dict(w=w6, b=b6,
                         w_bf16=w6.astype(jnp.bfloat16),
                         b2d=b6[None, :])
    return params


# ----------------------------------------------------------------------------
# Pure-JAX reference (full f32 precision) for verification.
# ----------------------------------------------------------------------------
def forward_reference(params, state_nchw):
    h = jnp.transpose(state_nchw, (0, 2, 3, 1)).astype(jnp.float32)
    for i in range(1, 5):
        p = params[f"conv{i}"]
        hp = jnp.pad(h, ((0, 0), (1, 1), (1, 1), (0, 0)), mode="wrap")
        h = lax.conv_general_dilated(
            hp, p["w_hwio"], window_strides=(1, 1), padding="VALID",
            dimension_numbers=("NHWC", "HWIO", "NHWC"),
            precision=lax.Precision.HIGHEST)
        h = jnp.maximum(h + p["b"], 0.0)
        h = h * p["scale"] + p["shift"]
    n = h.shape[0]
    hflat = jnp.transpose(h, (0, 3, 1, 2)).reshape(n, -1)     # PyTorch (C,H,W) flatten
    h5 = jnp.maximum(
        jnp.dot(hflat, params["fc5"]["w"], precision=lax.Precision.HIGHEST)
        + params["fc5"]["b"], 0.0)
    return (jnp.dot(h5, params["fc6"]["w"], precision=lax.Precision.HIGHEST)
            + params["fc6"]["b"])


if __name__ == "__main__":
    num_states = (8, 8)      # (H, W)
    num_actions = 6
    num_channels = 4
    batch = 2

    key = jax.random.PRNGKey(0)
    pkey, xkey = jax.random.split(key)
    params = init_params(pkey, num_states, num_actions, num_channels)

    # PyTorch-convention input: NCHW.
    state = jax.random.normal(
        xkey, (batch, num_channels, num_states[0], num_states[1]), jnp.float32)

    q = forward_pallas(params, state, tn=1)     # grid=(2,), parallel over batch
    q = jax.block_until_ready(q)
    assert q.shape == (batch, num_actions)

    q_ref = forward_reference(params, state)
    err = float(jnp.max(jnp.abs(q - q_ref)))
    # Slightly relaxed vs. the f32 version: kernel uses bf16 MXU operands with
    # f32 accumulation (largest contraction K=2048 in fc5).
    assert jnp.allclose(q, q_ref, atol=3e-2, rtol=3e-2), (
        f"mismatch vs reference: max abs err {err}")

    print("KERNEL_OK")
</pallas_src>

<mosaic_0001>
module attributes {stable_mosaic.version = 11 : i64} {
  func.func @_convnet_kernel(%arg0: i32, %arg1: memref<1x8x8x4xf32, #tpu.memory_space<vmem>>, %arg2: memref<9x4x32xbf16, #tpu.memory_space<vmem>>, %arg3: memref<3x32xf32, #tpu.memory_space<vmem>>, %arg4: memref<9x32x32xbf16, #tpu.memory_space<vmem>>, %arg5: memref<3x32xf32, #tpu.memory_space<vmem>>, %arg6: memref<9x32x32xbf16, #tpu.memory_space<vmem>>, %arg7: memref<3x32xf32, #tpu.memory_space<vmem>>, %arg8: memref<9x32x32xbf16, #tpu.memory_space<vmem>>, %arg9: memref<3x32xf32, #tpu.memory_space<vmem>>, %arg10: memref<2048x64xbf16, #tpu.memory_space<vmem>>, %arg11: memref<1x64xf32, #tpu.memory_space<vmem>>, %arg12: memref<64x6xbf16, #tpu.memory_space<vmem>>, %arg13: memref<1x6xf32, #tpu.memory_space<vmem>>, %arg14: memref<1x1x6xf32, #tpu.memory_space<vmem>>) attributes {dimension_semantics = [#tpu.dimension_semantics<parallel>], iteration_bounds = array<i64: 2>, scalar_prefetch = 0 : i64, scratch_operands = 0 : i64, tpu.core_type = #tpu.core_type<tc>, window_params = [{transform_indices = @transform_0, window_bounds = array<i64: 1, 8, 8, 4>}, {pipeline_mode = #tpu.pipeline_mode<synchronous>, transform_indices = @transform_1, window_bounds = array<i64: 9, 4, 32>}, {pipeline_mode = #tpu.pipeline_mode<synchronous>, transform_indices = @transform_2, window_bounds = array<i64: 3, 32>}, {pipeline_mode = #tpu.pipeline_mode<synchronous>, transform_indices = @transform_3, window_bounds = array<i64: 9, 32, 32>}, {pipeline_mode = #tpu.pipeline_mode<synchronous>, transform_indices = @transform_4, window_bounds = array<i64: 3, 32>}, {pipeline_mode = #tpu.pipeline_mode<synchronous>, transform_indices = @transform_5, window_bounds = array<i64: 9, 32, 32>}, {pipeline_mode = #tpu.pipeline_mode<synchronous>, transform_indices = @transform_6, window_bounds = array<i64: 3, 32>}, {pipeline_mode = #tpu.pipeline_mode<synchronous>, transform_indices = @transform_7, window_bounds = array<i64: 9, 32, 32>}, {pipeline_mode = #tpu.pipeline_mode<synchronous>, transform_indices = @transform_8, window_bounds = array<i64: 3, 32>}, {pipeline_mode = #tpu.pipeline_mode<synchronous>, transform_indices = @transform_9, window_bounds = array<i64: 2048, 64>}, {pipeline_mode = #tpu.pipeline_mode<synchronous>, transform_indices = @transform_10, window_bounds = array<i64: 1, 64>}, {pipeline_mode = #tpu.pipeline_mode<synchronous>, transform_indices = @transform_11, window_bounds = array<i64: 64, 6>}, {pipeline_mode = #tpu.pipeline_mode<synchronous>, transform_indices = @transform_12, window_bounds = array<i64: 1, 6>}, {transform_indices = @transform_13, window_bounds = array<i64: 1, 1, 6>}]} {
    %c0 = arith.constant 0 : index
    %c0_0 = arith.constant 0 : index
    %c0_1 = arith.constant 0 : index
    %c0_2 = arith.constant 0 : index
    %0 = vector.load %arg1[%c0, %c0_0, %c0_1, %c0_2] : memref<1x8x8x4xf32, #tpu.memory_space<vmem>>, vector<1x8x8x4xf32>
    %1 = vector.extract_strided_slice %0 {offsets = [0, 0, 7, 0], sizes = [1, 8, 1, 4], strides = [1, 1, 1, 1]} : vector<1x8x8x4xf32> to vector<1x8x1x4xf32>
    %2 = vector.extract_strided_slice %0 {offsets = [0, 0, 0, 0], sizes = [1, 8, 7, 4], strides = [1, 1, 1, 1]} : vector<1x8x8x4xf32> to vector<1x8x7x4xf32>
    %3 = tpu.concatenate %1, %2 in 2 : vector<1x8x1x4xf32>, vector<1x8x7x4xf32> -> vector<1x8x8x4xf32>
    %4 = vector.extract_strided_slice %3 {offsets = [0, 7, 0, 0], sizes = [1, 1, 8, 4], strides = [1, 1, 1, 1]} : vector<1x8x8x4xf32> to vector<1x1x8x4xf32>
    %5 = vector.extract_strided_slice %3 {offsets = [0, 0, 0, 0], sizes = [1, 7, 8, 4], strides = [1, 1, 1, 1]} : vector<1x8x8x4xf32> to vector<1x7x8x4xf32>
    %6 = tpu.concatenate %4, %5 in 1 : vector<1x1x8x4xf32>, vector<1x7x8x4xf32> -> vector<1x8x8x4xf32>
    %7 = vector.shape_cast %6 : vector<1x8x8x4xf32> to vector<64x4xf32>
    %8 = arith.truncf %7 : vector<64x4xf32> to vector<64x4xbf16>
    %c0_3 = arith.constant 0 : index
    %c0_4 = arith.constant 0 : index
    %c0_5 = arith.constant 0 : index
    %9 = vector.load %arg2[%c0_3, %c0_4, %c0_5] : memref<9x4x32xbf16, #tpu.memory_space<vmem>>, vector<1x4x32xbf16>
    %10 = vector.shape_cast %9 : vector<1x4x32xbf16> to vector<4x32xbf16>
    %cst = arith.constant dense<0.000000e+00> : vector<64x32xf32>
    %11 = tpu.matmul %8, %10, %cst {dimension_numbers = #tpu.dot_dimension_numbers<[1], [0], [0], [1], [0, 0, 1, 1], [], []>} : vector<64x4xbf16>, vector<4x32xbf16>, vector<64x32xf32> -> vector<64x32xf32>
    %12 = vector.shape_cast %3 : vector<1x8x8x4xf32> to vector<64x4xf32>
    %13 = arith.truncf %12 : vector<64x4xf32> to vector<64x4xbf16>
    %c3 = arith.constant 3 : index
    %c0_6 = arith.constant 0 : index
    %c0_7 = arith.constant 0 : index
    %14 = vector.load %arg2[%c3, %c0_6, %c0_7] : memref<9x4x32xbf16, #tpu.memory_space<vmem>>, vector<1x4x32xbf16>
    %15 = vector.shape_cast %14 : vector<1x4x32xbf16> to vector<4x32xbf16>
    %cst_8 = arith.constant dense<0.000000e+00> : vector<64x32xf32>
    %16 = tpu.matmul %13, %15, %cst_8 {dimension_numbers = #tpu.dot_dimension_numbers<[1], [0], [0], [1], [0, 0, 1, 1], [], []>} : vector<64x4xbf16>, vector<4x32xbf16>, vector<64x32xf32> -> vector<64x32xf32>
    %17 = arith.addf %11, %16 : vector<64x32xf32>
    %18 = vector.extract_strided_slice %3 {offsets = [0, 1, 0, 0], sizes = [1, 7, 8, 4], strides = [1, 1, 1, 1]} : vector<1x8x8x4xf32> to vector<1x7x8x4xf32>
    %19 = vector.extract_strided_slice %3 {offsets = [0, 0, 0, 0], sizes = [1, 1, 8, 4], strides = [1, 1, 1, 1]} : vector<1x8x8x4xf32> to vector<1x1x8x4xf32>
    %20 = tpu.concatenate %18, %19 in 1 : vector<1x7x8x4xf32>, vector<1x1x8x4xf32> -> vector<1x8x8x4xf32>
    %21 = vector.shape_cast %20 : vector<1x8x8x4xf32> to vector<64x4xf32>
    %22 = arith.truncf %21 : vector<64x4xf32> to vector<64x4xbf16>
    %c6 = arith.constant 6 : index
    %c0_9 = arith.constant 0 : index
    %c0_10 = arith.constant 0 : index
    %23 = vector.load %arg2[%c6, %c0_9, %c0_10] : memref<9x4x32xbf16, #tpu.memory_space<vmem>>, vector<1x4x32xbf16>
    %24 = vector.shape_cast %23 : vector<1x4x32xbf16> to vector<4x32xbf16>
    %cst_11 = arith.constant dense<0.000000e+00> : vector<64x32xf32>
    %25 = tpu.matmul %22, %24, %cst_11 {dimension_numbers = #tpu.dot_dimension_numbers<[1], [0], [0], [1], [0, 0, 1, 1], [], []>} : vector<64x4xbf16>, vector<4x32xbf16>, vector<64x32xf32> -> vector<64x32xf32>
    %26 = arith.addf %17, %25 : vector<64x32xf32>
    %27 = vector.extract_strided_slice %0 {offsets = [0, 7, 0, 0], sizes = [1, 1, 8, 4], strides = [1, 1, 1, 1]} : vector<1x8x8x4xf32> to vector<1x1x8x4xf32>
    %28 = vector.extract_strided_slice %0 {offsets = [0, 0, 0, 0], sizes = [1, 7, 8, 4], strides = [1, 1, 1, 1]} : vector<1x8x8x4xf32> to vector<1x7x8x4xf32>
    %29 = tpu.concatenate %27, %28 in 1 : vector<1x1x8x4xf32>, vector<1x7x8x4xf32> -> vector<1x8x8x4xf32>
    %30 = vector.shape_cast %29 : vector<1x8x8x4xf32> to vector<64x4xf32>
    %31 = arith.truncf %30 : vector<64x4xf32> to vector<64x4xbf16>
    %c1 = arith.constant 1 : index
    %c0_12 = arith.constant 0 : index
    %c0_13 = arith.constant 0 : index
    %32 = vector.load %arg2[%c1, %c0_12, %c0_13] : memref<9x4x32xbf16, #tpu.memory_space<vmem>>, vector<1x4x32xbf16>
    %33 = vector.shape_cast %32 : vector<1x4x32xbf16> to vector<4x32xbf16>
    %cst_14 = arith.constant dense<0.000000e+00> : vector<64x32xf32>
    %34 = tpu.matmul %31, %33, %cst_14 {dimension_numbers = #tpu.dot_dimension_numbers<[1], [0], [0], [1], [0, 0, 1, 1], [], []>} : vector<64x4xbf16>, vector<4x32xbf16>, vector<64x32xf32> -> vector<64x32xf32>
    %35 = arith.addf %26, %34 : vector<64x32xf32>
    %36 = vector.shape_cast %0 : vector<1x8x8x4xf32> to vector<64x4xf32>
    %37 = arith.truncf %36 : vector<64x4xf32> to vector<64x4xbf16>
    %c4 = arith.constant 4 : index
    %c0_15 = arith.constant 0 : index
    %c0_16 = arith.constant 0 : index
    %38 = vector.load %arg2[%c4, %c0_15, %c0_16] : memref<9x4x32xbf16, #tpu.memory_space<vmem>>, vector<1x4x32xbf16>
    %39 = vector.shape_cast %38 : vector<1x4x32xbf16> to vector<4x32xbf16>
    %cst_17 = arith.constant dense<0.000000e+00> : vector<64x32xf32>
    %40 = tpu.matmul %37, %39, %cst_17 {dimension_numbers = #tpu.dot_dimension_numbers<[1], [0], [0], [1], [0, 0, 1, 1], [], []>} : vector<64x4xbf16>, vector<4x32xbf16>, vector<64x32xf32> -> vector<64x32xf32>
    %41 = arith.addf %35, %40 : vector<64x32xf32>
    %42 = vector.extract_strided_slice %0 {offsets = [0, 1, 0, 0], sizes = [1, 7, 8, 4], strides = [1, 1, 1, 1]} : vector<1x8x8x4xf32> to vector<1x7x8x4xf32>
    %43 = vector.extract_strided_slice %0 {offsets = [0, 0, 0, 0], sizes = [1, 1, 8, 4], strides = [1, 1, 1, 1]} : vector<1x8x8x4xf32> to vector<1x1x8x4xf32>
    %44 = tpu.concatenate %42, %43 in 1 : vector<1x7x8x4xf32>, vector<1x1x8x4xf32> -> vector<1x8x8x4xf32>
    %45 = vector.shape_cast %44 : vector<1x8x8x4xf32> to vector<64x4xf32>
    %46 = arith.truncf %45 : vector<64x4xf32> to vector<64x4xbf16>
    %c7 = arith.constant 7 : index
    %c0_18 = arith.constant 0 : index
    %c0_19 = arith.constant 0 : index
    %47 = vector.load %arg2[%c7, %c0_18, %c0_19] : memref<9x4x32xbf16, #tpu.memory_space<vmem>>, vector<1x4x32xbf16>
    %48 = vector.shape_cast %47 : vector<1x4x32xbf16> to vector<4x32xbf16>
    %cst_20 = arith.constant dense<0.000000e+00> : vector<64x32xf32>
    %49 = tpu.matmul %46, %48, %cst_20 {dimension_numbers = #tpu.dot_dimension_numbers<[1], [0], [0], [1], [0, 0, 1, 1], [], []>} : vector<64x4xbf16>, vector<4x32xbf16>, vector<64x32xf32> -> vector<64x32xf32>
    %50 = arith.addf %41, %49 : vector<64x32xf32>
    %51 = vector.extract_strided_slice %0 {offsets = [0, 0, 1, 0], sizes = [1, 8, 7, 4], strides = [1, 1, 1, 1]} : vector<1x8x8x4xf32> to vector<1x8x7x4xf32>
    %52 = vector.extract_strided_slice %0 {offsets = [0, 0, 0, 0], sizes = [1, 8, 1, 4], strides = [1, 1, 1, 1]} : vector<1x8x8x4xf32> to vector<1x8x1x4xf32>
    %53 = tpu.concatenate %51, %52 in 2 : vector<1x8x7x4xf32>, vector<1x8x1x4xf32> -> vector<1x8x8x4xf32>
    %54 = vector.extract_strided_slice %53 {offsets = [0, 7, 0, 0], sizes = [1, 1, 8, 4], strides = [1, 1, 1, 1]} : vector<1x8x8x4xf32> to vector<1x1x8x4xf32>
    %55 = vector.extract_strided_slice %53 {offsets = [0, 0, 0, 0], sizes = [1, 7, 8, 4], strides = [1, 1, 1, 1]} : vector<1x8x8x4xf32> to vector<1x7x8x4xf32>
    %56 = tpu.concatenate %54, %55 in 1 : vector<1x1x8x4xf32>, vector<1x7x8x4xf32> -> vector<1x8x8x4xf32>
    %57 = vector.shape_cast %56 : vector<1x8x8x4xf32> to vector<64x4xf32>
    %58 = arith.truncf %57 : vector<64x4xf32> to vector<64x4xbf16>
    %c2 = arith.constant 2 : index
    %c0_21 = arith.constant 0 : index
    %c0_22 = arith.constant 0 : index
    %59 = vector.load %arg2[%c2, %c0_21, %c0_22] : memref<9x4x32xbf16, #tpu.memory_space<vmem>>, vector<1x4x32xbf16>
    %60 = vector.shape_cast %59 : vector<1x4x32xbf16> to vector<4x32xbf16>
    %cst_23 = arith.constant dense<0.000000e+00> : vector<64x32xf32>
    %61 = tpu.matmul %58, %60, %cst_23 {dimension_numbers = #tpu.dot_dimension_numbers<[1], [0], [0], [1], [0, 0, 1, 1], [], []>} : vector<64x4xbf16>, vector<4x32xbf16>, vector<64x32xf32> -> vector<64x32xf32>
    %62 = arith.addf %50, %61 : vector<64x32xf32>
    %63 = vector.shape_cast %53 : vector<1x8x8x4xf32> to vector<64x4xf32>
    %64 = arith.truncf %63 : vector<64x4xf32> to vector<64x4xbf16>
    %c5 = arith.constant 5 : index
    %c0_24 = arith.constant 0 : index
    %c0_25 = arith.constant 0 : index
    %65 = vector.load %arg2[%c5, %c0_24, %c0_25] : memref<9x4x32xbf16, #tpu.memory_space<vmem>>, vector<1x4x32xbf16>
    %66 = vector.shape_cast %65 : vector<1x4x32xbf16> to vector<4x32xbf16>
    %cst_26 = arith.constant dense<0.000000e+00> : vector<64x32xf32>
    %67 = tpu.matmul %64, %66, %cst_26 {dimension_numbers = #tpu.dot_dimension_numbers<[1], [0], [0], [1], [0, 0, 1, 1], [], []>} : vector<64x4xbf16>, vector<4x32xbf16>, vector<64x32xf32> -> vector<64x32xf32>
    %68 = arith.addf %62, %67 : vector<64x32xf32>
    %69 = vector.extract_strided_slice %53 {offsets = [0, 1, 0, 0], sizes = [1, 7, 8, 4], strides = [1, 1, 1, 1]} : vector<1x8x8x4xf32> to vector<1x7x8x4xf32>
    %70 = vector.extract_strided_slice %53 {offsets = [0, 0, 0, 0], sizes = [1, 1, 8, 4], strides = [1, 1, 1, 1]} : vector<1x8x8x4xf32> to vector<1x1x8x4xf32>
    %71 = tpu.concatenate %69, %70 in 1 : vector<1x7x8x4xf32>, vector<1x1x8x4xf32> -> vector<1x8x8x4xf32>
    %72 = vector.shape_cast %71 : vector<1x8x8x4xf32> to vector<64x4xf32>
    %73 = arith.truncf %72 : vector<64x4xf32> to vector<64x4xbf16>
    %c8 = arith.constant 8 : index
    %c0_27 = arith.constant 0 : index
    %c0_28 = arith.constant 0 : index
    %74 = vector.load %arg2[%c8, %c0_27, %c0_28] : memref<9x4x32xbf16, #tpu.memory_space<vmem>>, vector<1x4x32xbf16>
    %75 = vector.shape_cast %74 : vector<1x4x32xbf16> to vector<4x32xbf16>
    %cst_29 = arith.constant dense<0.000000e+00> : vector<64x32xf32>
    %76 = tpu.matmul %73, %75, %cst_29 {dimension_numbers = #tpu.dot_dimension_numbers<[1], [0], [0], [1], [0, 0, 1, 1], [], []>} : vector<64x4xbf16>, vector<4x32xbf16>, vector<64x32xf32> -> vector<64x32xf32>
    %77 = arith.addf %68, %76 : vector<64x32xf32>
    %c0_30 = arith.constant 0 : index
    %c0_31 = arith.constant 0 : index
    %78 = vector.load %arg3[%c0_30, %c0_31] : memref<3x32xf32, #tpu.memory_space<vmem>>, vector<3x32xf32>
    %79 = vector.extract_strided_slice %78 {offsets = [0, 0], sizes = [1, 32], strides = [1, 1]} : vector<3x32xf32> to vector<1x32xf32>
    %80 = vector.broadcast %79 : vector<1x32xf32> to vector<64x32xf32>
    %81 = arith.addf %77, %80 : vector<64x32xf32>
    %cst_32 = arith.constant 0.000000e+00 : f32
    %82 = vector.broadcast %cst_32 : f32 to vector<64x32xf32>
    %83 = arith.maximumf %81, %82 : vector<64x32xf32>
    %84 = vector.extract_strided_slice %78 {offsets = [1, 0], sizes = [1, 32], strides = [1, 1]} : vector<3x32xf32> to vector<1x32xf32>
    %85 = vector.broadcast %84 : vector<1x32xf32> to vector<64x32xf32>
    %86 = arith.mulf %83, %85 : vector<64x32xf32>
    %87 = vector.extract_strided_slice %78 {offsets = [2, 0], sizes = [1, 32], strides = [1, 1]} : vector<3x32xf32> to vector<1x32xf32>
    %88 = vector.broadcast %87 : vector<1x32xf32> to vector<64x32xf32>
    %89 = arith.addf %86, %88 : vector<64x32xf32>
    %90 = vector.shape_cast %89 : vector<64x32xf32> to vector<1x8x8x32xf32>
    %91 = vector.extract_strided_slice %90 {offsets = [0, 0, 7, 0], sizes = [1, 8, 1, 32], strides = [1, 1, 1, 1]} : vector<1x8x8x32xf32> to vector<1x8x1x32xf32>
    %92 = vector.extract_strided_slice %90 {offsets = [0, 0, 0, 0], sizes = [1, 8, 7, 32], strides = [1, 1, 1, 1]} : vector<1x8x8x32xf32> to vector<1x8x7x32xf32>
    %93 = tpu.concatenate %91, %92 in 2 : vector<1x8x1x32xf32>, vector<1x8x7x32xf32> -> vector<1x8x8x32xf32>
    %94 = vector.extract_strided_slice %93 {offsets = [0, 7, 0, 0], sizes = [1, 1, 8, 32], strides = [1, 1, 1, 1]} : vector<1x8x8x32xf32> to vector<1x1x8x32xf32>
    %95 = vector.extract_strided_slice %93 {offsets = [0, 0, 0, 0], sizes = [1, 7, 8, 32], strides = [1, 1, 1, 1]} : vector<1x8x8x32xf32> to vector<1x7x8x32xf32>
    %96 = tpu.concatenate %94, %95 in 1 : vector<1x1x8x32xf32>, vector<1x7x8x32xf32> -> vector<1x8x8x32xf32>
    %97 = vector.shape_cast %96 : vector<1x8x8x32xf32> to vector<64x32xf32>
    %98 = arith.truncf %97 : vector<64x32xf32> to vector<64x32xbf16>
    %c0_33 = arith.constant 0 : index
    %c0_34 = arith.constant 0 : index
    %c0_35 = arith.constant 0 : index
    %99 = vector.load %arg4[%c0_33, %c0_34, %c0_35] : memref<9x32x32xbf16, #tpu.memory_space<vmem>>, vector<1x32x32xbf16>
    %100 = vector.shape_cast %99 : vector<1x32x32xbf16> to vector<32x32xbf16>
    %cst_36 = arith.constant dense<0.000000e+00> : vector<64x32xf32>
    %101 = tpu.matmul %98, %100, %cst_36 {dimension_numbers = #tpu.dot_dimension_numbers<[1], [0], [0], [1], [0, 0, 1, 1], [], []>} : vector<64x32xbf16>, vector<32x32xbf16>, vector<64x32xf32> -> vector<64x32xf32>
    %102 = vector.shape_cast %93 : vector<1x8x8x32xf32> to vector<64x32xf32>
    %103 = arith.truncf %102 : vector<64x32xf32> to vector<64x32xbf16>
    %c3_37 = arith.constant 3 : index
    %c0_38 = arith.constant 0 : index
    %c0_39 = arith.constant 0 : index
    %104 = vector.load %arg4[%c3_37, %c0_38, %c0_39] : memref<9x32x32xbf16, #tpu.memory_space<vmem>>, vector<1x32x32xbf16>
    %105 = vector.shape_cast %104 : vector<1x32x32xbf16> to vector<32x32xbf16>
    %cst_40 = arith.constant dense<0.000000e+00> : vector<64x32xf32>
    %106 = tpu.matmul %103, %105, %cst_40 {dimension_numbers = #tpu.dot_dimension_numbers<[1], [0], [0], [1], [0, 0, 1, 1], [], []>} : vector<64x32xbf16>, vector<32x32xbf16>, vector<64x32xf32> -> vector<64x32xf32>
    %107 = arith.addf %101, %106 : vector<64x32xf32>
    %108 = vector.extract_strided_slice %93 {offsets = [0, 1, 0, 0], sizes = [1, 7, 8, 32], strides = [1, 1, 1, 1]} : vector<1x8x8x32xf32> to vector<1x7x8x32xf32>
    %109 = vector.extract_strided_slice %93 {offsets = [0, 0, 0, 0], sizes = [1, 1, 8, 32], strides = [1, 1, 1, 1]} : vector<1x8x8x32xf32> to vector<1x1x8x32xf32>
    %110 = tpu.concatenate %108, %109 in 1 : vector<1x7x8x32xf32>, vector<1x1x8x32xf32> -> vector<1x8x8x32xf32>
    %111 = vector.shape_cast %110 : vector<1x8x8x32xf32> to vector<64x32xf32>
    %112 = arith.truncf %111 : vector<64x32xf32> to vector<64x32xbf16>
    %c6_41 = arith.constant 6 : index
    %c0_42 = arith.constant 0 : index
    %c0_43 = arith.constant 0 : index
    %113 = vector.load %arg4[%c6_41, %c0_42, %c0_43] : memref<9x32x32xbf16, #tpu.memory_space<vmem>>, vector<1x32x32xbf16>
    %114 = vector.shape_cast %113 : vector<1x32x32xbf16> to vector<32x32xbf16>
    %cst_44 = arith.constant dense<0.000000e+00> : vector<64x32xf32>
    %115 = tpu.matmul %112, %114, %cst_44 {dimension_numbers = #tpu.dot_dimension_numbers<[1], [0], [0], [1], [0, 0, 1, 1], [], []>} : vector<64x32xbf16>, vector<32x32xbf16>, vector<64x32xf32> -> vector<64x32xf32>
    %116 = arith.addf %107, %115 : vector<64x32xf32>
    %117 = vector.extract_strided_slice %90 {offsets = [0, 7, 0, 0], sizes = [1, 1, 8, 32], strides = [1, 1, 1, 1]} : vector<1x8x8x32xf32> to vector<1x1x8x32xf32>
    %118 = vector.extract_strided_slice %90 {offsets = [0, 0, 0, 0], sizes = [1, 7, 8, 32], strides = [1, 1, 1, 1]} : vector<1x8x8x32xf32> to vector<1x7x8x32xf32>
    %119 = tpu.concatenate %117, %118 in 1 : vector<1x1x8x32xf32>, vector<1x7x8x32xf32> -> vector<1x8x8x32xf32>
    %120 = vector.shape_cast %119 : vector<1x8x8x32xf32> to vector<64x32xf32>
    %121 = arith.truncf %120 : vector<64x32xf32> to vector<64x32xbf16>
    %c1_45 = arith.constant 1 : index
    %c0_46 = arith.constant 0 : index
    %c0_47 = arith.constant 0 : index
    %122 = vector.load %arg4[%c1_45, %c0_46, %c0_47] : memref<9x32x32xbf16, #tpu.memory_space<vmem>>, vector<1x32x32xbf16>
    %123 = vector.shape_cast %122 : vector<1x32x32xbf16> to vector<32x32xbf16>
    %cst_48 = arith.constant dense<0.000000e+00> : vector<64x32xf32>
    %124 = tpu.matmul %121, %123, %cst_48 {dimension_numbers = #tpu.dot_dimension_numbers<[1], [0], [0], [1], [0, 0, 1, 1], [], []>} : vector<64x32xbf16>, vector<32x32xbf16>, vector<64x32xf32> -> vector<64x32xf32>
    %125 = arith.addf %116, %124 : vector<64x32xf32>
    %126 = vector.shape_cast %90 : vector<1x8x8x32xf32> to vector<64x32xf32>
    %127 = arith.truncf %126 : vector<64x32xf32> to vector<64x32xbf16>
    %c4_49 = arith.constant 4 : index
    %c0_50 = arith.constant 0 : index
    %c0_51 = arith.constant 0 : index
    %128 = vector.load %arg4[%c4_49, %c0_50, %c0_51] : memref<9x32x32xbf16, #tpu.memory_space<vmem>>, vector<1x32x32xbf16>
    %129 = vector.shape_cast %128 : vector<1x32x32xbf16> to vector<32x32xbf16>
    %cst_52 = arith.constant dense<0.000000e+00> : vector<64x32xf32>
    %130 = tpu.matmul %127, %129, %cst_52 {dimension_numbers = #tpu.dot_dimension_numbers<[1], [0], [0], [1], [0, 0, 1, 1], [], []>} : vector<64x32xbf16>, vector<32x32xbf16>, vector<64x32xf32> -> vector<64x32xf32>
    %131 = arith.addf %125, %130 : vector<64x32xf32>
    %132 = vector.extract_strided_slice %90 {offsets = [0, 1, 0, 0], sizes = [1, 7, 8, 32], strides = [1, 1, 1, 1]} : vector<1x8x8x32xf32> to vector<1x7x8x32xf32>
    %133 = vector.extract_strided_slice %90 {offsets = [0, 0, 0, 0], sizes = [1, 1, 8, 32], strides = [1, 1, 1, 1]} : vector<1x8x8x32xf32> to vector<1x1x8x32xf32>
    %134 = tpu.concatenate %132, %133 in 1 : vector<1x7x8x32xf32>, vector<1x1x8x32xf32> -> vector<1x8x8x32xf32>
    %135 = vector.shape_cast %134 : vector<1x8x8x32xf32> to vector<64x32xf32>
    %136 = arith.truncf %135 : vector<64x32xf32> to vector<64x32xbf16>
    %c7_53 = arith.constant 7 : index
    %c0_54 = arith.constant 0 : index
    %c0_55 = arith.constant 0 : index
    %137 = vector.load %arg4[%c7_53, %c0_54, %c0_55] : memref<9x32x32xbf16, #tpu.memory_space<vmem>>, vector<1x32x32xbf16>
    %138 = vector.shape_cast %137 : vector<1x32x32xbf16> to vector<32x32xbf16>
    %cst_56 = arith.constant dense<0.000000e+00> : vector<64x32xf32>
    %139 = tpu.matmul %136, %138, %cst_56 {dimension_numbers = #tpu.dot_dimension_numbers<[1], [0], [0], [1], [0, 0, 1, 1], [], []>} : vector<64x32xbf16>, vector<32x32xbf16>, vector<64x32xf32> -> vector<64x32xf32>
    %140 = arith.addf %131, %139 : vector<64x32xf32>
    %141 = vector.extract_strided_slice %90 {offsets = [0, 0, 1, 0], sizes = [1, 8, 7, 32], strides = [1, 1, 1, 1]} : vector<1x8x8x32xf32> to vector<1x8x7x32xf32>
    %142 = vector.extract_strided_slice %90 {offsets = [0, 0, 0, 0], sizes = [1, 8, 1, 32], strides = [1, 1, 1, 1]} : vector<1x8x8x32xf32> to vector<1x8x1x32xf32>
    %143 = tpu.concatenate %141, %142 in 2 : vector<1x8x7x32xf32>, vector<1x8x1x32xf32> -> vector<1x8x8x32xf32>
    %144 = vector.extract_strided_slice %143 {offsets = [0, 7, 0, 0], sizes = [1, 1, 8, 32], strides = [1, 1, 1, 1]} : vector<1x8x8x32xf32> to vector<1x1x8x32xf32>
    %145 = vector.extract_strided_slice %143 {offsets = [0, 0, 0, 0], sizes = [1, 7, 8, 32], strides = [1, 1, 1, 1]} : vector<1x8x8x32xf32> to vector<1x7x8x32xf32>
    %146 = tpu.concatenate %144, %145 in 1 : vector<1x1x8x32xf32>, vector<1x7x8x32xf32> -> vector<1x8x8x32xf32>
    %147 = vector.shape_cast %146 : vector<1x8x8x32xf32> to vector<64x32xf32>
    %148 = arith.truncf %147 : vector<64x32xf32> to vector<64x32xbf16>
    %c2_57 = arith.constant 2 : index
    %c0_58 = arith.constant 0 : index
    %c0_59 = arith.constant 0 : index
    %149 = vector.load %arg4[%c2_57, %c0_58, %c0_59] : memref<9x32x32xbf16, #tpu.memory_space<vmem>>, vector<1x32x32xbf16>
    %150 = vector.shape_cast %149 : vector<1x32x32xbf16> to vector<32x32xbf16>
    %cst_60 = arith.constant dense<0.000000e+00> : vector<64x32xf32>
    %151 = tpu.matmul %148, %150, %cst_60 {dimension_numbers = #tpu.dot_dimension_numbers<[1], [0], [0], [1], [0, 0, 1, 1], [], []>} : vector<64x32xbf16>, vector<32x32xbf16>, vector<64x32xf32> -> vector<64x32xf32>
    %152 = arith.addf %140, %151 : vector<64x32xf32>
    %153 = vector.shape_cast %143 : vector<1x8x8x32xf32> to vector<64x32xf32>
    %154 = arith.truncf %153 : vector<64x32xf32> to vector<64x32xbf16>
    %c5_61 = arith.constant 5 : index
    %c0_62 = arith.constant 0 : index
    %c0_63 = arith.constant 0 : index
    %155 = vector.load %arg4[%c5_61, %c0_62, %c0_63] : memref<9x32x32xbf16, #tpu.memory_space<vmem>>, vector<1x32x32xbf16>
    %156 = vector.shape_cast %155 : vector<1x32x32xbf16> to vector<32x32xbf16>
    %cst_64 = arith.constant dense<0.000000e+00> : vector<64x32xf32>
    %157 = tpu.matmul %154, %156, %cst_64 {dimension_numbers = #tpu.dot_dimension_numbers<[1], [0], [0], [1], [0, 0, 1, 1], [], []>} : vector<64x32xbf16>, vector<32x32xbf16>, vector<64x32xf32> -> vector<64x32xf32>
    %158 = arith.addf %152, %157 : vector<64x32xf32>
    %159 = vector.extract_strided_slice %143 {offsets = [0, 1, 0, 0], sizes = [1, 7, 8, 32], strides = [1, 1, 1, 1]} : vector<1x8x8x32xf32> to vector<1x7x8x32xf32>
    %160 = vector.extract_strided_slice %143 {offsets = [0, 0, 0, 0], sizes = [1, 1, 8, 32], strides = [1, 1, 1, 1]} : vector<1x8x8x32xf32> to vector<1x1x8x32xf32>
    %161 = tpu.concatenate %159, %160 in 1 : vector<1x7x8x32xf32>, vector<1x1x8x32xf32> -> vector<1x8x8x32xf32>
    %162 = vector.shape_cast %161 : vector<1x8x8x32xf32> to vector<64x32xf32>
    %163 = arith.truncf %162 : vector<64x32xf32> to vector<64x32xbf16>
    %c8_65 = arith.constant 8 : index
    %c0_66 = arith.constant 0 : index
    %c0_67 = arith.constant 0 : index
    %164 = vector.load %arg4[%c8_65, %c0_66, %c0_67] : memref<9x32x32xbf16, #tpu.memory_space<vmem>>, vector<1x32x32xbf16>
    %165 = vector.shape_cast %164 : vector<1x32x32xbf16> to vector<32x32xbf16>
    %cst_68 = arith.constant dense<0.000000e+00> : vector<64x32xf32>
    %166 = tpu.matmul %163, %165, %cst_68 {dimension_numbers = #tpu.dot_dimension_numbers<[1], [0], [0], [1], [0, 0, 1, 1], [], []>} : vector<64x32xbf16>, vector<32x32xbf16>, vector<64x32xf32> -> vector<64x32xf32>
    %167 = arith.addf %158, %166 : vector<64x32xf32>
    %c0_69 = arith.constant 0 : index
    %c0_70 = arith.constant 0 : index
    %168 = vector.load %arg5[%c0_69, %c0_70] : memref<3x32xf32, #tpu.memory_space<vmem>>, vector<3x32xf32>
    %169 = vector.extract_strided_slice %168 {offsets = [0, 0], sizes = [1, 32], strides = [1, 1]} : vector<3x32xf32> to vector<1x32xf32>
    %170 = vector.broadcast %169 : vector<1x32xf32> to vector<64x32xf32>
    %171 = arith.addf %167, %170 : vector<64x32xf32>
    %cst_71 = arith.constant 0.000000e+00 : f32
    %172 = vector.broadcast %cst_71 : f32 to vector<64x32xf32>
    %173 = arith.maximumf %171, %172 : vector<64x32xf32>
    %174 = vector.extract_strided_slice %168 {offsets = [1, 0], sizes = [1, 32], strides = [1, 1]} : vector<3x32xf32> to vector<1x32xf32>
    %175 = vector.broadcast %174 : vector<1x32xf32> to vector<64x32xf32>
    %176 = arith.mulf %173, %175 : vector<64x32xf32>
    %177 = vector.extract_strided_slice %168 {offsets = [2, 0], sizes = [1, 32], strides = [1, 1]} : vector<3x32xf32> to vector<1x32xf32>
    %178 = vector.broadcast %177 : vector<1x32xf32> to vector<64x32xf32>
    %179 = arith.addf %176, %178 : vector<64x32xf32>
    %180 = vector.shape_cast %179 : vector<64x32xf32> to vector<1x8x8x32xf32>
    %181 = vector.extract_strided_slice %180 {offsets = [0, 0, 7, 0], sizes = [1, 8, 1, 32], strides = [1, 1, 1, 1]} : vector<1x8x8x32xf32> to vector<1x8x1x32xf32>
    %182 = vector.extract_strided_slice %180 {offsets = [0, 0, 0, 0], sizes = [1, 8, 7, 32], strides = [1, 1, 1, 1]} : vector<1x8x8x32xf32> to vector<1x8x7x32xf32>
    %183 = tpu.concatenate %181, %182 in 2 : vector<1x8x1x32xf32>, vector<1x8x7x32xf32> -> vector<1x8x8x32xf32>
    %184 = vector.extract_strided_slice %183 {offsets = [0, 7, 0, 0], sizes = [1, 1, 8, 32], strides = [1, 1, 1, 1]} : vector<1x8x8x32xf32> to vector<1x1x8x32xf32>
    %185 = vector.extract_strided_slice %183 {offsets = [0, 0, 0, 0], sizes = [1, 7, 8, 32], strides = [1, 1, 1, 1]} : vector<1x8x8x32xf32> to vector<1x7x8x32xf32>
    %186 = tpu.concatenate %184, %185 in 1 : vector<1x1x8x32xf32>, vector<1x7x8x32xf32> -> vector<1x8x8x32xf32>
    %187 = vector.shape_cast %186 : vector<1x8x8x32xf32> to vector<64x32xf32>
    %188 = arith.truncf %187 : vector<64x32xf32> to vector<64x32xbf16>
    %c0_72 = arith.constant 0 : index
    %c0_73 = arith.constant 0 : index
    %c0_74 = arith.constant 0 : index
    %189 = vector.load %arg6[%c0_72, %c0_73, %c0_74] : memref<9x32x32xbf16, #tpu.memory_space<vmem>>, vector<1x32x32xbf16>
    %190 = vector.shape_cast %189 : vector<1x32x32xbf16> to vector<32x32xbf16>
    %cst_75 = arith.constant dense<0.000000e+00> : vector<64x32xf32>
    %191 = tpu.matmul %188, %190, %cst_75 {dimension_numbers = #tpu.dot_dimension_numbers<[1], [0], [0], [1], [0, 0, 1, 1], [], []>} : vector<64x32xbf16>, vector<32x32xbf16>, vector<64x32xf32> -> vector<64x32xf32>
    %192 = vector.shape_cast %183 : vector<1x8x8x32xf32> to vector<64x32xf32>
    %193 = arith.truncf %192 : vector<64x32xf32> to vector<64x32xbf16>
    %c3_76 = arith.constant 3 : index
    %c0_77 = arith.constant 0 : index
    %c0_78 = arith.constant 0 : index
    %194 = vector.load %arg6[%c3_76, %c0_77, %c0_78] : memref<9x32x32xbf16, #tpu.memory_space<vmem>>, vector<1x32x32xbf16>
    %195 = vector.shape_cast %194 : vector<1x32x32xbf16> to vector<32x32xbf16>
    %cst_79 = arith.constant dense<0.000000e+00> : vector<64x32xf32>
    %196 = tpu.matmul %193, %195, %cst_79 {dimension_numbers = #tpu.dot_dimension_numbers<[1], [0], [0], [1], [0, 0, 1, 1], [], []>} : vector<64x32xbf16>, vector<32x32xbf16>, vector<64x32xf32> -> vector<64x32xf32>
    %197 = arith.addf %191, %196 : vector<64x32xf32>
    %198 = vector.extract_strided_slice %183 {offsets = [0, 1, 0, 0], sizes = [1, 7, 8, 32], strides = [1, 1, 1, 1]} : vector<1x8x8x32xf32> to vector<1x7x8x32xf32>
    %199 = vector.extract_strided_slice %183 {offsets = [0, 0, 0, 0], sizes = [1, 1, 8, 32], strides = [1, 1, 1, 1]} : vector<1x8x8x32xf32> to vector<1x1x8x32xf32>
    %200 = tpu.concatenate %198, %199 in 1 : vector<1x7x8x32xf32>, vector<1x1x8x32xf32> -> vector<1x8x8x32xf32>
    %201 = vector.shape_cast %200 : vector<1x8x8x32xf32> to vector<64x32xf32>
    %202 = arith.truncf %201 : vector<64x32xf32> to vector<64x32xbf16>
    %c6_80 = arith.constant 6 : index
    %c0_81 = arith.constant 0 : index
    %c0_82 = arith.constant 0 : index
    %203 = vector.load %arg6[%c6_80, %c0_81, %c0_82] : memref<9x32x32xbf16, #tpu.memory_space<vmem>>, vector<1x32x32xbf16>
    %204 = vector.shape_cast %203 : vector<1x32x32xbf16> to vector<32x32xbf16>
    %cst_83 = arith.constant dense<0.000000e+00> : vector<64x32xf32>
    %205 = tpu.matmul %202, %204, %cst_83 {dimension_numbers = #tpu.dot_dimension_numbers<[1], [0], [0], [1], [0, 0, 1, 1], [], []>} : vector<64x32xbf16>, vector<32x32xbf16>, vector<64x32xf32> -> vector<64x32xf32>
    %206 = arith.addf %197, %205 : vector<64x32xf32>
    %207 = vector.extract_strided_slice %180 {offsets = [0, 7, 0, 0], sizes = [1, 1, 8, 32], strides = [1, 1, 1, 1]} : vector<1x8x8x32xf32> to vector<1x1x8x32xf32>
    %208 = vector.extract_strided_slice %180 {offsets = [0, 0, 0, 0], sizes = [1, 7, 8, 32], strides = [1, 1, 1, 1]} : vector<1x8x8x32xf32> to vector<1x7x8x32xf32>
    %209 = tpu.concatenate %207, %208 in 1 : vector<1x1x8x32xf32>, vector<1x7x8x32xf32> -> vector<1x8x8x32xf32>
    %210 = vector.shape_cast %209 : vector<1x8x8x32xf32> to vector<64x32xf32>
    %211 = arith.truncf %210 : vector<64x32xf32> to vector<64x32xbf16>
    %c1_84 = arith.constant 1 : index
    %c0_85 = arith.constant 0 : index
    %c0_86 = arith.constant 0 : index
    %212 = vector.load %arg6[%c1_84, %c0_85, %c0_86] : memref<9x32x32xbf16, #tpu.memory_space<vmem>>, vector<1x32x32xbf16>
    %213 = vector.shape_cast %212 : vector<1x32x32xbf16> to vector<32x32xbf16>
    %cst_87 = arith.constant dense<0.000000e+00> : vector<64x32xf32>
    %214 = tpu.matmul %211, %213, %cst_87 {dimension_numbers = #tpu.dot_dimension_numbers<[1], [0], [0], [1], [0, 0, 1, 1], [], []>} : vector<64x32xbf16>, vector<32x32xbf16>, vector<64x32xf32> -> vector<64x32xf32>
    %215 = arith.addf %206, %214 : vector<64x32xf32>
    %216 = vector.shape_cast %180 : vector<1x8x8x32xf32> to vector<64x32xf32>
    %217 = arith.truncf %216 : vector<64x32xf32> to vector<64x32xbf16>
    %c4_88 = arith.constant 4 : index
    %c0_89 = arith.constant 0 : index
    %c0_90 = arith.constant 0 : index
    %218 = vector.load %arg6[%c4_88, %c0_89, %c0_90] : memref<9x32x32xbf16, #tpu.memory_space<vmem>>, vector<1x32x32xbf16>
    %219 = vector.shape_cast %218 : vector<1x32x32xbf16> to vector<32x32xbf16>
    %cst_91 = arith.constant dense<0.000000e+00> : vector<64x32xf32>
    %220 = tpu.matmul %217, %219, %cst_91 {dimension_numbers = #tpu.dot_dimension_numbers<[1], [0], [0], [1], [0, 0, 1, 1], [], []>} : vector<64x32xbf16>, vector<32x32xbf16>, vector<64x32xf32> -> vector<64x32xf32>
    %221 = arith.addf %215, %220 : vector<64x32xf32>
    %222 = vector.extract_strided_slice %180 {offsets = [0, 1, 0, 0], sizes = [1, 7, 8, 32], strides = [1, 1, 1, 1]} : vector<1x8x8x32xf32> to vector<1x7x8x32xf32>
    %223 = vector.extract_strided_slice %180 {offsets = [0, 0, 0, 0], sizes = [1, 1, 8, 32], strides = [1, 1, 1, 1]} : vector<1x8x8x32xf32> to vector<1x1x8x32xf32>
    %224 = tpu.concatenate %222, %223 in 1 : vector<1x7x8x32xf32>, vector<1x1x8x32xf32> -> vector<1x8x8x32xf32>
    %225 = vector.shape_cast %224 : vector<1x8x8x32xf32> to vector<64x32xf32>
    %226 = arith.truncf %225 : vector<64x32xf32> to vector<64x32xbf16>
    %c7_92 = arith.constant 7 : index
    %c0_93 = arith.constant 0 : index
    %c0_94 = arith.constant 0 : index
    %227 = vector.load %arg6[%c7_92, %c0_93, %c0_94] : memref<9x32x32xbf16, #tpu.memory_space<vmem>>, vector<1x32x32xbf16>
    %228 = vector.shape_cast %227 : vector<1x32x32xbf16> to vector<32x32xbf16>
    %cst_95 = arith.constant dense<0.000000e+00> : vector<64x32xf32>
    %229 = tpu.matmul %226, %228, %cst_95 {dimension_numbers = #tpu.dot_dimension_numbers<[1], [0], [0], [1], [0, 0, 1, 1], [], []>} : vector<64x32xbf16>, vector<32x32xbf16>, vector<64x32xf32> -> vector<64x32xf32>
    %230 = arith.addf %221, %229 : vector<64x32xf32>
    %231 = vector.extract_strided_slice %180 {offsets = [0, 0, 1, 0], sizes = [1, 8, 7, 32], strides = [1, 1, 1, 1]} : vector<1x8x8x32xf32> to vector<1x8x7x32xf32>
    %232 = vector.extract_strided_slice %180 {offsets = [0, 0, 0, 0], sizes = [1, 8, 1, 32], strides = [1, 1, 1, 1]} : vector<1x8x8x32xf32> to vector<1x8x1x32xf32>
    %233 = tpu.concatenate %231, %232 in 2 : vector<1x8x7x32xf32>, vector<1x8x1x32xf32> -> vector<1x8x8x32xf32>
    %234 = vector.extract_strided_slice %233 {offsets = [0, 7, 0, 0], sizes = [1, 1, 8, 32], strides = [1, 1, 1, 1]} : vector<1x8x8x32xf32> to vector<1x1x8x32xf32>
    %235 = vector.extract_strided_slice %233 {offsets = [0, 0, 0, 0], sizes = [1, 7, 8, 32], strides = [1, 1, 1, 1]} : vector<1x8x8x32xf32> to vector<1x7x8x32xf32>
    %236 = tpu.concatenate %234, %235 in 1 : vector<1x1x8x32xf32>, vector<1x7x8x32xf32> -> vector<1x8x8x32xf32>
    %237 = vector.shape_cast %236 : vector<1x8x8x32xf32> to vector<64x32xf32>
    %238 = arith.truncf %237 : vector<64x32xf32> to vector<64x32xbf16>
    %c2_96 = arith.constant 2 : index
    %c0_97 = arith.constant 0 : index
    %c0_98 = arith.constant 0 : index
    %239 = vector.load %arg6[%c2_96, %c0_97, %c0_98] : memref<9x32x32xbf16, #tpu.memory_space<vmem>>, vector<1x32x32xbf16>
    %240 = vector.shape_cast %239 : vector<1x32x32xbf16> to vector<32x32xbf16>
    %cst_99 = arith.constant dense<0.000000e+00> : vector<64x32xf32>
    %241 = tpu.matmul %238, %240, %cst_99 {dimension_numbers = #tpu.dot_dimension_numbers<[1], [0], [0], [1], [0, 0, 1, 1], [], []>} : vector<64x32xbf16>, vector<32x32xbf16>, vector<64x32xf32> -> vector<64x32xf32>
    %242 = arith.addf %230, %241 : vector<64x32xf32>
    %243 = vector.shape_cast %233 : vector<1x8x8x32xf32> to vector<64x32xf32>
    %244 = arith.truncf %243 : vector<64x32xf32> to vector<64x32xbf16>
    %c5_100 = arith.constant 5 : index
    %c0_101 = arith.constant 0 : index
    %c0_102 = arith.constant 0 : index
    %245 = vector.load %arg6[%c5_100, %c0_101, %c0_102] : memref<9x32x32xbf16, #tpu.memory_space<vmem>>, vector<1x32x32xbf16>
    %246 = vector.shape_cast %245 : vector<1x32x32xbf16> to vector<32x32xbf16>
    %cst_103 = arith.constant dense<0.000000e+00> : vector<64x32xf32>
    %247 = tpu.matmul %244, %246, %cst_103 {dimension_numbers = #tpu.dot_dimension_numbers<[1], [0], [0], [1], [0, 0, 1, 1], [], []>} : vector<64x32xbf16>, vector<32x32xbf16>, vector<64x32xf32> -> vector<64x32xf32>
    %248 = arith.addf %242, %247 : vector<64x32xf32>
    %249 = vector.extract_strided_slice %233 {offsets = [0, 1, 0, 0], sizes = [1, 7, 8, 32], strides = [1, 1, 1, 1]} : vector<1x8x8x32xf32> to vector<1x7x8x32xf32>
    %250 = vector.extract_strided_slice %233 {offsets = [0, 0, 0, 0], sizes = [1, 1, 8, 32], strides = [1, 1, 1, 1]} : vector<1x8x8x32xf32> to vector<1x1x8x32xf32>
    %251 = tpu.concatenate %249, %250 in 1 : vector<1x7x8x32xf32>, vector<1x1x8x32xf32> -> vector<1x8x8x32xf32>
    %252 = vector.shape_cast %251 : vector<1x8x8x32xf32> to vector<64x32xf32>
    %253 = arith.truncf %252 : vector<64x32xf32> to vector<64x32xbf16>
    %c8_104 = arith.constant 8 : index
    %c0_105 = arith.constant 0 : index
    %c0_106 = arith.constant 0 : index
    %254 = vector.load %arg6[%c8_104, %c0_105, %c0_106] : memref<9x32x32xbf16, #tpu.memory_space<vmem>>, vector<1x32x32xbf16>
    %255 = vector.shape_cast %254 : vector<1x32x32xbf16> to vector<32x32xbf16>
    %cst_107 = arith.constant dense<0.000000e+00> : vector<64x32xf32>
    %256 = tpu.matmul %253, %255, %cst_107 {dimension_numbers = #tpu.dot_dimension_numbers<[1], [0], [0], [1], [0, 0, 1, 1], [], []>} : vector<64x32xbf16>, vector<32x32xbf16>, vector<64x32xf32> -> vector<64x32xf32>
    %257 = arith.addf %248, %256 : vector<64x32xf32>
    %c0_108 = arith.constant 0 : index
    %c0_109 = arith.constant 0 : index
    %258 = vector.load %arg7[%c0_108, %c0_109] : memref<3x32xf32, #tpu.memory_space<vmem>>, vector<3x32xf32>
    %259 = vector.extract_strided_slice %258 {offsets = [0, 0], sizes = [1, 32], strides = [1, 1]} : vector<3x32xf32> to vector<1x32xf32>
    %260 = vector.broadcast %259 : vector<1x32xf32> to vector<64x32xf32>
    %261 = arith.addf %257, %260 : vector<64x32xf32>
    %cst_110 = arith.constant 0.000000e+00 : f32
    %262 = vector.broadcast %cst_110 : f32 to vector<64x32xf32>
    %263 = arith.maximumf %261, %262 : vector<64x32xf32>
    %264 = vector.extract_strided_slice %258 {offsets = [1, 0], sizes = [1, 32], strides = [1, 1]} : vector<3x32xf32> to vector<1x32xf32>
    %265 = vector.broadcast %264 : vector<1x32xf32> to vector<64x32xf32>
    %266 = arith.mulf %263, %265 : vector<64x32xf32>
    %267 = vector.extract_strided_slice %258 {offsets = [2, 0], sizes = [1, 32], strides = [1, 1]} : vector<3x32xf32> to vector<1x32xf32>
    %268 = vector.broadcast %267 : vector<1x32xf32> to vector<64x32xf32>
    %269 = arith.addf %266, %268 : vector<64x32xf32>
    %270 = vector.shape_cast %269 : vector<64x32xf32> to vector<1x8x8x32xf32>
    %271 = vector.extract_strided_slice %270 {offsets = [0, 0, 7, 0], sizes = [1, 8, 1, 32], strides = [1, 1, 1, 1]} : vector<1x8x8x32xf32> to vector<1x8x1x32xf32>
    %272 = vector.extract_strided_slice %270 {offsets = [0, 0, 0, 0], sizes = [1, 8, 7, 32], strides = [1, 1, 1, 1]} : vector<1x8x8x32xf32> to vector<1x8x7x32xf32>
    %273 = tpu.concatenate %271, %272 in 2 : vector<1x8x1x32xf32>, vector<1x8x7x32xf32> -> vector<1x8x8x32xf32>
    %274 = vector.extract_strided_slice %273 {offsets = [0, 7, 0, 0], sizes = [1, 1, 8, 32], strides = [1, 1, 1, 1]} : vector<1x8x8x32xf32> to vector<1x1x8x32xf32>
    %275 = vector.extract_strided_slice %273 {offsets = [0, 0, 0, 0], sizes = [1, 7, 8, 32], strides = [1, 1, 1, 1]} : vector<1x8x8x32xf32> to vector<1x7x8x32xf32>
    %276 = tpu.concatenate %274, %275 in 1 : vector<1x1x8x32xf32>, vector<1x7x8x32xf32> -> vector<1x8x8x32xf32>
    %277 = vector.shape_cast %276 : vector<1x8x8x32xf32> to vector<64x32xf32>
    %278 = arith.truncf %277 : vector<64x32xf32> to vector<64x32xbf16>
    %c0_111 = arith.constant 0 : index
    %c0_112 = arith.constant 0 : index
    %c0_113 = arith.constant 0 : index
    %279 = vector.load %arg8[%c0_111, %c0_112, %c0_113] : memref<9x32x32xbf16, #tpu.memory_space<vmem>>, vector<1x32x32xbf16>
    %280 = vector.shape_cast %279 : vector<1x32x32xbf16> to vector<32x32xbf16>
    %cst_114 = arith.constant dense<0.000000e+00> : vector<64x32xf32>
    %281 = tpu.matmul %278, %280, %cst_114 {dimension_numbers = #tpu.dot_dimension_numbers<[1], [0], [0], [1], [0, 0, 1, 1], [], []>} : vector<64x32xbf16>, vector<32x32xbf16>, vector<64x32xf32> -> vector<64x32xf32>
    %282 = vector.shape_cast %273 : vector<1x8x8x32xf32> to vector<64x32xf32>
    %283 = arith.truncf %282 : vector<64x32xf32> to vector<64x32xbf16>
    %c3_115 = arith.constant 3 : index
    %c0_116 = arith.constant 0 : index
    %c0_117 = arith.constant 0 : index
    %284 = vector.load %arg8[%c3_115, %c0_116, %c0_117] : memref<9x32x32xbf16, #tpu.memory_space<vmem>>, vector<1x32x32xbf16>
    %285 = vector.shape_cast %284 : vector<1x32x32xbf16> to vector<32x32xbf16>
    %cst_118 = arith.constant dense<0.000000e+00> : vector<64x32xf32>
    %286 = tpu.matmul %283, %285, %cst_118 {dimension_numbers = #tpu.dot_dimension_numbers<[1], [0], [0], [1], [0, 0, 1, 1], [], []>} : vector<64x32xbf16>, vector<32x32xbf16>, vector<64x32xf32> -> vector<64x32xf32>
    %287 = arith.addf %281, %286 : vector<64x32xf32>
    %288 = vector.extract_strided_slice %273 {offsets = [0, 1, 0, 0], sizes = [1, 7, 8, 32], strides = [1, 1, 1, 1]} : vector<1x8x8x32xf32> to vector<1x7x8x32xf32>
    %289 = vector.extract_strided_slice %273 {offsets = [0, 0, 0, 0], sizes = [1, 1, 8, 32], strides = [1, 1, 1, 1]} : vector<1x8x8x32xf32> to vector<1x1x8x32xf32>
    %290 = tpu.concatenate %288, %289 in 1 : vector<1x7x8x32xf32>, vector<1x1x8x32xf32> -> vector<1x8x8x32xf32>
    %291 = vector.shape_cast %290 : vector<1x8x8x32xf32> to vector<64x32xf32>
    %292 = arith.truncf %291 : vector<64x32xf32> to vector<64x32xbf16>
    %c6_119 = arith.constant 6 : index
    %c0_120 = arith.constant 0 : index
    %c0_121 = arith.constant 0 : index
    %293 = vector.load %arg8[%c6_119, %c0_120, %c0_121] : memref<9x32x32xbf16, #tpu.memory_space<vmem>>, vector<1x32x32xbf16>
    %294 = vector.shape_cast %293 : vector<1x32x32xbf16> to vector<32x32xbf16>
    %cst_122 = arith.constant dense<0.000000e+00> : vector<64x32xf32>
    %295 = tpu.matmul %292, %294, %cst_122 {dimension_numbers = #tpu.dot_dimension_numbers<[1], [0], [0], [1], [0, 0, 1, 1], [], []>} : vector<64x32xbf16>, vector<32x32xbf16>, vector<64x32xf32> -> vector<64x32xf32>
    %296 = arith.addf %287, %295 : vector<64x32xf32>
    %297 = vector.extract_strided_slice %270 {offsets = [0, 7, 0, 0], sizes = [1, 1, 8, 32], strides = [1, 1, 1, 1]} : vector<1x8x8x32xf32> to vector<1x1x8x32xf32>
    %298 = vector.extract_strided_slice %270 {offsets = [0, 0, 0, 0], sizes = [1, 7, 8, 32], strides = [1, 1, 1, 1]} : vector<1x8x8x32xf32> to vector<1x7x8x32xf32>
    %299 = tpu.concatenate %297, %298 in 1 : vector<1x1x8x32xf32>, vector<1x7x8x32xf32> -> vector<1x8x8x32xf32>
    %300 = vector.shape_cast %299 : vector<1x8x8x32xf32> to vector<64x32xf32>
    %301 = arith.truncf %300 : vector<64x32xf32> to vector<64x32xbf16>
    %c1_123 = arith.constant 1 : index
    %c0_124 = arith.constant 0 : index
    %c0_125 = arith.constant 0 : index
    %302 = vector.load %arg8[%c1_123, %c0_124, %c0_125] : memref<9x32x32xbf16, #tpu.memory_space<vmem>>, vector<1x32x32xbf16>
    %303 = vector.shape_cast %302 : vector<1x32x32xbf16> to vector<32x32xbf16>
    %cst_126 = arith.constant dense<0.000000e+00> : vector<64x32xf32>
    %304 = tpu.matmul %301, %303, %cst_126 {dimension_numbers = #tpu.dot_dimension_numbers<[1], [0], [0], [1], [0, 0, 1, 1], [], []>} : vector<64x32xbf16>, vector<32x32xbf16>, vector<64x32xf32> -> vector<64x32xf32>
    %305 = arith.addf %296, %304 : vector<64x32xf32>
    %306 = vector.shape_cast %270 : vector<1x8x8x32xf32> to vector<64x32xf32>
    %307 = arith.truncf %306 : vector<64x32xf32> to vector<64x32xbf16>
    %c4_127 = arith.constant 4 : index
    %c0_128 = arith.constant 0 : index
    %c0_129 = arith.constant 0 : index
    %308 = vector.load %arg8[%c4_127, %c0_128, %c0_129] : memref<9x32x32xbf16, #tpu.memory_space<vmem>>, vector<1x32x32xbf16>
    %309 = vector.shape_cast %308 : vector<1x32x32xbf16> to vector<32x32xbf16>
    %cst_130 = arith.constant dense<0.000000e+00> : vector<64x32xf32>
    %310 = tpu.matmul %307, %309, %cst_130 {dimension_numbers = #tpu.dot_dimension_numbers<[1], [0], [0], [1], [0, 0, 1, 1], [], []>} : vector<64x32xbf16>, vector<32x32xbf16>, vector<64x32xf32> -> vector<64x32xf32>
    %311 = arith.addf %305, %310 : vector<64x32xf32>
    %312 = vector.extract_strided_slice %270 {offsets = [0, 1, 0, 0], sizes = [1, 7, 8, 32], strides = [1, 1, 1, 1]} : vector<1x8x8x32xf32> to vector<1x7x8x32xf32>
    %313 = vector.extract_strided_slice %270 {offsets = [0, 0, 0, 0], sizes = [1, 1, 8, 32], strides = [1, 1, 1, 1]} : vector<1x8x8x32xf32> to vector<1x1x8x32xf32>
    %314 = tpu.concatenate %312, %313 in 1 : vector<1x7x8x32xf32>, vector<1x1x8x32xf32> -> vector<1x8x8x32xf32>
    %315 = vector.shape_cast %314 : vector<1x8x8x32xf32> to vector<64x32xf32>
    %316 = arith.truncf %315 : vector<64x32xf32> to vector<64x32xbf16>
    %c7_131 = arith.constant 7 : index
    %c0_132 = arith.constant 0 : index
    %c0_133 = arith.constant 0 : index
    %317 = vector.load %arg8[%c7_131, %c0_132, %c0_133] : memref<9x32x32xbf16, #tpu.memory_space<vmem>>, vector<1x32x32xbf16>
    %318 = vector.shape_cast %317 : vector<1x32x32xbf16> to vector<32x32xbf16>
    %cst_134 = arith.constant dense<0.000000e+00> : vector<64x32xf32>
    %319 = tpu.matmul %316, %318, %cst_134 {dimension_numbers = #tpu.dot_dimension_numbers<[1], [0], [0], [1], [0, 0, 1, 1], [], []>} : vector<64x32xbf16>, vector<32x32xbf16>, vector<64x32xf32> -> vector<64x32xf32>
    %320 = arith.addf %311, %319 : vector<64x32xf32>
    %321 = vector.extract_strided_slice %270 {offsets = [0, 0, 1, 0], sizes = [1, 8, 7, 32], strides = [1, 1, 1, 1]} : vector<1x8x8x32xf32> to vector<1x8x7x32xf32>
    %322 = vector.extract_strided_slice %270 {offsets = [0, 0, 0, 0], sizes = [1, 8, 1, 32], strides = [1, 1, 1, 1]} : vector<1x8x8x32xf32> to vector<1x8x1x32xf32>
    %323 = tpu.concatenate %321, %322 in 2 : vector<1x8x7x32xf32>, vector<1x8x1x32xf32> -> vector<1x8x8x32xf32>
    %324 = vector.extract_strided_slice %323 {offsets = [0, 7, 0, 0], sizes = [1, 1, 8, 32], strides = [1, 1, 1, 1]} : vector<1x8x8x32xf32> to vector<1x1x8x32xf32>
    %325 = vector.extract_strided_slice %323 {offsets = [0, 0, 0, 0], sizes = [1, 7, 8, 32], strides = [1, 1, 1, 1]} : vector<1x8x8x32xf32> to vector<1x7x8x32xf32>
    %326 = tpu.concatenate %324, %325 in 1 : vector<1x1x8x32xf32>, vector<1x7x8x32xf32> -> vector<1x8x8x32xf32>
    %327 = vector.shape_cast %326 : vector<1x8x8x32xf32> to vector<64x32xf32>
    %328 = arith.truncf %327 : vector<64x32xf32> to vector<64x32xbf16>
    %c2_135 = arith.constant 2 : index
    %c0_136 = arith.constant 0 : index
    %c0_137 = arith.constant 0 : index
    %329 = vector.load %arg8[%c2_135, %c0_136, %c0_137] : memref<9x32x32xbf16, #tpu.memory_space<vmem>>, vector<1x32x32xbf16>
    %330 = vector.shape_cast %329 : vector<1x32x32xbf16> to vector<32x32xbf16>
    %cst_138 = arith.constant dense<0.000000e+00> : vector<64x32xf32>
    %331 = tpu.matmul %328, %330, %cst_138 {dimension_numbers = #tpu.dot_dimension_numbers<[1], [0], [0], [1], [0, 0, 1, 1], [], []>} : vector<64x32xbf16>, vector<32x32xbf16>, vector<64x32xf32> -> vector<64x32xf32>
    %332 = arith.addf %320, %331 : vector<64x32xf32>
    %333 = vector.shape_cast %323 : vector<1x8x8x32xf32> to vector<64x32xf32>
    %334 = arith.truncf %333 : vector<64x32xf32> to vector<64x32xbf16>
    %c5_139 = arith.constant 5 : index
    %c0_140 = arith.constant 0 : index
    %c0_141 = arith.constant 0 : index
    %335 = vector.load %arg8[%c5_139, %c0_140, %c0_141] : memref<9x32x32xbf16, #tpu.memory_space<vmem>>, vector<1x32x32xbf16>
    %336 = vector.shape_cast %335 : vector<1x32x32xbf16> to vector<32x32xbf16>
    %cst_142 = arith.constant dense<0.000000e+00> : vector<64x32xf32>
    %337 = tpu.matmul %334, %336, %cst_142 {dimension_numbers = #tpu.dot_dimension_numbers<[1], [0], [0], [1], [0, 0, 1, 1], [], []>} : vector<64x32xbf16>, vector<32x32xbf16>, vector<64x32xf32> -> vector<64x32xf32>
    %338 = arith.addf %332, %337 : vector<64x32xf32>
    %339 = vector.extract_strided_slice %323 {offsets = [0, 1, 0, 0], sizes = [1, 7, 8, 32], strides = [1, 1, 1, 1]} : vector<1x8x8x32xf32> to vector<1x7x8x32xf32>
    %340 = vector.extract_strided_slice %323 {offsets = [0, 0, 0, 0], sizes = [1, 1, 8, 32], strides = [1, 1, 1, 1]} : vector<1x8x8x32xf32> to vector<1x1x8x32xf32>
    %341 = tpu.concatenate %339, %340 in 1 : vector<1x7x8x32xf32>, vector<1x1x8x32xf32> -> vector<1x8x8x32xf32>
    %342 = vector.shape_cast %341 : vector<1x8x8x32xf32> to vector<64x32xf32>
    %343 = arith.truncf %342 : vector<64x32xf32> to vector<64x32xbf16>
    %c8_143 = arith.constant 8 : index
    %c0_144 = arith.constant 0 : index
    %c0_145 = arith.constant 0 : index
    %344 = vector.load %arg8[%c8_143, %c0_144, %c0_145] : memref<9x32x32xbf16, #tpu.memory_space<vmem>>, vector<1x32x32xbf16>
    %345 = vector.shape_cast %344 : vector<1x32x32xbf16> to vector<32x32xbf16>
    %cst_146 = arith.constant dense<0.000000e+00> : vector<64x32xf32>
    %346 = tpu.matmul %343, %345, %cst_146 {dimension_numbers = #tpu.dot_dimension_numbers<[1], [0], [0], [1], [0, 0, 1, 1], [], []>} : vector<64x32xbf16>, vector<32x32xbf16>, vector<64x32xf32> -> vector<64x32xf32>
    %347 = arith.addf %338, %346 : vector<64x32xf32>
    %c0_147 = arith.constant 0 : index
    %c0_148 = arith.constant 0 : index
    %348 = vector.load %arg9[%c0_147, %c0_148] : memref<3x32xf32, #tpu.memory_space<vmem>>, vector<3x32xf32>
    %349 = vector.extract_strided_slice %348 {offsets = [0, 0], sizes = [1, 32], strides = [1, 1]} : vector<3x32xf32> to vector<1x32xf32>
    %350 = vector.broadcast %349 : vector<1x32xf32> to vector<64x32xf32>
    %351 = arith.addf %347, %350 : vector<64x32xf32>
    %cst_149 = arith.constant 0.000000e+00 : f32
    %352 = vector.broadcast %cst_149 : f32 to vector<64x32xf32>
    %353 = arith.maximumf %351, %352 : vector<64x32xf32>
    %354 = vector.extract_strided_slice %348 {offsets = [1, 0], sizes = [1, 32], strides = [1, 1]} : vector<3x32xf32> to vector<1x32xf32>
    %355 = vector.broadcast %354 : vector<1x32xf32> to vector<64x32xf32>
    %356 = arith.mulf %353, %355 : vector<64x32xf32>
    %357 = vector.extract_strided_slice %348 {offsets = [2, 0], sizes = [1, 32], strides = [1, 1]} : vector<3x32xf32> to vector<1x32xf32>
    %358 = vector.broadcast %357 : vector<1x32xf32> to vector<64x32xf32>
    %359 = arith.addf %356, %358 : vector<64x32xf32>
    %360 = vector.shape_cast %359 : vector<64x32xf32> to vector<1x8x8x32xf32>
    %361 = vector.extract_strided_slice %360 {offsets = [0, 0, 0, 0], sizes = [1, 8, 1, 32], strides = [1, 1, 1, 1]} : vector<1x8x8x32xf32> to vector<1x8x1x32xf32>
    %362 = vector.shape_cast %361 : vector<1x8x1x32xf32> to vector<1x8x32xf32>
    %363 = vector.extract_strided_slice %360 {offsets = [0, 0, 1, 0], sizes = [1, 8, 1, 32], strides = [1, 1, 1, 1]} : vector<1x8x8x32xf32> to vector<1x8x1x32xf32>
    %364 = vector.shape_cast %363 : vector<1x8x1x32xf32> to vector<1x8x32xf32>
    %365 = vector.extract_strided_slice %360 {offsets = [0, 0, 2, 0], sizes = [1, 8, 1, 32], strides = [1, 1, 1, 1]} : vector<1x8x8x32xf32> to vector<1x8x1x32xf32>
    %366 = vector.shape_cast %365 : vector<1x8x1x32xf32> to vector<1x8x32xf32>
    %367 = vector.extract_strided_slice %360 {offsets = [0, 0, 3, 0], sizes = [1, 8, 1, 32], strides = [1, 1, 1, 1]} : vector<1x8x8x32xf32> to vector<1x8x1x32xf32>
    %368 = vector.shape_cast %367 : vector<1x8x1x32xf32> to vector<1x8x32xf32>
    %369 = vector.extract_strided_slice %360 {offsets = [0, 0, 4, 0], sizes = [1, 8, 1, 32], strides = [1, 1, 1, 1]} : vector<1x8x8x32xf32> to vector<1x8x1x32xf32>
    %370 = vector.shape_cast %369 : vector<1x8x1x32xf32> to vector<1x8x32xf32>
    %371 = vector.extract_strided_slice %360 {offsets = [0, 0, 5, 0], sizes = [1, 8, 1, 32], strides = [1, 1, 1, 1]} : vector<1x8x8x32xf32> to vector<1x8x1x32xf32>
    %372 = vector.shape_cast %371 : vector<1x8x1x32xf32> to vector<1x8x32xf32>
    %373 = vector.extract_strided_slice %360 {offsets = [0, 0, 6, 0], sizes = [1, 8, 1, 32], strides = [1, 1, 1, 1]} : vector<1x8x8x32xf32> to vector<1x8x1x32xf32>
    %374 = vector.shape_cast %373 : vector<1x8x1x32xf32> to vector<1x8x32xf32>
    %375 = vector.extract_strided_slice %360 {offsets = [0, 0, 7, 0], sizes = [1, 8, 1, 32], strides = [1, 1, 1, 1]} : vector<1x8x8x32xf32> to vector<1x8x1x32xf32>
    %376 = vector.shape_cast %375 : vector<1x8x1x32xf32> to vector<1x8x32xf32>
    %377 = tpu.concatenate %362, %364, %366, %368, %370, %372, %374, %376 in 2 : vector<1x8x32xf32>, vector<1x8x32xf32>, vector<1x8x32xf32>, vector<1x8x32xf32>, vector<1x8x32xf32>, vector<1x8x32xf32>, vector<1x8x32xf32>, vector<1x8x32xf32> -> vector<1x8x256xf32>
    %378 = vector.extract_strided_slice %377 {offsets = [0, 0, 0], sizes = [1, 1, 256], strides = [1, 1, 1]} : vector<1x8x256xf32> to vector<1x1x256xf32>
    %379 = vector.shape_cast %378 : vector<1x1x256xf32> to vector<1x256xf32>
    %380 = vector.extract_strided_slice %377 {offsets = [0, 1, 0], sizes = [1, 1, 256], strides = [1, 1, 1]} : vector<1x8x256xf32> to vector<1x1x256xf32>
    %381 = vector.shape_cast %380 : vector<1x1x256xf32> to vector<1x256xf32>
    %382 = vector.extract_strided_slice %377 {offsets = [0, 2, 0], sizes = [1, 1, 256], strides = [1, 1, 1]} : vector<1x8x256xf32> to vector<1x1x256xf32>
    %383 = vector.shape_cast %382 : vector<1x1x256xf32> to vector<1x256xf32>
    %384 = vector.extract_strided_slice %377 {offsets = [0, 3, 0], sizes = [1, 1, 256], strides = [1, 1, 1]} : vector<1x8x256xf32> to vector<1x1x256xf32>
    %385 = vector.shape_cast %384 : vector<1x1x256xf32> to vector<1x256xf32>
    %386 = vector.extract_strided_slice %377 {offsets = [0, 4, 0], sizes = [1, 1, 256], strides = [1, 1, 1]} : vector<1x8x256xf32> to vector<1x1x256xf32>
    %387 = vector.shape_cast %386 : vector<1x1x256xf32> to vector<1x256xf32>
    %388 = vector.extract_strided_slice %377 {offsets = [0, 5, 0], sizes = [1, 1, 256], strides = [1, 1, 1]} : vector<1x8x256xf32> to vector<1x1x256xf32>
    %389 = vector.shape_cast %388 : vector<1x1x256xf32> to vector<1x256xf32>
    %390 = vector.extract_strided_slice %377 {offsets = [0, 6, 0], sizes = [1, 1, 256], strides = [1, 1, 1]} : vector<1x8x256xf32> to vector<1x1x256xf32>
    %391 = vector.shape_cast %390 : vector<1x1x256xf32> to vector<1x256xf32>
    %392 = vector.extract_strided_slice %377 {offsets = [0, 7, 0], sizes = [1, 1, 256], strides = [1, 1, 1]} : vector<1x8x256xf32> to vector<1x1x256xf32>
    %393 = vector.shape_cast %392 : vector<1x1x256xf32> to vector<1x256xf32>
    %394 = tpu.concatenate %379, %381, %383, %385, %387, %389, %391, %393 in 1 : vector<1x256xf32>, vector<1x256xf32>, vector<1x256xf32>, vector<1x256xf32>, vector<1x256xf32>, vector<1x256xf32>, vector<1x256xf32>, vector<1x256xf32> -> vector<1x2048xf32>
    %395 = arith.truncf %394 : vector<1x2048xf32> to vector<1x2048xbf16>
    %c0_150 = arith.constant 0 : index
    %c0_151 = arith.constant 0 : index
    %396 = vector.load %arg10[%c0_150, %c0_151] : memref<2048x64xbf16, #tpu.memory_space<vmem>>, vector<2048x64xbf16>
    %cst_152 = arith.constant dense<0.000000e+00> : vector<1x64xf32>
    %397 = tpu.matmul %395, %396, %cst_152 {dimension_numbers = #tpu.dot_dimension_numbers<[1], [0], [0], [1], [0, 0, 1, 1], [], []>} : vector<1x2048xbf16>, vector<2048x64xbf16>, vector<1x64xf32> -> vector<1x64xf32>
    %c0_153 = arith.constant 0 : index
    %c0_154 = arith.constant 0 : index
    %398 = vector.load %arg11[%c0_153, %c0_154] : memref<1x64xf32, #tpu.memory_space<vmem>>, vector<1x64xf32>
    %399 = arith.addf %397, %398 : vector<1x64xf32>
    %cst_155 = arith.constant 0.000000e+00 : f32
    %400 = vector.broadcast %cst_155 : f32 to vector<1x64xf32>
    %401 = arith.maximumf %399, %400 : vector<1x64xf32>
    %402 = arith.truncf %401 : vector<1x64xf32> to vector<1x64xbf16>
    %c0_156 = arith.constant 0 : index
    %c0_157 = arith.constant 0 : index
    %403 = vector.load %arg12[%c0_156, %c0_157] : memref<64x6xbf16, #tpu.memory_space<vmem>>, vector<64x6xbf16>
    %cst_158 = arith.constant dense<0.000000e+00> : vector<1x6xf32>
    %404 = tpu.matmul %402, %403, %cst_158 {dimension_numbers = #tpu.dot_dimension_numbers<[1], [0], [0], [1], [0, 0, 1, 1], [], []>} : vector<1x64xbf16>, vector<64x6xbf16>, vector<1x6xf32> -> vector<1x6xf32>
    %c0_159 = arith.constant 0 : index
    %c0_160 = arith.constant 0 : index
    %405 = vector.load %arg13[%c0_159, %c0_160] : memref<1x6xf32, #tpu.memory_space<vmem>>, vector<1x6xf32>
    %406 = arith.addf %404, %405 : vector<1x6xf32>
    %c0_161 = arith.constant 0 : index
    %c0_162 = arith.constant 0 : index
    %c0_163 = arith.constant 0 : index
    %407 = vector.load %arg14[%c0_161, %c0_162, %c0_163] : memref<1x1x6xf32, #tpu.memory_space<vmem>>, vector<1x1x6xf32>
    %408 = vector.shape_cast %407 : vector<1x1x6xf32> to vector<1x6xf32>
    %409 = vector.shape_cast %406 : vector<1x6xf32> to vector<1x1x6xf32>
    tpu.vector_store %arg14[%c0_161, %c0_162, %c0_163], %409 {strides = array<i32>} : memref<1x1x6xf32, #tpu.memory_space<vmem>>, vector<1x1x6xf32>,
    return
  }
  func.func @transform_0(%arg0: i32) -> (i32, i32, i32, i32) {
    %c0_i32 = arith.constant 0 : i32
    %c0_i32_0 = arith.constant 0 : i32
    %c0_i32_1 = arith.constant 0 : i32
    %c0_i32_2 = arith.constant 0 : i32
    return %arg0, %c0_i32, %c0_i32_0, %c0_i32_1 : i32, i32, i32, i32
  }
  func.func @transform_1(%arg0: i32) -> (i32, i32, i32) {
    %c0_i32 = arith.constant 0 : i32
    %c0_i32_0 = arith.constant 0 : i32
    %c0_i32_1 = arith.constant 0 : i32
    %c0_i32_2 = arith.constant 0 : i32
    return %c0_i32, %c0_i32_0, %c0_i32_1 : i32, i32, i32
  }
  func.func @transform_2(%arg0: i32) -> (i32, i32) {
    %c0_i32 = arith.constant 0 : i32
    %c0_i32_0 = arith.constant 0 : i32
    %c0_i32_1 = arith.constant 0 : i32
    return %c0_i32, %c0_i32_0 : i32, i32
  }
  func.func @transform_3(%arg0: i32) -> (i32, i32, i32) {
    %c0_i32 = arith.constant 0 : i32
    %c0_i32_0 = arith.constant 0 : i32
    %c0_i32_1 = arith.constant 0 : i32
    %c0_i32_2 = arith.constant 0 : i32
    return %c0_i32, %c0_i32_0, %c0_i32_1 : i32, i32, i32
  }
  func.func @transform_4(%arg0: i32) -> (i32, i32) {
    %c0_i32 = arith.constant 0 : i32
    %c0_i32_0 = arith.constant 0 : i32
    %c0_i32_1 = arith.constant 0 : i32
    return %c0_i32, %c0_i32_0 : i32, i32
  }
  func.func @transform_5(%arg0: i32) -> (i32, i32, i32) {
    %c0_i32 = arith.constant 0 : i32
    %c0_i32_0 = arith.constant 0 : i32
    %c0_i32_1 = arith.constant 0 : i32
    %c0_i32_2 = arith.constant 0 : i32
    return %c0_i32, %c0_i32_0, %c0_i32_1 : i32, i32, i32
  }
  func.func @transform_6(%arg0: i32) -> (i32, i32) {
    %c0_i32 = arith.constant 0 : i32
    %c0_i32_0 = arith.constant 0 : i32
    %c0_i32_1 = arith.constant 0 : i32
    return %c0_i32, %c0_i32_0 : i32, i32
  }
  func.func @transform_7(%arg0: i32) -> (i32, i32, i32) {
    %c0_i32 = arith.constant 0 : i32
    %c0_i32_0 = arith.constant 0 : i32
    %c0_i32_1 = arith.constant 0 : i32
    %c0_i32_2 = arith.constant 0 : i32
    return %c0_i32, %c0_i32_0, %c0_i32_1 : i32, i32, i32
  }
  func.func @transform_8(%arg0: i32) -> (i32, i32) {
    %c0_i32 = arith.constant 0 : i32
    %c0_i32_0 = arith.constant 0 : i32
    %c0_i32_1 = arith.constant 0 : i32
    return %c0_i32, %c0_i32_0 : i32, i32
  }
  func.func @transform_9(%arg0: i32) -> (i32, i32) {
    %c0_i32 = arith.constant 0 : i32
    %c0_i32_0 = arith.constant 0 : i32
    %c0_i32_1 = arith.constant 0 : i32
    return %c0_i32, %c0_i32_0 : i32, i32
  }
  func.func @transform_10(%arg0: i32) -> (i32, i32) {
    %c0_i32 = arith.constant 0 : i32
    %c0_i32_0 = arith.constant 0 : i32
    %c0_i32_1 = arith.constant 0 : i32
    return %c0_i32, %c0_i32_0 : i32, i32
  }
  func.func @transform_11(%arg0: i32) -> (i32, i32) {
    %c0_i32 = arith.constant 0 : i32
    %c0_i32_0 = arith.constant 0 : i32
    %c0_i32_1 = arith.constant 0 : i32
    return %c0_i32, %c0_i32_0 : i32, i32
  }
  func.func @transform_12(%arg0: i32) -> (i32, i32) {
    %c0_i32 = arith.constant 0 : i32
    %c0_i32_0 = arith.constant 0 : i32
    %c0_i32_1 = arith.constant 0 : i32
    return %c0_i32, %c0_i32_0 : i32, i32
  }
  func.func @transform_13(%arg0: i32) -> (i32, i32, i32) {
    %c0_i32 = arith.constant 0 : i32
    %c0_i32_0 = arith.constant 0 : i32
    %c0_i32_1 = arith.constant 0 : i32
    return %arg0, %c0_i32, %c0_i32_0 : i32, i32, i32
  }
}

</mosaic_0001>

<llo_original>
// kernel: forward_pallas.1
$region0: #{forward_pallas.1}
  #allocation0 [shape = 'u32[]', space=smem, size = 0x4, offset = 0x4, fixed_abs, tag = 'smem constant byte address 0x4 - core index']
  #allocation1 [shape = 'u32[144,128]{1,0:T(1,128)}', space=vmem, size = 0x12000, scoped, tag = 'internal scratch']
  %s0 = inlined_call_operand.vmem [shape: f32[2,8,8,4], index: 0, kind: input, shape index: {}]
  %s1 = inlined_call_operand.vmem [shape: bf16[9,4,32], index: 1, kind: input, shape index: {}]
  %s2 = inlined_call_operand.vmem [shape: f32[3,32], index: 2, kind: input, shape index: {}]
  %s3 = inlined_call_operand.vmem [shape: bf16[9,32,32], index: 3, kind: input, shape index: {}]
  %s4 = inlined_call_operand.vmem [shape: f32[3,32], index: 4, kind: input, shape index: {}]
  %s5 = inlined_call_operand.vmem [shape: bf16[9,32,32], index: 5, kind: input, shape index: {}]
  %s6 = inlined_call_operand.vmem [shape: f32[3,32], index: 6, kind: input, shape index: {}]
  %s7 = inlined_call_operand.vmem [shape: bf16[9,32,32], index: 7, kind: input, shape index: {}]
  %s8 = inlined_call_operand.vmem [shape: f32[3,32], index: 8, kind: input, shape index: {}]
  %s9 = inlined_call_operand.vmem [shape: bf16[2048,64], index: 9, kind: input, shape index: {}]
  %s10 = inlined_call_operand.vmem [shape: f32[1,64], index: 10, kind: input, shape index: {}]
  %s11 = inlined_call_operand.vmem [shape: bf16[64,6], index: 11, kind: input, shape index: {}]
  %s12 = inlined_call_operand.vmem [shape: f32[1,6], index: 12, kind: input, shape index: {}]
  %s13 = inlined_call_operand.hbm [shape: f32[2,1,6], index: 13, kind: output, shape index: {}]
  %s14 = sld [smem:[#allocation0]]
  $region85: #{forward_pallas.1} parent=0
    _
  %s16 = ssub.s32 1, %s14
  %s17 = scalar_select 0, %s16, %s14
  $region1: #{forward_pallas.1} parent=0
    #allocation2 [shape = 'u8[1024]{0}', space=vmem, size = 0x400, scoped, tag = 'output window, operand 0']
    #allocation3 [shape = 's32[2]{0}', space=sflag, size = 0x8, scoped, tag = 'scoped memory for forward_pallas.1']
    %18 = vsyncpa [#allocation3], 0
    %s19 = scalar_lea.sflag [#allocation3], 1
    %20 = vsyncpa %s19, 0
    loop: start=0, step=1, limit=4
    $region2: #{forward_pallas.1} parent=1 // loop_pre_header
      _
    $region3: #{forward_pallas.1} parent=1 // loop_header
      %s22 = sphi 0, %s26
      %p23 = scmp.ge.s32.totalorder %s22, 4
      %s32 = sphi 0, %s34
      %s35 = sphi 0, %s32
      %s36 = sphi 0, %s35
      %s52 = sphi 0, %s36
      %s56 = sphi 0, %s56
      %s58 = sphi 0, %s56
      %s59 = sphi 0, %s58
      %s73 = sphi 0, %s59
      %s77 = sphi 0, %s77
      %s79 = sphi 0, %s77
      %s80 = sphi 0, %s79
      %s94 = sphi 0, %s80
      %s98 = sphi 0, %s98
      %s100 = sphi 0, %s98
      %s101 = sphi 0, %s100
      %s115 = sphi 0, %s101
      %s119 = sphi 0, %s119
      %s121 = sphi 0, %s119
      %s122 = sphi 0, %s121
      %s136 = sphi 0, %s122
      %s140 = sphi 0, %s140
      %s142 = sphi 0, %s140
      %s143 = sphi 0, %s142
      %s157 = sphi 0, %s143
      %s161 = sphi 0, %s161
      %s163 = sphi 0, %s161
      %s164 = sphi 0, %s163
      %s178 = sphi 0, %s164
      %s182 = sphi 0, %s182
      %s184 = sphi 0, %s182
      %s185 = sphi 0, %s184
      %s199 = sphi 0, %s185
      %s203 = sphi 0, %s203
      %s205 = sphi 0, %s203
      %s206 = sphi 0, %s205
      %s220 = sphi 0, %s206
      %s224 = sphi 0, %s224
      %s226 = sphi 0, %s224
      %s227 = sphi 0, %s226
      %s241 = sphi 0, %s227
      %s245 = sphi 0, %s245
      %s247 = sphi 0, %s245
      %s248 = sphi 0, %s247
      %s262 = sphi 0, %s248
      %s266 = sphi 0, %s266
      %s268 = sphi 0, %s266
      %s269 = sphi 0, %s268
      %s283 = sphi 0, %s269
      %s287 = sphi 0, %s287
      %s289 = sphi 0, %s287
      %s290 = sphi 0, %s289
      %s304 = sphi 0, %s290
      %s310 = sphi 0, %s312
      %s313 = sphi 0, %s310
      %s314 = sphi 0, %s313
      %s330 = sphi 0, %s314
    $region4: #{forward_pallas.1} parent=1 // loop_header_branch
      %25 = sbr.rel (%p23) target = $region8
    $region5: #{forward_pallas.1} parent=1 // loop_body
      %s27 = ssub.s32 %s22, 1
      %s28 = ssub.s32 %s22, 2
      %s29 = sadd.s32 %s22, 1
      %s30 = ssub.s32 %s22, %s29
      %p31 = scmp.eq.s32.totalorder %s30, 0
      %s33 = sadd.s32 %s32, 1
      %s34 = scalar_select %p31, %s32, %s33
      %p37 = pneg %p31
      %p38 = scmp.eq.s32.totalorder %s22, 1
      %p39 = por %p37, %p38
      %p40 = scmp.ne.s32.totalorder %s32, %s35
      %p41 = scmp.eq.s32.totalorder %s22, 0
      %p42 = por %p40, %p41
      %p43 = scmp.ne.s32.totalorder %s32, %s35
      %p44 = scmp.eq.s32.totalorder %s27, 1
      %p45 = por %p43, %p44
      %p46 = scmp.ne.s32.totalorder %s35, %s36
      %p47 = scmp.eq.s32.totalorder %s27, 0
      %p48 = por %p46, %p47
      %p49 = scmp.ne.s32.totalorder %s35, %s36
      %p50 = scmp.eq.s32.totalorder %s28, 1
      %p51 = por %p49, %p50
      %p53 = scmp.ne.s32.totalorder %s36, %s52
      %p54 = scmp.eq.s32.totalorder %s28, 0
      %p55 = por %p53, %p54
      %s57 = sadd.s32 %s56, 1
      %p60 = scmp.eq.s32.totalorder %s22, 1
      %p61 = scmp.ne.s32.totalorder %s56, %s58
      %p62 = scmp.eq.s32.totalorder %s22, 0
      %p63 = por %p61, %p62
      %p64 = scmp.ne.s32.totalorder %s56, %s58
      %p65 = scmp.eq.s32.totalorder %s27, 1
      %p66 = por %p64, %p65
      %p67 = scmp.ne.s32.totalorder %s58, %s59
      %p68 = scmp.eq.s32.totalorder %s27, 0
      %p69 = por %p67, %p68
      %p70 = scmp.ne.s32.totalorder %s58, %s59
      %p71 = scmp.eq.s32.totalorder %s28, 1
      %p72 = por %p70, %p71
      %p74 = scmp.ne.s32.totalorder %s59, %s73
      %p75 = scmp.eq.s32.totalorder %s28, 0
      %p76 = por %p74, %p75
      %s78 = sadd.s32 %s77, 1
      %p81 = scmp.eq.s32.totalorder %s22, 1
      %p82 = scmp.ne.s32.totalorder %s77, %s79
      %p83 = scmp.eq.s32.totalorder %s22, 0
      %p84 = por %p82, %p83
      %p85 = scmp.ne.s32.totalorder %s77, %s79
      %p86 = scmp.eq.s32.totalorder %s27, 1
      %p87 = por %p85, %p86
      %p88 = scmp.ne.s32.totalorder %s79, %s80
      %p89 = scmp.eq.s32.totalorder %s27, 0
      %p90 = por %p88, %p89
      %p91 = scmp.ne.s32.totalorder %s79, %s80
      %p92 = scmp.eq.s32.totalorder %s28, 1
      %p93 = por %p91, %p92
      %p95 = scmp.ne.s32.totalorder %s80, %s94
      %p96 = scmp.eq.s32.totalorder %s28, 0
      %p97 = por %p95, %p96
      %s99 = sadd.s32 %s98, 1
      %p102 = scmp.eq.s32.totalorder %s22, 1
      %p103 = scmp.ne.s32.totalorder %s98, %s100
      %p104 = scmp.eq.s32.totalorder %s22, 0
      %p105 = por %p103, %p104
      %p106 = scmp.ne.s32.totalorder %s98, %s100
      %p107 = scmp.eq.s32.totalorder %s27, 1
      %p108 = por %p106, %p107
      %p109 = scmp.ne.s32.totalorder %s100, %s101
      %p110 = scmp.eq.s32.totalorder %s27, 0
      %p111 = por %p109, %p110
      %p112 = scmp.ne.s32.totalorder %s100, %s101
      %p113 = scmp.eq.s32.totalorder %s28, 1
      %p114 = por %p112, %p113
      %p116 = scmp.ne.s32.totalorder %s101, %s115
      %p117 = scmp.eq.s32.totalorder %s28, 0
      %p118 = por %p116, %p117
      %s120 = sadd.s32 %s119, 1
      %p123 = scmp.eq.s32.totalorder %s22, 1
      %p124 = scmp.ne.s32.totalorder %s119, %s121
      %p125 = scmp.eq.s32.totalorder %s22, 0
      %p126 = por %p124, %p125
      %p127 = scmp.ne.s32.totalorder %s119, %s121
      %p128 = scmp.eq.s32.totalorder %s27, 1
      %p129 = por %p127, %p128
      %p130 = scmp.ne.s32.totalorder %s121, %s122
      %p131 = scmp.eq.s32.totalorder %s27, 0
      %p132 = por %p130, %p131
      %p133 = scmp.ne.s32.totalorder %s121, %s122
      %p134 = scmp.eq.s32.totalorder %s28, 1
      %p135 = por %p133, %p134
      %p137 = scmp.ne.s32.totalorder %s122, %s136
      %p138 = scmp.eq.s32.totalorder %s28, 0
      %p139 = por %p137, %p138
      %s141 = sadd.s32 %s140, 1
      %p144 = scmp.eq.s32.totalorder %s22, 1
      %p145 = scmp.ne.s32.totalorder %s140, %s142
      %p146 = scmp.eq.s32.totalorder %s22, 0
      %p147 = por %p145, %p146
      %p148 = scmp.ne.s32.totalorder %s140, %s142
      %p149 = scmp.eq.s32.totalorder %s27, 1
      %p150 = por %p148, %p149
      %p151 = scmp.ne.s32.totalorder %s142, %s143
      %p152 = scmp.eq.s32.totalorder %s27, 0
      %p153 = por %p151, %p152
      %p154 = scmp.ne.s32.totalorder %s142, %s143
      %p155 = scmp.eq.s32.totalorder %s28, 1
      %p156 = por %p154, %p155
      %p158 = scmp.ne.s32.totalorder %s143, %s157
      %p159 = scmp.eq.s32.totalorder %s28, 0
      %p160 = por %p158, %p159
      %s162 = sadd.s32 %s161, 1
      %p165 = scmp.eq.s32.totalorder %s22, 1
      %p166 = scmp.ne.s32.totalorder %s161, %s163
      %p167 = scmp.eq.s32.totalorder %s22, 0
      %p168 = por %p166, %p167
      %p169 = scmp.ne.s32.totalorder %s161, %s163
      %p170 = scmp.eq.s32.totalorder %s27, 1
      %p171 = por %p169, %p170
      %p172 = scmp.ne.s32.totalorder %s163, %s164
      %p173 = scmp.eq.s32.totalorder %s27, 0
      %p174 = por %p172, %p173
      %p175 = scmp.ne.s32.totalorder %s163, %s164
      %p176 = scmp.eq.s32.totalorder %s28, 1
      %p177 = por %p175, %p176
      %p179 = scmp.ne.s32.totalorder %s164, %s178
      %p180 = scmp.eq.s32.totalorder %s28, 0
      %p181 = por %p179, %p180
      %s183 = sadd.s32 %s182, 1
      %p186 = scmp.eq.s32.totalorder %s22, 1
      %p187 = scmp.ne.s32.totalorder %s182, %s184
      %p188 = scmp.eq.s32.totalorder %s22, 0
      %p189 = por %p187, %p188
      %p190 = scmp.ne.s32.totalorder %s182, %s184
      %p191 = scmp.eq.s32.totalorder %s27, 1
      %p192 = por %p190, %p191
      %p193 = scmp.ne.s32.totalorder %s184, %s185
      %p194 = scmp.eq.s32.totalorder %s27, 0
      %p195 = por %p193, %p194
      %p196 = scmp.ne.s32.totalorder %s184, %s185
      %p197 = scmp.eq.s32.totalorder %s28, 1
      %p198 = por %p196, %p197
      %p200 = scmp.ne.s32.totalorder %s185, %s199
      %p201 = scmp.eq.s32.totalorder %s28, 0
      %p202 = por %p200, %p201
      %s204 = sadd.s32 %s203, 1
      %p207 = scmp.eq.s32.totalorder %s22, 1
      %p208 = scmp.ne.s32.totalorder %s203, %s205
      %p209 = scmp.eq.s32.totalorder %s22, 0
      %p210 = por %p208, %p209
      %p211 = scmp.ne.s32.totalorder %s203, %s205
      %p212 = scmp.eq.s32.totalorder %s27, 1
      %p213 = por %p211, %p212
      %p214 = scmp.ne.s32.totalorder %s205, %s206
      %p215 = scmp.eq.s32.totalorder %s27, 0
      %p216 = por %p214, %p215
      %p217 = scmp.ne.s32.totalorder %s205, %s206
      %p218 = scmp.eq.s32.totalorder %s28, 1
      %p219 = por %p217, %p218
      %p221 = scmp.ne.s32.totalorder %s206, %s220
      %p222 = scmp.eq.s32.totalorder %s28, 0
      %p223 = por %p221, %p222
      %s225 = sadd.s32 %s224, 1
      %p228 = scmp.eq.s32.totalorder %s22, 1
      %p229 = scmp.ne.s32.totalorder %s224, %s226
      %p230 = scmp.eq.s32.totalorder %s22, 0
      %p231 = por %p229, %p230
      %p232 = scmp.ne.s32.totalorder %s224, %s226
      %p233 = scmp.eq.s32.totalorder %s27, 1
      %p234 = por %p232, %p233
      %p235 = scmp.ne.s32.totalorder %s226, %s227
      %p236 = scmp.eq.s32.totalorder %s27, 0
      %p237 = por %p235, %p236
      %p238 = scmp.ne.s32.totalorder %s226, %s227
      %p239 = scmp.eq.s32.totalorder %s28, 1
      %p240 = por %p238, %p239
      %p242 = scmp.ne.s32.totalorder %s227, %s241
      %p243 = scmp.eq.s32.totalorder %s28, 0
      %p244 = por %p242, %p243
      %s246 = sadd.s32 %s245, 1
      %p249 = scmp.eq.s32.totalorder %s22, 1
      %p250 = scmp.ne.s32.totalorder %s245, %s247
      %p251 = scmp.eq.s32.totalorder %s22, 0
      %p252 = por %p250, %p251
      %p253 = scmp.ne.s32.totalorder %s245, %s247
      %p254 = scmp.eq.s32.totalorder %s27, 1
      %p255 = por %p253, %p254
      %p256 = scmp.ne.s32.totalorder %s247, %s248
      %p257 = scmp.eq.s32.totalorder %s27, 0
      %p258 = por %p256, %p257
      %p259 = scmp.ne.s32.totalorder %s247, %s248
      %p260 = scmp.eq.s32.totalorder %s28, 1
      %p261 = por %p259, %p260
      %p263 = scmp.ne.s32.totalorder %s248, %s262
      %p264 = scmp.eq.s32.totalorder %s28, 0
      %p265 = por %p263, %p264
      %s267 = sadd.s32 %s266, 1
      %p270 = scmp.eq.s32.totalorder %s22, 1
      %p271 = scmp.ne.s32.totalorder %s266, %s268
      %p272 = scmp.eq.s32.totalorder %s22, 0
      %p273 = por %p271, %p272
      %p274 = scmp.ne.s32.totalorder %s266, %s268
      %p275 = scmp.eq.s32.totalorder %s27, 1
      %p276 = por %p274, %p275
      %p277 = scmp.ne.s32.totalorder %s268, %s269
      %p278 = scmp.eq.s32.totalorder %s27, 0
      %p279 = por %p277, %p278
      %p280 = scmp.ne.s32.totalorder %s268, %s269
      %p281 = scmp.eq.s32.totalorder %s28, 1
      %p282 = por %p280, %p281
      %p284 = scmp.ne.s32.totalorder %s269, %s283
      %p285 = scmp.eq.s32.totalorder %s28, 0
      %p286 = por %p284, %p285
      %s288 = sadd.s32 %s287, 1
      %p291 = scmp.eq.s32.totalorder %s22, 1
      %p292 = scmp.ne.s32.totalorder %s287, %s289
      %p293 = scmp.eq.s32.totalorder %s22, 0
      %p294 = por %p292, %p293
      %p295 = scmp.ne.s32.totalorder %s287, %s289
      %p296 = scmp.eq.s32.totalorder %s27, 1
      %p297 = por %p295, %p296
      %p298 = scmp.ne.s32.totalorder %s289, %s290
      %p299 = scmp.eq.s32.totalorder %s27, 0
      %p300 = por %p298, %p299
      %p301 = scmp.ne.s32.totalorder %s289, %s290
      %p302 = scmp.eq.s32.totalorder %s28, 1
      %p303 = por %p301, %p302
      %p305 = scmp.ne.s32.totalorder %s290, %s304
      %p306 = scmp.eq.s32.totalorder %s28, 0
      %p307 = por %p305, %p306
      %s308 = ssub.s32 %s22, %s29
      %p309 = scmp.eq.s32.totalorder %s308, 0
      %s311 = sadd.s32 %s310, 1
      %s312 = scalar_select %p309, %s310, %s311
      %p315 = pneg %p309
      %p316 = scmp.eq.s32.totalorder %s22, 1
      %p317 = por %p315, %p316
      %p318 = scmp.ne.s32.totalorder %s310, %s313
      %p319 = scmp.eq.s32.totalorder %s22, 0
      %p320 = por %p318, %p319
      %p321 = scmp.ne.s32.totalorder %s310, %s313
      %p322 = scmp.eq.s32.totalorder %s27, 1
      %p323 = por %p321, %p322
      %p324 = scmp.ne.s32.totalorder %s313, %s314
      %p325 = scmp.eq.s32.totalorder %s27, 0
      %p326 = por %p324, %p325
      %p327 = scmp.ne.s32.totalorder %s313, %s314
      %p328 = scmp.eq.s32.totalorder %s28, 1
      %p329 = por %p327, %p328
      %p331 = scmp.ne.s32.totalorder %s314, %s330
      %p332 = scmp.eq.s32.totalorder %s28, 0
      %p333 = por %p331, %p332
      %p334 = scmp.le.s32.totalorder 1, %s22
      %p335 = scmp.lt.s32.totalorder %s22, 3
      %p336 = pnand %p334, %p335
      %p337 = pneg %p336
      // Predicated region
      $region9: #{forward_pallas.1} parent=5 // pred_check
        _
      $region10: #{forward_pallas.1} parent=5 // pred_check_branch
        %339 = sbr.rel (%p336) target = $region12
      $region11: #{forward_pallas.1} parent=5 // pred_region
        %s340 = ssub.s32 %s22, 1
        // Predicated region
        $region13: #{forward_pallas.1} parent=11 // pred_check
          %p341 = pneg %p69
        $region14: #{forward_pallas.1} parent=11 // pred_check_branch
          %343 = sbr.rel (%p341) target = $region16
        $region15: #{forward_pallas.1} parent=11 // pred_region
          _
        $region16: #{forward_pallas.1} parent=11 // pred_fallthru
          _
        // Predicated region
        $region17: #{forward_pallas.1} parent=11 // pred_check
          %p344 = pneg %p90
        $region18: #{forward_pallas.1} parent=11 // pred_check_branch
          %346 = sbr.rel (%p344) target = $region20
        $region19: #{forward_pallas.1} parent=11 // pred_region
          _
        $region20: #{forward_pallas.1} parent=11 // pred_fallthru
          _
        // Predicated region
        $region21: #{forward_pallas.1} parent=11 // pred_check
          %p347 = pneg %p111
        $region22: #{forward_pallas.1} parent=11 // pred_check_branch
          %349 = sbr.rel (%p347) target = $region24
        $region23: #{forward_pallas.1} parent=11 // pred_region
          _
        $region24: #{forward_pallas.1} parent=11 // pred_fallthru
          _
        // Predicated region
        $region25: #{forward_pallas.1} parent=11 // pred_check
          %p350 = pneg %p132
        $region26: #{forward_pallas.1} parent=11 // pred_check_branch
          %352 = sbr.rel (%p350) target = $region28
        $region27: #{forward_pallas.1} parent=11 // pred_region
          _
        $region28: #{forward_pallas.1} parent=11 // pred_fallthru
          _
        // Predicated region
        $region29: #{forward_pallas.1} parent=11 // pred_check
          %p353 = pneg %p153
        $region30: #{forward_pallas.1} parent=11 // pred_check_branch
          %355 = sbr.rel (%p353) target = $region32
        $region31: #{forward_pallas.1} parent=11 // pred_region
          _
        $region32: #{forward_pallas.1} parent=11 // pred_fallthru
          _
        // Predicated region
        $region33: #{forward_pallas.1} parent=11 // pred_check
          %p356 = pneg %p174
        $region34: #{forward_pallas.1} parent=11 // pred_check_branch
          %358 = sbr.rel (%p356) target = $region36
        $region35: #{forward_pallas.1} parent=11 // pred_region
          _
        $region36: #{forward_pallas.1} parent=11 // pred_fallthru
          _
        // Predicated region
        $region37: #{forward_pallas.1} parent=11 // pred_check
          %p359 = pneg %p195
        $region38: #{forward_pallas.1} parent=11 // pred_check_branch
          %361 = sbr.rel (%p359) target = $region40
        $region39: #{forward_pallas.1} parent=11 // pred_region
          _
        $region40: #{forward_pallas.1} parent=11 // pred_fallthru
          _
        // Predicated region
        $region41: #{forward_pallas.1} parent=11 // pred_check
          %p362 = pneg %p216
        $region42: #{forward_pallas.1} parent=11 // pred_check_branch
          %364 = sbr.rel (%p362) target = $region44
        $region43: #{forward_pallas.1} parent=11 // pred_region
          _
        $region44: #{forward_pallas.1} parent=11 // pred_fallthru
          _
        // Predicated region
        $region45: #{forward_pallas.1} parent=11 // pred_check
          %p365 = pneg %p237
        $region46: #{forward_pallas.1} parent=11 // pred_check_branch
          %367 = sbr.rel (%p365) target = $region48
        $region47: #{forward_pallas.1} parent=11 // pred_region
          _
        $region48: #{forward_pallas.1} parent=11 // pred_fallthru
          _
        // Predicated region
        $region49: #{forward_pallas.1} parent=11 // pred_check
          %p368 = pneg %p258
        $region50: #{forward_pallas.1} parent=11 // pred_check_branch
          %370 = sbr.rel (%p368) target = $region52
        $region51: #{forward_pallas.1} parent=11 // pred_region
          _
        $region52: #{forward_pallas.1} parent=11 // pred_fallthru
          _
        // Predicated region
        $region53: #{forward_pallas.1} parent=11 // pred_check
          %p371 = pneg %p279
        $region54: #{forward_pallas.1} parent=11 // pred_check_branch
          %373 = sbr.rel (%p371) target = $region56
        $region55: #{forward_pallas.1} parent=11 // pred_region
          _
        $region56: #{forward_pallas.1} parent=11 // pred_fallthru
          _
        // Predicated region
        $region57: #{forward_pallas.1} parent=11 // pred_check
          %p374 = pneg %p300
        $region58: #{forward_pallas.1} parent=11 // pred_check_branch
          %376 = sbr.rel (%p374) target = $region60
        $region59: #{forward_pallas.1} parent=11 // pred_region
          _
        $region60: #{forward_pallas.1} parent=11 // pred_fallthru
          _
      $region12: #{forward_pallas.1} parent=5 // pred_fallthru
        _
      %p377 = scmp.lt.s32.totalorder %s22, 2
      // Predicated region
      $region61: #{forward_pallas.1} parent=5 // pred_check
        %p378 = pneg %p377
      $region62: #{forward_pallas.1} parent=5 // pred_check_branch
        %380 = sbr.rel (%p378) target = $region64
      $region63: #{forward_pallas.1} parent=5 // pred_region
        // Predicated region
        $region65: #{forward_pallas.1} parent=63 // pred_check
          %p381 = pneg %p42
        $region66: #{forward_pallas.1} parent=63 // pred_check_branch
          %383 = sbr.rel (%p381) target = $region68
        $region67: #{forward_pallas.1} parent=63 // pred_region
          %p384 = scmp.lt.s32.totalorder %s22, 1
          %s385 = scalar_select %p384, %s22, 1
          %s386 = smul.addr %s385, 8
          %s387 = smul.addr %s386, 8
          %s388 = scalar_lea.vmem %s0, %s387
        $region68: #{forward_pallas.1} parent=63 // pred_fallthru
          _
      $region64: #{forward_pallas.1} parent=5 // pred_fallthru
        _
      %p389 = scmp.le.s32.totalorder 1, %s22
      %p390 = scmp.lt.s32.totalorder %s22, 3
      %p391 = pnand %p389, %p390
      %p392 = pneg %p391
      // Predicated region
      $region69: #{forward_pallas.1} parent=5 // pred_check
        _
      $region70: #{forward_pallas.1} parent=5 // pred_check_branch
        %394 = sbr.rel (%p391) target = $region72
      $region71: #{forward_pallas.1} parent=5 // pred_region
        %s395 = ssub.s32 %s22, 1
        %p396 = scmp.lt.s32.totalorder %s27, 1
        %s397 = scalar_select %p396, %s27, 1
        %s398 = smul.addr %s397, 8
        %s399 = smul.addr %s398, 8
        %s400 = scalar_lea.vmem %s0, %s399
        %p401 = pneg %p48
        %p402 = pneg %p45
        %p403 = pneg %p69
        %p404 = pneg %p66
        %p405 = pneg %p90
        %p406 = pneg %p87
        %p407 = pneg %p111
        %p408 = pneg %p108
        %p409 = pneg %p132
        %p410 = pneg %p129
        %p411 = pneg %p153
        %p412 = pneg %p150
        %p413 = pneg %p174
        %p414 = pneg %p171
        %p415 = pneg %p195
        %p416 = pneg %p192
        %p417 = pneg %p216
        %p418 = pneg %p213
        %p419 = pneg %p237
        %p420 = pneg %p234
        %p421 = pneg %p258
        %p422 = pneg %p255
        %p423 = pneg %p279
        %p424 = pneg %p276
        %p425 = pneg %p300
        %p426 = pneg %p297
        %p427 = pneg %p326
        %p428 = pneg %p323
        %s429 = sand.u32 %s313, 1
        %s430 = scalar_lea.sflag [#allocation3], %s429
        %s431 = sand.u32 %s313, 1
        %s432 = scalar_lea.vmem [#allocation2], %s431
        %p433 = scmp.lt.s32.totalorder %s27, 1
        %s434 = scalar_select %p433, %s27, 1
        %s435 = smul.addr %s434, 8
        %s436 = smul.addr %s435, 8
        %s437 = scalar_lea.vmem %s0, %s436
        %v439 = vld [vmem:[%s437] sm:$0xff]
        %v440 = vld [vmem:[%s437 + $0x8] sm:$0xff]
        %v441 = vld [vmem:[%s437 + $0x10] sm:$0xff]
        %v442 = vld [vmem:[%s437 + $0x18] sm:$0xff]
        %v443 = vld [vmem:[%s437 + $0x20] sm:$0xff]
        %v444 = vld [vmem:[%s437 + $0x28] sm:$0xff]
        %v445 = vld [vmem:[%s437 + $0x30] sm:$0xff]
        %v446 = vld [vmem:[%s437 + $0x38] sm:$0xff]
        %v455 = vrot.slane %v439, 7
        %v456 = vrot.slane %v440, 7
        %v457 = vrot.slane %v441, 7
        %v458 = vrot.slane %v442, 7
        %v459 = vrot.slane %v443, 7
        %v460 = vrot.slane %v444, 7
        %v461 = vrot.slane %v445, 7
        %v462 = vrot.slane %v446, 7
        %vm471 = vcmask 1040384
        %v472 = vsel %vm471, %v455, %v455
        %v473 = vsel %vm471, %v456, %v456
        %v474 = vsel %vm471, %v457, %v457
        %v475 = vsel %vm471, %v458, %v458
        %v476 = vsel %vm471, %v459, %v459
        %v477 = vsel %vm471, %v460, %v460
        %v478 = vsel %vm471, %v461, %v461
        %v479 = vsel %vm471, %v462, %v462
        %v480 = vpack.c.bf16 %v472, %v479
        %v481 = vpack.c.bf16 %v474, %v473
        %v482 = vpack.c.bf16 %v476, %v475
        %v483 = vpack.c.bf16 %v478, %v477
        %v484 = vld [vmem:[%s1] sm:$0x3]
        %v485 = vpack.c.bf16 %v473, %v472
        %v486 = vpack.c.bf16 %v475, %v474
        %v487 = vpack.c.bf16 %v477, %v476
        %v488 = vpack.c.bf16 %v479, %v478
        %s489 = scalar_lea.vmem %s1, 6
        %v490 = vld [vmem:[%s489] sm:$0x3]
        %vm491 = vcmask 31744
        %v493 = vsel %vm491, %v485, 0
        %v496 = vsel %vm491, %v486, 0
        %v499 = vsel %vm491, %v487, 0
        %v502 = vsel %vm491, %v488, 0
        %vm504 = vcmask 1041408
        %v506 = vsel %vm504, %v490, 0
        %508 = vmatprep.subr.bf16.mxu0 0
        %509 = vmatpush1.bf16.msra.mxu0 0
        %510 = vmatprep.subr.bf16.mxu0 0
        %511 = vmatpush1.bf16.msra.mxu0 0
        %512 = vmatprep.subr.bf16.mxu0 0
        %513 = vmatpush1.bf16.msra.mxu0 0
        %514 = vmatprep.subr.bf16.mxu0 0
        %515 = vmatpush1.bf16.msra.mxu0 0
        %516 = vmatprep.subr.bf16.mxu0 0
        %517 = vmatpush1.bf16.msra.mxu0 0
        %518 = vmatprep.subr.bf16.mxu0 0
        %519 = vmatpush1.bf16.msra.mxu0 0
        %520 = vmatprep.subr.bf16.mxu0 0
        %521 = vmatpush1.bf16.msra.mxu0 0
        %522 = vmatprep.subr.bf16.mxu0 0
        %523 = vmatpush1.bf16.msra.mxu0 %v506
        %524 = vmatprep.subr.bf16.mxu0 0
        %525 = vmatpush2.bf16.msra.mxu0 0
        %526 = vmatprep.subr.bf16.mxu0 0
        %527 = vmatpush2.bf16.msra.mxu0 0
        %528 = vmatprep.subr.bf16.mxu0 0
        %529 = vmatpush2.bf16.msra.mxu0 0
        %530 = vmatprep.subr.bf16.mxu0 0
        %531 = vmatpush2.bf16.msra.mxu0 0
        %532 = vmatprep.subr.bf16.mxu0 0
        %533 = vmatpush2.bf16.msra.mxu0 0
        %534 = vmatprep.subr.bf16.mxu0 0
        %535 = vmatpush2.bf16.msra.mxu0 0
        %536 = vmatprep.subr.bf16.mxu0 0
        %537 = vmatpush2.bf16.msra.mxu0 0
        %538 = vmatprep.subr.bf16.mxu0 0
        %539 = vmatpush2.bf16.msra.mxu0 0
        %540 = vmatprep.mubr.bf16.mxu0 0
        %541 = vmatmul.mubr.bf16.gmra.mxu0 %v493
        %v542 = vpop.f32.mrf.mxu0
        %v543 = vadd.f32 0.0, %v542
        %v544 = vpop.f32.mrf.mxu0
        %v545 = vpop.f32.mrf.mxu0
        %v546 = vadd.f32 0.0, %v545
        %v547 = vpop.f32.mrf.mxu0
        %548 = vmatprep.mubr.bf16.mxu0 0
        %549 = vmatmul.mubr.bf16.gmra.mxu0 %v496
        %v550 = vpop.f32.mrf.mxu0
        %v551 = vadd.f32 0.0, %v550
        %v552 = vpop.f32.mrf.mxu0
        %v553 = vpop.f32.mrf.mxu0
        %v554 = vadd.f32 0.0, %v553
        %v555 = vpop.f32.mrf.mxu0
        %556 = vmatprep.mubr.bf16.mxu0 0
        %557 = vmatmul.mubr.bf16.gmra.mxu0 %v499
        %v558 = vpop.f32.mrf.mxu0
        %v559 = vadd.f32 0.0, %v558
        %v560 = vpop.f32.mrf.mxu0
        %v561 = vpop.f32.mrf.mxu0
        %v562 = vadd.f32 0.0, %v561
        %v563 = vpop.f32.mrf.mxu0
        %564 = vmatprep.mubr.bf16.mxu0 0
        %565 = vmatmul.mubr.bf16.gmra.mxu0 %v502
        %v566 = vpop.f32.mrf.mxu0
        %v567 = vadd.f32 0.0, %v566
        %v568 = vpop.f32.mrf.mxu0
        %v569 = vpop.f32.mrf.mxu0
        %v570 = vadd.f32 0.0, %v569
        %v571 = vpop.f32.mrf.mxu0
        %572 = vdwg.mxu0
        %v574 = vsel %vm491, %v480, 0
        %v577 = vsel %vm491, %v481, 0
        %v580 = vsel %vm491, %v482, 0
        %v583 = vsel %vm491, %v483, 0
        %v586 = vsel %vm504, %v484, 0
        %588 = vmatprep.subr.bf16.mxu0 0
        %589 = vmatpush1.bf16.msra.mxu0 0
        %590 = vmatprep.subr.bf16.mxu0 0
        %591 = vmatpush1.bf16.msra.mxu0 0
        %592 = vmatprep.subr.bf16.mxu0 0
        %593 = vmatpush1.bf16.msra.mxu0 0
        %594 = vmatprep.subr.bf16.mxu0 0
        %595 = vmatpush1.bf16.msra.mxu0 0
        %596 = vmatprep.subr.bf16.mxu0 0
        %597 = vmatpush1.bf16.msra.mxu0 0
        %598 = vmatprep.subr.bf16.mxu0 0
        %599 = vmatpush1.bf16.msra.mxu0 0
        %600 = vmatprep.subr.bf16.mxu0 0
        %601 = vmatpush1.bf16.msra.mxu0 0
        %602 = vmatprep.subr.bf16.mxu0 0
        %603 = vmatpush1.bf16.msra.mxu0 %v586
        %604 = vmatprep.subr.bf16.mxu0 0
        %605 = vmatpush2.bf16.msra.mxu0 0
        %606 = vmatprep.subr.bf16.mxu0 0
        %607 = vmatpush2.bf16.msra.mxu0 0
        %608 = vmatprep.subr.bf16.mxu0 0
        %609 = vmatpush2.bf16.msra.mxu0 0
        %610 = vmatprep.subr.bf16.mxu0 0
        %611 = vmatpush2.bf16.msra.mxu0 0
        %612 = vmatprep.subr.bf16.mxu0 0
        %613 = vmatpush2.bf16.msra.mxu0 0
        %614 = vmatprep.subr.bf16.mxu0 0
        %615 = vmatpush2.bf16.msra.mxu0 0
        %616 = vmatprep.subr.bf16.mxu0 0
        %617 = vmatpush2.bf16.msra.mxu0 0
        %618 = vmatprep.subr.bf16.mxu0 0
        %619 = vmatpush2.bf16.msra.mxu0 0
        %620 = vmatprep.mubr.bf16.mxu0 0
        %621 = vmatmul.mubr.bf16.gmra.mxu0 %v574
        %v622 = vpop.f32.mrf.mxu0
        %v623 = vadd.f32 %v543, %v622
        %v624 = vpop.f32.mrf.mxu0
        %v625 = vpop.f32.mrf.mxu0
        %v626 = vadd.f32 %v546, %v625
        %v627 = vpop.f32.mrf.mxu0
        %628 = vmatprep.mubr.bf16.mxu0 0
        %629 = vmatmul.mubr.bf16.gmra.mxu0 %v577
        %v630 = vpop.f32.mrf.mxu0
        %v631 = vadd.f32 %v551, %v630
        %v632 = vpop.f32.mrf.mxu0
        %v633 = vpop.f32.mrf.mxu0
        %v634 = vadd.f32 %v554, %v633
        %v635 = vpop.f32.mrf.mxu0
        %636 = vmatprep.mubr.bf16.mxu0 0
        %637 = vmatmul.mubr.bf16.gmra.mxu0 %v580
        %v638 = vpop.f32.mrf.mxu0
        %v639 = vadd.f32 %v559, %v638
        %v640 = vpop.f32.mrf.mxu0
        %v641 = vpop.f32.mrf.mxu0
        %v642 = vadd.f32 %v562, %v641
        %v643 = vpop.f32.mrf.mxu0
        %644 = vmatprep.mubr.bf16.mxu0 0
        %645 = vmatmul.mubr.bf16.gmra.mxu0 %v583
        %v646 = vpop.f32.mrf.mxu0
        %v647 = vadd.f32 %v567, %v646
        %v648 = vpop.f32.mrf.mxu0
        %v649 = vpop.f32.mrf.mxu0
        %v650 = vadd.f32 %v570, %v649
        %v651 = vpop.f32.mrf.mxu0
        %652 = vdwg.mxu0
        %s653 = scalar_lea.vmem %s1, 12
        %v654 = vld [vmem:[%s653] sm:$0x3]
        %v656 = vsel %vm504, %v654, 0
        %658 = vmatprep.subr.bf16.mxu0 0
        %659 = vmatpush1.bf16.msra.mxu0 0
        %660 = vmatprep.subr.bf16.mxu0 0
        %661 = vmatpush1.bf16.msra.mxu0 0
        %662 = vmatprep.subr.bf16.mxu0 0
        %663 = vmatpush1.bf16.msra.mxu0 0
        %664 = vmatprep.subr.bf16.mxu0 0
        %665 = vmatpush1.bf16.msra.mxu0 0
        %666 = vmatprep.subr.bf16.mxu0 0
        %667 = vmatpush1.bf16.msra.mxu0 0
        %668 = vmatprep.subr.bf16.mxu0 0
        %669 = vmatpush1.bf16.msra.mxu0 0
        %670 = vmatprep.subr.bf16.mxu0 0
        %671 = vmatpush1.bf16.msra.mxu0 0
        %672 = vmatprep.subr.bf16.mxu0 0
        %673 = vmatpush1.bf16.msra.mxu0 %v656
        %674 = vmatprep.subr.bf16.mxu0 0
        %675 = vmatpush2.bf16.msra.mxu0 0
        %676 = vmatprep.subr.bf16.mxu0 0
        %677 = vmatpush2.bf16.msra.mxu0 0
        %678 = vmatprep.subr.bf16.mxu0 0
        %679 = vmatpush2.bf16.msra.mxu0 0
        %680 = vmatprep.subr.bf16.mxu0 0
        %681 = vmatpush2.bf16.msra.mxu0 0
        %682 = vmatprep.subr.bf16.mxu0 0
        %683 = vmatpush2.bf16.msra.mxu0 0
        %684 = vmatprep.subr.bf16.mxu0 0
        %685 = vmatpush2.bf16.msra.mxu0 0
        %686 = vmatprep.subr.bf16.mxu0 0
        %687 = vmatpush2.bf16.msra.mxu0 0
        %688 = vmatprep.subr.bf16.mxu0 0
        %689 = vmatpush2.bf16.msra.mxu0 0
        %690 = vmatprep.mubr.bf16.mxu0 0
        %691 = vmatmul.mubr.bf16.gmra.mxu0 %v577
        %v692 = vpop.f32.mrf.mxu0
        %v693 = vadd.f32 0.0, %v692
        %v694 = vpop.f32.mrf.mxu0
        %v695 = vpop.f32.mrf.mxu0
        %v696 = vadd.f32 0.0, %v695
        %v697 = vpop.f32.mrf.mxu0
        %698 = vmatprep.mubr.bf16.mxu0 0
        %699 = vmatmul.mubr.bf16.gmra.mxu0 %v580
        %v700 = vpop.f32.mrf.mxu0
        %v701 = vadd.f32 0.0, %v700
        %v702 = vpop.f32.mrf.mxu0
        %v703 = vpop.f32.mrf.mxu0
        %v704 = vadd.f32 0.0, %v703
        %v705 = vpop.f32.mrf.mxu0
        %706 = vmatprep.mubr.bf16.mxu0 0
        %707 = vmatmul.mubr.bf16.gmra.mxu0 %v583
        %v708 = vpop.f32.mrf.mxu0
        %v709 = vadd.f32 0.0, %v708
        %v710 = vpop.f32.mrf.mxu0
        %v711 = vpop.f32.mrf.mxu0
        %v712 = vadd.f32 0.0, %v711
        %v713 = vpop.f32.mrf.mxu0
        %714 = vmatprep.mubr.bf16.mxu0 0
        %715 = vmatmul.mubr.bf16.gmra.mxu0 %v574
        %v716 = vpop.f32.mrf.mxu0
        %v717 = vadd.f32 0.0, %v716
        %v718 = vpop.f32.mrf.mxu0
        %v719 = vpop.f32.mrf.mxu0
        %v720 = vadd.f32 0.0, %v719
        %v721 = vpop.f32.mrf.mxu0
        %722 = vdwg.mxu0
        %v723 = vadd.f32 %v623, %v693
        %v724 = vadd.f32 %v626, %v696
        %v725 = vadd.f32 %v631, %v701
        %v726 = vadd.f32 %v634, %v704
        %v727 = vadd.f32 %v639, %v709
        %v728 = vadd.f32 %v642, %v712
        %v729 = vadd.f32 %v647, %v717
        %v730 = vadd.f32 %v650, %v720
        %v731 = vpack.c.bf16 %v439, %v446
        %v732 = vpack.c.bf16 %v441, %v440
        %v733 = vpack.c.bf16 %v443, %v442
        %v734 = vpack.c.bf16 %v445, %v444
        %s735 = scalar_lea.vmem %s1, 2
        %v736 = vld [vmem:[%s735] sm:$0x3]
        %v738 = vsel %vm491, %v731, 0
        %v741 = vsel %vm491, %v732, 0
        %v744 = vsel %vm491, %v733, 0
        %v747 = vsel %vm491, %v734, 0
        %v750 = vsel %vm504, %v736, 0
        %752 = vmatprep.subr.bf16.mxu0 0
        %753 = vmatpush1.bf16.msra.mxu0 0
        %754 = vmatprep.subr.bf16.mxu0 0
        %755 = vmatpush1.bf16.msra.mxu0 0
        %756 = vmatprep.subr.bf16.mxu0 0
        %757 = vmatpush1.bf16.msra.mxu0 0
        %758 = vmatprep.subr.bf16.mxu0 0
        %759 = vmatpush1.bf16.msra.mxu0 0
        %760 = vmatprep.subr.bf16.mxu0 0
        %761 = vmatpush1.bf16.msra.mxu0 0
        %762 = vmatprep.subr.bf16.mxu0 0
        %763 = vmatpush1.bf16.msra.mxu0 0
        %764 = vmatprep.subr.bf16.mxu0 0
        %765 = vmatpush1.bf16.msra.mxu0 0
        %766 = vmatprep.subr.bf16.mxu0 0
        %767 = vmatpush1.bf16.msra.mxu0 %v750
        %768 = vmatprep.subr.bf16.mxu0 0
        %769 = vmatpush2.bf16.msra.mxu0 0
        %770 = vmatprep.subr.bf16.mxu0 0
        %771 = vmatpush2.bf16.msra.mxu0 0
        %772 = vmatprep.subr.bf16.mxu0 0
        %773 = vmatpush2.bf16.msra.mxu0 0
        %774 = vmatprep.subr.bf16.mxu0 0
        %775 = vmatpush2.bf16.msra.mxu0 0
        %776 = vmatprep.subr.bf16.mxu0 0
        %777 = vmatpush2.bf16.msra.mxu0 0
        %778 = vmatprep.subr.bf16.mxu0 0
        %779 = vmatpush2.bf16.msra.mxu0 0
        %780 = vmatprep.subr.bf16.mxu0 0
        %781 = vmatpush2.bf16.msra.mxu0 0
        %782 = vmatprep.subr.bf16.mxu0 0
        %783 = vmatpush2.bf16.msra.mxu0 0
        %784 = vmatprep.mubr.bf16.mxu0 0
        %785 = vmatmul.mubr.bf16.gmra.mxu0 %v738
        %v786 = vpop.f32.mrf.mxu0
        %v787 = vadd.f32 0.0, %v786
        %v788 = vpop.f32.mrf.mxu0
        %v789 = vpop.f32.mrf.mxu0
        %v790 = vadd.f32 0.0, %v789
        %v791 = vpop.f32.mrf.mxu0
        %792 = vmatprep.mubr.bf16.mxu0 0
        %793 = vmatmul.mubr.bf16.gmra.mxu0 %v741
        %v794 = vpop.f32.mrf.mxu0
        %v795 = vadd.f32 0.0, %v794
        %v796 = vpop.f32.mrf.mxu0
        %v797 = vpop.f32.mrf.mxu0
        %v798 = vadd.f32 0.0, %v797
        %v799 = vpop.f32.mrf.mxu0
        %800 = vmatprep.mubr.bf16.mxu0 0
        %801 = vmatmul.mubr.bf16.gmra.mxu0 %v744
        %v802 = vpop.f32.mrf.mxu0
        %v803 = vadd.f32 0.0, %v802
        %v804 = vpop.f32.mrf.mxu0
        %v805 = vpop.f32.mrf.mxu0
        %v806 = vadd.f32 0.0, %v805
        %v807 = vpop.f32.mrf.mxu0
        %808 = vmatprep.mubr.bf16.mxu0 0
        %809 = vmatmul.mubr.bf16.gmra.mxu0 %v747
        %v810 = vpop.f32.mrf.mxu0
        %v811 = vadd.f32 0.0, %v810
        %v812 = vpop.f32.mrf.mxu0
        %v813 = vpop.f32.mrf.mxu0
        %v814 = vadd.f32 0.0, %v813
        %v815 = vpop.f32.mrf.mxu0
        %816 = vdwg.mxu0
        %v817 = vadd.f32 %v723, %v787
        %v818 = vadd.f32 %v724, %v790
        %v819 = vadd.f32 %v725, %v795
        %v820 = vadd.f32 %v726, %v798
        %v821 = vadd.f32 %v727, %v803
        %v822 = vadd.f32 %v728, %v806
        %v823 = vadd.f32 %v729, %v811
        %v824 = vadd.f32 %v730, %v814
        %v825 = vpack.c.bf16 %v440, %v439
        %v826 = vpack.c.bf16 %v442, %v441
        %v827 = vpack.c.bf16 %v444, %v443
        %v828 = vpack.c.bf16 %v446, %v445
        %s829 = scalar_lea.vmem %s1, 8
        %v830 = vld [vmem:[%s829] sm:$0x3]
        %v832 = vsel %vm491, %v825, 0
        %v835 = vsel %vm491, %v826, 0
        %v838 = vsel %vm491, %v827, 0
        %v841 = vsel %vm491, %v828, 0
        %v844 = vsel %vm504, %v830, 0
        %846 = vmatprep.subr.bf16.mxu0 0
        %847 = vmatpush1.bf16.msra.mxu0 0
        %848 = vmatprep.subr.bf16.mxu0 0
        %849 = vmatpush1.bf16.msra.mxu0 0
        %850 = vmatprep.subr.bf16.mxu0 0
        %851 = vmatpush1.bf16.msra.mxu0 0
        %852 = vmatprep.subr.bf16.mxu0 0
        %853 = vmatpush1.bf16.msra.mxu0 0
        %854 = vmatprep.subr.bf16.mxu0 0
        %855 = vmatpush1.bf16.msra.mxu0 0
        %856 = vmatprep.subr.bf16.mxu0 0
        %857 = vmatpush1.bf16.msra.mxu0 0
        %858 = vmatprep.subr.bf16.mxu0 0
        %859 = vmatpush1.bf16.msra.mxu0 0
        %860 = vmatprep.subr.bf16.mxu0 0
        %861 = vmatpush1.bf16.msra.mxu0 %v844
        %862 = vmatprep.subr.bf16.mxu0 0
        %863 = vmatpush2.bf16.msra.mxu0 0
        %864 = vmatprep.subr.bf16.mxu0 0
        %865 = vmatpush2.bf16.msra.mxu0 0
        %866 = vmatprep.subr.bf16.mxu0 0
        %867 = vmatpush2.bf16.msra.mxu0 0
        %868 = vmatprep.subr.bf16.mxu0 0
        %869 = vmatpush2.bf16.msra.mxu0 0
        %870 = vmatprep.subr.bf16.mxu0 0
        %871 = vmatpush2.bf16.msra.mxu0 0
        %872 = vmatprep.subr.bf16.mxu0 0
        %873 = vmatpush2.bf16.msra.mxu0 0
        %874 = vmatprep.subr.bf16.mxu0 0
        %875 = vmatpush2.bf16.msra.mxu0 0
        %876 = vmatprep.subr.bf16.mxu0 0
        %877 = vmatpush2.bf16.msra.mxu0 0
        %878 = vmatprep.mubr.bf16.mxu0 0
        %879 = vmatmul.mubr.bf16.gmra.mxu0 %v832
        %v880 = vpop.f32.mrf.mxu0
        %v881 = vadd.f32 0.0, %v880
        %v882 = vpop.f32.mrf.mxu0
        %v883 = vpop.f32.mrf.mxu0
        %v884 = vadd.f32 0.0, %v883
        %v885 = vpop.f32.mrf.mxu0
        %886 = vmatprep.mubr.bf16.mxu0 0
        %887 = vmatmul.mubr.bf16.gmra.mxu0 %v835
        %v888 = vpop.f32.mrf.mxu0
        %v889 = vadd.f32 0.0, %v888
        %v890 = vpop.f32.mrf.mxu0
        %v891 = vpop.f32.mrf.mxu0
        %v892 = vadd.f32 0.0, %v891
        %v893 = vpop.f32.mrf.mxu0
        %894 = vmatprep.mubr.bf16.mxu0 0
        %895 = vmatmul.mubr.bf16.gmra.mxu0 %v838
        %v896 = vpop.f32.mrf.mxu0
        %v897 = vadd.f32 0.0, %v896
        %v898 = vpop.f32.mrf.mxu0
        %v899 = vpop.f32.mrf.mxu0
        %v900 = vadd.f32 0.0, %v899
        %v901 = vpop.f32.mrf.mxu0
        %902 = vmatprep.mubr.bf16.mxu0 0
        %903 = vmatmul.mubr.bf16.gmra.mxu0 %v841
        %v904 = vpop.f32.mrf.mxu0
        %v905 = vadd.f32 0.0, %v904
        %v906 = vpop.f32.mrf.mxu0
        %v907 = vpop.f32.mrf.mxu0
        %v908 = vadd.f32 0.0, %v907
        %v909 = vpop.f32.mrf.mxu0
        %910 = vdwg.mxu0
        %v911 = vadd.f32 %v817, %v881
        %v912 = vadd.f32 %v818, %v884
        %v913 = vadd.f32 %v819, %v889
        %v914 = vadd.f32 %v820, %v892
        %v915 = vadd.f32 %v821, %v897
        %v916 = vadd.f32 %v822, %v900
        %v917 = vadd.f32 %v823, %v905
        %v918 = vadd.f32 %v824, %v908
        %s919 = scalar_lea.vmem %s1, 14
        %v920 = vld [vmem:[%s919] sm:$0x3]
        %v922 = vsel %vm504, %v920, 0
        %924 = vmatprep.subr.bf16.mxu0 0
        %925 = vmatpush1.bf16.msra.mxu0 0
        %926 = vmatprep.subr.bf16.mxu0 0
        %927 = vmatpush1.bf16.msra.mxu0 0
        %928 = vmatprep.subr.bf16.mxu0 0
        %929 = vmatpush1.bf16.msra.mxu0 0
        %930 = vmatprep.subr.bf16.mxu0 0
        %931 = vmatpush1.bf16.msra.mxu0 0
        %932 = vmatprep.subr.bf16.mxu0 0
        %933 = vmatpush1.bf16.msra.mxu0 0
        %934 = vmatprep.subr.bf16.mxu0 0
        %935 = vmatpush1.bf16.msra.mxu0 0
        %936 = vmatprep.subr.bf16.mxu0 0
        %937 = vmatpush1.bf16.msra.mxu0 0
        %938 = vmatprep.subr.bf16.mxu0 0
        %939 = vmatpush1.bf16.msra.mxu0 %v922
        %940 = vmatprep.subr.bf16.mxu0 0
        %941 = vmatpush2.bf16.msra.mxu0 0
        %942 = vmatprep.subr.bf16.mxu0 0
        %943 = vmatpush2.bf16.msra.mxu0 0
        %944 = vmatprep.subr.bf16.mxu0 0
        %945 = vmatpush2.bf16.msra.mxu0 0
        %946 = vmatprep.subr.bf16.mxu0 0
        %947 = vmatpush2.bf16.msra.mxu0 0
        %948 = vmatprep.subr.bf16.mxu0 0
        %949 = vmatpush2.bf16.msra.mxu0 0
        %950 = vmatprep.subr.bf16.mxu0 0
        %951 = vmatpush2.bf16.msra.mxu0 0
        %952 = vmatprep.subr.bf16.mxu0 0
        %953 = vmatpush2.bf16.msra.mxu0 0
        %954 = vmatprep.subr.bf16.mxu0 0
        %955 = vmatpush2.bf16.msra.mxu0 0
        %956 = vmatprep.mubr.bf16.mxu0 0
        %957 = vmatmul.mubr.bf16.gmra.mxu0 %v741
        %v958 = vpop.f32.mrf.mxu0
        %v959 = vadd.f32 0.0, %v958
        %v960 = vpop.f32.mrf.mxu0
        %v961 = vpop.f32.mrf.mxu0
        %v962 = vadd.f32 0.0, %v961
        %v963 = vpop.f32.mrf.mxu0
        %964 = vmatprep.mubr.bf16.mxu0 0
        %965 = vmatmul.mubr.bf16.gmra.mxu0 %v744
        %v966 = vpop.f32.mrf.mxu0
        %v967 = vadd.f32 0.0, %v966
        %v968 = vpop.f32.mrf.mxu0
        %v969 = vpop.f32.mrf.mxu0
        %v970 = vadd.f32 0.0, %v969
        %v971 = vpop.f32.mrf.mxu0
        %972 = vmatprep.mubr.bf16.mxu0 0
        %973 = vmatmul.mubr.bf16.gmra.mxu0 %v747
        %v974 = vpop.f32.mrf.mxu0
        %v975 = vadd.f32 0.0, %v974
        %v976 = vpop.f32.mrf.mxu0
        %v977 = vpop.f32.mrf.mxu0
        %v978 = vadd.f32 0.0, %v977
        %v979 = vpop.f32.mrf.mxu0
        %980 = vmatprep.mubr.bf16.mxu0 0
        %981 = vmatmul.mubr.bf16.gmra.mxu0 %v738
        %v982 = vpop.f32.mrf.mxu0
        %v983 = vadd.f32 0.0, %v982
        %v984 = vpop.f32.mrf.mxu0
        %v985 = vpop.f32.mrf.mxu0
        %v986 = vadd.f32 0.0, %v985
        %v987 = vpop.f32.mrf.mxu0
        %988 = vdwg.mxu0
        %v989 = vadd.f32 %v911, %v959
        %v990 = vadd.f32 %v912, %v962
        %v991 = vadd.f32 %v913, %v967
        %v992 = vadd.f32 %v914, %v970
        %v993 = vadd.f32 %v915, %v975
        %v994 = vadd.f32 %v916, %v978
        %v995 = vadd.f32 %v917, %v983
        %v996 = vadd.f32 %v918, %v986
        %v997 = vrot.slane %v439, 1
        %v998 = vrot.slane %v440, 1
        %v999 = vrot.slane %v441, 1
        %v1000 = vrot.slane %v442, 1
        %v1001 = vrot.slane %v443, 1
        %v1002 = vrot.slane %v444, 1
        %v1003 = vrot.slane %v445, 1
        %v1004 = vrot.slane %v446, 1
        %vm1013 = vcmask 1046528
        %v1014 = vsel %vm1013, %v997, %v997
        %v1015 = vsel %vm1013, %v998, %v998
        %v1016 = vsel %vm1013, %v999, %v999
        %v1017 = vsel %vm1013, %v1000, %v1000
        %v1018 = vsel %vm1013, %v1001, %v1001
        %v1019 = vsel %vm1013, %v1002, %v1002
        %v1020 = vsel %vm1013, %v1003, %v1003
        %v1021 = vsel %vm1013, %v1004, %v1004
        %v1022 = vpack.c.bf16 %v1014, %v1021
        %v1023 = vpack.c.bf16 %v1016, %v1015
        %v1024 = vpack.c.bf16 %v1018, %v1017
        %v1025 = vpack.c.bf16 %v1020, %v1019
        %s1026 = scalar_lea.vmem %s1, 4
        %v1027 = vld [vmem:[%s1026] sm:$0x3]
        %v1029 = vsel %vm491, %v1022, 0
        %v1032 = vsel %vm491, %v1023, 0
        %v1035 = vsel %vm491, %v1024, 0
        %v1038 = vsel %vm491, %v1025, 0
        %v1041 = vsel %vm504, %v1027, 0
        %1043 = vmatprep.subr.bf16.mxu0 0
        %1044 = vmatpush1.bf16.msra.mxu0 0
        %1045 = vmatprep.subr.bf16.mxu0 0
        %1046 = vmatpush1.bf16.msra.mxu0 0
        %1047 = vmatprep.subr.bf16.mxu0 0
        %1048 = vmatpush1.bf16.msra.mxu0 0
        %1049 = vmatprep.subr.bf16.mxu0 0
        %1050 = vmatpush1.bf16.msra.mxu0 0
        %1051 = vmatprep.subr.bf16.mxu0 0
        %1052 = vmatpush1.bf16.msra.mxu0 0
        %1053 = vmatprep.subr.bf16.mxu0 0
        %1054 = vmatpush1.bf16.msra.mxu0 0
        %1055 = vmatprep.subr.bf16.mxu0 0
        %1056 = vmatpush1.bf16.msra.mxu0 0
        %1057 = vmatprep.subr.bf16.mxu0 0
        %1058 = vmatpush1.bf16.msra.mxu0 %v1041
        %1059 = vmatprep.subr.bf16.mxu0 0
        %1060 = vmatpush2.bf16.msra.mxu0 0
        %1061 = vmatprep.subr.bf16.mxu0 0
        %1062 = vmatpush2.bf16.msra.mxu0 0
        %1063 = vmatprep.subr.bf16.mxu0 0
        %1064 = vmatpush2.bf16.msra.mxu0 0
        %1065 = vmatprep.subr.bf16.mxu0 0
        %1066 = vmatpush2.bf16.msra.mxu0 0
        %1067 = vmatprep.subr.bf16.mxu0 0
        %1068 = vmatpush2.bf16.msra.mxu0 0
        %1069 = vmatprep.subr.bf16.mxu0 0
        %1070 = vmatpush2.bf16.msra.mxu0 0
        %1071 = vmatprep.subr.bf16.mxu0 0
        %1072 = vmatpush2.bf16.msra.mxu0 0
        %1073 = vmatprep.subr.bf16.mxu0 0
        %1074 = vmatpush2.bf16.msra.mxu0 0
        %1075 = vmatprep.mubr.bf16.mxu0 0
        %1076 = vmatmul.mubr.bf16.gmra.mxu0 %v1029
        %v1077 = vpop.f32.mrf.mxu0
        %v1078 = vadd.f32 0.0, %v1077
        %v1079 = vpop.f32.mrf.mxu0
        %v1080 = vpop.f32.mrf.mxu0
        %v1081 = vadd.f32 0.0, %v1080
        %v1082 = vpop.f32.mrf.mxu0
        %1083 = vmatprep.mubr.bf16.mxu0 0
        %1084 = vmatmul.mubr.bf16.gmra.mxu0 %v1032
        %v1085 = vpop.f32.mrf.mxu0
        %v1086 = vadd.f32 0.0, %v1085
        %v1087 = vpop.f32.mrf.mxu0
        %v1088 = vpop.f32.mrf.mxu0
        %v1089 = vadd.f32 0.0, %v1088
        %v1090 = vpop.f32.mrf.mxu0
        %1091 = vmatprep.mubr.bf16.mxu0 0
        %1092 = vmatmul.mubr.bf16.gmra.mxu0 %v1035
        %v1093 = vpop.f32.mrf.mxu0
        %v1094 = vadd.f32 0.0, %v1093
        %v1095 = vpop.f32.mrf.mxu0
        %v1096 = vpop.f32.mrf.mxu0
        %v1097 = vadd.f32 0.0, %v1096
        %v1098 = vpop.f32.mrf.mxu0
        %1099 = vmatprep.mubr.bf16.mxu0 0
        %1100 = vmatmul.mubr.bf16.gmra.mxu0 %v1038
        %v1101 = vpop.f32.mrf.mxu0
        %v1102 = vadd.f32 0.0, %v1101
        %v1103 = vpop.f32.mrf.mxu0
        %v1104 = vpop.f32.mrf.mxu0
        %v1105 = vadd.f32 0.0, %v1104
        %v1106 = vpop.f32.mrf.mxu0
        %1107 = vdwg.mxu0
        %v1108 = vadd.f32 %v989, %v1078
        %v1109 = vadd.f32 %v990, %v1081
        %v1110 = vadd.f32 %v991, %v1086
        %v1111 = vadd.f32 %v992, %v1089
        %v1112 = vadd.f32 %v993, %v1094
        %v1113 = vadd.f32 %v994, %v1097
        %v1114 = vadd.f32 %v995, %v1102
        %v1115 = vadd.f32 %v996, %v1105
        %v1116 = vpack.c.bf16 %v1015, %v1014
        %v1117 = vpack.c.bf16 %v1017, %v1016
        %v1118 = vpack.c.bf16 %v1019, %v1018
        %v1119 = vpack.c.bf16 %v1021, %v1020
        %s1120 = scalar_lea.vmem %s1, 10
        %v1121 = vld [vmem:[%s1120] sm:$0x3]
        %v1123 = vsel %vm491, %v1116, 0
        %v1126 = vsel %vm491, %v1117, 0
        %v1129 = vsel %vm491, %v1118, 0
        %v1132 = vsel %vm491, %v1119, 0
        %v1135 = vsel %vm504, %v1121, 0
        %1137 = vmatprep.subr.bf16.mxu0 0
        %1138 = vmatpush1.bf16.msra.mxu0 0
        %1139 = vmatprep.subr.bf16.mxu0 0
        %1140 = vmatpush1.bf16.msra.mxu0 0
        %1141 = vmatprep.subr.bf16.mxu0 0
        %1142 = vmatpush1.bf16.msra.mxu0 0
        %1143 = vmatprep.subr.bf16.mxu0 0
        %1144 = vmatpush1.bf16.msra.mxu0 0
        %1145 = vmatprep.subr.bf16.mxu0 0
        %1146 = vmatpush1.bf16.msra.mxu0 0
        %1147 = vmatprep.subr.bf16.mxu0 0
        %1148 = vmatpush1.bf16.msra.mxu0 0
        %1149 = vmatprep.subr.bf16.mxu0 0
        %1150 = vmatpush1.bf16.msra.mxu0 0
        %1151 = vmatprep.subr.bf16.mxu0 0
        %1152 = vmatpush1.bf16.msra.mxu0 %v1135
        %1153 = vmatprep.subr.bf16.mxu0 0
        %1154 = vmatpush2.bf16.msra.mxu0 0
        %1155 = vmatprep.subr.bf16.mxu0 0
        %1156 = vmatpush2.bf16.msra.mxu0 0
        %1157 = vmatprep.subr.bf16.mxu0 0
        %1158 = vmatpush2.bf16.msra.mxu0 0
        %1159 = vmatprep.subr.bf16.mxu0 0
        %1160 = vmatpush2.bf16.msra.mxu0 0
        %1161 = vmatprep.subr.bf16.mxu0 0
        %1162 = vmatpush2.bf16.msra.mxu0 0
        %1163 = vmatprep.subr.bf16.mxu0 0
        %1164 = vmatpush2.bf16.msra.mxu0 0
        %1165 = vmatprep.subr.bf16.mxu0 0
        %1166 = vmatpush2.bf16.msra.mxu0 0
        %1167 = vmatprep.subr.bf16.mxu0 0
        %1168 = vmatpush2.bf16.msra.mxu0 0
        %1169 = vmatprep.mubr.bf16.mxu0 0
        %1170 = vmatmul.mubr.bf16.gmra.mxu0 %v1123
        %v1171 = vpop.f32.mrf.mxu0
        %v1172 = vadd.f32 0.0, %v1171
        %v1173 = vpop.f32.mrf.mxu0
        %v1174 = vpop.f32.mrf.mxu0
        %v1175 = vadd.f32 0.0, %v1174
        %v1176 = vpop.f32.mrf.mxu0
        %1177 = vmatprep.mubr.bf16.mxu0 0
        %1178 = vmatmul.mubr.bf16.gmra.mxu0 %v1126
        %v1179 = vpop.f32.mrf.mxu0
        %v1180 = vadd.f32 0.0, %v1179
        %v1181 = vpop.f32.mrf.mxu0
        %v1182 = vpop.f32.mrf.mxu0
        %v1183 = vadd.f32 0.0, %v1182
        %v1184 = vpop.f32.mrf.mxu0
        %1185 = vmatprep.mubr.bf16.mxu0 0
        %1186 = vmatmul.mubr.bf16.gmra.mxu0 %v1129
        %v1187 = vpop.f32.mrf.mxu0
        %v1188 = vadd.f32 0.0, %v1187
        %v1189 = vpop.f32.mrf.mxu0
        %v1190 = vpop.f32.mrf.mxu0
        %v1191 = vadd.f32 0.0, %v1190
        %v1192 = vpop.f32.mrf.mxu0
        %1193 = vmatprep.mubr.bf16.mxu0 0
        %1194 = vmatmul.mubr.bf16.gmra.mxu0 %v1132
        %v1195 = vpop.f32.mrf.mxu0
        %v1196 = vadd.f32 0.0, %v1195
        %v1197 = vpop.f32.mrf.mxu0
        %v1198 = vpop.f32.mrf.mxu0
        %v1199 = vadd.f32 0.0, %v1198
        %v1200 = vpop.f32.mrf.mxu0
        %1201 = vdwg.mxu0
        %v1202 = vadd.f32 %v1108, %v1172
        %v1203 = vadd.f32 %v1109, %v1175
        %v1204 = vadd.f32 %v1110, %v1180
        %v1205 = vadd.f32 %v1111, %v1183
        %v1206 = vadd.f32 %v1112, %v1188
        %v1207 = vadd.f32 %v1113, %v1191
        %v1208 = vadd.f32 %v1114, %v1196
        %v1209 = vadd.f32 %v1115, %v1199
        %s1210 = scalar_lea.vmem %s1, 16
        %v1211 = vld [vmem:[%s1210] sm:$0x3]
        %v1213 = vsel %vm504, %v1211, 0
        %1215 = vmatprep.subr.bf16.mxu0 0
        %1216 = vmatpush1.bf16.msra.mxu0 0
        %1217 = vmatprep.subr.bf16.mxu0 0
        %1218 = vmatpush1.bf16.msra.mxu0 0
        %1219 = vmatprep.subr.bf16.mxu0 0
        %1220 = vmatpush1.bf16.msra.mxu0 0
        %1221 = vmatprep.subr.bf16.mxu0 0
        %1222 = vmatpush1.bf16.msra.mxu0 0
        %1223 = vmatprep.subr.bf16.mxu0 0
        %1224 = vmatpush1.bf16.msra.mxu0 0
        %1225 = vmatprep.subr.bf16.mxu0 0
        %1226 = vmatpush1.bf16.msra.mxu0 0
        %1227 = vmatprep.subr.bf16.mxu0 0
        %1228 = vmatpush1.bf16.msra.mxu0 0
        %1229 = vmatprep.subr.bf16.mxu0 0
        %1230 = vmatpush1.bf16.msra.mxu0 %v1213
        %1231 = vmatprep.subr.bf16.mxu0 0
        %1232 = vmatpush2.bf16.msra.mxu0 0
        %1233 = vmatprep.subr.bf16.mxu0 0
        %1234 = vmatpush2.bf16.msra.mxu0 0
        %1235 = vmatprep.subr.bf16.mxu0 0
        %1236 = vmatpush2.bf16.msra.mxu0 0
        %1237 = vmatprep.subr.bf16.mxu0 0
        %1238 = vmatpush2.bf16.msra.mxu0 0
        %1239 = vmatprep.subr.bf16.mxu0 0
        %1240 = vmatpush2.bf16.msra.mxu0 0
        %1241 = vmatprep.subr.bf16.mxu0 0
        %1242 = vmatpush2.bf16.msra.mxu0 0
        %1243 = vmatprep.subr.bf16.mxu0 0
        %1244 = vmatpush2.bf16.msra.mxu0 0
        %1245 = vmatprep.subr.bf16.mxu0 0
        %1246 = vmatpush2.bf16.msra.mxu0 0
        %1247 = vmatprep.mubr.bf16.mxu0 0
        %1248 = vmatmul.mubr.bf16.gmra.mxu0 %v1032
        %v1249 = vpop.f32.mrf.mxu0
        %v1250 = vadd.f32 0.0, %v1249
        %v1251 = vpop.f32.mrf.mxu0
        %v1252 = vpop.f32.mrf.mxu0
        %v1253 = vadd.f32 0.0, %v1252
        %v1254 = vpop.f32.mrf.mxu0
        %1255 = vmatprep.mubr.bf16.mxu0 0
        %1256 = vmatmul.mubr.bf16.gmra.mxu0 %v1035
        %v1257 = vpop.f32.mrf.mxu0
        %v1258 = vadd.f32 0.0, %v1257
        %v1259 = vpop.f32.mrf.mxu0
        %v1260 = vpop.f32.mrf.mxu0
        %v1261 = vadd.f32 0.0, %v1260
        %v1262 = vpop.f32.mrf.mxu0
        %1263 = vmatprep.mubr.bf16.mxu0 0
        %1264 = vmatmul.mubr.bf16.gmra.mxu0 %v1038
        %v1265 = vpop.f32.mrf.mxu0
        %v1266 = vadd.f32 0.0, %v1265
        %v1267 = vpop.f32.mrf.mxu0
        %v1268 = vpop.f32.mrf.mxu0
        %v1269 = vadd.f32 0.0, %v1268
        %v1270 = vpop.f32.mrf.mxu0
        %1271 = vmatprep.mubr.bf16.mxu0 0
        %1272 = vmatmul.mubr.bf16.gmra.mxu0 %v1029
        %v1273 = vpop.f32.mrf.mxu0
        %v1274 = vadd.f32 0.0, %v1273
        %v1275 = vpop.f32.mrf.mxu0
        %v1276 = vpop.f32.mrf.mxu0
        %v1277 = vadd.f32 0.0, %v1276
        %v1278 = vpop.f32.mrf.mxu0
        %1279 = vdwg.mxu0
        %v1280 = vadd.f32 %v1202, %v1250
        %v1281 = vadd.f32 %v1203, %v1253
        %v1282 = vadd.f32 %v1204, %v1258
        %v1283 = vadd.f32 %v1205, %v1261
        %v1284 = vadd.f32 %v1206, %v1266
        %v1285 = vadd.f32 %v1207, %v1269
        %v1286 = vadd.f32 %v1208, %v1274
        %v1287 = vadd.f32 %v1209, %v1277
        %v1288 = vld [vmem:[%s2] sm:$0x7]
        %v1289 = vlaneseq
        %v1290 = vshrl.u32 %v1289, 7
        %v1291 = vsub.s32 0, %v1290
        %v1292 = vrot.slane %v1288, %v1291
        %v1293 = vadd.f32 %v1280, %v1292
        %v1294 = vadd.f32 %v1281, %v1292
        %v1295 = vadd.f32 %v1282, %v1292
        %v1296 = vadd.f32 %v1283, %v1292
        %v1297 = vadd.f32 %v1284, %v1292
        %v1298 = vadd.f32 %v1285, %v1292
        %v1299 = vadd.f32 %v1286, %v1292
        %v1300 = vadd.f32 %v1287, %v1292
        %v1301 = vmax.f32 %v1293, 0.0
        %v1302 = vmax.f32 %v1294, 0.0
        %v1303 = vmax.f32 %v1295, 0.0
        %v1304 = vmax.f32 %v1296, 0.0
        %v1305 = vmax.f32 %v1297, 0.0
        %v1306 = vmax.f32 %v1298, 0.0
        %v1307 = vmax.f32 %v1299, 0.0
        %v1308 = vmax.f32 %v1300, 0.0
        %v1309 = vlaneseq
        %v1310 = vshrl.u32 %v1309, 7
        %v1311 = vsub.s32 1, %v1310
        %v1312 = vrot.slane %v1288, %v1311
        %v1313 = vmul.f32 %v1301, %v1312
        %v1314 = vmul.f32 %v1302, %v1312
        %v1315 = vmul.f32 %v1303, %v1312
        %v1316 = vmul.f32 %v1304, %v1312
        %v1317 = vmul.f32 %v1305, %v1312
        %v1318 = vmul.f32 %v1306, %v1312
        %v1319 = vmul.f32 %v1307, %v1312
        %v1320 = vmul.f32 %v1308, %v1312
        %v1321 = vlaneseq
        %v1322 = vshrl.u32 %v1321, 7
        %v1323 = vsub.s32 2, %v1322
        %v1324 = vrot.slane %v1288, %v1323
        %v1325 = vadd.f32 %v1313, %v1324
        %v1326 = vadd.f32 %v1314, %v1324
        %v1327 = vadd.f32 %v1315, %v1324
        %v1328 = vadd.f32 %v1316, %v1324
        %v1329 = vadd.f32 %v1317, %v1324
        %v1330 = vadd.f32 %v1318, %v1324
        %v1331 = vadd.f32 %v1319, %v1324
        %v1332 = vadd.f32 %v1320, %v1324
        %v1341 = vrot.slane %v1325, 7
        %v1342 = vrot.slane %v1326, 7
        %v1343 = vrot.slane %v1327, 7
        %v1344 = vrot.slane %v1328, 7
        %v1345 = vrot.slane %v1329, 7
        %v1346 = vrot.slane %v1330, 7
        %v1347 = vrot.slane %v1331, 7
        %v1348 = vrot.slane %v1332, 7
        %v1357 = vsel %vm471, %v1341, %v1341
        %v1358 = vsel %vm471, %v1342, %v1342
        %v1359 = vsel %vm471, %v1343, %v1343
        %v1360 = vsel %vm471, %v1344, %v1344
        %v1361 = vsel %vm471, %v1345, %v1345
        %v1362 = vsel %vm471, %v1346, %v1346
        %v1363 = vsel %vm471, %v1347, %v1347
        %v1364 = vsel %vm471, %v1348, %v1348
        %v1365 = vpack.c.bf16 %v1357, %v1364
        %v1366 = vpack.c.bf16 %v1359, %v1358
        %v1367 = vpack.c.bf16 %v1361, %v1360
        %v1368 = vpack.c.bf16 %v1363, %v1362
        %v1369 = vld [vmem:[%s3] sm:$0xf]
        %v1370 = vld [vmem:[%s3 + $0x4] sm:$0xf]
        %v1371 = vld [vmem:[%s3 + $0x8] sm:$0xf]
        %v1372 = vld [vmem:[%s3 + $0xc] sm:$0xf]
        %v1373 = vpack.c.bf16 %v1358, %v1357
        %v1374 = vpack.c.bf16 %v1360, %v1359
        %v1375 = vpack.c.bf16 %v1362, %v1361
        %v1376 = vpack.c.bf16 %v1364, %v1363
        %s1377 = scalar_lea.vmem %s3, 48
        %v1378 = vld [vmem:[%s1377] sm:$0xf]
        %v1379 = vld [vmem:[%s1377 + $0x4] sm:$0xf]
        %v1380 = vld [vmem:[%s1377 + $0x8] sm:$0xf]
        %v1381 = vld [vmem:[%s1377 + $0xc] sm:$0xf]
        %v1386 = vunpack.c.l.b16 %v1378
        %v1387 = vunpack.c.l.b16 %v1379
        %v1388 = vunpack.c.l.b16 %v1380
        %v1389 = vunpack.c.l.b16 %v1381
        %v1390 = vpack.c.b16 %v1387, %v1386
        %v1391 = vpack.c.b16 %v1389, %v1388
        %vm1394 = vcmask 261120
        %v1396 = vsel %vm1394, %v1373, 0
        %v1399 = vsel %vm1394, %v1374, 0
        %v1402 = vsel %vm1394, %v1375, 0
        %v1405 = vsel %vm1394, %v1376, 0
        %1407 = vmatprep.subr.bf16.mxu0 0
        %1408 = vmatpush1.bf16.msra.mxu0 0
        %1409 = vmatprep.subr.bf16.mxu0 0
        %1410 = vmatpush1.bf16.msra.mxu0 0
        %1411 = vmatprep.subr.bf16.mxu0 0
        %1412 = vmatpush1.bf16.msra.mxu0 0
        %1413 = vmatprep.subr.bf16.mxu0 0
        %1414 = vmatpush1.bf16.msra.mxu0 0
        %1415 = vmatprep.subr.bf16.mxu0 0
        %1416 = vmatpush1.bf16.msra.mxu0 0
        %1417 = vmatprep.subr.bf16.mxu0 0
        %1418 = vmatpush1.bf16.msra.mxu0 0
        %1419 = vmatprep.subr.bf16.mxu0 0
        %1420 = vmatpush1.bf16.msra.mxu0 %v1391
        %1421 = vmatprep.subr.bf16.mxu0 0
        %1422 = vmatpush1.bf16.msra.mxu0 %v1390
        %1423 = vmatprep.subr.bf16.mxu0 0
        %1424 = vmatpush2.bf16.msra.mxu0 0
        %1425 = vmatprep.subr.bf16.mxu0 0
        %1426 = vmatpush2.bf16.msra.mxu0 0
        %1427 = vmatprep.subr.bf16.mxu0 0
        %1428 = vmatpush2.bf16.msra.mxu0 0
        %1429 = vmatprep.subr.bf16.mxu0 0
        %1430 = vmatpush2.bf16.msra.mxu0 0
        %1431 = vmatprep.subr.bf16.mxu0 0
        %1432 = vmatpush2.bf16.msra.mxu0 0
        %1433 = vmatprep.subr.bf16.mxu0 0
        %1434 = vmatpush2.bf16.msra.mxu0 0
        %1435 = vmatprep.subr.bf16.mxu0 0
        %1436 = vmatpush2.bf16.msra.mxu0 0
        %1437 = vmatprep.subr.bf16.mxu0 0
        %1438 = vmatpush2.bf16.msra.mxu0 0
        %1439 = vmatprep.mubr.bf16.mxu0 0
        %1440 = vmatmul.mubr.bf16.gmra.mxu0 %v1396
        %v1441 = vpop.f32.mrf.mxu0
        %v1442 = vadd.f32 0.0, %v1441
        %v1443 = vpop.f32.mrf.mxu0
        %v1444 = vpop.f32.mrf.mxu0
        %v1445 = vadd.f32 0.0, %v1444
        %v1446 = vpop.f32.mrf.mxu0
        %1447 = vmatprep.mubr.bf16.mxu0 0
        %1448 = vmatmul.mubr.bf16.gmra.mxu0 %v1399
        %v1449 = vpop.f32.mrf.mxu0
        %v1450 = vadd.f32 0.0, %v1449
        %v1451 = vpop.f32.mrf.mxu0
        %v1452 = vpop.f32.mrf.mxu0
        %v1453 = vadd.f32 0.0, %v1452
        %v1454 = vpop.f32.mrf.mxu0
        %1455 = vmatprep.mubr.bf16.mxu0 0
        %1456 = vmatmul.mubr.bf16.gmra.mxu0 %v1402
        %v1457 = vpop.f32.mrf.mxu0
        %v1458 = vadd.f32 0.0, %v1457
        %v1459 = vpop.f32.mrf.mxu0
        %v1460 = vpop.f32.mrf.mxu0
        %v1461 = vadd.f32 0.0, %v1460
        %v1462 = vpop.f32.mrf.mxu0
        %1463 = vmatprep.mubr.bf16.mxu0 0
        %1464 = vmatmul.mubr.bf16.gmra.mxu0 %v1405
        %v1465 = vpop.f32.mrf.mxu0
        %v1466 = vadd.f32 0.0, %v1465
        %v1467 = vpop.f32.mrf.mxu0
        %v1468 = vpop.f32.mrf.mxu0
        %v1469 = vadd.f32 0.0, %v1468
        %v1470 = vpop.f32.mrf.mxu0
        %1471 = vdwg.mxu0
        %v1476 = vunpack.c.l.b16 %v1369
        %v1477 = vunpack.c.l.b16 %v1370
        %v1478 = vunpack.c.l.b16 %v1371
        %v1479 = vunpack.c.l.b16 %v1372
        %v1480 = vpack.c.b16 %v1477, %v1476
        %v1481 = vpack.c.b16 %v1479, %v1478
        %v1485 = vsel %vm1394, %v1365, 0
        %v1488 = vsel %vm1394, %v1366, 0
        %v1491 = vsel %vm1394, %v1367, 0
        %v1494 = vsel %vm1394, %v1368, 0
        %1496 = vmatprep.subr.bf16.mxu0 0
        %1497 = vmatpush1.bf16.msra.mxu0 0
        %1498 = vmatprep.subr.bf16.mxu0 0
        %1499 = vmatpush1.bf16.msra.mxu0 0
        %1500 = vmatprep.subr.bf16.mxu0 0
        %1501 = vmatpush1.bf16.msra.mxu0 0
        %1502 = vmatprep.subr.bf16.mxu0 0
        %1503 = vmatpush1.bf16.msra.mxu0 0
        %1504 = vmatprep.subr.bf16.mxu0 0
        %1505 = vmatpush1.bf16.msra.mxu0 0
        %1506 = vmatprep.subr.bf16.mxu0 0
        %1507 = vmatpush1.bf16.msra.mxu0 0
        %1508 = vmatprep.subr.bf16.mxu0 0
        %1509 = vmatpush1.bf16.msra.mxu0 %v1481
        %1510 = vmatprep.subr.bf16.mxu0 0
        %1511 = vmatpush1.bf16.msra.mxu0 %v1480
        %1512 = vmatprep.subr.bf16.mxu0 0
        %1513 = vmatpush2.bf16.msra.mxu0 0
        %1514 = vmatprep.subr.bf16.mxu0 0
        %1515 = vmatpush2.bf16.msra.mxu0 0
        %1516 = vmatprep.subr.bf16.mxu0 0
        %1517 = vmatpush2.bf16.msra.mxu0 0
        %1518 = vmatprep.subr.bf16.mxu0 0
        %1519 = vmatpush2.bf16.msra.mxu0 0
        %1520 = vmatprep.subr.bf16.mxu0 0
        %1521 = vmatpush2.bf16.msra.mxu0 0
        %1522 = vmatprep.subr.bf16.mxu0 0
        %1523 = vmatpush2.bf16.msra.mxu0 0
        %1524 = vmatprep.subr.bf16.mxu0 0
        %1525 = vmatpush2.bf16.msra.mxu0 0
        %1526 = vmatprep.subr.bf16.mxu0 0
        %1527 = vmatpush2.bf16.msra.mxu0 0
        %1528 = vmatprep.mubr.bf16.mxu0 0
        %1529 = vmatmul.mubr.bf16.gmra.mxu0 %v1485
        %v1530 = vpop.f32.mrf.mxu0
        %v1531 = vadd.f32 %v1442, %v1530
        %v1532 = vpop.f32.mrf.mxu0
        %v1533 = vpop.f32.mrf.mxu0
        %v1534 = vadd.f32 %v1445, %v1533
        %v1535 = vpop.f32.mrf.mxu0
        %1536 = vmatprep.mubr.bf16.mxu0 0
        %1537 = vmatmul.mubr.bf16.gmra.mxu0 %v1488
        %v1538 = vpop.f32.mrf.mxu0
        %v1539 = vadd.f32 %v1450, %v1538
        %v1540 = vpop.f32.mrf.mxu0
        %v1541 = vpop.f32.mrf.mxu0
        %v1542 = vadd.f32 %v1453, %v1541
        %v1543 = vpop.f32.mrf.mxu0
        %1544 = vmatprep.mubr.bf16.mxu0 0
        %1545 = vmatmul.mubr.bf16.gmra.mxu0 %v1491
        %v1546 = vpop.f32.mrf.mxu0
        %v1547 = vadd.f32 %v1458, %v1546
        %v1548 = vpop.f32.mrf.mxu0
        %v1549 = vpop.f32.mrf.mxu0
        %v1550 = vadd.f32 %v1461, %v1549
        %v1551 = vpop.f32.mrf.mxu0
        %1552 = vmatprep.mubr.bf16.mxu0 0
        %1553 = vmatmul.mubr.bf16.gmra.mxu0 %v1494
        %v1554 = vpop.f32.mrf.mxu0
        %v1555 = vadd.f32 %v1466, %v1554
        %v1556 = vpop.f32.mrf.mxu0
        %v1557 = vpop.f32.mrf.mxu0
        %v1558 = vadd.f32 %v1469, %v1557
        %v1559 = vpop.f32.mrf.mxu0
        %1560 = vdwg.mxu0
        %s1561 = scalar_lea.vmem %s3, 96
        %v1562 = vld [vmem:[%s1561] sm:$0xf]
        %v1563 = vld [vmem:[%s1561 + $0x4] sm:$0xf]
        %v1564 = vld [vmem:[%s1561 + $0x8] sm:$0xf]
        %v1565 = vld [vmem:[%s1561 + $0xc] sm:$0xf]
        %v1570 = vunpack.c.l.b16 %v1562
        %v1571 = vunpack.c.l.b16 %v1563
        %v1572 = vunpack.c.l.b16 %v1564
        %v1573 = vunpack.c.l.b16 %v1565
        %v1574 = vpack.c.b16 %v1571, %v1570
        %v1575 = vpack.c.b16 %v1573, %v1572
        %1578 = vmatprep.subr.bf16.mxu0 0
        %1579 = vmatpush1.bf16.msra.mxu0 0
        %1580 = vmatprep.subr.bf16.mxu0 0
        %1581 = vmatpush1.bf16.msra.mxu0 0
        %1582 = vmatprep.subr.bf16.mxu0 0
        %1583 = vmatpush1.bf16.msra.mxu0 0
        %1584 = vmatprep.subr.bf16.mxu0 0
        %1585 = vmatpush1.bf16.msra.mxu0 0
        %1586 = vmatprep.subr.bf16.mxu0 0
        %1587 = vmatpush1.bf16.msra.mxu0 0
        %1588 = vmatprep.subr.bf16.mxu0 0
        %1589 = vmatpush1.bf16.msra.mxu0 0
        %1590 = vmatprep.subr.bf16.mxu0 0
        %1591 = vmatpush1.bf16.msra.mxu0 %v1575
        %1592 = vmatprep.subr.bf16.mxu0 0
        %1593 = vmatpush1.bf16.msra.mxu0 %v1574
        %1594 = vmatprep.subr.bf16.mxu0 0
        %1595 = vmatpush2.bf16.msra.mxu0 0
        %1596 = vmatprep.subr.bf16.mxu0 0
        %1597 = vmatpush2.bf16.msra.mxu0 0
        %1598 = vmatprep.subr.bf16.mxu0 0
        %1599 = vmatpush2.bf16.msra.mxu0 0
        %1600 = vmatprep.subr.bf16.mxu0 0
        %1601 = vmatpush2.bf16.msra.mxu0 0
        %1602 = vmatprep.subr.bf16.mxu0 0
        %1603 = vmatpush2.bf16.msra.mxu0 0
        %1604 = vmatprep.subr.bf16.mxu0 0
        %1605 = vmatpush2.bf16.msra.mxu0 0
        %1606 = vmatprep.subr.bf16.mxu0 0
        %1607 = vmatpush2.bf16.msra.mxu0 0
        %1608 = vmatprep.subr.bf16.mxu0 0
        %1609 = vmatpush2.bf16.msra.mxu0 0
        %1610 = vmatprep.mubr.bf16.mxu0 0
        %1611 = vmatmul.mubr.bf16.gmra.mxu0 %v1488
        %v1612 = vpop.f32.mrf.mxu0
        %v1613 = vadd.f32 0.0, %v1612
        %v1614 = vpop.f32.mrf.mxu0
        %v1615 = vpop.f32.mrf.mxu0
        %v1616 = vadd.f32 0.0, %v1615
        %v1617 = vpop.f32.mrf.mxu0
        %1618 = vmatprep.mubr.bf16.mxu0 0
        %1619 = vmatmul.mubr.bf16.gmra.mxu0 %v1491
        %v1620 = vpop.f32.mrf.mxu0
        %v1621 = vadd.f32 0.0, %v1620
        %v1622 = vpop.f32.mrf.mxu0
        %v1623 = vpop.f32.mrf.mxu0
        %v1624 = vadd.f32 0.0, %v1623
        %v1625 = vpop.f32.mrf.mxu0
        %1626 = vmatprep.mubr.bf16.mxu0 0
        %1627 = vmatmul.mubr.bf16.gmra.mxu0 %v1494
        %v1628 = vpop.f32.mrf.mxu0
        %v1629 = vadd.f32 0.0, %v1628
        %v1630 = vpop.f32.mrf.mxu0
        %v1631 = vpop.f32.mrf.mxu0
        %v1632 = vadd.f32 0.0, %v1631
        %v1633 = vpop.f32.mrf.mxu0
        %1634 = vmatprep.mubr.bf16.mxu0 0
        %1635 = vmatmul.mubr.bf16.gmra.mxu0 %v1485
        %v1636 = vpop.f32.mrf.mxu0
        %v1637 = vadd.f32 0.0, %v1636
        %v1638 = vpop.f32.mrf.mxu0
        %v1639 = vpop.f32.mrf.mxu0
        %v1640 = vadd.f32 0.0, %v1639
        %v1641 = vpop.f32.mrf.mxu0
        %1642 = vdwg.mxu0
        %v1643 = vadd.f32 %v1531, %v1613
        %v1644 = vadd.f32 %v1534, %v1616
        %v1645 = vadd.f32 %v1539, %v1621
        %v1646 = vadd.f32 %v1542, %v1624
        %v1647 = vadd.f32 %v1547, %v1629
        %v1648 = vadd.f32 %v1550, %v1632
        %v1649 = vadd.f32 %v1555, %v1637
        %v1650 = vadd.f32 %v1558, %v1640
        %v1651 = vpack.c.bf16 %v1325, %v1332
        %v1652 = vpack.c.bf16 %v1327, %v1326
        %v1653 = vpack.c.bf16 %v1329, %v1328
        %v1654 = vpack.c.bf16 %v1331, %v1330
        %s1655 = scalar_lea.vmem %s3, 16
        %v1656 = vld [vmem:[%s1655] sm:$0xf]
        %v1657 = vld [vmem:[%s1655 + $0x4] sm:$0xf]
        %v1658 = vld [vmem:[%s1655 + $0x8] sm:$0xf]
        %v1659 = vld [vmem:[%s1655 + $0xc] sm:$0xf]
        %v1664 = vunpack.c.l.b16 %v1656
        %v1665 = vunpack.c.l.b16 %v1657
        %v1666 = vunpack.c.l.b16 %v1658
        %v1667 = vunpack.c.l.b16 %v1659
        %v1668 = vpack.c.b16 %v1665, %v1664
        %v1669 = vpack.c.b16 %v1667, %v1666
        %v1673 = vsel %vm1394, %v1651, 0
        %v1676 = vsel %vm1394, %v1652, 0
        %v1679 = vsel %vm1394, %v1653, 0
        %v1682 = vsel %vm1394, %v1654, 0
        %1684 = vmatprep.subr.bf16.mxu0 0
        %1685 = vmatpush1.bf16.msra.mxu0 0
        %1686 = vmatprep.subr.bf16.mxu0 0
        %1687 = vmatpush1.bf16.msra.mxu0 0
        %1688 = vmatprep.subr.bf16.mxu0 0
        %1689 = vmatpush1.bf16.msra.mxu0 0
        %1690 = vmatprep.subr.bf16.mxu0 0
        %1691 = vmatpush1.bf16.msra.mxu0 0
        %1692 = vmatprep.subr.bf16.mxu0 0
        %1693 = vmatpush1.bf16.msra.mxu0 0
        %1694 = vmatprep.subr.bf16.mxu0 0
        %1695 = vmatpush1.bf16.msra.mxu0 0
        %1696 = vmatprep.subr.bf16.mxu0 0
        %1697 = vmatpush1.bf16.msra.mxu0 %v1669
        %1698 = vmatprep.subr.bf16.mxu0 0
        %1699 = vmatpush1.bf16.msra.mxu0 %v1668
        %1700 = vmatprep.subr.bf16.mxu0 0
        %1701 = vmatpush2.bf16.msra.mxu0 0
        %1702 = vmatprep.subr.bf16.mxu0 0
        %1703 = vmatpush2.bf16.msra.mxu0 0
        %1704 = vmatprep.subr.bf16.mxu0 0
        %1705 = vmatpush2.bf16.msra.mxu0 0
        %1706 = vmatprep.subr.bf16.mxu0 0
        %1707 = vmatpush2.bf16.msra.mxu0 0
        %1708 = vmatprep.subr.bf16.mxu0 0
        %1709 = vmatpush2.bf16.msra.mxu0 0
        %1710 = vmatprep.subr.bf16.mxu0 0
        %1711 = vmatpush2.bf16.msra.mxu0 0
        %1712 = vmatprep.subr.bf16.mxu0 0
        %1713 = vmatpush2.bf16.msra.mxu0 0
        %1714 = vmatprep.subr.bf16.mxu0 0
        %1715 = vmatpush2.bf16.msra.mxu0 0
        %1716 = vmatprep.mubr.bf16.mxu0 0
        %1717 = vmatmul.mubr.bf16.gmra.mxu0 %v1673
        %v1718 = vpop.f32.mrf.mxu0
        %v1719 = vadd.f32 0.0, %v1718
        %v1720 = vpop.f32.mrf.mxu0
        %v1721 = vpop.f32.mrf.mxu0
        %v1722 = vadd.f32 0.0, %v1721
        %v1723 = vpop.f32.mrf.mxu0
        %1724 = vmatprep.mubr.bf16.mxu0 0
        %1725 = vmatmul.mubr.bf16.gmra.mxu0 %v1676
        %v1726 = vpop.f32.mrf.mxu0
        %v1727 = vadd.f32 0.0, %v1726
        %v1728 = vpop.f32.mrf.mxu0
        %v1729 = vpop.f32.mrf.mxu0
        %v1730 = vadd.f32 0.0, %v1729
        %v1731 = vpop.f32.mrf.mxu0
        %1732 = vmatprep.mubr.bf16.mxu0 0
        %1733 = vmatmul.mubr.bf16.gmra.mxu0 %v1679
        %v1734 = vpop.f32.mrf.mxu0
        %v1735 = vadd.f32 0.0, %v1734
        %v1736 = vpop.f32.mrf.mxu0
        %v1737 = vpop.f32.mrf.mxu0
        %v1738 = vadd.f32 0.0, %v1737
        %v1739 = vpop.f32.mrf.mxu0
        %1740 = vmatprep.mubr.bf16.mxu0 0
        %1741 = vmatmul.mubr.bf16.gmra.mxu0 %v1682
        %v1742 = vpop.f32.mrf.mxu0
        %v1743 = vadd.f32 0.0, %v1742
        %v1744 = vpop.f32.mrf.mxu0
        %v1745 = vpop.f32.mrf.mxu0
        %v1746 = vadd.f32 0.0, %v1745
        %v1747 = vpop.f32.mrf.mxu0
        %1748 = vdwg.mxu0
        %v1749 = vadd.f32 %v1643, %v1719
        %v1750 = vadd.f32 %v1644, %v1722
        %v1751 = vadd.f32 %v1645, %v1727
        %v1752 = vadd.f32 %v1646, %v1730
        %v1753 = vadd.f32 %v1647, %v1735
        %v1754 = vadd.f32 %v1648, %v1738
        %v1755 = vadd.f32 %v1649, %v1743
        %v1756 = vadd.f32 %v1650, %v1746
        %v1757 = vpack.c.bf16 %v1326, %v1325
        %v1758 = vpack.c.bf16 %v1328, %v1327
        %v1759 = vpack.c.bf16 %v1330, %v1329
        %v1760 = vpack.c.bf16 %v1332, %v1331
        %s1761 = scalar_lea.vmem %s3, 64
        %v1762 = vld [vmem:[%s1761] sm:$0xf]
        %v1763 = vld [vmem:[%s1761 + $0x4] sm:$0xf]
        %v1764 = vld [vmem:[%s1761 + $0x8] sm:$0xf]
        %v1765 = vld [vmem:[%s1761 + $0xc] sm:$0xf]
        %v1770 = vunpack.c.l.b16 %v1762
        %v1771 = vunpack.c.l.b16 %v1763
        %v1772 = vunpack.c.l.b16 %v1764
        %v1773 = vunpack.c.l.b16 %v1765
        %v1774 = vpack.c.b16 %v1771, %v1770
        %v1775 = vpack.c.b16 %v1773, %v1772
        %v1779 = vsel %vm1394, %v1757, 0
        %v1782 = vsel %vm1394, %v1758, 0
        %v1785 = vsel %vm1394, %v1759, 0
        %v1788 = vsel %vm1394, %v1760, 0
        %1790 = vmatprep.subr.bf16.mxu0 0
        %1791 = vmatpush1.bf16.msra.mxu0 0
        %1792 = vmatprep.subr.bf16.mxu0 0
        %1793 = vmatpush1.bf16.msra.mxu0 0
        %1794 = vmatprep.subr.bf16.mxu0 0
        %1795 = vmatpush1.bf16.msra.mxu0 0
        %1796 = vmatprep.subr.bf16.mxu0 0
        %1797 = vmatpush1.bf16.msra.mxu0 0
        %1798 = vmatprep.subr.bf16.mxu0 0
        %1799 = vmatpush1.bf16.msra.mxu0 0
        %1800 = vmatprep.subr.bf16.mxu0 0
        %1801 = vmatpush1.bf16.msra.mxu0 0
        %1802 = vmatprep.subr.bf16.mxu0 0
        %1803 = vmatpush1.bf16.msra.mxu0 %v1775
        %1804 = vmatprep.subr.bf16.mxu0 0
        %1805 = vmatpush1.bf16.msra.mxu0 %v1774
        %1806 = vmatprep.subr.bf16.mxu0 0
        %1807 = vmatpush2.bf16.msra.mxu0 0
        %1808 = vmatprep.subr.bf16.mxu0 0
        %1809 = vmatpush2.bf16.msra.mxu0 0
        %1810 = vmatprep.subr.bf16.mxu0 0
        %1811 = vmatpush2.bf16.msra.mxu0 0
        %1812 = vmatprep.subr.bf16.mxu0 0
        %1813 = vmatpush2.bf16.msra.mxu0 0
        %1814 = vmatprep.subr.bf16.mxu0 0
        %1815 = vmatpush2.bf16.msra.mxu0 0
        %1816 = vmatprep.subr.bf16.mxu0 0
        %1817 = vmatpush2.bf16.msra.mxu0 0
        %1818 = vmatprep.subr.bf16.mxu0 0
        %1819 = vmatpush2.bf16.msra.mxu0 0
        %1820 = vmatprep.subr.bf16.mxu0 0
        %1821 = vmatpush2.bf16.msra.mxu0 0
        %1822 = vmatprep.mubr.bf16.mxu0 0
        %1823 = vmatmul.mubr.bf16.gmra.mxu0 %v1779
        %v1824 = vpop.f32.mrf.mxu0
        %v1825 = vadd.f32 0.0, %v1824
        %v1826 = vpop.f32.mrf.mxu0
        %v1827 = vpop.f32.mrf.mxu0
        %v1828 = vadd.f32 0.0, %v1827
        %v1829 = vpop.f32.mrf.mxu0
        %1830 = vmatprep.mubr.bf16.mxu0 0
        %1831 = vmatmul.mubr.bf16.gmra.mxu0 %v1782
        %v1832 = vpop.f32.mrf.mxu0
        %v1833 = vadd.f32 0.0, %v1832
        %v1834 = vpop.f32.mrf.mxu0
        %v1835 = vpop.f32.mrf.mxu0
        %v1836 = vadd.f32 0.0, %v1835
        %v1837 = vpop.f32.mrf.mxu0
        %1838 = vmatprep.mubr.bf16.mxu0 0
        %1839 = vmatmul.mubr.bf16.gmra.mxu0 %v1785
        %v1840 = vpop.f32.mrf.mxu0
        %v1841 = vadd.f32 0.0, %v1840
        %v1842 = vpop.f32.mrf.mxu0
        %v1843 = vpop.f32.mrf.mxu0
        %v1844 = vadd.f32 0.0, %v1843
        %v1845 = vpop.f32.mrf.mxu0
        %1846 = vmatprep.mubr.bf16.mxu0 0
        %1847 = vmatmul.mubr.bf16.gmra.mxu0 %v1788
        %v1848 = vpop.f32.mrf.mxu0
        %v1849 = vadd.f32 0.0, %v1848
        %v1850 = vpop.f32.mrf.mxu0
        %v1851 = vpop.f32.mrf.mxu0
        %v1852 = vadd.f32 0.0, %v1851
        %v1853 = vpop.f32.mrf.mxu0
        %1854 = vdwg.mxu0
        %v1855 = vadd.f32 %v1749, %v1825
        %v1856 = vadd.f32 %v1750, %v1828
        %v1857 = vadd.f32 %v1751, %v1833
        %v1858 = vadd.f32 %v1752, %v1836
        %v1859 = vadd.f32 %v1753, %v1841
        %v1860 = vadd.f32 %v1754, %v1844
        %v1861 = vadd.f32 %v1755, %v1849
        %v1862 = vadd.f32 %v1756, %v1852
        %s1863 = scalar_lea.vmem %s3, 112
        %v1864 = vld [vmem:[%s1863] sm:$0xf]
        %v1865 = vld [vmem:[%s1863 + $0x4] sm:$0xf]
        %v1866 = vld [vmem:[%s1863 + $0x8] sm:$0xf]
        %v1867 = vld [vmem:[%s1863 + $0xc] sm:$0xf]
        %v1872 = vunpack.c.l.b16 %v1864
        %v1873 = vunpack.c.l.b16 %v1865
        %v1874 = vunpack.c.l.b16 %v1866
        %v1875 = vunpack.c.l.b16 %v1867
        %v1876 = vpack.c.b16 %v1873, %v1872
        %v1877 = vpack.c.b16 %v1875, %v1874
        %1880 = vmatprep.subr.bf16.mxu0 0
        %1881 = vmatpush1.bf16.msra.mxu0 0
        %1882 = vmatprep.subr.bf16.mxu0 0
        %1883 = vmatpush1.bf16.msra.mxu0 0
        %1884 = vmatprep.subr.bf16.mxu0 0
        %1885 = vmatpush1.bf16.msra.mxu0 0
        %1886 = vmatprep.subr.bf16.mxu0 0
        %1887 = vmatpush1.bf16.msra.mxu0 0
        %1888 = vmatprep.subr.bf16.mxu0 0
        %1889 = vmatpush1.bf16.msra.mxu0 0
        %1890 = vmatprep.subr.bf16.mxu0 0
        %1891 = vmatpush1.bf16.msra.mxu0 0
        %1892 = vmatprep.subr.bf16.mxu0 0
        %1893 = vmatpush1.bf16.msra.mxu0 %v1877
        %1894 = vmatprep.subr.bf16.mxu0 0
        %1895 = vmatpush1.bf16.msra.mxu0 %v1876
        %1896 = vmatprep.subr.bf16.mxu0 0
        %1897 = vmatpush2.bf16.msra.mxu0 0
        %1898 = vmatprep.subr.bf16.mxu0 0
        %1899 = vmatpush2.bf16.msra.mxu0 0
        %1900 = vmatprep.subr.bf16.mxu0 0
        %1901 = vmatpush2.bf16.msra.mxu0 0
        %1902 = vmatprep.subr.bf16.mxu0 0
        %1903 = vmatpush2.bf16.msra.mxu0 0
        %1904 = vmatprep.subr.bf16.mxu0 0
        %1905 = vmatpush2.bf16.msra.mxu0 0
        %1906 = vmatprep.subr.bf16.mxu0 0
        %1907 = vmatpush2.bf16.msra.mxu0 0
        %1908 = vmatprep.subr.bf16.mxu0 0
        %1909 = vmatpush2.bf16.msra.mxu0 0
        %1910 = vmatprep.subr.bf16.mxu0 0
        %1911 = vmatpush2.bf16.msra.mxu0 0
        %1912 = vmatprep.mubr.bf16.mxu0 0
        %1913 = vmatmul.mubr.bf16.gmra.mxu0 %v1676
        %v1914 = vpop.f32.mrf.mxu0
        %v1915 = vadd.f32 0.0, %v1914
        %v1916 = vpop.f32.mrf.mxu0
        %v1917 = vpop.f32.mrf.mxu0
        %v1918 = vadd.f32 0.0, %v1917
        %v1919 = vpop.f32.mrf.mxu0
        %1920 = vmatprep.mubr.bf16.mxu0 0
        %1921 = vmatmul.mubr.bf16.gmra.mxu0 %v1679
        %v1922 = vpop.f32.mrf.mxu0
        %v1923 = vadd.f32 0.0, %v1922
        %v1924 = vpop.f32.mrf.mxu0
        %v1925 = vpop.f32.mrf.mxu0
        %v1926 = vadd.f32 0.0, %v1925
        %v1927 = vpop.f32.mrf.mxu0
        %1928 = vmatprep.mubr.bf16.mxu0 0
        %1929 = vmatmul.mubr.bf16.gmra.mxu0 %v1682
        %v1930 = vpop.f32.mrf.mxu0
        %v1931 = vadd.f32 0.0, %v1930
        %v1932 = vpop.f32.mrf.mxu0
        %v1933 = vpop.f32.mrf.mxu0
        %v1934 = vadd.f32 0.0, %v1933
        %v1935 = vpop.f32.mrf.mxu0
        %1936 = vmatprep.mubr.bf16.mxu0 0
        %1937 = vmatmul.mubr.bf16.gmra.mxu0 %v1673
        %v1938 = vpop.f32.mrf.mxu0
        %v1939 = vadd.f32 0.0, %v1938
        %v1940 = vpop.f32.mrf.mxu0
        %v1941 = vpop.f32.mrf.mxu0
        %v1942 = vadd.f32 0.0, %v1941
        %v1943 = vpop.f32.mrf.mxu0
        %1944 = vdwg.mxu0
        %v1945 = vadd.f32 %v1855, %v1915
        %v1946 = vadd.f32 %v1856, %v1918
        %v1947 = vadd.f32 %v1857, %v1923
        %v1948 = vadd.f32 %v1858, %v1926
        %v1949 = vadd.f32 %v1859, %v1931
        %v1950 = vadd.f32 %v1860, %v1934
        %v1951 = vadd.f32 %v1861, %v1939
        %v1952 = vadd.f32 %v1862, %v1942
        %v1953 = vrot.slane %v1325, 1
        %v1954 = vrot.slane %v1326, 1
        %v1955 = vrot.slane %v1327, 1
        %v1956 = vrot.slane %v1328, 1
        %v1957 = vrot.slane %v1329, 1
        %v1958 = vrot.slane %v1330, 1
        %v1959 = vrot.slane %v1331, 1
        %v1960 = vrot.slane %v1332, 1
        %v1969 = vsel %vm1013, %v1953, %v1953
        %v1970 = vsel %vm1013, %v1954, %v1954
        %v1971 = vsel %vm1013, %v1955, %v1955
        %v1972 = vsel %vm1013, %v1956, %v1956
        %v1973 = vsel %vm1013, %v1957, %v1957
        %v1974 = vsel %vm1013, %v1958, %v1958
        %v1975 = vsel %vm1013, %v1959, %v1959
        %v1976 = vsel %vm1013, %v1960, %v1960
        %v1977 = vpack.c.bf16 %v1969, %v1976
        %v1978 = vpack.c.bf16 %v1971, %v1970
        %v1979 = vpack.c.bf16 %v1973, %v1972
        %v1980 = vpack.c.bf16 %v1975, %v1974
        %s1981 = scalar_lea.vmem %s3, 32
        %v1982 = vld [vmem:[%s1981] sm:$0xf]
        %v1983 = vld [vmem:[%s1981 + $0x4] sm:$0xf]
        %v1984 = vld [vmem:[%s1981 + $0x8] sm:$0xf]
        %v1985 = vld [vmem:[%s1981 + $0xc] sm:$0xf]
        %v1990 = vunpack.c.l.b16 %v1982
        %v1991 = vunpack.c.l.b16 %v1983
        %v1992 = vunpack.c.l.b16 %v1984
        %v1993 = vunpack.c.l.b16 %v1985
        %v1994 = vpack.c.b16 %v1991, %v1990
        %v1995 = vpack.c.b16 %v1993, %v1992
        %v1999 = vsel %vm1394, %v1977, 0
        %v2002 = vsel %vm1394, %v1978, 0
        %v2005 = vsel %vm1394, %v1979, 0
        %v2008 = vsel %vm1394, %v1980, 0
        %2010 = vmatprep.subr.bf16.mxu0 0
        %2011 = vmatpush1.bf16.msra.mxu0 0
        %2012 = vmatprep.subr.bf16.mxu0 0
        %2013 = vmatpush1.bf16.msra.mxu0 0
        %2014 = vmatprep.subr.bf16.mxu0 0
        %2015 = vmatpush1.bf16.msra.mxu0 0
        %2016 = vmatprep.subr.bf16.mxu0 0
        %2017 = vmatpush1.bf16.msra.mxu0 0
        %2018 = vmatprep.subr.bf16.mxu0 0
        %2019 = vmatpush1.bf16.msra.mxu0 0
        %2020 = vmatprep.subr.bf16.mxu0 0
        %2021 = vmatpush1.bf16.msra.mxu0 0
        %2022 = vmatprep.subr.bf16.mxu0 0
        %2023 = vmatpush1.bf16.msra.mxu0 %v1995
        %2024 = vmatprep.subr.bf16.mxu0 0
        %2025 = vmatpush1.bf16.msra.mxu0 %v1994
        %2026 = vmatprep.subr.bf16.mxu0 0
        %2027 = vmatpush2.bf16.msra.mxu0 0
        %2028 = vmatprep.subr.bf16.mxu0 0
        %2029 = vmatpush2.bf16.msra.mxu0 0
        %2030 = vmatprep.subr.bf16.mxu0 0
        %2031 = vmatpush2.bf16.msra.mxu0 0
        %2032 = vmatprep.subr.bf16.mxu0 0
        %2033 = vmatpush2.bf16.msra.mxu0 0
        %2034 = vmatprep.subr.bf16.mxu0 0
        %2035 = vmatpush2.bf16.msra.mxu0 0
        %2036 = vmatprep.subr.bf16.mxu0 0
        %2037 = vmatpush2.bf16.msra.mxu0 0
        %2038 = vmatprep.subr.bf16.mxu0 0
        %2039 = vmatpush2.bf16.msra.mxu0 0
        %2040 = vmatprep.subr.bf16.mxu0 0
        %2041 = vmatpush2.bf16.msra.mxu0 0
        %2042 = vmatprep.mubr.bf16.mxu0 0
        %2043 = vmatmul.mubr.bf16.gmra.mxu0 %v1999
        %v2044 = vpop.f32.mrf.mxu0
        %v2045 = vadd.f32 0.0, %v2044
        %v2046 = vpop.f32.mrf.mxu0
        %v2047 = vpop.f32.mrf.mxu0
        %v2048 = vadd.f32 0.0, %v2047
        %v2049 = vpop.f32.mrf.mxu0
        %2050 = vmatprep.mubr.bf16.mxu0 0
        %2051 = vmatmul.mubr.bf16.gmra.mxu0 %v2002
        %v2052 = vpop.f32.mrf.mxu0
        %v2053 = vadd.f32 0.0, %v2052
        %v2054 = vpop.f32.mrf.mxu0
        %v2055 = vpop.f32.mrf.mxu0
        %v2056 = vadd.f32 0.0, %v2055
        %v2057 = vpop.f32.mrf.mxu0
        %2058 = vmatprep.mubr.bf16.mxu0 0
        %2059 = vmatmul.mubr.bf16.gmra.mxu0 %v2005
        %v2060 = vpop.f32.mrf.mxu0
        %v2061 = vadd.f32 0.0, %v2060
        %v2062 = vpop.f32.mrf.mxu0
        %v2063 = vpop.f32.mrf.mxu0
        %v2064 = vadd.f32 0.0, %v2063
        %v2065 = vpop.f32.mrf.mxu0
        %2066 = vmatprep.mubr.bf16.mxu0 0
        %2067 = vmatmul.mubr.bf16.gmra.mxu0 %v2008
        %v2068 = vpop.f32.mrf.mxu0
        %v2069 = vadd.f32 0.0, %v2068
        %v2070 = vpop.f32.mrf.mxu0
        %v2071 = vpop.f32.mrf.mxu0
        %v2072 = vadd.f32 0.0, %v2071
        %v2073 = vpop.f32.mrf.mxu0
        %2074 = vdwg.mxu0
        %v2075 = vadd.f32 %v1945, %v2045
        %v2076 = vadd.f32 %v1946, %v2048
        %v2077 = vadd.f32 %v1947, %v2053
        %v2078 = vadd.f32 %v1948, %v2056
        %v2079 = vadd.f32 %v1949, %v2061
        %v2080 = vadd.f32 %v1950, %v2064
        %v2081 = vadd.f32 %v1951, %v2069
        %v2082 = vadd.f32 %v1952, %v2072
        %v2083 = vpack.c.bf16 %v1970, %v1969
        %v2084 = vpack.c.bf16 %v1972, %v1971
        %v2085 = vpack.c.bf16 %v1974, %v1973
        %v2086 = vpack.c.bf16 %v1976, %v1975
        %s2087 = scalar_lea.vmem %s3, 80
        %v2088 = vld [vmem:[%s2087] sm:$0xf]
        %v2089 = vld [vmem:[%s2087 + $0x4] sm:$0xf]
        %v2090 = vld [vmem:[%s2087 + $0x8] sm:$0xf]
        %v2091 = vld [vmem:[%s2087 + $0xc] sm:$0xf]
        %v2096 = vunpack.c.l.b16 %v2088
        %v2097 = vunpack.c.l.b16 %v2089
        %v2098 = vunpack.c.l.b16 %v2090
        %v2099 = vunpack.c.l.b16 %v2091
        %v2100 = vpack.c.b16 %v2097, %v2096
        %v2101 = vpack.c.b16 %v2099, %v2098
        %v2105 = vsel %vm1394, %v2083, 0
        %v2108 = vsel %vm1394, %v2084, 0
        %v2111 = vsel %vm1394, %v2085, 0
        %v2114 = vsel %vm1394, %v2086, 0
        %2116 = vmatprep.subr.bf16.mxu0 0
        %2117 = vmatpush1.bf16.msra.mxu0 0
        %2118 = vmatprep.subr.bf16.mxu0 0
        %2119 = vmatpush1.bf16.msra.mxu0 0
        %2120 = vmatprep.subr.bf16.mxu0 0
        %2121 = vmatpush1.bf16.msra.mxu0 0
        %2122 = vmatprep.subr.bf16.mxu0 0
        %2123 = vmatpush1.bf16.msra.mxu0 0
        %2124 = vmatprep.subr.bf16.mxu0 0
        %2125 = vmatpush1.bf16.msra.mxu0 0
        %2126 = vmatprep.subr.bf16.mxu0 0
        %2127 = vmatpush1.bf16.msra.mxu0 0
        %2128 = vmatprep.subr.bf16.mxu0 0
        %2129 = vmatpush1.bf16.msra.mxu0 %v2101
        %2130 = vmatprep.subr.bf16.mxu0 0
        %2131 = vmatpush1.bf16.msra.mxu0 %v2100
        %2132 = vmatprep.subr.bf16.mxu0 0
        %2133 = vmatpush2.bf16.msra.mxu0 0
        %2134 = vmatprep.subr.bf16.mxu0 0
        %2135 = vmatpush2.bf16.msra.mxu0 0
        %2136 = vmatprep.subr.bf16.mxu0 0
        %2137 = vmatpush2.bf16.msra.mxu0 0
        %2138 = vmatprep.subr.bf16.mxu0 0
        %2139 = vmatpush2.bf16.msra.mxu0 0
        %2140 = vmatprep.subr.bf16.mxu0 0
        %2141 = vmatpush2.bf16.msra.mxu0 0
        %2142 = vmatprep.subr.bf16.mxu0 0
        %2143 = vmatpush2.bf16.msra.mxu0 0
        %2144 = vmatprep.subr.bf16.mxu0 0
        %2145 = vmatpush2.bf16.msra.mxu0 0
        %2146 = vmatprep.subr.bf16.mxu0 0
        %2147 = vmatpush2.bf16.msra.mxu0 0
        %2148 = vmatprep.mubr.bf16.mxu0 0
        %2149 = vmatmul.mubr.bf16.gmra.mxu0 %v2105
        %v2150 = vpop.f32.mrf.mxu0
        %v2151 = vadd.f32 0.0, %v2150
        %v2152 = vpop.f32.mrf.mxu0
        %v2153 = vpop.f32.mrf.mxu0
        %v2154 = vadd.f32 0.0, %v2153
        %v2155 = vpop.f32.mrf.mxu0
        %2156 = vmatprep.mubr.bf16.mxu0 0
        %2157 = vmatmul.mubr.bf16.gmra.mxu0 %v2108
        %v2158 = vpop.f32.mrf.mxu0
        %v2159 = vadd.f32 0.0, %v2158
        %v2160 = vpop.f32.mrf.mxu0
        %v2161 = vpop.f32.mrf.mxu0
        %v2162 = vadd.f32 0.0, %v2161
        %v2163 = vpop.f32.mrf.mxu0
        %2164 = vmatprep.mubr.bf16.mxu0 0
        %2165 = vmatmul.mubr.bf16.gmra.mxu0 %v2111
        %v2166 = vpop.f32.mrf.mxu0
        %v2167 = vadd.f32 0.0, %v2166
        %v2168 = vpop.f32.mrf.mxu0
        %v2169 = vpop.f32.mrf.mxu0
        %v2170 = vadd.f32 0.0, %v2169
        %v2171 = vpop.f32.mrf.mxu0
        %2172 = vmatprep.mubr.bf16.mxu0 0
        %2173 = vmatmul.mubr.bf16.gmra.mxu0 %v2114
        %v2174 = vpop.f32.mrf.mxu0
        %v2175 = vadd.f32 0.0, %v2174
        %v2176 = vpop.f32.mrf.mxu0
        %v2177 = vpop.f32.mrf.mxu0
        %v2178 = vadd.f32 0.0, %v2177
        %v2179 = vpop.f32.mrf.mxu0
        %2180 = vdwg.mxu0
        %v2181 = vadd.f32 %v2075, %v2151
        %v2182 = vadd.f32 %v2076, %v2154
        %v2183 = vadd.f32 %v2077, %v2159
        %v2184 = vadd.f32 %v2078, %v2162
        %v2185 = vadd.f32 %v2079, %v2167
        %v2186 = vadd.f32 %v2080, %v2170
        %v2187 = vadd.f32 %v2081, %v2175
        %v2188 = vadd.f32 %v2082, %v2178
        %s2189 = scalar_lea.vmem %s3, 128
        %v2190 = vld [vmem:[%s2189] sm:$0xf]
        %v2191 = vld [vmem:[%s2189 + $0x4] sm:$0xf]
        %v2192 = vld [vmem:[%s2189 + $0x8] sm:$0xf]
        %v2193 = vld [vmem:[%s2189 + $0xc] sm:$0xf]
        %v2198 = vunpack.c.l.b16 %v2190
        %v2199 = vunpack.c.l.b16 %v2191
        %v2200 = vunpack.c.l.b16 %v2192
        %v2201 = vunpack.c.l.b16 %v2193
        %v2202 = vpack.c.b16 %v2199, %v2198
        %v2203 = vpack.c.b16 %v2201, %v2200
        %2206 = vmatprep.subr.bf16.mxu0 0
        %2207 = vmatpush1.bf16.msra.mxu0 0
        %2208 = vmatprep.subr.bf16.mxu0 0
        %2209 = vmatpush1.bf16.msra.mxu0 0
        %2210 = vmatprep.subr.bf16.mxu0 0
        %2211 = vmatpush1.bf16.msra.mxu0 0
        %2212 = vmatprep.subr.bf16.mxu0 0
        %2213 = vmatpush1.bf16.msra.mxu0 0
        %2214 = vmatprep.subr.bf16.mxu0 0
        %2215 = vmatpush1.bf16.msra.mxu0 0
        %2216 = vmatprep.subr.bf16.mxu0 0
        %2217 = vmatpush1.bf16.msra.mxu0 0
        %2218 = vmatprep.subr.bf16.mxu0 0
        %2219 = vmatpush1.bf16.msra.mxu0 %v2203
        %2220 = vmatprep.subr.bf16.mxu0 0
        %2221 = vmatpush1.bf16.msra.mxu0 %v2202
        %2222 = vmatprep.subr.bf16.mxu0 0
        %2223 = vmatpush2.bf16.msra.mxu0 0
        %2224 = vmatprep.subr.bf16.mxu0 0
        %2225 = vmatpush2.bf16.msra.mxu0 0
        %2226 = vmatprep.subr.bf16.mxu0 0
        %2227 = vmatpush2.bf16.msra.mxu0 0
        %2228 = vmatprep.subr.bf16.mxu0 0
        %2229 = vmatpush2.bf16.msra.mxu0 0
        %2230 = vmatprep.subr.bf16.mxu0 0
        %2231 = vmatpush2.bf16.msra.mxu0 0
        %2232 = vmatprep.subr.bf16.mxu0 0
        %2233 = vmatpush2.bf16.msra.mxu0 0
        %2234 = vmatprep.subr.bf16.mxu0 0
        %2235 = vmatpush2.bf16.msra.mxu0 0
        %2236 = vmatprep.subr.bf16.mxu0 0
        %2237 = vmatpush2.bf16.msra.mxu0 0
        %2238 = vmatprep.mubr.bf16.mxu0 0
        %2239 = vmatmul.mubr.bf16.gmra.mxu0 %v2002
        %v2240 = vpop.f32.mrf.mxu0
        %v2241 = vadd.f32 0.0, %v2240
        %v2242 = vpop.f32.mrf.mxu0
        %v2243 = vpop.f32.mrf.mxu0
        %v2244 = vadd.f32 0.0, %v2243
        %v2245 = vpop.f32.mrf.mxu0
        %2246 = vmatprep.mubr.bf16.mxu0 0
        %2247 = vmatmul.mubr.bf16.gmra.mxu0 %v2005
        %v2248 = vpop.f32.mrf.mxu0
        %v2249 = vadd.f32 0.0, %v2248
        %v2250 = vpop.f32.mrf.mxu0
        %v2251 = vpop.f32.mrf.mxu0
        %v2252 = vadd.f32 0.0, %v2251
        %v2253 = vpop.f32.mrf.mxu0
        %2254 = vmatprep.mubr.bf16.mxu0 0
        %2255 = vmatmul.mubr.bf16.gmra.mxu0 %v2008
        %v2256 = vpop.f32.mrf.mxu0
        %v2257 = vadd.f32 0.0, %v2256
        %v2258 = vpop.f32.mrf.mxu0
        %v2259 = vpop.f32.mrf.mxu0
        %v2260 = vadd.f32 0.0, %v2259
        %v2261 = vpop.f32.mrf.mxu0
        %2262 = vmatprep.mubr.bf16.mxu0 0
        %2263 = vmatmul.mubr.bf16.gmra.mxu0 %v1999
        %v2264 = vpop.f32.mrf.mxu0
        %v2265 = vadd.f32 0.0, %v2264
        %v2266 = vpop.f32.mrf.mxu0
        %v2267 = vpop.f32.mrf.mxu0
        %v2268 = vadd.f32 0.0, %v2267
        %v2269 = vpop.f32.mrf.mxu0
        %2270 = vdwg.mxu0
        %v2271 = vadd.f32 %v2181, %v2241
        %v2272 = vadd.f32 %v2182, %v2244
        %v2273 = vadd.f32 %v2183, %v2249
        %v2274 = vadd.f32 %v2184, %v2252
        %v2275 = vadd.f32 %v2185, %v2257
        %v2276 = vadd.f32 %v2186, %v2260
        %v2277 = vadd.f32 %v2187, %v2265
        %v2278 = vadd.f32 %v2188, %v2268
        %v2279 = vld [vmem:[%s4] sm:$0x7]
        %v2280 = vlaneseq
        %v2281 = vshrl.u32 %v2280, 7
        %v2282 = vsub.s32 0, %v2281
        %v2283 = vrot.slane %v2279, %v2282
        %v2284 = vadd.f32 %v2271, %v2283
        %v2285 = vadd.f32 %v2272, %v2283
        %v2286 = vadd.f32 %v2273, %v2283
        %v2287 = vadd.f32 %v2274, %v2283
        %v2288 = vadd.f32 %v2275, %v2283
        %v2289 = vadd.f32 %v2276, %v2283
        %v2290 = vadd.f32 %v2277, %v2283
        %v2291 = vadd.f32 %v2278, %v2283
        %v2292 = vmax.f32 %v2284, 0.0
        %v2293 = vmax.f32 %v2285, 0.0
        %v2294 = vmax.f32 %v2286, 0.0
        %v2295 = vmax.f32 %v2287, 0.0
        %v2296 = vmax.f32 %v2288, 0.0
        %v2297 = vmax.f32 %v2289, 0.0
        %v2298 = vmax.f32 %v2290, 0.0
        %v2299 = vmax.f32 %v2291, 0.0
        %v2300 = vlaneseq
        %v2301 = vshrl.u32 %v2300, 7
        %v2302 = vsub.s32 1, %v2301
        %v2303 = vrot.slane %v2279, %v2302
        %v2304 = vmul.f32 %v2292, %v2303
        %v2305 = vmul.f32 %v2293, %v2303
        %v2306 = vmul.f32 %v2294, %v2303
        %v2307 = vmul.f32 %v2295, %v2303
        %v2308 = vmul.f32 %v2296, %v2303
        %v2309 = vmul.f32 %v2297, %v2303
        %v2310 = vmul.f32 %v2298, %v2303
        %v2311 = vmul.f32 %v2299, %v2303
        %v2312 = vlaneseq
        %v2313 = vshrl.u32 %v2312, 7
        %v2314 = vsub.s32 2, %v2313
        %v2315 = vrot.slane %v2279, %v2314
        %v2316 = vadd.f32 %v2304, %v2315
        %v2317 = vadd.f32 %v2305, %v2315
        %v2318 = vadd.f32 %v2306, %v2315
        %v2319 = vadd.f32 %v2307, %v2315
        %v2320 = vadd.f32 %v2308, %v2315
        %v2321 = vadd.f32 %v2309, %v2315
        %v2322 = vadd.f32 %v2310, %v2315
        %v2323 = vadd.f32 %v2311, %v2315
        %v2332 = vrot.slane %v2316, 7
        %v2333 = vrot.slane %v2317, 7
        %v2334 = vrot.slane %v2318, 7
        %v2335 = vrot.slane %v2319, 7
        %v2336 = vrot.slane %v2320, 7
        %v2337 = vrot.slane %v2321, 7
        %v2338 = vrot.slane %v2322, 7
        %v2339 = vrot.slane %v2323, 7
        %v2348 = vsel %vm471, %v2332, %v2332
        %v2349 = vsel %vm471, %v2333, %v2333
        %v2350 = vsel %vm471, %v2334, %v2334
        %v2351 = vsel %vm471, %v2335, %v2335
        %v2352 = vsel %vm471, %v2336, %v2336
        %v2353 = vsel %vm471, %v2337, %v2337
        %v2354 = vsel %vm471, %v2338, %v2338
        %v2355 = vsel %vm471, %v2339, %v2339
        %v2356 = vpack.c.bf16 %v2348, %v2355
        %v2357 = vpack.c.bf16 %v2350, %v2349
        %v2358 = vpack.c.bf16 %v2352, %v2351
        %v2359 = vpack.c.bf16 %v2354, %v2353
        %v2360 = vld [vmem:[%s5] sm:$0xf]
        %v2361 = vld [vmem:[%s5 + $0x4] sm:$0xf]
        %v2362 = vld [vmem:[%s5 + $0x8] sm:$0xf]
        %v2363 = vld [vmem:[%s5 + $0xc] sm:$0xf]
        %v2364 = vpack.c.bf16 %v2349, %v2348
        %v2365 = vpack.c.bf16 %v2351, %v2350
        %v2366 = vpack.c.bf16 %v2353, %v2352
        %v2367 = vpack.c.bf16 %v2355, %v2354
        %s2368 = scalar_lea.vmem %s5, 48
        %v2369 = vld [vmem:[%s2368] sm:$0xf]
        %v2370 = vld [vmem:[%s2368 + $0x4] sm:$0xf]
        %v2371 = vld [vmem:[%s2368 + $0x8] sm:$0xf]
        %v2372 = vld [vmem:[%s2368 + $0xc] sm:$0xf]
        %v2377 = vunpack.c.l.b16 %v2369
        %v2378 = vunpack.c.l.b16 %v2370
        %v2379 = vunpack.c.l.b16 %v2371
        %v2380 = vunpack.c.l.b16 %v2372
        %v2381 = vpack.c.b16 %v2378, %v2377
        %v2382 = vpack.c.b16 %v2380, %v2379
        %v2386 = vsel %vm1394, %v2364, 0
        %v2389 = vsel %vm1394, %v2365, 0
        %v2392 = vsel %vm1394, %v2366, 0
        %v2395 = vsel %vm1394, %v2367, 0
        %2397 = vmatprep.subr.bf16.mxu0 0
        %2398 = vmatpush1.bf16.msra.mxu0 0
        %2399 = vmatprep.subr.bf16.mxu0 0
        %2400 = vmatpush1.bf16.msra.mxu0 0
        %2401 = vmatprep.subr.bf16.mxu0 0
        %2402 = vmatpush1.bf16.msra.mxu0 0
        %2403 = vmatprep.subr.bf16.mxu0 0
        %2404 = vmatpush1.bf16.msra.mxu0 0
        %2405 = vmatprep.subr.bf16.mxu0 0
        %2406 = vmatpush1.bf16.msra.mxu0 0
        %2407 = vmatprep.subr.bf16.mxu0 0
        %2408 = vmatpush1.bf16.msra.mxu0 0
        %2409 = vmatprep.subr.bf16.mxu0 0
        %2410 = vmatpush1.bf16.msra.mxu0 %v2382
        %2411 = vmatprep.subr.bf16.mxu0 0
        %2412 = vmatpush1.bf16.msra.mxu0 %v2381
        %2413 = vmatprep.subr.bf16.mxu0 0
        %2414 = vmatpush2.bf16.msra.mxu0 0
        %2415 = vmatprep.subr.bf16.mxu0 0
        %2416 = vmatpush2.bf16.msra.mxu0 0
        %2417 = vmatprep.subr.bf16.mxu0 0
        %2418 = vmatpush2.bf16.msra.mxu0 0
        %2419 = vmatprep.subr.bf16.mxu0 0
        %2420 = vmatpush2.bf16.msra.mxu0 0
        %2421 = vmatprep.subr.bf16.mxu0 0
        %2422 = vmatpush2.bf16.msra.mxu0 0
        %2423 = vmatprep.subr.bf16.mxu0 0
        %2424 = vmatpush2.bf16.msra.mxu0 0
        %2425 = vmatprep.subr.bf16.mxu0 0
        %2426 = vmatpush2.bf16.msra.mxu0 0
        %2427 = vmatprep.subr.bf16.mxu0 0
        %2428 = vmatpush2.bf16.msra.mxu0 0
        %2429 = vmatprep.mubr.bf16.mxu0 0
        %2430 = vmatmul.mubr.bf16.gmra.mxu0 %v2386
        %v2431 = vpop.f32.mrf.mxu0
        %v2432 = vadd.f32 0.0, %v2431
        %v2433 = vpop.f32.mrf.mxu0
        %v2434 = vpop.f32.mrf.mxu0
        %v2435 = vadd.f32 0.0, %v2434
        %v2436 = vpop.f32.mrf.mxu0
        %2437 = vmatprep.mubr.bf16.mxu0 0
        %2438 = vmatmul.mubr.bf16.gmra.mxu0 %v2389
        %v2439 = vpop.f32.mrf.mxu0
        %v2440 = vadd.f32 0.0, %v2439
        %v2441 = vpop.f32.mrf.mxu0
        %v2442 = vpop.f32.mrf.mxu0
        %v2443 = vadd.f32 0.0, %v2442
        %v2444 = vpop.f32.mrf.mxu0
        %2445 = vmatprep.mubr.bf16.mxu0 0
        %2446 = vmatmul.mubr.bf16.gmra.mxu0 %v2392
        %v2447 = vpop.f32.mrf.mxu0
        %v2448 = vadd.f32 0.0, %v2447
        %v2449 = vpop.f32.mrf.mxu0
        %v2450 = vpop.f32.mrf.mxu0
        %v2451 = vadd.f32 0.0, %v2450
        %v2452 = vpop.f32.mrf.mxu0
        %2453 = vmatprep.mubr.bf16.mxu0 0
        %2454 = vmatmul.mubr.bf16.gmra.mxu0 %v2395
        %v2455 = vpop.f32.mrf.mxu0
        %v2456 = vadd.f32 0.0, %v2455
        %v2457 = vpop.f32.mrf.mxu0
        %v2458 = vpop.f32.mrf.mxu0
        %v2459 = vadd.f32 0.0, %v2458
        %v2460 = vpop.f32.mrf.mxu0
        %2461 = vdwg.mxu0
        %v2466 = vunpack.c.l.b16 %v2360
        %v2467 = vunpack.c.l.b16 %v2361
        %v2468 = vunpack.c.l.b16 %v2362
        %v2469 = vunpack.c.l.b16 %v2363
        %v2470 = vpack.c.b16 %v2467, %v2466
        %v2471 = vpack.c.b16 %v2469, %v2468
        %v2475 = vsel %vm1394, %v2356, 0
        %v2478 = vsel %vm1394, %v2357, 0
        %v2481 = vsel %vm1394, %v2358, 0
        %v2484 = vsel %vm1394, %v2359, 0
        %2486 = vmatprep.subr.bf16.mxu0 0
        %2487 = vmatpush1.bf16.msra.mxu0 0
        %2488 = vmatprep.subr.bf16.mxu0 0
        %2489 = vmatpush1.bf16.msra.mxu0 0
        %2490 = vmatprep.subr.bf16.mxu0 0
        %2491 = vmatpush1.bf16.msra.mxu0 0
        %2492 = vmatprep.subr.bf16.mxu0 0
        %2493 = vmatpush1.bf16.msra.mxu0 0
        %2494 = vmatprep.subr.bf16.mxu0 0
        %2495 = vmatpush1.bf16.msra.mxu0 0
        %2496 = vmatprep.subr.bf16.mxu0 0
        %2497 = vmatpush1.bf16.msra.mxu0 0
        %2498 = vmatprep.subr.bf16.mxu0 0
        %2499 = vmatpush1.bf16.msra.mxu0 %v2471
        %2500 = vmatprep.subr.bf16.mxu0 0
        %2501 = vmatpush1.bf16.msra.mxu0 %v2470
        %2502 = vmatprep.subr.bf16.mxu0 0
        %2503 = vmatpush2.bf16.msra.mxu0 0
        %2504 = vmatprep.subr.bf16.mxu0 0
        %2505 = vmatpush2.bf16.msra.mxu0 0
        %2506 = vmatprep.subr.bf16.mxu0 0
        %2507 = vmatpush2.bf16.msra.mxu0 0
        %2508 = vmatprep.subr.bf16.mxu0 0
        %2509 = vmatpush2.bf16.msra.mxu0 0
        %2510 = vmatprep.subr.bf16.mxu0 0
        %2511 = vmatpush2.bf16.msra.mxu0 0
        %2512 = vmatprep.subr.bf16.mxu0 0
        %2513 = vmatpush2.bf16.msra.mxu0 0
        %2514 = vmatprep.subr.bf16.mxu0 0
        %2515 = vmatpush2.bf16.msra.mxu0 0
        %2516 = vmatprep.subr.bf16.mxu0 0
        %2517 = vmatpush2.bf16.msra.mxu0 0
        %2518 = vmatprep.mubr.bf16.mxu0 0
        %2519 = vmatmul.mubr.bf16.gmra.mxu0 %v2475
        %v2520 = vpop.f32.mrf.mxu0
        %v2521 = vadd.f32 %v2432, %v2520
        %v2522 = vpop.f32.mrf.mxu0
        %v2523 = vpop.f32.mrf.mxu0
        %v2524 = vadd.f32 %v2435, %v2523
        %v2525 = vpop.f32.mrf.mxu0
        %2526 = vmatprep.mubr.bf16.mxu0 0
        %2527 = vmatmul.mubr.bf16.gmra.mxu0 %v2478
        %v2528 = vpop.f32.mrf.mxu0
        %v2529 = vadd.f32 %v2440, %v2528
        %v2530 = vpop.f32.mrf.mxu0
        %v2531 = vpop.f32.mrf.mxu0
        %v2532 = vadd.f32 %v2443, %v2531
        %v2533 = vpop.f32.mrf.mxu0
        %2534 = vmatprep.mubr.bf16.mxu0 0
        %2535 = vmatmul.mubr.bf16.gmra.mxu0 %v2481
        %v2536 = vpop.f32.mrf.mxu0
        %v2537 = vadd.f32 %v2448, %v2536
        %v2538 = vpop.f32.mrf.mxu0
        %v2539 = vpop.f32.mrf.mxu0
        %v2540 = vadd.f32 %v2451, %v2539
        %v2541 = vpop.f32.mrf.mxu0
        %2542 = vmatprep.mubr.bf16.mxu0 0
        %2543 = vmatmul.mubr.bf16.gmra.mxu0 %v2484
        %v2544 = vpop.f32.mrf.mxu0
        %v2545 = vadd.f32 %v2456, %v2544
        %v2546 = vpop.f32.mrf.mxu0
        %v2547 = vpop.f32.mrf.mxu0
        %v2548 = vadd.f32 %v2459, %v2547
        %v2549 = vpop.f32.mrf.mxu0
        %2550 = vdwg.mxu0
        %s2551 = scalar_lea.vmem %s5, 96
        %v2552 = vld [vmem:[%s2551] sm:$0xf]
        %v2553 = vld [vmem:[%s2551 + $0x4] sm:$0xf]
        %v2554 = vld [vmem:[%s2551 + $0x8] sm:$0xf]
        %v2555 = vld [vmem:[%s2551 + $0xc] sm:$0xf]
        %v2560 = vunpack.c.l.b16 %v2552
        %v2561 = vunpack.c.l.b16 %v2553
        %v2562 = vunpack.c.l.b16 %v2554
        %v2563 = vunpack.c.l.b16 %v2555
        %v2564 = vpack.c.b16 %v2561, %v2560
        %v2565 = vpack.c.b16 %v2563, %v2562
        %2568 = vmatprep.subr.bf16.mxu0 0
        %2569 = vmatpush1.bf16.msra.mxu0 0
        %2570 = vmatprep.subr.bf16.mxu0 0
        %2571 = vmatpush1.bf16.msra.mxu0 0
        %2572 = vmatprep.subr.bf16.mxu0 0
        %2573 = vmatpush1.bf16.msra.mxu0 0
        %2574 = vmatprep.subr.bf16.mxu0 0
        %2575 = vmatpush1.bf16.msra.mxu0 0
        %2576 = vmatprep.subr.bf16.mxu0 0
        %2577 = vmatpush1.bf16.msra.mxu0 0
        %2578 = vmatprep.subr.bf16.mxu0 0
        %2579 = vmatpush1.bf16.msra.mxu0 0
        %2580 = vmatprep.subr.bf16.mxu0 0
        %2581 = vmatpush1.bf16.msra.mxu0 %v2565
        %2582 = vmatprep.subr.bf16.mxu0 0
        %2583 = vmatpush1.bf16.msra.mxu0 %v2564
        %2584 = vmatprep.subr.bf16.mxu0 0
        %2585 = vmatpush2.bf16.msra.mxu0 0
        %2586 = vmatprep.subr.bf16.mxu0 0
        %2587 = vmatpush2.bf16.msra.mxu0 0
        %2588 = vmatprep.subr.bf16.mxu0 0
        %2589 = vmatpush2.bf16.msra.mxu0 0
        %2590 = vmatprep.subr.bf16.mxu0 0
        %2591 = vmatpush2.bf16.msra.mxu0 0
        %2592 = vmatprep.subr.bf16.mxu0 0
        %2593 = vmatpush2.bf16.msra.mxu0 0
        %2594 = vmatprep.subr.bf16.mxu0 0
        %2595 = vmatpush2.bf16.msra.mxu0 0
        %2596 = vmatprep.subr.bf16.mxu0 0
        %2597 = vmatpush2.bf16.msra.mxu0 0
        %2598 = vmatprep.subr.bf16.mxu0 0
        %2599 = vmatpush2.bf16.msra.mxu0 0
        %2600 = vmatprep.mubr.bf16.mxu0 0
        %2601 = vmatmul.mubr.bf16.gmra.mxu0 %v2478
        %v2602 = vpop.f32.mrf.mxu0
        %v2603 = vadd.f32 0.0, %v2602
        %v2604 = vpop.f32.mrf.mxu0
        %v2605 = vpop.f32.mrf.mxu0
        %v2606 = vadd.f32 0.0, %v2605
        %v2607 = vpop.f32.mrf.mxu0
        %2608 = vmatprep.mubr.bf16.mxu0 0
        %2609 = vmatmul.mubr.bf16.gmra.mxu0 %v2481
        %v2610 = vpop.f32.mrf.mxu0
        %v2611 = vadd.f32 0.0, %v2610
        %v2612 = vpop.f32.mrf.mxu0
        %v2613 = vpop.f32.mrf.mxu0
        %v2614 = vadd.f32 0.0, %v2613
        %v2615 = vpop.f32.mrf.mxu0
        %2616 = vmatprep.mubr.bf16.mxu0 0
        %2617 = vmatmul.mubr.bf16.gmra.mxu0 %v2484
        %v2618 = vpop.f32.mrf.mxu0
        %v2619 = vadd.f32 0.0, %v2618
        %v2620 = vpop.f32.mrf.mxu0
        %v2621 = vpop.f32.mrf.mxu0
        %v2622 = vadd.f32 0.0, %v2621
        %v2623 = vpop.f32.mrf.mxu0
        %2624 = vmatprep.mubr.bf16.mxu0 0
        %2625 = vmatmul.mubr.bf16.gmra.mxu0 %v2475
        %v2626 = vpop.f32.mrf.mxu0
        %v2627 = vadd.f32 0.0, %v2626
        %v2628 = vpop.f32.mrf.mxu0
        %v2629 = vpop.f32.mrf.mxu0
        %v2630 = vadd.f32 0.0, %v2629
        %v2631 = vpop.f32.mrf.mxu0
        %2632 = vdwg.mxu0
        %v2633 = vadd.f32 %v2521, %v2603
        %v2634 = vadd.f32 %v2524, %v2606
        %v2635 = vadd.f32 %v2529, %v2611
        %v2636 = vadd.f32 %v2532, %v2614
        %v2637 = vadd.f32 %v2537, %v2619
        %v2638 = vadd.f32 %v2540, %v2622
        %v2639 = vadd.f32 %v2545, %v2627
        %v2640 = vadd.f32 %v2548, %v2630
        %v2641 = vpack.c.bf16 %v2316, %v2323
        %v2642 = vpack.c.bf16 %v2318, %v2317
        %v2643 = vpack.c.bf16 %v2320, %v2319
        %v2644 = vpack.c.bf16 %v2322, %v2321
        %s2645 = scalar_lea.vmem %s5, 16
        %v2646 = vld [vmem:[%s2645] sm:$0xf]
        %v2647 = vld [vmem:[%s2645 + $0x4] sm:$0xf]
        %v2648 = vld [vmem:[%s2645 + $0x8] sm:$0xf]
        %v2649 = vld [vmem:[%s2645 + $0xc] sm:$0xf]
        %v2654 = vunpack.c.l.b16 %v2646
        %v2655 = vunpack.c.l.b16 %v2647
        %v2656 = vunpack.c.l.b16 %v2648
        %v2657 = vunpack.c.l.b16 %v2649
        %v2658 = vpack.c.b16 %v2655, %v2654
        %v2659 = vpack.c.b16 %v2657, %v2656
        %v2663 = vsel %vm1394, %v2641, 0
        %v2666 = vsel %vm1394, %v2642, 0
        %v2669 = vsel %vm1394, %v2643, 0
        %v2672 = vsel %vm1394, %v2644, 0
        %2674 = vmatprep.subr.bf16.mxu0 0
        %2675 = vmatpush1.bf16.msra.mxu0 0
        %2676 = vmatprep.subr.bf16.mxu0 0
        %2677 = vmatpush1.bf16.msra.mxu0 0
        %2678 = vmatprep.subr.bf16.mxu0 0
        %2679 = vmatpush1.bf16.msra.mxu0 0
        %2680 = vmatprep.subr.bf16.mxu0 0
        %2681 = vmatpush1.bf16.msra.mxu0 0
        %2682 = vmatprep.subr.bf16.mxu0 0
        %2683 = vmatpush1.bf16.msra.mxu0 0
        %2684 = vmatprep.subr.bf16.mxu0 0
        %2685 = vmatpush1.bf16.msra.mxu0 0
        %2686 = vmatprep.subr.bf16.mxu0 0
        %2687 = vmatpush1.bf16.msra.mxu0 %v2659
        %2688 = vmatprep.subr.bf16.mxu0 0
        %2689 = vmatpush1.bf16.msra.mxu0 %v2658
        %2690 = vmatprep.subr.bf16.mxu0 0
        %2691 = vmatpush2.bf16.msra.mxu0 0
        %2692 = vmatprep.subr.bf16.mxu0 0
        %2693 = vmatpush2.bf16.msra.mxu0 0
        %2694 = vmatprep.subr.bf16.mxu0 0
        %2695 = vmatpush2.bf16.msra.mxu0 0
        %2696 = vmatprep.subr.bf16.mxu0 0
        %2697 = vmatpush2.bf16.msra.mxu0 0
        %2698 = vmatprep.subr.bf16.mxu0 0
        %2699 = vmatpush2.bf16.msra.mxu0 0
        %2700 = vmatprep.subr.bf16.mxu0 0
        %2701 = vmatpush2.bf16.msra.mxu0 0
        %2702 = vmatprep.subr.bf16.mxu0 0
        %2703 = vmatpush2.bf16.msra.mxu0 0
        %2704 = vmatprep.subr.bf16.mxu0 0
        %2705 = vmatpush2.bf16.msra.mxu0 0
        %2706 = vmatprep.mubr.bf16.mxu0 0
        %2707 = vmatmul.mubr.bf16.gmra.mxu0 %v2663
        %v2708 = vpop.f32.mrf.mxu0
        %v2709 = vadd.f32 0.0, %v2708
        %v2710 = vpop.f32.mrf.mxu0
        %v2711 = vpop.f32.mrf.mxu0
        %v2712 = vadd.f32 0.0, %v2711
        %v2713 = vpop.f32.mrf.mxu0
        %2714 = vmatprep.mubr.bf16.mxu0 0
        %2715 = vmatmul.mubr.bf16.gmra.mxu0 %v2666
        %v2716 = vpop.f32.mrf.mxu0
        %v2717 = vadd.f32 0.0, %v2716
        %v2718 = vpop.f32.mrf.mxu0
        %v2719 = vpop.f32.mrf.mxu0
        %v2720 = vadd.f32 0.0, %v2719
        %v2721 = vpop.f32.mrf.mxu0
        %2722 = vmatprep.mubr.bf16.mxu0 0
        %2723 = vmatmul.mubr.bf16.gmra.mxu0 %v2669
        %v2724 = vpop.f32.mrf.mxu0
        %v2725 = vadd.f32 0.0, %v2724
        %v2726 = vpop.f32.mrf.mxu0
        %v2727 = vpop.f32.mrf.mxu0
        %v2728 = vadd.f32 0.0, %v2727
        %v2729 = vpop.f32.mrf.mxu0
        %2730 = vmatprep.mubr.bf16.mxu0 0
        %2731 = vmatmul.mubr.bf16.gmra.mxu0 %v2672
        %v2732 = vpop.f32.mrf.mxu0
        %v2733 = vadd.f32 0.0, %v2732
        %v2734 = vpop.f32.mrf.mxu0
        %v2735 = vpop.f32.mrf.mxu0
        %v2736 = vadd.f32 0.0, %v2735
        %v2737 = vpop.f32.mrf.mxu0
        %2738 = vdwg.mxu0
        %v2739 = vadd.f32 %v2633, %v2709
        %v2740 = vadd.f32 %v2634, %v2712
        %v2741 = vadd.f32 %v2635, %v2717
        %v2742 = vadd.f32 %v2636, %v2720
        %v2743 = vadd.f32 %v2637, %v2725
        %v2744 = vadd.f32 %v2638, %v2728
        %v2745 = vadd.f32 %v2639, %v2733
        %v2746 = vadd.f32 %v2640, %v2736
        %v2747 = vpack.c.bf16 %v2317, %v2316
        %v2748 = vpack.c.bf16 %v2319, %v2318
        %v2749 = vpack.c.bf16 %v2321, %v2320
        %v2750 = vpack.c.bf16 %v2323, %v2322
        %s2751 = scalar_lea.vmem %s5, 64
        %v2752 = vld [vmem:[%s2751] sm:$0xf]
        %v2753 = vld [vmem:[%s2751 + $0x4] sm:$0xf]
        %v2754 = vld [vmem:[%s2751 + $0x8] sm:$0xf]
        %v2755 = vld [vmem:[%s2751 + $0xc] sm:$0xf]
        %v2760 = vunpack.c.l.b16 %v2752
        %v2761 = vunpack.c.l.b16 %v2753
        %v2762 = vunpack.c.l.b16 %v2754
        %v2763 = vunpack.c.l.b16 %v2755
        %v2764 = vpack.c.b16 %v2761, %v2760
        %v2765 = vpack.c.b16 %v2763, %v2762
        %v2769 = vsel %vm1394, %v2747, 0
        %v2772 = vsel %vm1394, %v2748, 0
        %v2775 = vsel %vm1394, %v2749, 0
        %v2778 = vsel %vm1394, %v2750, 0
        %2780 = vmatprep.subr.bf16.mxu0 0
        %2781 = vmatpush1.bf16.msra.mxu0 0
        %2782 = vmatprep.subr.bf16.mxu0 0
        %2783 = vmatpush1.bf16.msra.mxu0 0
        %2784 = vmatprep.subr.bf16.mxu0 0
        %2785 = vmatpush1.bf16.msra.mxu0 0
        %2786 = vmatprep.subr.bf16.mxu0 0
        %2787 = vmatpush1.bf16.msra.mxu0 0
        %2788 = vmatprep.subr.bf16.mxu0 0
        %2789 = vmatpush1.bf16.msra.mxu0 0
        %2790 = vmatprep.subr.bf16.mxu0 0
        %2791 = vmatpush1.bf16.msra.mxu0 0
        %2792 = vmatprep.subr.bf16.mxu0 0
        %2793 = vmatpush1.bf16.msra.mxu0 %v2765
        %2794 = vmatprep.subr.bf16.mxu0 0
        %2795 = vmatpush1.bf16.msra.mxu0 %v2764
        %2796 = vmatprep.subr.bf16.mxu0 0
        %2797 = vmatpush2.bf16.msra.mxu0 0
        %2798 = vmatprep.subr.bf16.mxu0 0
        %2799 = vmatpush2.bf16.msra.mxu0 0
        %2800 = vmatprep.subr.bf16.mxu0 0
        %2801 = vmatpush2.bf16.msra.mxu0 0
        %2802 = vmatprep.subr.bf16.mxu0 0
        %2803 = vmatpush2.bf16.msra.mxu0 0
        %2804 = vmatprep.subr.bf16.mxu0 0
        %2805 = vmatpush2.bf16.msra.mxu0 0
        %2806 = vmatprep.subr.bf16.mxu0 0
        %2807 = vmatpush2.bf16.msra.mxu0 0
        %2808 = vmatprep.subr.bf16.mxu0 0
        %2809 = vmatpush2.bf16.msra.mxu0 0
        %2810 = vmatprep.subr.bf16.mxu0 0
        %2811 = vmatpush2.bf16.msra.mxu0 0
        %2812 = vmatprep.mubr.bf16.mxu0 0
        %2813 = vmatmul.mubr.bf16.gmra.mxu0 %v2769
        %v2814 = vpop.f32.mrf.mxu0
        %v2815 = vadd.f32 0.0, %v2814
        %v2816 = vpop.f32.mrf.mxu0
        %v2817 = vpop.f32.mrf.mxu0
        %v2818 = vadd.f32 0.0, %v2817
        %v2819 = vpop.f32.mrf.mxu0
        %2820 = vmatprep.mubr.bf16.mxu0 0
        %2821 = vmatmul.mubr.bf16.gmra.mxu0 %v2772
        %v2822 = vpop.f32.mrf.mxu0
        %v2823 = vadd.f32 0.0, %v2822
        %v2824 = vpop.f32.mrf.mxu0
        %v2825 = vpop.f32.mrf.mxu0
        %v2826 = vadd.f32 0.0, %v2825
        %v2827 = vpop.f32.mrf.mxu0
        %2828 = vmatprep.mubr.bf16.mxu0 0
        %2829 = vmatmul.mubr.bf16.gmra.mxu0 %v2775
        %v2830 = vpop.f32.mrf.mxu0
        %v2831 = vadd.f32 0.0, %v2830
        %v2832 = vpop.f32.mrf.mxu0
        %v2833 = vpop.f32.mrf.mxu0
        %v2834 = vadd.f32 0.0, %v2833
        %v2835 = vpop.f32.mrf.mxu0
        %2836 = vmatprep.mubr.bf16.mxu0 0
        %2837 = vmatmul.mubr.bf16.gmra.mxu0 %v2778
        %v2838 = vpop.f32.mrf.mxu0
        %v2839 = vadd.f32 0.0, %v2838
        %v2840 = vpop.f32.mrf.mxu0
        %v2841 = vpop.f32.mrf.mxu0
        %v2842 = vadd.f32 0.0, %v2841
        %v2843 = vpop.f32.mrf.mxu0
        %2844 = vdwg.mxu0
        %v2845 = vadd.f32 %v2739, %v2815
        %v2846 = vadd.f32 %v2740, %v2818
        %v2847 = vadd.f32 %v2741, %v2823
        %v2848 = vadd.f32 %v2742, %v2826
        %v2849 = vadd.f32 %v2743, %v2831
        %v2850 = vadd.f32 %v2744, %v2834
        %v2851 = vadd.f32 %v2745, %v2839
        %v2852 = vadd.f32 %v2746, %v2842
        %s2853 = scalar_lea.vmem %s5, 112
        %v2854 = vld [vmem:[%s2853] sm:$0xf]
        %v2855 = vld [vmem:[%s2853 + $0x4] sm:$0xf]
        %v2856 = vld [vmem:[%s2853 + $0x8] sm:$0xf]
        %v2857 = vld [vmem:[%s2853 + $0xc] sm:$0xf]
        %v2862 = vunpack.c.l.b16 %v2854
        %v2863 = vunpack.c.l.b16 %v2855
        %v2864 = vunpack.c.l.b16 %v2856
        %v2865 = vunpack.c.l.b16 %v2857
        %v2866 = vpack.c.b16 %v2863, %v2862
        %v2867 = vpack.c.b16 %v2865, %v2864
        %2870 = vmatprep.subr.bf16.mxu0 0
        %2871 = vmatpush1.bf16.msra.mxu0 0
        %2872 = vmatprep.subr.bf16.mxu0 0
        %2873 = vmatpush1.bf16.msra.mxu0 0
        %2874 = vmatprep.subr.bf16.mxu0 0
        %2875 = vmatpush1.bf16.msra.mxu0 0
        %2876 = vmatprep.subr.bf16.mxu0 0
        %2877 = vmatpush1.bf16.msra.mxu0 0
        %2878 = vmatprep.subr.bf16.mxu0 0
        %2879 = vmatpush1.bf16.msra.mxu0 0
        %2880 = vmatprep.subr.bf16.mxu0 0
        %2881 = vmatpush1.bf16.msra.mxu0 0
        %2882 = vmatprep.subr.bf16.mxu0 0
        %2883 = vmatpush1.bf16.msra.mxu0 %v2867
        %2884 = vmatprep.subr.bf16.mxu0 0
        %2885 = vmatpush1.bf16.msra.mxu0 %v2866
        %2886 = vmatprep.subr.bf16.mxu0 0
        %2887 = vmatpush2.bf16.msra.mxu0 0
        %2888 = vmatprep.subr.bf16.mxu0 0
        %2889 = vmatpush2.bf16.msra.mxu0 0
        %2890 = vmatprep.subr.bf16.mxu0 0
        %2891 = vmatpush2.bf16.msra.mxu0 0
        %2892 = vmatprep.subr.bf16.mxu0 0
        %2893 = vmatpush2.bf16.msra.mxu0 0
        %2894 = vmatprep.subr.bf16.mxu0 0
        %2895 = vmatpush2.bf16.msra.mxu0 0
        %2896 = vmatprep.subr.bf16.mxu0 0
        %2897 = vmatpush2.bf16.msra.mxu0 0
        %2898 = vmatprep.subr.bf16.mxu0 0
        %2899 = vmatpush2.bf16.msra.mxu0 0
        %2900 = vmatprep.subr.bf16.mxu0 0
        %2901 = vmatpush2.bf16.msra.mxu0 0
        %2902 = vmatprep.mubr.bf16.mxu0 0
        %2903 = vmatmul.mubr.bf16.gmra.mxu0 %v2666
        %v2904 = vpop.f32.mrf.mxu0
        %v2905 = vadd.f32 0.0, %v2904
        %v2906 = vpop.f32.mrf.mxu0
        %v2907 = vpop.f32.mrf.mxu0
        %v2908 = vadd.f32 0.0, %v2907
        %v2909 = vpop.f32.mrf.mxu0
        %2910 = vmatprep.mubr.bf16.mxu0 0
        %2911 = vmatmul.mubr.bf16.gmra.mxu0 %v2669
        %v2912 = vpop.f32.mrf.mxu0
        %v2913 = vadd.f32 0.0, %v2912
        %v2914 = vpop.f32.mrf.mxu0
        %v2915 = vpop.f32.mrf.mxu0
        %v2916 = vadd.f32 0.0, %v2915
        %v2917 = vpop.f32.mrf.mxu0
        %2918 = vmatprep.mubr.bf16.mxu0 0
        %2919 = vmatmul.mubr.bf16.gmra.mxu0 %v2672
        %v2920 = vpop.f32.mrf.mxu0
        %v2921 = vadd.f32 0.0, %v2920
        %v2922 = vpop.f32.mrf.mxu0
        %v2923 = vpop.f32.mrf.mxu0
        %v2924 = vadd.f32 0.0, %v2923
        %v2925 = vpop.f32.mrf.mxu0
        %2926 = vmatprep.mubr.bf16.mxu0 0
        %2927 = vmatmul.mubr.bf16.gmra.mxu0 %v2663
        %v2928 = vpop.f32.mrf.mxu0
        %v2929 = vadd.f32 0.0, %v2928
        %v2930 = vpop.f32.mrf.mxu0
        %v2931 = vpop.f32.mrf.mxu0
        %v2932 = vadd.f32 0.0, %v2931
        %v2933 = vpop.f32.mrf.mxu0
        %2934 = vdwg.mxu0
        %v2935 = vadd.f32 %v2845, %v2905
        %v2936 = vadd.f32 %v2846, %v2908
        %v2937 = vadd.f32 %v2847, %v2913
        %v2938 = vadd.f32 %v2848, %v2916
        %v2939 = vadd.f32 %v2849, %v2921
        %v2940 = vadd.f32 %v2850, %v2924
        %v2941 = vadd.f32 %v2851, %v2929
        %v2942 = vadd.f32 %v2852, %v2932
        %v2943 = vrot.slane %v2316, 1
        %v2944 = vrot.slane %v2317, 1
        %v2945 = vrot.slane %v2318, 1
        %v2946 = vrot.slane %v2319, 1
        %v2947 = vrot.slane %v2320, 1
        %v2948 = vrot.slane %v2321, 1
        %v2949 = vrot.slane %v2322, 1
        %v2950 = vrot.slane %v2323, 1
        %v2959 = vsel %vm1013, %v2943, %v2943
        %v2960 = vsel %vm1013, %v2944, %v2944
        %v2961 = vsel %vm1013, %v2945, %v2945
        %v2962 = vsel %vm1013, %v2946, %v2946
        %v2963 = vsel %vm1013, %v2947, %v2947
        %v2964 = vsel %vm1013, %v2948, %v2948
        %v2965 = vsel %vm1013, %v2949, %v2949
        %v2966 = vsel %vm1013, %v2950, %v2950
        %v2967 = vpack.c.bf16 %v2959, %v2966
        %v2968 = vpack.c.bf16 %v2961, %v2960
        %v2969 = vpack.c.bf16 %v2963, %v2962
        %v2970 = vpack.c.bf16 %v2965, %v2964
        %s2971 = scalar_lea.vmem %s5, 32
        %v2972 = vld [vmem:[%s2971] sm:$0xf]
        %v2973 = vld [vmem:[%s2971 + $0x4] sm:$0xf]
        %v2974 = vld [vmem:[%s2971 + $0x8] sm:$0xf]
        %v2975 = vld [vmem:[%s2971 + $0xc] sm:$0xf]
        %v2980 = vunpack.c.l.b16 %v2972
        %v2981 = vunpack.c.l.b16 %v2973
        %v2982 = vunpack.c.l.b16 %v2974
        %v2983 = vunpack.c.l.b16 %v2975
        %v2984 = vpack.c.b16 %v2981, %v2980
        %v2985 = vpack.c.b16 %v2983, %v2982
        %v2989 = vsel %vm1394, %v2967, 0
        %v2992 = vsel %vm1394, %v2968, 0
        %v2995 = vsel %vm1394, %v2969, 0
        %v2998 = vsel %vm1394, %v2970, 0
        %3000 = vmatprep.subr.bf16.mxu0 0
        %3001 = vmatpush1.bf16.msra.mxu0 0
        %3002 = vmatprep.subr.bf16.mxu0 0
        %3003 = vmatpush1.bf16.msra.mxu0 0
        %3004 = vmatprep.subr.bf16.mxu0 0
        %3005 = vmatpush1.bf16.msra.mxu0 0
        %3006 = vmatprep.subr.bf16.mxu0 0
        %3007 = vmatpush1.bf16.msra.mxu0 0
        %3008 = vmatprep.subr.bf16.mxu0 0
        %3009 = vmatpush1.bf16.msra.mxu0 0
        %3010 = vmatprep.subr.bf16.mxu0 0
        %3011 = vmatpush1.bf16.msra.mxu0 0
        %3012 = vmatprep.subr.bf16.mxu0 0
        %3013 = vmatpush1.bf16.msra.mxu0 %v2985
        %3014 = vmatprep.subr.bf16.mxu0 0
        %3015 = vmatpush1.bf16.msra.mxu0 %v2984
        %3016 = vmatprep.subr.bf16.mxu0 0
        %3017 = vmatpush2.bf16.msra.mxu0 0
        %3018 = vmatprep.subr.bf16.mxu0 0
        %3019 = vmatpush2.bf16.msra.mxu0 0
        %3020 = vmatprep.subr.bf16.mxu0 0
        %3021 = vmatpush2.bf16.msra.mxu0 0
        %3022 = vmatprep.subr.bf16.mxu0 0
        %3023 = vmatpush2.bf16.msra.mxu0 0
        %3024 = vmatprep.subr.bf16.mxu0 0
        %3025 = vmatpush2.bf16.msra.mxu0 0
        %3026 = vmatprep.subr.bf16.mxu0 0
        %3027 = vmatpush2.bf16.msra.mxu0 0
        %3028 = vmatprep.subr.bf16.mxu0 0
        %3029 = vmatpush2.bf16.msra.mxu0 0
        %3030 = vmatprep.subr.bf16.mxu0 0
        %3031 = vmatpush2.bf16.msra.mxu0 0
        %3032 = vmatprep.mubr.bf16.mxu0 0
        %3033 = vmatmul.mubr.bf16.gmra.mxu0 %v2989
        %v3034 = vpop.f32.mrf.mxu0
        %v3035 = vadd.f32 0.0, %v3034
        %v3036 = vpop.f32.mrf.mxu0
        %v3037 = vpop.f32.mrf.mxu0
        %v3038 = vadd.f32 0.0, %v3037
        %v3039 = vpop.f32.mrf.mxu0
        %3040 = vmatprep.mubr.bf16.mxu0 0
        %3041 = vmatmul.mubr.bf16.gmra.mxu0 %v2992
        %v3042 = vpop.f32.mrf.mxu0
        %v3043 = vadd.f32 0.0, %v3042
        %v3044 = vpop.f32.mrf.mxu0
        %v3045 = vpop.f32.mrf.mxu0
        %v3046 = vadd.f32 0.0, %v3045
        %v3047 = vpop.f32.mrf.mxu0
        %3048 = vmatprep.mubr.bf16.mxu0 0
        %3049 = vmatmul.mubr.bf16.gmra.mxu0 %v2995
        %v3050 = vpop.f32.mrf.mxu0
        %v3051 = vadd.f32 0.0, %v3050
        %v3052 = vpop.f32.mrf.mxu0
        %v3053 = vpop.f32.mrf.mxu0
        %v3054 = vadd.f32 0.0, %v3053
        %v3055 = vpop.f32.mrf.mxu0
        %3056 = vmatprep.mubr.bf16.mxu0 0
        %3057 = vmatmul.mubr.bf16.gmra.mxu0 %v2998
        %v3058 = vpop.f32.mrf.mxu0
        %v3059 = vadd.f32 0.0, %v3058
        %v3060 = vpop.f32.mrf.mxu0
        %v3061 = vpop.f32.mrf.mxu0
        %v3062 = vadd.f32 0.0, %v3061
        %v3063 = vpop.f32.mrf.mxu0
        %3064 = vdwg.mxu0
        %v3065 = vadd.f32 %v2935, %v3035
        %v3066 = vadd.f32 %v2936, %v3038
        %v3067 = vadd.f32 %v2937, %v3043
        %v3068 = vadd.f32 %v2938, %v3046
        %v3069 = vadd.f32 %v2939, %v3051
        %v3070 = vadd.f32 %v2940, %v3054
        %v3071 = vadd.f32 %v2941, %v3059
        %v3072 = vadd.f32 %v2942, %v3062
        %v3073 = vpack.c.bf16 %v2960, %v2959
        %v3074 = vpack.c.bf16 %v2962, %v2961
        %v3075 = vpack.c.bf16 %v2964, %v2963
        %v3076 = vpack.c.bf16 %v2966, %v2965
        %s3077 = scalar_lea.vmem %s5, 80
        %v3078 = vld [vmem:[%s3077] sm:$0xf]
        %v3079 = vld [vmem:[%s3077 + $0x4] sm:$0xf]
        %v3080 = vld [vmem:[%s3077 + $0x8] sm:$0xf]
        %v3081 = vld [vmem:[%s3077 + $0xc] sm:$0xf]
        %v3086 = vunpack.c.l.b16 %v3078
        %v3087 = vunpack.c.l.b16 %v3079
        %v3088 = vunpack.c.l.b16 %v3080
        %v3089 = vunpack.c.l.b16 %v3081
        %v3090 = vpack.c.b16 %v3087, %v3086
        %v3091 = vpack.c.b16 %v3089, %v3088
        %v3095 = vsel %vm1394, %v3073, 0
        %v3098 = vsel %vm1394, %v3074, 0
        %v3101 = vsel %vm1394, %v3075, 0
        %v3104 = vsel %vm1394, %v3076, 0
        %3106 = vmatprep.subr.bf16.mxu0 0
        %3107 = vmatpush1.bf16.msra.mxu0 0
        %3108 = vmatprep.subr.bf16.mxu0 0
        %3109 = vmatpush1.bf16.msra.mxu0 0
        %3110 = vmatprep.subr.bf16.mxu0 0
        %3111 = vmatpush1.bf16.msra.mxu0 0
        %3112 = vmatprep.subr.bf16.mxu0 0
        %3113 = vmatpush1.bf16.msra.mxu0 0
        %3114 = vmatprep.subr.bf16.mxu0 0
        %3115 = vmatpush1.bf16.msra.mxu0 0
        %3116 = vmatprep.subr.bf16.mxu0 0
        %3117 = vmatpush1.bf16.msra.mxu0 0
        %3118 = vmatprep.subr.bf16.mxu0 0
        %3119 = vmatpush1.bf16.msra.mxu0 %v3091
        %3120 = vmatprep.subr.bf16.mxu0 0
        %3121 = vmatpush1.bf16.msra.mxu0 %v3090
        %3122 = vmatprep.subr.bf16.mxu0 0
        %3123 = vmatpush2.bf16.msra.mxu0 0
        %3124 = vmatprep.subr.bf16.mxu0 0
        %3125 = vmatpush2.bf16.msra.mxu0 0
        %3126 = vmatprep.subr.bf16.mxu0 0
        %3127 = vmatpush2.bf16.msra.mxu0 0
        %3128 = vmatprep.subr.bf16.mxu0 0
        %3129 = vmatpush2.bf16.msra.mxu0 0
        %3130 = vmatprep.subr.bf16.mxu0 0
        %3131 = vmatpush2.bf16.msra.mxu0 0
        %3132 = vmatprep.subr.bf16.mxu0 0
        %3133 = vmatpush2.bf16.msra.mxu0 0
        %3134 = vmatprep.subr.bf16.mxu0 0
        %3135 = vmatpush2.bf16.msra.mxu0 0
        %3136 = vmatprep.subr.bf16.mxu0 0
        %3137 = vmatpush2.bf16.msra.mxu0 0
        %3138 = vmatprep.mubr.bf16.mxu0 0
        %3139 = vmatmul.mubr.bf16.gmra.mxu0 %v3095
        %v3140 = vpop.f32.mrf.mxu0
        %v3141 = vadd.f32 0.0, %v3140
        %v3142 = vpop.f32.mrf.mxu0
        %v3143 = vpop.f32.mrf.mxu0
        %v3144 = vadd.f32 0.0, %v3143
        %v3145 = vpop.f32.mrf.mxu0
        %3146 = vmatprep.mubr.bf16.mxu0 0
        %3147 = vmatmul.mubr.bf16.gmra.mxu0 %v3098
        %v3148 = vpop.f32.mrf.mxu0
        %v3149 = vadd.f32 0.0, %v3148
        %v3150 = vpop.f32.mrf.mxu0
        %v3151 = vpop.f32.mrf.mxu0
        %v3152 = vadd.f32 0.0, %v3151
        %v3153 = vpop.f32.mrf.mxu0
        %3154 = vmatprep.mubr.bf16.mxu0 0
        %3155 = vmatmul.mubr.bf16.gmra.mxu0 %v3101
        %v3156 = vpop.f32.mrf.mxu0
        %v3157 = vadd.f32 0.0, %v3156
        %v3158 = vpop.f32.mrf.mxu0
        %v3159 = vpop.f32.mrf.mxu0
        %v3160 = vadd.f32 0.0, %v3159
        %v3161 = vpop.f32.mrf.mxu0
        %3162 = vmatprep.mubr.bf16.mxu0 0
        %3163 = vmatmul.mubr.bf16.gmra.mxu0 %v3104
        %v3164 = vpop.f32.mrf.mxu0
        %v3165 = vadd.f32 0.0, %v3164
        %v3166 = vpop.f32.mrf.mxu0
        %v3167 = vpop.f32.mrf.mxu0
        %v3168 = vadd.f32 0.0, %v3167
        %v3169 = vpop.f32.mrf.mxu0
        %3170 = vdwg.mxu0
        %v3171 = vadd.f32 %v3065, %v3141
        %v3172 = vadd.f32 %v3066, %v3144
        %v3173 = vadd.f32 %v3067, %v3149
        %v3174 = vadd.f32 %v3068, %v3152
        %v3175 = vadd.f32 %v3069, %v3157
        %v3176 = vadd.f32 %v3070, %v3160
        %v3177 = vadd.f32 %v3071, %v3165
        %v3178 = vadd.f32 %v3072, %v3168
        %s3179 = scalar_lea.vmem %s5, 128
        %v3180 = vld [vmem:[%s3179] sm:$0xf]
        %v3181 = vld [vmem:[%s3179 + $0x4] sm:$0xf]
        %v3182 = vld [vmem:[%s3179 + $0x8] sm:$0xf]
        %v3183 = vld [vmem:[%s3179 + $0xc] sm:$0xf]
        %v3188 = vunpack.c.l.b16 %v3180
        %v3189 = vunpack.c.l.b16 %v3181
        %v3190 = vunpack.c.l.b16 %v3182
        %v3191 = vunpack.c.l.b16 %v3183
        %v3192 = vpack.c.b16 %v3189, %v3188
        %v3193 = vpack.c.b16 %v3191, %v3190
        %3196 = vmatprep.subr.bf16.mxu0 0
        %3197 = vmatpush1.bf16.msra.mxu0 0
        %3198 = vmatprep.subr.bf16.mxu0 0
        %3199 = vmatpush1.bf16.msra.mxu0 0
        %3200 = vmatprep.subr.bf16.mxu0 0
        %3201 = vmatpush1.bf16.msra.mxu0 0
        %3202 = vmatprep.subr.bf16.mxu0 0
        %3203 = vmatpush1.bf16.msra.mxu0 0
        %3204 = vmatprep.subr.bf16.mxu0 0
        %3205 = vmatpush1.bf16.msra.mxu0 0
        %3206 = vmatprep.subr.bf16.mxu0 0
        %3207 = vmatpush1.bf16.msra.mxu0 0
        %3208 = vmatprep.subr.bf16.mxu0 0
        %3209 = vmatpush1.bf16.msra.mxu0 %v3193
        %3210 = vmatprep.subr.bf16.mxu0 0
        %3211 = vmatpush1.bf16.msra.mxu0 %v3192
        %3212 = vmatprep.subr.bf16.mxu0 0
        %3213 = vmatpush2.bf16.msra.mxu0 0
        %3214 = vmatprep.subr.bf16.mxu0 0
        %3215 = vmatpush2.bf16.msra.mxu0 0
        %3216 = vmatprep.subr.bf16.mxu0 0
        %3217 = vmatpush2.bf16.msra.mxu0 0
        %3218 = vmatprep.subr.bf16.mxu0 0
        %3219 = vmatpush2.bf16.msra.mxu0 0
        %3220 = vmatprep.subr.bf16.mxu0 0
        %3221 = vmatpush2.bf16.msra.mxu0 0
        %3222 = vmatprep.subr.bf16.mxu0 0
        %3223 = vmatpush2.bf16.msra.mxu0 0
        %3224 = vmatprep.subr.bf16.mxu0 0
        %3225 = vmatpush2.bf16.msra.mxu0 0
        %3226 = vmatprep.subr.bf16.mxu0 0
        %3227 = vmatpush2.bf16.msra.mxu0 0
        %3228 = vmatprep.mubr.bf16.mxu0 0
        %3229 = vmatmul.mubr.bf16.gmra.mxu0 %v2992
        %v3230 = vpop.f32.mrf.mxu0
        %v3231 = vadd.f32 0.0, %v3230
        %v3232 = vpop.f32.mrf.mxu0
        %v3233 = vpop.f32.mrf.mxu0
        %v3234 = vadd.f32 0.0, %v3233
        %v3235 = vpop.f32.mrf.mxu0
        %3236 = vmatprep.mubr.bf16.mxu0 0
        %3237 = vmatmul.mubr.bf16.gmra.mxu0 %v2995
        %v3238 = vpop.f32.mrf.mxu0
        %v3239 = vadd.f32 0.0, %v3238
        %v3240 = vpop.f32.mrf.mxu0
        %v3241 = vpop.f32.mrf.mxu0
        %v3242 = vadd.f32 0.0, %v3241
        %v3243 = vpop.f32.mrf.mxu0
        %3244 = vmatprep.mubr.bf16.mxu0 0
        %3245 = vmatmul.mubr.bf16.gmra.mxu0 %v2998
        %v3246 = vpop.f32.mrf.mxu0
        %v3247 = vadd.f32 0.0, %v3246
        %v3248 = vpop.f32.mrf.mxu0
        %v3249 = vpop.f32.mrf.mxu0
        %v3250 = vadd.f32 0.0, %v3249
        %v3251 = vpop.f32.mrf.mxu0
        %3252 = vmatprep.mubr.bf16.mxu0 0
        %3253 = vmatmul.mubr.bf16.gmra.mxu0 %v2989
        %v3254 = vpop.f32.mrf.mxu0
        %v3255 = vadd.f32 0.0, %v3254
        %v3256 = vpop.f32.mrf.mxu0
        %v3257 = vpop.f32.mrf.mxu0
        %v3258 = vadd.f32 0.0, %v3257
        %v3259 = vpop.f32.mrf.mxu0
        %3260 = vdwg.mxu0
        %v3261 = vadd.f32 %v3171, %v3231
        %v3262 = vadd.f32 %v3172, %v3234
        %v3263 = vadd.f32 %v3173, %v3239
        %v3264 = vadd.f32 %v3174, %v3242
        %v3265 = vadd.f32 %v3175, %v3247
        %v3266 = vadd.f32 %v3176, %v3250
        %v3267 = vadd.f32 %v3177, %v3255
        %v3268 = vadd.f32 %v3178, %v3258
        %v3269 = vld [vmem:[%s6] sm:$0x7]
        %v3270 = vlaneseq
        %v3271 = vshrl.u32 %v3270, 7
        %v3272 = vsub.s32 0, %v3271
        %v3273 = vrot.slane %v3269, %v3272
        %v3274 = vadd.f32 %v3261, %v3273
        %v3275 = vadd.f32 %v3262, %v3273
        %v3276 = vadd.f32 %v3263, %v3273
        %v3277 = vadd.f32 %v3264, %v3273
        %v3278 = vadd.f32 %v3265, %v3273
        %v3279 = vadd.f32 %v3266, %v3273
        %v3280 = vadd.f32 %v3267, %v3273
        %v3281 = vadd.f32 %v3268, %v3273
        %v3282 = vmax.f32 %v3274, 0.0
        %v3283 = vmax.f32 %v3275, 0.0
        %v3284 = vmax.f32 %v3276, 0.0
        %v3285 = vmax.f32 %v3277, 0.0
        %v3286 = vmax.f32 %v3278, 0.0
        %v3287 = vmax.f32 %v3279, 0.0
        %v3288 = vmax.f32 %v3280, 0.0
        %v3289 = vmax.f32 %v3281, 0.0
        %v3290 = vlaneseq
        %v3291 = vshrl.u32 %v3290, 7
        %v3292 = vsub.s32 1, %v3291
        %v3293 = vrot.slane %v3269, %v3292
        %v3294 = vmul.f32 %v3282, %v3293
        %v3295 = vmul.f32 %v3283, %v3293
        %v3296 = vmul.f32 %v3284, %v3293
        %v3297 = vmul.f32 %v3285, %v3293
        %v3298 = vmul.f32 %v3286, %v3293
        %v3299 = vmul.f32 %v3287, %v3293
        %v3300 = vmul.f32 %v3288, %v3293
        %v3301 = vmul.f32 %v3289, %v3293
        %v3302 = vlaneseq
        %v3303 = vshrl.u32 %v3302, 7
        %v3304 = vsub.s32 2, %v3303
        %v3305 = vrot.slane %v3269, %v3304
        %v3306 = vadd.f32 %v3294, %v3305
        %v3307 = vadd.f32 %v3295, %v3305
        %v3308 = vadd.f32 %v3296, %v3305
        %v3309 = vadd.f32 %v3297, %v3305
        %v3310 = vadd.f32 %v3298, %v3305
        %v3311 = vadd.f32 %v3299, %v3305
        %v3312 = vadd.f32 %v3300, %v3305
        %v3313 = vadd.f32 %v3301, %v3305
        %v3322 = vrot.slane %v3306, 7
        %v3323 = vrot.slane %v3307, 7
        %v3324 = vrot.slane %v3308, 7
        %v3325 = vrot.slane %v3309, 7
        %v3326 = vrot.slane %v3310, 7
        %v3327 = vrot.slane %v3311, 7
        %v3328 = vrot.slane %v3312, 7
        %v3329 = vrot.slane %v3313, 7
        %v3338 = vsel %vm471, %v3322, %v3322
        %v3339 = vsel %vm471, %v3323, %v3323
        %v3340 = vsel %vm471, %v3324, %v3324
        %v3341 = vsel %vm471, %v3325, %v3325
        %v3342 = vsel %vm471, %v3326, %v3326
        %v3343 = vsel %vm471, %v3327, %v3327
        %v3344 = vsel %vm471, %v3328, %v3328
        %v3345 = vsel %vm471, %v3329, %v3329
        %v3346 = vpack.c.bf16 %v3338, %v3345
        %v3347 = vpack.c.bf16 %v3340, %v3339
        %v3348 = vpack.c.bf16 %v3342, %v3341
        %v3349 = vpack.c.bf16 %v3344, %v3343
        %v3350 = vld [vmem:[%s7] sm:$0xf]
        %v3351 = vld [vmem:[%s7 + $0x4] sm:$0xf]
        %v3352 = vld [vmem:[%s7 + $0x8] sm:$0xf]
        %v3353 = vld [vmem:[%s7 + $0xc] sm:$0xf]
        %v3354 = vpack.c.bf16 %v3339, %v3338
        %v3355 = vpack.c.bf16 %v3341, %v3340
        %v3356 = vpack.c.bf16 %v3343, %v3342
        %v3357 = vpack.c.bf16 %v3345, %v3344
        %s3358 = scalar_lea.vmem %s7, 48
        %v3359 = vld [vmem:[%s3358] sm:$0xf]
        %v3360 = vld [vmem:[%s3358 + $0x4] sm:$0xf]
        %v3361 = vld [vmem:[%s3358 + $0x8] sm:$0xf]
        %v3362 = vld [vmem:[%s3358 + $0xc] sm:$0xf]
        %v3367 = vunpack.c.l.b16 %v3359
        %v3368 = vunpack.c.l.b16 %v3360
        %v3369 = vunpack.c.l.b16 %v3361
        %v3370 = vunpack.c.l.b16 %v3362
        %v3371 = vpack.c.b16 %v3368, %v3367
        %v3372 = vpack.c.b16 %v3370, %v3369
        %v3376 = vsel %vm1394, %v3354, 0
        %v3379 = vsel %vm1394, %v3355, 0
        %v3382 = vsel %vm1394, %v3356, 0
        %v3385 = vsel %vm1394, %v3357, 0
        %3387 = vmatprep.subr.bf16.mxu0 0
        %3388 = vmatpush1.bf16.msra.mxu0 0
        %3389 = vmatprep.subr.bf16.mxu0 0
        %3390 = vmatpush1.bf16.msra.mxu0 0
        %3391 = vmatprep.subr.bf16.mxu0 0
        %3392 = vmatpush1.bf16.msra.mxu0 0
        %3393 = vmatprep.subr.bf16.mxu0 0
        %3394 = vmatpush1.bf16.msra.mxu0 0
        %3395 = vmatprep.subr.bf16.mxu0 0
        %3396 = vmatpush1.bf16.msra.mxu0 0
        %3397 = vmatprep.subr.bf16.mxu0 0
        %3398 = vmatpush1.bf16.msra.mxu0 0
        %3399 = vmatprep.subr.bf16.mxu0 0
        %3400 = vmatpush1.bf16.msra.mxu0 %v3372
        %3401 = vmatprep.subr.bf16.mxu0 0
        %3402 = vmatpush1.bf16.msra.mxu0 %v3371
        %3403 = vmatprep.subr.bf16.mxu0 0
        %3404 = vmatpush2.bf16.msra.mxu0 0
        %3405 = vmatprep.subr.bf16.mxu0 0
        %3406 = vmatpush2.bf16.msra.mxu0 0
        %3407 = vmatprep.subr.bf16.mxu0 0
        %3408 = vmatpush2.bf16.msra.mxu0 0
        %3409 = vmatprep.subr.bf16.mxu0 0
        %3410 = vmatpush2.bf16.msra.mxu0 0
        %3411 = vmatprep.subr.bf16.mxu0 0
        %3412 = vmatpush2.bf16.msra.mxu0 0
        %3413 = vmatprep.subr.bf16.mxu0 0
        %3414 = vmatpush2.bf16.msra.mxu0 0
        %3415 = vmatprep.subr.bf16.mxu0 0
        %3416 = vmatpush2.bf16.msra.mxu0 0
        %3417 = vmatprep.subr.bf16.mxu0 0
        %3418 = vmatpush2.bf16.msra.mxu0 0
        %3419 = vmatprep.mubr.bf16.mxu0 0
        %3420 = vmatmul.mubr.bf16.gmra.mxu0 %v3376
        %v3421 = vpop.f32.mrf.mxu0
        %v3422 = vadd.f32 0.0, %v3421
        %v3423 = vpop.f32.mrf.mxu0
        %v3424 = vpop.f32.mrf.mxu0
        %v3425 = vadd.f32 0.0, %v3424
        %v3426 = vpop.f32.mrf.mxu0
        %3427 = vmatprep.mubr.bf16.mxu0 0
        %3428 = vmatmul.mubr.bf16.gmra.mxu0 %v3379
        %v3429 = vpop.f32.mrf.mxu0
        %v3430 = vadd.f32 0.0, %v3429
        %v3431 = vpop.f32.mrf.mxu0
        %v3432 = vpop.f32.mrf.mxu0
        %v3433 = vadd.f32 0.0, %v3432
        %v3434 = vpop.f32.mrf.mxu0
        %3435 = vmatprep.mubr.bf16.mxu0 0
        %3436 = vmatmul.mubr.bf16.gmra.mxu0 %v3382
        %v3437 = vpop.f32.mrf.mxu0
        %v3438 = vadd.f32 0.0, %v3437
        %v3439 = vpop.f32.mrf.mxu0
        %v3440 = vpop.f32.mrf.mxu0
        %v3441 = vadd.f32 0.0, %v3440
        %v3442 = vpop.f32.mrf.mxu0
        %3443 = vmatprep.mubr.bf16.mxu0 0
        %3444 = vmatmul.mubr.bf16.gmra.mxu0 %v3385
        %v3445 = vpop.f32.mrf.mxu0
        %v3446 = vadd.f32 0.0, %v3445
        %v3447 = vpop.f32.mrf.mxu0
        %v3448 = vpop.f32.mrf.mxu0
        %v3449 = vadd.f32 0.0, %v3448
        %v3450 = vpop.f32.mrf.mxu0
        %3451 = vdwg.mxu0
        %v3456 = vunpack.c.l.b16 %v3350
        %v3457 = vunpack.c.l.b16 %v3351
        %v3458 = vunpack.c.l.b16 %v3352
        %v3459 = vunpack.c.l.b16 %v3353
        %v3460 = vpack.c.b16 %v3457, %v3456
        %v3461 = vpack.c.b16 %v3459, %v3458
        %v3465 = vsel %vm1394, %v3346, 0
        %v3468 = vsel %vm1394, %v3347, 0
        %v3471 = vsel %vm1394, %v3348, 0
        %v3474 = vsel %vm1394, %v3349, 0
        %3476 = vmatprep.subr.bf16.mxu0 0
        %3477 = vmatpush1.bf16.msra.mxu0 0
        %3478 = vmatprep.subr.bf16.mxu0 0
        %3479 = vmatpush1.bf16.msra.mxu0 0
        %3480 = vmatprep.subr.bf16.mxu0 0
        %3481 = vmatpush1.bf16.msra.mxu0 0
        %3482 = vmatprep.subr.bf16.mxu0 0
        %3483 = vmatpush1.bf16.msra.mxu0 0
        %3484 = vmatprep.subr.bf16.mxu0 0
        %3485 = vmatpush1.bf16.msra.mxu0 0
        %3486 = vmatprep.subr.bf16.mxu0 0
        %3487 = vmatpush1.bf16.msra.mxu0 0
        %3488 = vmatprep.subr.bf16.mxu0 0
        %3489 = vmatpush1.bf16.msra.mxu0 %v3461
        %3490 = vmatprep.subr.bf16.mxu0 0
        %3491 = vmatpush1.bf16.msra.mxu0 %v3460
        %3492 = vmatprep.subr.bf16.mxu0 0
        %3493 = vmatpush2.bf16.msra.mxu0 0
        %3494 = vmatprep.subr.bf16.mxu0 0
        %3495 = vmatpush2.bf16.msra.mxu0 0
        %3496 = vmatprep.subr.bf16.mxu0 0
        %3497 = vmatpush2.bf16.msra.mxu0 0
        %3498 = vmatprep.subr.bf16.mxu0 0
        %3499 = vmatpush2.bf16.msra.mxu0 0
        %3500 = vmatprep.subr.bf16.mxu0 0
        %3501 = vmatpush2.bf16.msra.mxu0 0
        %3502 = vmatprep.subr.bf16.mxu0 0
        %3503 = vmatpush2.bf16.msra.mxu0 0
        %3504 = vmatprep.subr.bf16.mxu0 0
        %3505 = vmatpush2.bf16.msra.mxu0 0
        %3506 = vmatprep.subr.bf16.mxu0 0
        %3507 = vmatpush2.bf16.msra.mxu0 0
        %3508 = vmatprep.mubr.bf16.mxu0 0
        %3509 = vmatmul.mubr.bf16.gmra.mxu0 %v3465
        %v3510 = vpop.f32.mrf.mxu0
        %v3511 = vadd.f32 %v3422, %v3510
        %v3512 = vpop.f32.mrf.mxu0
        %v3513 = vpop.f32.mrf.mxu0
        %v3514 = vadd.f32 %v3425, %v3513
        %v3515 = vpop.f32.mrf.mxu0
        %3516 = vmatprep.mubr.bf16.mxu0 0
        %3517 = vmatmul.mubr.bf16.gmra.mxu0 %v3468
        %v3518 = vpop.f32.mrf.mxu0
        %v3519 = vadd.f32 %v3430, %v3518
        %v3520 = vpop.f32.mrf.mxu0
        %v3521 = vpop.f32.mrf.mxu0
        %v3522 = vadd.f32 %v3433, %v3521
        %v3523 = vpop.f32.mrf.mxu0
        %3524 = vmatprep.mubr.bf16.mxu0 0
        %3525 = vmatmul.mubr.bf16.gmra.mxu0 %v3471
        %v3526 = vpop.f32.mrf.mxu0
        %v3527 = vadd.f32 %v3438, %v3526
        %v3528 = vpop.f32.mrf.mxu0
        %v3529 = vpop.f32.mrf.mxu0
        %v3530 = vadd.f32 %v3441, %v3529
        %v3531 = vpop.f32.mrf.mxu0
        %3532 = vmatprep.mubr.bf16.mxu0 0
        %3533 = vmatmul.mubr.bf16.gmra.mxu0 %v3474
        %v3534 = vpop.f32.mrf.mxu0
        %v3535 = vadd.f32 %v3446, %v3534
        %v3536 = vpop.f32.mrf.mxu0
        %v3537 = vpop.f32.mrf.mxu0
        %v3538 = vadd.f32 %v3449, %v3537
        %v3539 = vpop.f32.mrf.mxu0
        %3540 = vdwg.mxu0
        %s3541 = scalar_lea.vmem %s7, 96
        %v3542 = vld [vmem:[%s3541] sm:$0xf]
        %v3543 = vld [vmem:[%s3541 + $0x4] sm:$0xf]
        %v3544 = vld [vmem:[%s3541 + $0x8] sm:$0xf]
        %v3545 = vld [vmem:[%s3541 + $0xc] sm:$0xf]
        %v3550 = vunpack.c.l.b16 %v3542
        %v3551 = vunpack.c.l.b16 %v3543
        %v3552 = vunpack.c.l.b16 %v3544
        %v3553 = vunpack.c.l.b16 %v3545
        %v3554 = vpack.c.b16 %v3551, %v3550
        %v3555 = vpack.c.b16 %v3553, %v3552
        %3558 = vmatprep.subr.bf16.mxu0 0
        %3559 = vmatpush1.bf16.msra.mxu0 0
        %3560 = vmatprep.subr.bf16.mxu0 0
        %3561 = vmatpush1.bf16.msra.mxu0 0
        %3562 = vmatprep.subr.bf16.mxu0 0
        %3563 = vmatpush1.bf16.msra.mxu0 0
        %3564 = vmatprep.subr.bf16.mxu0 0
        %3565 = vmatpush1.bf16.msra.mxu0 0
        %3566 = vmatprep.subr.bf16.mxu0 0
        %3567 = vmatpush1.bf16.msra.mxu0 0
        %3568 = vmatprep.subr.bf16.mxu0 0
        %3569 = vmatpush1.bf16.msra.mxu0 0
        %3570 = vmatprep.subr.bf16.mxu0 0
        %3571 = vmatpush1.bf16.msra.mxu0 %v3555
        %3572 = vmatprep.subr.bf16.mxu0 0
        %3573 = vmatpush1.bf16.msra.mxu0 %v3554
        %3574 = vmatprep.subr.bf16.mxu0 0
        %3575 = vmatpush2.bf16.msra.mxu0 0
        %3576 = vmatprep.subr.bf16.mxu0 0
        %3577 = vmatpush2.bf16.msra.mxu0 0
        %3578 = vmatprep.subr.bf16.mxu0 0
        %3579 = vmatpush2.bf16.msra.mxu0 0
        %3580 = vmatprep.subr.bf16.mxu0 0
        %3581 = vmatpush2.bf16.msra.mxu0 0
        %3582 = vmatprep.subr.bf16.mxu0 0
        %3583 = vmatpush2.bf16.msra.mxu0 0
        %3584 = vmatprep.subr.bf16.mxu0 0
        %3585 = vmatpush2.bf16.msra.mxu0 0
        %3586 = vmatprep.subr.bf16.mxu0 0
        %3587 = vmatpush2.bf16.msra.mxu0 0
        %3588 = vmatprep.subr.bf16.mxu0 0
        %3589 = vmatpush2.bf16.msra.mxu0 0
        %3590 = vmatprep.mubr.bf16.mxu0 0
        %3591 = vmatmul.mubr.bf16.gmra.mxu0 %v3468
        %v3592 = vpop.f32.mrf.mxu0
        %v3593 = vadd.f32 0.0, %v3592
        %v3594 = vpop.f32.mrf.mxu0
        %v3595 = vpop.f32.mrf.mxu0
        %v3596 = vadd.f32 0.0, %v3595
        %v3597 = vpop.f32.mrf.mxu0
        %3598 = vmatprep.mubr.bf16.mxu0 0
        %3599 = vmatmul.mubr.bf16.gmra.mxu0 %v3471
        %v3600 = vpop.f32.mrf.mxu0
        %v3601 = vadd.f32 0.0, %v3600
        %v3602 = vpop.f32.mrf.mxu0
        %v3603 = vpop.f32.mrf.mxu0
        %v3604 = vadd.f32 0.0, %v3603
        %v3605 = vpop.f32.mrf.mxu0
        %3606 = vmatprep.mubr.bf16.mxu0 0
        %3607 = vmatmul.mubr.bf16.gmra.mxu0 %v3474
        %v3608 = vpop.f32.mrf.mxu0
        %v3609 = vadd.f32 0.0, %v3608
        %v3610 = vpop.f32.mrf.mxu0
        %v3611 = vpop.f32.mrf.mxu0
        %v3612 = vadd.f32 0.0, %v3611
        %v3613 = vpop.f32.mrf.mxu0
        %3614 = vmatprep.mubr.bf16.mxu0 0
        %3615 = vmatmul.mubr.bf16.gmra.mxu0 %v3465
        %v3616 = vpop.f32.mrf.mxu0
        %v3617 = vadd.f32 0.0, %v3616
        %v3618 = vpop.f32.mrf.mxu0
        %v3619 = vpop.f32.mrf.mxu0
        %v3620 = vadd.f32 0.0, %v3619
        %v3621 = vpop.f32.mrf.mxu0
        %3622 = vdwg.mxu0
        %v3623 = vadd.f32 %v3511, %v3593
        %v3624 = vadd.f32 %v3514, %v3596
        %v3625 = vadd.f32 %v3519, %v3601
        %v3626 = vadd.f32 %v3522, %v3604
        %v3627 = vadd.f32 %v3527, %v3609
        %v3628 = vadd.f32 %v3530, %v3612
        %v3629 = vadd.f32 %v3535, %v3617
        %v3630 = vadd.f32 %v3538, %v3620
        %v3631 = vpack.c.bf16 %v3306, %v3313
        %v3632 = vpack.c.bf16 %v3308, %v3307
        %v3633 = vpack.c.bf16 %v3310, %v3309
        %v3634 = vpack.c.bf16 %v3312, %v3311
        %s3635 = scalar_lea.vmem %s7, 16
        %v3636 = vld [vmem:[%s3635] sm:$0xf]
        %v3637 = vld [vmem:[%s3635 + $0x4] sm:$0xf]
        %v3638 = vld [vmem:[%s3635 + $0x8] sm:$0xf]
        %v3639 = vld [vmem:[%s3635 + $0xc] sm:$0xf]
        %v3644 = vunpack.c.l.b16 %v3636
        %v3645 = vunpack.c.l.b16 %v3637
        %v3646 = vunpack.c.l.b16 %v3638
        %v3647 = vunpack.c.l.b16 %v3639
        %v3648 = vpack.c.b16 %v3645, %v3644
        %v3649 = vpack.c.b16 %v3647, %v3646
        %v3653 = vsel %vm1394, %v3631, 0
        %v3656 = vsel %vm1394, %v3632, 0
        %v3659 = vsel %vm1394, %v3633, 0
        %v3662 = vsel %vm1394, %v3634, 0
        %3664 = vmatprep.subr.bf16.mxu0 0
        %3665 = vmatpush1.bf16.msra.mxu0 0
        %3666 = vmatprep.subr.bf16.mxu0 0
        %3667 = vmatpush1.bf16.msra.mxu0 0
        %3668 = vmatprep.subr.bf16.mxu0 0
        %3669 = vmatpush1.bf16.msra.mxu0 0
        %3670 = vmatprep.subr.bf16.mxu0 0
        %3671 = vmatpush1.bf16.msra.mxu0 0
        %3672 = vmatprep.subr.bf16.mxu0 0
        %3673 = vmatpush1.bf16.msra.mxu0 0
        %3674 = vmatprep.subr.bf16.mxu0 0
        %3675 = vmatpush1.bf16.msra.mxu0 0
        %3676 = vmatprep.subr.bf16.mxu0 0
        %3677 = vmatpush1.bf16.msra.mxu0 %v3649
        %3678 = vmatprep.subr.bf16.mxu0 0
        %3679 = vmatpush1.bf16.msra.mxu0 %v3648
        %3680 = vmatprep.subr.bf16.mxu0 0
        %3681 = vmatpush2.bf16.msra.mxu0 0
        %3682 = vmatprep.subr.bf16.mxu0 0
        %3683 = vmatpush2.bf16.msra.mxu0 0
        %3684 = vmatprep.subr.bf16.mxu0 0
        %3685 = vmatpush2.bf16.msra.mxu0 0
        %3686 = vmatprep.subr.bf16.mxu0 0
        %3687 = vmatpush2.bf16.msra.mxu0 0
        %3688 = vmatprep.subr.bf16.mxu0 0
        %3689 = vmatpush2.bf16.msra.mxu0 0
        %3690 = vmatprep.subr.bf16.mxu0 0
        %3691 = vmatpush2.bf16.msra.mxu0 0
        %3692 = vmatprep.subr.bf16.mxu0 0
        %3693 = vmatpush2.bf16.msra.mxu0 0
        %3694 = vmatprep.subr.bf16.mxu0 0
        %3695 = vmatpush2.bf16.msra.mxu0 0
        %3696 = vmatprep.mubr.bf16.mxu0 0
        %3697 = vmatmul.mubr.bf16.gmra.mxu0 %v3653
        %v3698 = vpop.f32.mrf.mxu0
        %v3699 = vadd.f32 0.0, %v3698
        %v3700 = vpop.f32.mrf.mxu0
        %v3701 = vpop.f32.mrf.mxu0
        %v3702 = vadd.f32 0.0, %v3701
        %v3703 = vpop.f32.mrf.mxu0
        %3704 = vmatprep.mubr.bf16.mxu0 0
        %3705 = vmatmul.mubr.bf16.gmra.mxu0 %v3656
        %v3706 = vpop.f32.mrf.mxu0
        %v3707 = vadd.f32 0.0, %v3706
        %v3708 = vpop.f32.mrf.mxu0
        %v3709 = vpop.f32.mrf.mxu0
        %v3710 = vadd.f32 0.0, %v3709
        %v3711 = vpop.f32.mrf.mxu0
        %3712 = vmatprep.mubr.bf16.mxu0 0
        %3713 = vmatmul.mubr.bf16.gmra.mxu0 %v3659
        %v3714 = vpop.f32.mrf.mxu0
        %v3715 = vadd.f32 0.0, %v3714
        %v3716 = vpop.f32.mrf.mxu0
        %v3717 = vpop.f32.mrf.mxu0
        %v3718 = vadd.f32 0.0, %v3717
        %v3719 = vpop.f32.mrf.mxu0
        %3720 = vmatprep.mubr.bf16.mxu0 0
        %3721 = vmatmul.mubr.bf16.gmra.mxu0 %v3662
        %v3722 = vpop.f32.mrf.mxu0
        %v3723 = vadd.f32 0.0, %v3722
        %v3724 = vpop.f32.mrf.mxu0
        %v3725 = vpop.f32.mrf.mxu0
        %v3726 = vadd.f32 0.0, %v3725
        %v3727 = vpop.f32.mrf.mxu0
        %3728 = vdwg.mxu0
        %v3729 = vadd.f32 %v3623, %v3699
        %v3730 = vadd.f32 %v3624, %v3702
        %v3731 = vadd.f32 %v3625, %v3707
        %v3732 = vadd.f32 %v3626, %v3710
        %v3733 = vadd.f32 %v3627, %v3715
        %v3734 = vadd.f32 %v3628, %v3718
        %v3735 = vadd.f32 %v3629, %v3723
        %v3736 = vadd.f32 %v3630, %v3726
        %v3737 = vpack.c.bf16 %v3307, %v3306
        %v3738 = vpack.c.bf16 %v3309, %v3308
        %v3739 = vpack.c.bf16 %v3311, %v3310
        %v3740 = vpack.c.bf16 %v3313, %v3312
        %s3741 = scalar_lea.vmem %s7, 64
        %v3742 = vld [vmem:[%s3741] sm:$0xf]
        %v3743 = vld [vmem:[%s3741 + $0x4] sm:$0xf]
        %v3744 = vld [vmem:[%s3741 + $0x8] sm:$0xf]
        %v3745 = vld [vmem:[%s3741 + $0xc] sm:$0xf]
        %v3750 = vunpack.c.l.b16 %v3742
        %v3751 = vunpack.c.l.b16 %v3743
        %v3752 = vunpack.c.l.b16 %v3744
        %v3753 = vunpack.c.l.b16 %v3745
        %v3754 = vpack.c.b16 %v3751, %v3750
        %v3755 = vpack.c.b16 %v3753, %v3752
        %v3759 = vsel %vm1394, %v3737, 0
        %v3762 = vsel %vm1394, %v3738, 0
        %v3765 = vsel %vm1394, %v3739, 0
        %v3768 = vsel %vm1394, %v3740, 0
        %3770 = vmatprep.subr.bf16.mxu0 0
        %3771 = vmatpush1.bf16.msra.mxu0 0
        %3772 = vmatprep.subr.bf16.mxu0 0
        %3773 = vmatpush1.bf16.msra.mxu0 0
        %3774 = vmatprep.subr.bf16.mxu0 0
        %3775 = vmatpush1.bf16.msra.mxu0 0
        %3776 = vmatprep.subr.bf16.mxu0 0
        %3777 = vmatpush1.bf16.msra.mxu0 0
        %3778 = vmatprep.subr.bf16.mxu0 0
        %3779 = vmatpush1.bf16.msra.mxu0 0
        %3780 = vmatprep.subr.bf16.mxu0 0
        %3781 = vmatpush1.bf16.msra.mxu0 0
        %3782 = vmatprep.subr.bf16.mxu0 0
        %3783 = vmatpush1.bf16.msra.mxu0 %v3755
        %3784 = vmatprep.subr.bf16.mxu0 0
        %3785 = vmatpush1.bf16.msra.mxu0 %v3754
        %3786 = vmatprep.subr.bf16.mxu0 0
        %3787 = vmatpush2.bf16.msra.mxu0 0
        %3788 = vmatprep.subr.bf16.mxu0 0
        %3789 = vmatpush2.bf16.msra.mxu0 0
        %3790 = vmatprep.subr.bf16.mxu0 0
        %3791 = vmatpush2.bf16.msra.mxu0 0
        %3792 = vmatprep.subr.bf16.mxu0 0
        %3793 = vmatpush2.bf16.msra.mxu0 0
        %3794 = vmatprep.subr.bf16.mxu0 0
        %3795 = vmatpush2.bf16.msra.mxu0 0
        %3796 = vmatprep.subr.bf16.mxu0 0
        %3797 = vmatpush2.bf16.msra.mxu0 0
        %3798 = vmatprep.subr.bf16.mxu0 0
        %3799 = vmatpush2.bf16.msra.mxu0 0
        %3800 = vmatprep.subr.bf16.mxu0 0
        %3801 = vmatpush2.bf16.msra.mxu0 0
        %3802 = vmatprep.mubr.bf16.mxu0 0
        %3803 = vmatmul.mubr.bf16.gmra.mxu0 %v3759
        %v3804 = vpop.f32.mrf.mxu0
        %v3805 = vadd.f32 0.0, %v3804
        %v3806 = vpop.f32.mrf.mxu0
        %v3807 = vpop.f32.mrf.mxu0
        %v3808 = vadd.f32 0.0, %v3807
        %v3809 = vpop.f32.mrf.mxu0
        %3810 = vmatprep.mubr.bf16.mxu0 0
        %3811 = vmatmul.mubr.bf16.gmra.mxu0 %v3762
        %v3812 = vpop.f32.mrf.mxu0
        %v3813 = vadd.f32 0.0, %v3812
        %v3814 = vpop.f32.mrf.mxu0
        %v3815 = vpop.f32.mrf.mxu0
        %v3816 = vadd.f32 0.0, %v3815
        %v3817 = vpop.f32.mrf.mxu0
        %3818 = vmatprep.mubr.bf16.mxu0 0
        %3819 = vmatmul.mubr.bf16.gmra.mxu0 %v3765
        %v3820 = vpop.f32.mrf.mxu0
        %v3821 = vadd.f32 0.0, %v3820
        %v3822 = vpop.f32.mrf.mxu0
        %v3823 = vpop.f32.mrf.mxu0
        %v3824 = vadd.f32 0.0, %v3823
        %v3825 = vpop.f32.mrf.mxu0
        %3826 = vmatprep.mubr.bf16.mxu0 0
        %3827 = vmatmul.mubr.bf16.gmra.mxu0 %v3768
        %v3828 = vpop.f32.mrf.mxu0
        %v3829 = vadd.f32 0.0, %v3828
        %v3830 = vpop.f32.mrf.mxu0
        %v3831 = vpop.f32.mrf.mxu0
        %v3832 = vadd.f32 0.0, %v3831
        %v3833 = vpop.f32.mrf.mxu0
        %3834 = vdwg.mxu0
        %v3835 = vadd.f32 %v3729, %v3805
        %v3836 = vadd.f32 %v3730, %v3808
        %v3837 = vadd.f32 %v3731, %v3813
        %v3838 = vadd.f32 %v3732, %v3816
        %v3839 = vadd.f32 %v3733, %v3821
        %v3840 = vadd.f32 %v3734, %v3824
        %v3841 = vadd.f32 %v3735, %v3829
        %v3842 = vadd.f32 %v3736, %v3832
        %s3843 = scalar_lea.vmem %s7, 112
        %v3844 = vld [vmem:[%s3843] sm:$0xf]
        %v3845 = vld [vmem:[%s3843 + $0x4] sm:$0xf]
        %v3846 = vld [vmem:[%s3843 + $0x8] sm:$0xf]
        %v3847 = vld [vmem:[%s3843 + $0xc] sm:$0xf]
        %v3852 = vunpack.c.l.b16 %v3844
        %v3853 = vunpack.c.l.b16 %v3845
        %v3854 = vunpack.c.l.b16 %v3846
        %v3855 = vunpack.c.l.b16 %v3847
        %v3856 = vpack.c.b16 %v3853, %v3852
        %v3857 = vpack.c.b16 %v3855, %v3854
        %3860 = vmatprep.subr.bf16.mxu0 0
        %3861 = vmatpush1.bf16.msra.mxu0 0
        %3862 = vmatprep.subr.bf16.mxu0 0
        %3863 = vmatpush1.bf16.msra.mxu0 0
        %3864 = vmatprep.subr.bf16.mxu0 0
        %3865 = vmatpush1.bf16.msra.mxu0 0
        %3866 = vmatprep.subr.bf16.mxu0 0
        %3867 = vmatpush1.bf16.msra.mxu0 0
        %3868 = vmatprep.subr.bf16.mxu0 0
        %3869 = vmatpush1.bf16.msra.mxu0 0
        %3870 = vmatprep.subr.bf16.mxu0 0
        %3871 = vmatpush1.bf16.msra.mxu0 0
        %3872 = vmatprep.subr.bf16.mxu0 0
        %3873 = vmatpush1.bf16.msra.mxu0 %v3857
        %3874 = vmatprep.subr.bf16.mxu0 0
        %3875 = vmatpush1.bf16.msra.mxu0 %v3856
        %3876 = vmatprep.subr.bf16.mxu0 0
        %3877 = vmatpush2.bf16.msra.mxu0 0
        %3878 = vmatprep.subr.bf16.mxu0 0
        %3879 = vmatpush2.bf16.msra.mxu0 0
        %3880 = vmatprep.subr.bf16.mxu0 0
        %3881 = vmatpush2.bf16.msra.mxu0 0
        %3882 = vmatprep.subr.bf16.mxu0 0
        %3883 = vmatpush2.bf16.msra.mxu0 0
        %3884 = vmatprep.subr.bf16.mxu0 0
        %3885 = vmatpush2.bf16.msra.mxu0 0
        %3886 = vmatprep.subr.bf16.mxu0 0
        %3887 = vmatpush2.bf16.msra.mxu0 0
        %3888 = vmatprep.subr.bf16.mxu0 0
        %3889 = vmatpush2.bf16.msra.mxu0 0
        %3890 = vmatprep.subr.bf16.mxu0 0
        %3891 = vmatpush2.bf16.msra.mxu0 0
        %3892 = vmatprep.mubr.bf16.mxu0 0
        %3893 = vmatmul.mubr.bf16.gmra.mxu0 %v3656
        %v3894 = vpop.f32.mrf.mxu0
        %v3895 = vadd.f32 0.0, %v3894
        %v3896 = vpop.f32.mrf.mxu0
        %v3897 = vpop.f32.mrf.mxu0
        %v3898 = vadd.f32 0.0, %v3897
        %v3899 = vpop.f32.mrf.mxu0
        %3900 = vmatprep.mubr.bf16.mxu0 0
        %3901 = vmatmul.mubr.bf16.gmra.mxu0 %v3659
        %v3902 = vpop.f32.mrf.mxu0
        %v3903 = vadd.f32 0.0, %v3902
        %v3904 = vpop.f32.mrf.mxu0
        %v3905 = vpop.f32.mrf.mxu0
        %v3906 = vadd.f32 0.0, %v3905
        %v3907 = vpop.f32.mrf.mxu0
        %3908 = vmatprep.mubr.bf16.mxu0 0
        %3909 = vmatmul.mubr.bf16.gmra.mxu0 %v3662
        %v3910 = vpop.f32.mrf.mxu0
        %v3911 = vadd.f32 0.0, %v3910
        %v3912 = vpop.f32.mrf.mxu0
        %v3913 = vpop.f32.mrf.mxu0
        %v3914 = vadd.f32 0.0, %v3913
        %v3915 = vpop.f32.mrf.mxu0
        %3916 = vmatprep.mubr.bf16.mxu0 0
        %3917 = vmatmul.mubr.bf16.gmra.mxu0 %v3653
        %v3918 = vpop.f32.mrf.mxu0
        %v3919 = vadd.f32 0.0, %v3918
        %v3920 = vpop.f32.mrf.mxu0
        %v3921 = vpop.f32.mrf.mxu0
        %v3922 = vadd.f32 0.0, %v3921
        %v3923 = vpop.f32.mrf.mxu0
        %3924 = vdwg.mxu0
        %v3925 = vadd.f32 %v3835, %v3895
        %v3926 = vadd.f32 %v3836, %v3898
        %v3927 = vadd.f32 %v3837, %v3903
        %v3928 = vadd.f32 %v3838, %v3906
        %v3929 = vadd.f32 %v3839, %v3911
        %v3930 = vadd.f32 %v3840, %v3914
        %v3931 = vadd.f32 %v3841, %v3919
        %v3932 = vadd.f32 %v3842, %v3922
        %v3933 = vrot.slane %v3306, 1
        %v3934 = vrot.slane %v3307, 1
        %v3935 = vrot.slane %v3308, 1
        %v3936 = vrot.slane %v3309, 1
        %v3937 = vrot.slane %v3310, 1
        %v3938 = vrot.slane %v3311, 1
        %v3939 = vrot.slane %v3312, 1
        %v3940 = vrot.slane %v3313, 1
        %v3949 = vsel %vm1013, %v3933, %v3933
        %v3950 = vsel %vm1013, %v3934, %v3934
        %v3951 = vsel %vm1013, %v3935, %v3935
        %v3952 = vsel %vm1013, %v3936, %v3936
        %v3953 = vsel %vm1013, %v3937, %v3937
        %v3954 = vsel %vm1013, %v3938, %v3938
        %v3955 = vsel %vm1013, %v3939, %v3939
        %v3956 = vsel %vm1013, %v3940, %v3940
        %v3957 = vpack.c.bf16 %v3949, %v3956
        %v3958 = vpack.c.bf16 %v3951, %v3950
        %v3959 = vpack.c.bf16 %v3953, %v3952
        %v3960 = vpack.c.bf16 %v3955, %v3954
        %s3961 = scalar_lea.vmem %s7, 32
        %v3962 = vld [vmem:[%s3961] sm:$0xf]
        %v3963 = vld [vmem:[%s3961 + $0x4] sm:$0xf]
        %v3964 = vld [vmem:[%s3961 + $0x8] sm:$0xf]
        %v3965 = vld [vmem:[%s3961 + $0xc] sm:$0xf]
        %v3970 = vunpack.c.l.b16 %v3962
        %v3971 = vunpack.c.l.b16 %v3963
        %v3972 = vunpack.c.l.b16 %v3964
        %v3973 = vunpack.c.l.b16 %v3965
        %v3974 = vpack.c.b16 %v3971, %v3970
        %v3975 = vpack.c.b16 %v3973, %v3972
        %v3979 = vsel %vm1394, %v3957, 0
        %v3982 = vsel %vm1394, %v3958, 0
        %v3985 = vsel %vm1394, %v3959, 0
        %v3988 = vsel %vm1394, %v3960, 0
        %3990 = vmatprep.subr.bf16.mxu0 0
        %3991 = vmatpush1.bf16.msra.mxu0 0
        %3992 = vmatprep.subr.bf16.mxu0 0
        %3993 = vmatpush1.bf16.msra.mxu0 0
        %3994 = vmatprep.subr.bf16.mxu0 0
        %3995 = vmatpush1.bf16.msra.mxu0 0
        %3996 = vmatprep.subr.bf16.mxu0 0
        %3997 = vmatpush1.bf16.msra.mxu0 0
        %3998 = vmatprep.subr.bf16.mxu0 0
        %3999 = vmatpush1.bf16.msra.mxu0 0
        %4000 = vmatprep.subr.bf16.mxu0 0
        %4001 = vmatpush1.bf16.msra.mxu0 0
        %4002 = vmatprep.subr.bf16.mxu0 0
        %4003 = vmatpush1.bf16.msra.mxu0 %v3975
        %4004 = vmatprep.subr.bf16.mxu0 0
        %4005 = vmatpush1.bf16.msra.mxu0 %v3974
        %4006 = vmatprep.subr.bf16.mxu0 0
        %4007 = vmatpush2.bf16.msra.mxu0 0
        %4008 = vmatprep.subr.bf16.mxu0 0
        %4009 = vmatpush2.bf16.msra.mxu0 0
        %4010 = vmatprep.subr.bf16.mxu0 0
        %4011 = vmatpush2.bf16.msra.mxu0 0
        %4012 = vmatprep.subr.bf16.mxu0 0
        %4013 = vmatpush2.bf16.msra.mxu0 0
        %4014 = vmatprep.subr.bf16.mxu0 0
        %4015 = vmatpush2.bf16.msra.mxu0 0
        %4016 = vmatprep.subr.bf16.mxu0 0
        %4017 = vmatpush2.bf16.msra.mxu0 0
        %4018 = vmatprep.subr.bf16.mxu0 0
        %4019 = vmatpush2.bf16.msra.mxu0 0
        %4020 = vmatprep.subr.bf16.mxu0 0
        %4021 = vmatpush2.bf16.msra.mxu0 0
        %4022 = vmatprep.mubr.bf16.mxu0 0
        %4023 = vmatmul.mubr.bf16.gmra.mxu0 %v3979
        %v4024 = vpop.f32.mrf.mxu0
        %v4025 = vadd.f32 0.0, %v4024
        %v4026 = vpop.f32.mrf.mxu0
        %v4027 = vpop.f32.mrf.mxu0
        %v4028 = vadd.f32 0.0, %v4027
        %v4029 = vpop.f32.mrf.mxu0
        %4030 = vmatprep.mubr.bf16.mxu0 0
        %4031 = vmatmul.mubr.bf16.gmra.mxu0 %v3982
        %v4032 = vpop.f32.mrf.mxu0
        %v4033 = vadd.f32 0.0, %v4032
        %v4034 = vpop.f32.mrf.mxu0
        %v4035 = vpop.f32.mrf.mxu0
        %v4036 = vadd.f32 0.0, %v4035
        %v4037 = vpop.f32.mrf.mxu0
        %4038 = vmatprep.mubr.bf16.mxu0 0
        %4039 = vmatmul.mubr.bf16.gmra.mxu0 %v3985
        %v4040 = vpop.f32.mrf.mxu0
        %v4041 = vadd.f32 0.0, %v4040
        %v4042 = vpop.f32.mrf.mxu0
        %v4043 = vpop.f32.mrf.mxu0
        %v4044 = vadd.f32 0.0, %v4043
        %v4045 = vpop.f32.mrf.mxu0
        %4046 = vmatprep.mubr.bf16.mxu0 0
        %4047 = vmatmul.mubr.bf16.gmra.mxu0 %v3988
        %v4048 = vpop.f32.mrf.mxu0
        %v4049 = vadd.f32 0.0, %v4048
        %v4050 = vpop.f32.mrf.mxu0
        %v4051 = vpop.f32.mrf.mxu0
        %v4052 = vadd.f32 0.0, %v4051
        %v4053 = vpop.f32.mrf.mxu0
        %4054 = vdwg.mxu0
        %v4055 = vadd.f32 %v3925, %v4025
        %v4056 = vadd.f32 %v3926, %v4028
        %v4057 = vadd.f32 %v3927, %v4033
        %v4058 = vadd.f32 %v3928, %v4036
        %v4059 = vadd.f32 %v3929, %v4041
        %v4060 = vadd.f32 %v3930, %v4044
        %v4061 = vadd.f32 %v3931, %v4049
        %v4062 = vadd.f32 %v3932, %v4052
        %v4063 = vpack.c.bf16 %v3950, %v3949
        %v4064 = vpack.c.bf16 %v3952, %v3951
        %v4065 = vpack.c.bf16 %v3954, %v3953
        %v4066 = vpack.c.bf16 %v3956, %v3955
        %s4067 = scalar_lea.vmem %s7, 80
        %v4068 = vld [vmem:[%s4067] sm:$0xf]
        %v4069 = vld [vmem:[%s4067 + $0x4] sm:$0xf]
        %v4070 = vld [vmem:[%s4067 + $0x8] sm:$0xf]
        %v4071 = vld [vmem:[%s4067 + $0xc] sm:$0xf]
        %v4076 = vunpack.c.l.b16 %v4068
        %v4077 = vunpack.c.l.b16 %v4069
        %v4078 = vunpack.c.l.b16 %v4070
        %v4079 = vunpack.c.l.b16 %v4071
        %v4080 = vpack.c.b16 %v4077, %v4076
        %v4081 = vpack.c.b16 %v4079, %v4078
        %v4085 = vsel %vm1394, %v4063, 0
        %v4088 = vsel %vm1394, %v4064, 0
        %v4091 = vsel %vm1394, %v4065, 0
        %v4094 = vsel %vm1394, %v4066, 0
        %4096 = vmatprep.subr.bf16.mxu0 0
        %4097 = vmatpush1.bf16.msra.mxu0 0
        %4098 = vmatprep.subr.bf16.mxu0 0
        %4099 = vmatpush1.bf16.msra.mxu0 0
        %4100 = vmatprep.subr.bf16.mxu0 0
        %4101 = vmatpush1.bf16.msra.mxu0 0
        %4102 = vmatprep.subr.bf16.mxu0 0
        %4103 = vmatpush1.bf16.msra.mxu0 0
        %4104 = vmatprep.subr.bf16.mxu0 0
        %4105 = vmatpush1.bf16.msra.mxu0 0
        %4106 = vmatprep.subr.bf16.mxu0 0
        %4107 = vmatpush1.bf16.msra.mxu0 0
        %4108 = vmatprep.subr.bf16.mxu0 0
        %4109 = vmatpush1.bf16.msra.mxu0 %v4081
        %4110 = vmatprep.subr.bf16.mxu0 0
        %4111 = vmatpush1.bf16.msra.mxu0 %v4080
        %4112 = vmatprep.subr.bf16.mxu0 0
        %4113 = vmatpush2.bf16.msra.mxu0 0
        %4114 = vmatprep.subr.bf16.mxu0 0
        %4115 = vmatpush2.bf16.msra.mxu0 0
        %4116 = vmatprep.subr.bf16.mxu0 0
        %4117 = vmatpush2.bf16.msra.mxu0 0
        %4118 = vmatprep.subr.bf16.mxu0 0
        %4119 = vmatpush2.bf16.msra.mxu0 0
        %4120 = vmatprep.subr.bf16.mxu0 0
        %4121 = vmatpush2.bf16.msra.mxu0 0
        %4122 = vmatprep.subr.bf16.mxu0 0
        %4123 = vmatpush2.bf16.msra.mxu0 0
        %4124 = vmatprep.subr.bf16.mxu0 0
        %4125 = vmatpush2.bf16.msra.mxu0 0
        %4126 = vmatprep.subr.bf16.mxu0 0
        %4127 = vmatpush2.bf16.msra.mxu0 0
        %4128 = vmatprep.mubr.bf16.mxu0 0
        %4129 = vmatmul.mubr.bf16.gmra.mxu0 %v4085
        %v4130 = vpop.f32.mrf.mxu0
        %v4131 = vadd.f32 0.0, %v4130
        %v4132 = vpop.f32.mrf.mxu0
        %v4133 = vpop.f32.mrf.mxu0
        %v4134 = vadd.f32 0.0, %v4133
        %v4135 = vpop.f32.mrf.mxu0
        %4136 = vmatprep.mubr.bf16.mxu0 0
        %4137 = vmatmul.mubr.bf16.gmra.mxu0 %v4088
        %v4138 = vpop.f32.mrf.mxu0
        %v4139 = vadd.f32 0.0, %v4138
        %v4140 = vpop.f32.mrf.mxu0
        %v4141 = vpop.f32.mrf.mxu0
        %v4142 = vadd.f32 0.0, %v4141
        %v4143 = vpop.f32.mrf.mxu0
        %4144 = vmatprep.mubr.bf16.mxu0 0
        %4145 = vmatmul.mubr.bf16.gmra.mxu0 %v4091
        %v4146 = vpop.f32.mrf.mxu0
        %v4147 = vadd.f32 0.0, %v4146
        %v4148 = vpop.f32.mrf.mxu0
        %v4149 = vpop.f32.mrf.mxu0
        %v4150 = vadd.f32 0.0, %v4149
        %v4151 = vpop.f32.mrf.mxu0
        %4152 = vmatprep.mubr.bf16.mxu0 0
        %4153 = vmatmul.mubr.bf16.gmra.mxu0 %v4094
        %v4154 = vpop.f32.mrf.mxu0
        %v4155 = vadd.f32 0.0, %v4154
        %v4156 = vpop.f32.mrf.mxu0
        %v4157 = vpop.f32.mrf.mxu0
        %v4158 = vadd.f32 0.0, %v4157
        %v4159 = vpop.f32.mrf.mxu0
        %4160 = vdwg.mxu0
        %v4161 = vadd.f32 %v4055, %v4131
        %v4162 = vadd.f32 %v4056, %v4134
        %v4163 = vadd.f32 %v4057, %v4139
        %v4164 = vadd.f32 %v4058, %v4142
        %v4165 = vadd.f32 %v4059, %v4147
        %v4166 = vadd.f32 %v4060, %v4150
        %v4167 = vadd.f32 %v4061, %v4155
        %v4168 = vadd.f32 %v4062, %v4158
        %s4169 = scalar_lea.vmem %s7, 128
        %v4170 = vld [vmem:[%s4169] sm:$0xf]
        %v4171 = vld [vmem:[%s4169 + $0x4] sm:$0xf]
        %v4172 = vld [vmem:[%s4169 + $0x8] sm:$0xf]
        %v4173 = vld [vmem:[%s4169 + $0xc] sm:$0xf]
        %v4178 = vunpack.c.l.b16 %v4170
        %v4179 = vunpack.c.l.b16 %v4171
        %v4180 = vunpack.c.l.b16 %v4172
        %v4181 = vunpack.c.l.b16 %v4173
        %v4182 = vpack.c.b16 %v4179, %v4178
        %v4183 = vpack.c.b16 %v4181, %v4180
        %4186 = vmatprep.subr.bf16.mxu0 0
        %4187 = vmatpush1.bf16.msra.mxu0 0
        %4188 = vmatprep.subr.bf16.mxu0 0
        %4189 = vmatpush1.bf16.msra.mxu0 0
        %4190 = vmatprep.subr.bf16.mxu0 0
        %4191 = vmatpush1.bf16.msra.mxu0 0
        %4192 = vmatprep.subr.bf16.mxu0 0
        %4193 = vmatpush1.bf16.msra.mxu0 0
        %4194 = vmatprep.subr.bf16.mxu0 0
        %4195 = vmatpush1.bf16.msra.mxu0 0
        %4196 = vmatprep.subr.bf16.mxu0 0
        %4197 = vmatpush1.bf16.msra.mxu0 0
        %4198 = vmatprep.subr.bf16.mxu0 0
        %4199 = vmatpush1.bf16.msra.mxu0 %v4183
        %4200 = vmatprep.subr.bf16.mxu0 0
        %4201 = vmatpush1.bf16.msra.mxu0 %v4182
        %4202 = vmatprep.subr.bf16.mxu0 0
        %4203 = vmatpush2.bf16.msra.mxu0 0
        %4204 = vmatprep.subr.bf16.mxu0 0
        %4205 = vmatpush2.bf16.msra.mxu0 0
        %4206 = vmatprep.subr.bf16.mxu0 0
        %4207 = vmatpush2.bf16.msra.mxu0 0
        %4208 = vmatprep.subr.bf16.mxu0 0
        %4209 = vmatpush2.bf16.msra.mxu0 0
        %4210 = vmatprep.subr.bf16.mxu0 0
        %4211 = vmatpush2.bf16.msra.mxu0 0
        %4212 = vmatprep.subr.bf16.mxu0 0
        %4213 = vmatpush2.bf16.msra.mxu0 0
        %4214 = vmatprep.subr.bf16.mxu0 0
        %4215 = vmatpush2.bf16.msra.mxu0 0
        %4216 = vmatprep.subr.bf16.mxu0 0
        %4217 = vmatpush2.bf16.msra.mxu0 0
        %4218 = vmatprep.mubr.bf16.mxu0 0
        %4219 = vmatmul.mubr.bf16.gmra.mxu0 %v3982
        %v4220 = vpop.f32.mrf.mxu0
        %v4221 = vadd.f32 0.0, %v4220
        %v4222 = vpop.f32.mrf.mxu0
        %v4223 = vpop.f32.mrf.mxu0
        %v4224 = vadd.f32 0.0, %v4223
        %v4225 = vpop.f32.mrf.mxu0
        %4226 = vmatprep.mubr.bf16.mxu0 0
        %4227 = vmatmul.mubr.bf16.gmra.mxu0 %v3985
        %v4228 = vpop.f32.mrf.mxu0
        %v4229 = vadd.f32 0.0, %v4228
        %v4230 = vpop.f32.mrf.mxu0
        %v4231 = vpop.f32.mrf.mxu0
        %v4232 = vadd.f32 0.0, %v4231
        %v4233 = vpop.f32.mrf.mxu0
        %4234 = vmatprep.mubr.bf16.mxu0 0
        %4235 = vmatmul.mubr.bf16.gmra.mxu0 %v3988
        %v4236 = vpop.f32.mrf.mxu0
        %v4237 = vadd.f32 0.0, %v4236
        %v4238 = vpop.f32.mrf.mxu0
        %v4239 = vpop.f32.mrf.mxu0
        %v4240 = vadd.f32 0.0, %v4239
        %v4241 = vpop.f32.mrf.mxu0
        %4242 = vmatprep.mubr.bf16.mxu0 0
        %4243 = vmatmul.mubr.bf16.gmra.mxu0 %v3979
        %v4244 = vpop.f32.mrf.mxu0
        %v4245 = vadd.f32 0.0, %v4244
        %v4246 = vpop.f32.mrf.mxu0
        %v4247 = vpop.f32.mrf.mxu0
        %v4248 = vadd.f32 0.0, %v4247
        %v4249 = vpop.f32.mrf.mxu0
        %4250 = vdwg.mxu0
        %v4251 = vadd.f32 %v4161, %v4221
        %v4252 = vadd.f32 %v4162, %v4224
        %v4253 = vadd.f32 %v4163, %v4229
        %v4254 = vadd.f32 %v4164, %v4232
        %v4255 = vadd.f32 %v4165, %v4237
        %v4256 = vadd.f32 %v4166, %v4240
        %v4257 = vadd.f32 %v4167, %v4245
        %v4258 = vadd.f32 %v4168, %v4248
        %v4259 = vld [vmem:[%s8] sm:$0x7]
        %v4260 = vlaneseq
        %v4261 = vshrl.u32 %v4260, 7
        %v4262 = vsub.s32 0, %v4261
        %v4263 = vrot.slane %v4259, %v4262
        %v4264 = vadd.f32 %v4251, %v4263
        %v4265 = vadd.f32 %v4252, %v4263
        %v4266 = vadd.f32 %v4253, %v4263
        %v4267 = vadd.f32 %v4254, %v4263
        %v4268 = vadd.f32 %v4255, %v4263
        %v4269 = vadd.f32 %v4256, %v4263
        %v4270 = vadd.f32 %v4257, %v4263
        %v4271 = vadd.f32 %v4258, %v4263
        %v4272 = vmax.f32 %v4264, 0.0
        %v4273 = vmax.f32 %v4265, 0.0
        %v4274 = vmax.f32 %v4266, 0.0
        %v4275 = vmax.f32 %v4267, 0.0
        %v4276 = vmax.f32 %v4268, 0.0
        %v4277 = vmax.f32 %v4269, 0.0
        %v4278 = vmax.f32 %v4270, 0.0
        %v4279 = vmax.f32 %v4271, 0.0
        %v4280 = vlaneseq
        %v4281 = vshrl.u32 %v4280, 7
        %v4282 = vsub.s32 1, %v4281
        %v4283 = vrot.slane %v4259, %v4282
        %v4284 = vmul.f32 %v4272, %v4283
        %v4285 = vmul.f32 %v4273, %v4283
        %v4286 = vmul.f32 %v4274, %v4283
        %v4287 = vmul.f32 %v4275, %v4283
        %v4288 = vmul.f32 %v4276, %v4283
        %v4289 = vmul.f32 %v4277, %v4283
        %v4290 = vmul.f32 %v4278, %v4283
        %v4291 = vmul.f32 %v4279, %v4283
        %v4292 = vlaneseq
        %v4293 = vshrl.u32 %v4292, 7
        %v4294 = vsub.s32 2, %v4293
        %v4295 = vrot.slane %v4259, %v4294
        %v4296 = vadd.f32 %v4284, %v4295
        %v4297 = vadd.f32 %v4285, %v4295
        %v4298 = vadd.f32 %v4286, %v4295
        %v4299 = vadd.f32 %v4287, %v4295
        %v4300 = vadd.f32 %v4288, %v4295
        %v4301 = vadd.f32 %v4289, %v4295
        %v4302 = vadd.f32 %v4290, %v4295
        %v4303 = vadd.f32 %v4291, %v4295
        %v4312 = vrot.slane %v4297, 7
        %vm4313 = vcmask 1041409
        %v4314 = vsel %vm4313, %v4312, %v4296
        %v4315 = vrot.slane %v4298, 6
        %vm4316 = vcmask 1042434
        %v4317 = vsel %vm4316, %v4315, %v4314
        %v4318 = vrot.slane %v4299, 5
        %vm4319 = vcmask 1043459
        %v4320 = vsel %vm4319, %v4318, %v4317
        %v4321 = vrot.slane %v4300, 4
        %vm4322 = vcmask 1044484
        %v4323 = vsel %vm4322, %v4321, %v4320
        %v4324 = vrot.slane %v4301, 3
        %vm4325 = vcmask 1045509
        %v4326 = vsel %vm4325, %v4324, %v4323
        %v4327 = vrot.slane %v4302, 2
        %vm4328 = vcmask 1046534
        %v4329 = vsel %vm4328, %v4327, %v4326
        %v4330 = vrot.slane %v4303, 1
        %vm4331 = vcmask 1047559
        %v4332 = vsel %vm4331, %v4330, %v4329
        %v4334 = vrot.slane %v4296, 1
        %v4335 = vsel %vm4313, %v4297, %v4334
        %v4336 = vrot.slane %v4298, 7
        %v4337 = vsel %vm4316, %v4336, %v4335
        %v4338 = vrot.slane %v4299, 6
        %v4339 = vsel %vm4319, %v4338, %v4337
        %v4340 = vrot.slane %v4300, 5
        %v4341 = vsel %vm4322, %v4340, %v4339
        %v4342 = vrot.slane %v4301, 4
        %v4343 = vsel %vm4325, %v4342, %v4341
        %v4344 = vrot.slane %v4302, 3
        %v4345 = vsel %vm4328, %v4344, %v4343
        %v4346 = vrot.slane %v4303, 2
        %v4347 = vsel %vm4331, %v4346, %v4345
        %4348 = vrot.lane.b32.xlu0 %v4347, 32
        %v4349 = vpop.permute.xlu0 %4348
        %v4351 = vrot.slane %v4296, 2
        %v4352 = vrot.slane %v4297, 1
        %v4353 = vsel %vm4313, %v4352, %v4351
        %v4354 = vsel %vm4316, %v4298, %v4353
        %v4355 = vrot.slane %v4299, 7
        %v4356 = vsel %vm4319, %v4355, %v4354
        %v4357 = vrot.slane %v4300, 6
        %v4358 = vsel %vm4322, %v4357, %v4356
        %v4359 = vrot.slane %v4301, 5
        %v4360 = vsel %vm4325, %v4359, %v4358
        %v4361 = vrot.slane %v4302, 4
        %v4362 = vsel %vm4328, %v4361, %v4360
        %v4363 = vrot.slane %v4303, 3
        %v4364 = vsel %vm4331, %v4363, %v4362
        %4365 = vrot.lane.b32.xlu0 %v4364, 64
        %v4366 = vpop.permute.xlu0 %4365
        %v4368 = vrot.slane %v4296, 3
        %v4369 = vrot.slane %v4297, 2
        %v4370 = vsel %vm4313, %v4369, %v4368
        %v4371 = vrot.slane %v4298, 1
        %v4372 = vsel %vm4316, %v4371, %v4370
        %v4373 = vsel %vm4319, %v4299, %v4372
        %v4374 = vrot.slane %v4300, 7
        %v4375 = vsel %vm4322, %v4374, %v4373
        %v4376 = vrot.slane %v4301, 6
        %v4377 = vsel %vm4325, %v4376, %v4375
        %v4378 = vrot.slane %v4302, 5
        %v4379 = vsel %vm4328, %v4378, %v4377
        %v4380 = vrot.slane %v4303, 4
        %v4381 = vsel %vm4331, %v4380, %v4379
        %4382 = vrot.lane.b32.xlu0 %v4381, 96
        %v4383 = vpop.permute.xlu0 %4382
        %v4385 = vrot.slane %v4296, 4
        %v4386 = vrot.slane %v4297, 3
        %v4387 = vsel %vm4313, %v4386, %v4385
        %v4388 = vrot.slane %v4298, 2
        %v4389 = vsel %vm4316, %v4388, %v4387
        %v4390 = vrot.slane %v4299, 1
        %v4391 = vsel %vm4319, %v4390, %v4389
        %v4392 = vsel %vm4322, %v4300, %v4391
        %v4393 = vrot.slane %v4301, 7
        %v4394 = vsel %vm4325, %v4393, %v4392
        %v4395 = vrot.slane %v4302, 6
        %v4396 = vsel %vm4328, %v4395, %v4394
        %v4397 = vrot.slane %v4303, 5
        %v4398 = vsel %vm4331, %v4397, %v4396
        %v4400 = vrot.slane %v4296, 5
        %v4401 = vrot.slane %v4297, 4
        %v4402 = vsel %vm4313, %v4401, %v4400
        %v4403 = vrot.slane %v4298, 3
        %v4404 = vsel %vm4316, %v4403, %v4402
        %v4405 = vrot.slane %v4299, 2
        %v4406 = vsel %vm4319, %v4405, %v4404
        %v4407 = vrot.slane %v4300, 1
        %v4408 = vsel %vm4322, %v4407, %v4406
        %v4409 = vsel %vm4325, %v4301, %v4408
        %v4410 = vrot.slane %v4302, 7
        %v4411 = vsel %vm4328, %v4410, %v4409
        %v4412 = vrot.slane %v4303, 6
        %v4413 = vsel %vm4331, %v4412, %v4411
        %4414 = vrot.lane.b32.xlu0 %v4413, 32
        %v4415 = vpop.permute.xlu0 %4414
        %v4417 = vrot.slane %v4296, 6
        %v4418 = vrot.slane %v4297, 5
        %v4419 = vsel %vm4313, %v4418, %v4417
        %v4420 = vrot.slane %v4298, 4
        %v4421 = vsel %vm4316, %v4420, %v4419
        %v4422 = vrot.slane %v4299, 3
        %v4423 = vsel %vm4319, %v4422, %v4421
        %v4424 = vrot.slane %v4300, 2
        %v4425 = vsel %vm4322, %v4424, %v4423
        %v4426 = vrot.slane %v4301, 1
        %v4427 = vsel %vm4325, %v4426, %v4425
        %v4428 = vsel %vm4328, %v4302, %v4427
        %v4429 = vrot.slane %v4303, 7
        %v4430 = vsel %vm4331, %v4429, %v4428
        %4431 = vrot.lane.b32.xlu0 %v4430, 64
        %v4432 = vpop.permute.xlu0 %4431
        %v4434 = vrot.slane %v4296, 7
        %v4435 = vrot.slane %v4297, 6
        %v4436 = vsel %vm4313, %v4435, %v4434
        %v4437 = vrot.slane %v4298, 5
        %v4438 = vsel %vm4316, %v4437, %v4436
        %v4439 = vrot.slane %v4299, 4
        %v4440 = vsel %vm4319, %v4439, %v4438
        %v4441 = vrot.slane %v4300, 3
        %v4442 = vsel %vm4322, %v4441, %v4440
        %v4443 = vrot.slane %v4301, 2
        %v4444 = vsel %vm4325, %v4443, %v4442
        %v4445 = vrot.slane %v4302, 1
        %v4446 = vsel %vm4328, %v4445, %v4444
        %v4447 = vsel %vm4331, %v4303, %v4446
        %4448 = vrot.lane.b32.xlu0 %v4447, 96
        %v4449 = vpop.permute.xlu0 %4448
        %v4451 = vsel %vm1394, %v4332, %v4349
        %vm4452 = vcmask 523264
        %v4453 = vsel %vm4452, %v4451, %v4366
        %vm4454 = vcmask 785408
        %v4455 = vsel %vm4454, %v4453, %v4383
        %v4456 = vsel %vm1394, %v4398, %v4415
        %v4457 = vsel %vm4452, %v4456, %v4432
        %v4458 = vsel %vm4454, %v4457, %v4449
        %v4461 = vrot.slane %v4455, 1
        %v4462 = vrot.slane %v4458, 1
        %v4465 = vrot.slane %v4455, 2
        %v4466 = vrot.slane %v4458, 2
        %v4469 = vrot.slane %v4455, 3
        %v4470 = vrot.slane %v4458, 3
        %v4473 = vrot.slane %v4455, 4
        %v4474 = vrot.slane %v4458, 4
        %v4477 = vrot.slane %v4455, 5
        %v4478 = vrot.slane %v4458, 5
        %v4481 = vrot.slane %v4455, 6
        %v4482 = vrot.slane %v4458, 6
        %v4485 = vrot.slane %v4455, 7
        %v4486 = vrot.slane %v4458, 7
        %v4489 = vpack.c.bf16 %v4455, %v4455
        %v4490 = vpack.c.bf16 %v4458, %v4458
        %v4491 = vpack.c.bf16 %v4461, %v4461
        %v4492 = vpack.c.bf16 %v4462, %v4462
        %v4493 = vpack.c.bf16 %v4465, %v4465
        %v4494 = vpack.c.bf16 %v4466, %v4466
        %v4495 = vpack.c.bf16 %v4469, %v4469
        %v4496 = vpack.c.bf16 %v4470, %v4470
        %v4497 = vpack.c.bf16 %v4473, %v4473
        %v4498 = vpack.c.bf16 %v4474, %v4474
        %v4499 = vpack.c.bf16 %v4477, %v4477
        %v4500 = vpack.c.bf16 %v4478, %v4478
        %v4501 = vpack.c.bf16 %v4481, %v4481
        %v4502 = vpack.c.bf16 %v4482, %v4482
        %v4503 = vpack.c.bf16 %v4485, %v4485
        %v4504 = vpack.c.bf16 %v4486, %v4486
        %v4505 = vld [vmem:[%s9] sm:$0xf]
        %v4506 = vld [vmem:[%s9 + $0x4] sm:$0xf]
        %v4507 = vld [vmem:[%s9 + $0x8] sm:$0xf]
        %v4508 = vld [vmem:[%s9 + $0xc] sm:$0xf]
        %v4509 = vld [vmem:[%s9 + $0x10] sm:$0xf]
        %v4510 = vld [vmem:[%s9 + $0x14] sm:$0xf]
        %v4511 = vld [vmem:[%s9 + $0x18] sm:$0xf]
        %v4512 = vld [vmem:[%s9 + $0x1c] sm:$0xf]
        %v4513 = vld [vmem:[%s9 + $0x20] sm:$0xf]
        %v4514 = vld [vmem:[%s9 + $0x24] sm:$0xf]
        %v4515 = vld [vmem:[%s9 + $0x28] sm:$0xf]
        %v4516 = vld [vmem:[%s9 + $0x2c] sm:$0xf]
        %v4517 = vld [vmem:[%s9 + $0x30] sm:$0xf]
        %v4518 = vld [vmem:[%s9 + $0x34] sm:$0xf]
        %v4519 = vld [vmem:[%s9 + $0x38] sm:$0xf]
        %v4520 = vld [vmem:[%s9 + $0x3c] sm:$0xf]
        %v4521 = vld [vmem:[%s9 + $0x40] sm:$0xf]
        %v4522 = vld [vmem:[%s9 + $0x44] sm:$0xf]
        %v4523 = vld [vmem:[%s9 + $0x48] sm:$0xf]
        %v4524 = vld [vmem:[%s9 + $0x4c] sm:$0xf]
        %v4525 = vld [vmem:[%s9 + $0x50] sm:$0xf]
        %v4526 = vld [vmem:[%s9 + $0x54] sm:$0xf]
        %v4527 = vld [vmem:[%s9 + $0x58] sm:$0xf]
        %v4528 = vld [vmem:[%s9 + $0x5c] sm:$0xf]
        %v4529 = vld [vmem:[%s9 + $0x60] sm:$0xf]
        %v4530 = vld [vmem:[%s9 + $0x64] sm:$0xf]
        %v4531 = vld [vmem:[%s9 + $0x68] sm:$0xf]
        %v4532 = vld [vmem:[%s9 + $0x6c] sm:$0xf]
        %v4533 = vld [vmem:[%s9 + $0x70] sm:$0xf]
        %v4534 = vld [vmem:[%s9 + $0x74] sm:$0xf]
        %v4535 = vld [vmem:[%s9 + $0x78] sm:$0xf]
        %v4536 = vld [vmem:[%s9 + $0x7c] sm:$0xf]
        %v4537 = vld [vmem:[%s9 + $0x80] sm:$0xf]
        %v4538 = vld [vmem:[%s9 + $0x84] sm:$0xf]
        %v4539 = vld [vmem:[%s9 + $0x88] sm:$0xf]
        %v4540 = vld [vmem:[%s9 + $0x8c] sm:$0xf]
        %v4541 = vld [vmem:[%s9 + $0x90] sm:$0xf]
        %v4542 = vld [vmem:[%s9 + $0x94] sm:$0xf]
        %v4543 = vld [vmem:[%s9 + $0x98] sm:$0xf]
        %v4544 = vld [vmem:[%s9 + $0x9c] sm:$0xf]
        %v4545 = vld [vmem:[%s9 + $0xa0] sm:$0xf]
        %v4546 = vld [vmem:[%s9 + $0xa4] sm:$0xf]
        %v4547 = vld [vmem:[%s9 + $0xa8] sm:$0xf]
        %v4548 = vld [vmem:[%s9 + $0xac] sm:$0xf]
        %v4549 = vld [vmem:[%s9 + $0xb0] sm:$0xf]
        %v4550 = vld [vmem:[%s9 + $0xb4] sm:$0xf]
        %v4551 = vld [vmem:[%s9 + $0xb8] sm:$0xf]
        %v4552 = vld [vmem:[%s9 + $0xbc] sm:$0xf]
        %v4553 = vld [vmem:[%s9 + $0xc0] sm:$0xf]
        %v4554 = vld [vmem:[%s9 + $0xc4] sm:$0xf]
        %v4555 = vld [vmem:[%s9 + $0xc8] sm:$0xf]
        %v4556 = vld [vmem:[%s9 + $0xcc] sm:$0xf]
        %v4557 = vld [vmem:[%s9 + $0xd0] sm:$0xf]
        %v4558 = vld [vmem:[%s9 + $0xd4] sm:$0xf]
        %v4559 = vld [vmem:[%s9 + $0xd8] sm:$0xf]
        %v4560 = vld [vmem:[%s9 + $0xdc] sm:$0xf]
        %v4561 = vld [vmem:[%s9 + $0xe0] sm:$0xf]
        %v4562 = vld [vmem:[%s9 + $0xe4] sm:$0xf]
        %v4563 = vld [vmem:[%s9 + $0xe8] sm:$0xf]
        %v4564 = vld [vmem:[%s9 + $0xec] sm:$0xf]
        %v4565 = vld [vmem:[%s9 + $0xf0] sm:$0xf]
        %v4566 = vld [vmem:[%s9 + $0xf4] sm:$0xf]
        %v4567 = vld [vmem:[%s9 + $0xf8] sm:$0xf]
        %v4568 = vld [vmem:[%s9 + $0xfc] sm:$0xf]
        %v4569 = vld [vmem:[%s9 + $0x100] sm:$0xf]
        %v4570 = vld [vmem:[%s9 + $0x104] sm:$0xf]
        %v4571 = vld [vmem:[%s9 + $0x108] sm:$0xf]
        %v4572 = vld [vmem:[%s9 + $0x10c] sm:$0xf]
        %v4573 = vld [vmem:[%s9 + $0x110] sm:$0xf]
        %v4574 = vld [vmem:[%s9 + $0x114] sm:$0xf]
        %v4575 = vld [vmem:[%s9 + $0x118] sm:$0xf]
        %v4576 = vld [vmem:[%s9 + $0x11c] sm:$0xf]
        %v4577 = vld [vmem:[%s9 + $0x120] sm:$0xf]
        %v4578 = vld [vmem:[%s9 + $0x124] sm:$0xf]
        %v4579 = vld [vmem:[%s9 + $0x128] sm:$0xf]
        %v4580 = vld [vmem:[%s9 + $0x12c] sm:$0xf]
        %v4581 = vld [vmem:[%s9 + $0x130] sm:$0xf]
        %v4582 = vld [vmem:[%s9 + $0x134] sm:$0xf]
        %v4583 = vld [vmem:[%s9 + $0x138] sm:$0xf]
        %v4584 = vld [vmem:[%s9 + $0x13c] sm:$0xf]
        %v4585 = vld [vmem:[%s9 + $0x140] sm:$0xf]
        %v4586 = vld [vmem:[%s9 + $0x144] sm:$0xf]
        %v4587 = vld [vmem:[%s9 + $0x148] sm:$0xf]
        %v4588 = vld [vmem:[%s9 + $0x14c] sm:$0xf]
        %v4589 = vld [vmem:[%s9 + $0x150] sm:$0xf]
        %v4590 = vld [vmem:[%s9 + $0x154] sm:$0xf]
        %v4591 = vld [vmem:[%s9 + $0x158] sm:$0xf]
        %v4592 = vld [vmem:[%s9 + $0x15c] sm:$0xf]
        %v4593 = vld [vmem:[%s9 + $0x160] sm:$0xf]
        %v4594 = vld [vmem:[%s9 + $0x164] sm:$0xf]
        %v4595 = vld [vmem:[%s9 + $0x168] sm:$0xf]
        %v4596 = vld [vmem:[%s9 + $0x16c] sm:$0xf]
        %v4597 = vld [vmem:[%s9 + $0x170] sm:$0xf]
        %v4598 = vld [vmem:[%s9 + $0x174] sm:$0xf]
        %v4599 = vld [vmem:[%s9 + $0x178] sm:$0xf]
        %v4600 = vld [vmem:[%s9 + $0x17c] sm:$0xf]
        %v4601 = vld [vmem:[%s9 + $0x180] sm:$0xf]
        %v4602 = vld [vmem:[%s9 + $0x184] sm:$0xf]
        %v4603 = vld [vmem:[%s9 + $0x188] sm:$0xf]
        %v4604 = vld [vmem:[%s9 + $0x18c] sm:$0xf]
        %v4605 = vld [vmem:[%s9 + $0x190] sm:$0xf]
        %v4606 = vld [vmem:[%s9 + $0x194] sm:$0xf]
        %v4607 = vld [vmem:[%s9 + $0x198] sm:$0xf]
        %v4608 = vld [vmem:[%s9 + $0x19c] sm:$0xf]
        %v4609 = vld [vmem:[%s9 + $0x1a0] sm:$0xf]
        %v4610 = vld [vmem:[%s9 + $0x1a4] sm:$0xf]
        %v4611 = vld [vmem:[%s9 + $0x1a8] sm:$0xf]
        %v4612 = vld [vmem:[%s9 + $0x1ac] sm:$0xf]
        %v4613 = vld [vmem:[%s9 + $0x1b0] sm:$0xf]
        %v4614 = vld [vmem:[%s9 + $0x1b4] sm:$0xf]
        %v4615 = vld [vmem:[%s9 + $0x1b8] sm:$0xf]
        %v4616 = vld [vmem:[%s9 + $0x1bc] sm:$0xf]
        %v4617 = vld [vmem:[%s9 + $0x1c0] sm:$0xf]
        %v4618 = vld [vmem:[%s9 + $0x1c4] sm:$0xf]
        %v4619 = vld [vmem:[%s9 + $0x1c8] sm:$0xf]
        %v4620 = vld [vmem:[%s9 + $0x1cc] sm:$0xf]
        %v4621 = vld [vmem:[%s9 + $0x1d0] sm:$0xf]
        %v4622 = vld [vmem:[%s9 + $0x1d4] sm:$0xf]
        %v4623 = vld [vmem:[%s9 + $0x1d8] sm:$0xf]
        %v4624 = vld [vmem:[%s9 + $0x1dc] sm:$0xf]
        %v4625 = vld [vmem:[%s9 + $0x1e0] sm:$0xf]
        %v4626 = vld [vmem:[%s9 + $0x1e4] sm:$0xf]
        %v4627 = vld [vmem:[%s9 + $0x1e8] sm:$0xf]
        %v4628 = vld [vmem:[%s9 + $0x1ec] sm:$0xf]
        %v4629 = vld [vmem:[%s9 + $0x1f0] sm:$0xf]
        %v4630 = vld [vmem:[%s9 + $0x1f4] sm:$0xf]
        %v4631 = vld [vmem:[%s9 + $0x1f8] sm:$0xf]
        %v4632 = vld [vmem:[%s9 + $0x1fc] sm:$0xf]
        %v4633 = vld [vmem:[%s9 + $0x200] sm:$0xf]
        %v4634 = vld [vmem:[%s9 + $0x204] sm:$0xf]
        %v4635 = vld [vmem:[%s9 + $0x208] sm:$0xf]
        %v4636 = vld [vmem:[%s9 + $0x20c] sm:$0xf]
        %v4637 = vld [vmem:[%s9 + $0x210] sm:$0xf]
        %v4638 = vld [vmem:[%s9 + $0x214] sm:$0xf]
        %v4639 = vld [vmem:[%s9 + $0x218] sm:$0xf]
        %v4640 = vld [vmem:[%s9 + $0x21c] sm:$0xf]
        %v4641 = vld [vmem:[%s9 + $0x220] sm:$0xf]
        %v4642 = vld [vmem:[%s9 + $0x224] sm:$0xf]
        %v4643 = vld [vmem:[%s9 + $0x228] sm:$0xf]
        %v4644 = vld [vmem:[%s9 + $0x22c] sm:$0xf]
        %v4645 = vld [vmem:[%s9 + $0x230] sm:$0xf]
        %v4646 = vld [vmem:[%s9 + $0x234] sm:$0xf]
        %v4647 = vld [vmem:[%s9 + $0x238] sm:$0xf]
        %v4648 = vld [vmem:[%s9 + $0x23c] sm:$0xf]
        %v4649 = vld [vmem:[%s9 + $0x240] sm:$0xf]
        %v4650 = vld [vmem:[%s9 + $0x244] sm:$0xf]
        %v4651 = vld [vmem:[%s9 + $0x248] sm:$0xf]
        %v4652 = vld [vmem:[%s9 + $0x24c] sm:$0xf]
        %v4653 = vld [vmem:[%s9 + $0x250] sm:$0xf]
        %v4654 = vld [vmem:[%s9 + $0x254] sm:$0xf]
        %v4655 = vld [vmem:[%s9 + $0x258] sm:$0xf]
        %v4656 = vld [vmem:[%s9 + $0x25c] sm:$0xf]
        %v4657 = vld [vmem:[%s9 + $0x260] sm:$0xf]
        %v4658 = vld [vmem:[%s9 + $0x264] sm:$0xf]
        %v4659 = vld [vmem:[%s9 + $0x268] sm:$0xf]
        %v4660 = vld [vmem:[%s9 + $0x26c] sm:$0xf]
        %v4661 = vld [vmem:[%s9 + $0x270] sm:$0xf]
        %v4662 = vld [vmem:[%s9 + $0x274] sm:$0xf]
        %v4663 = vld [vmem:[%s9 + $0x278] sm:$0xf]
        %v4664 = vld [vmem:[%s9 + $0x27c] sm:$0xf]
        %v4665 = vld [vmem:[%s9 + $0x280] sm:$0xf]
        %v4666 = vld [vmem:[%s9 + $0x284] sm:$0xf]
        %v4667 = vld [vmem:[%s9 + $0x288] sm:$0xf]
        %v4668 = vld [vmem:[%s9 + $0x28c] sm:$0xf]
        %v4669 = vld [vmem:[%s9 + $0x290] sm:$0xf]
        %v4670 = vld [vmem:[%s9 + $0x294] sm:$0xf]
        %v4671 = vld [vmem:[%s9 + $0x298] sm:$0xf]
        %v4672 = vld [vmem:[%s9 + $0x29c] sm:$0xf]
        %v4673 = vld [vmem:[%s9 + $0x2a0] sm:$0xf]
        %v4674 = vld [vmem:[%s9 + $0x2a4] sm:$0xf]
        %v4675 = vld [vmem:[%s9 + $0x2a8] sm:$0xf]
        %v4676 = vld [vmem:[%s9 + $0x2ac] sm:$0xf]
        %v4677 = vld [vmem:[%s9 + $0x2b0] sm:$0xf]
        %v4678 = vld [vmem:[%s9 + $0x2b4] sm:$0xf]
        %v4679 = vld [vmem:[%s9 + $0x2b8] sm:$0xf]
        %v4680 = vld [vmem:[%s9 + $0x2bc] sm:$0xf]
        %v4681 = vld [vmem:[%s9 + $0x2c0] sm:$0xf]
        %v4682 = vld [vmem:[%s9 + $0x2c4] sm:$0xf]
        %v4683 = vld [vmem:[%s9 + $0x2c8] sm:$0xf]
        %v4684 = vld [vmem:[%s9 + $0x2cc] sm:$0xf]
        %v4685 = vld [vmem:[%s9 + $0x2d0] sm:$0xf]
        %v4686 = vld [vmem:[%s9 + $0x2d4] sm:$0xf]
        %v4687 = vld [vmem:[%s9 + $0x2d8] sm:$0xf]
        %v4688 = vld [vmem:[%s9 + $0x2dc] sm:$0xf]
        %v4689 = vld [vmem:[%s9 + $0x2e0] sm:$0xf]
        %v4690 = vld [vmem:[%s9 + $0x2e4] sm:$0xf]
        %v4691 = vld [vmem:[%s9 + $0x2e8] sm:$0xf]
        %v4692 = vld [vmem:[%s9 + $0x2ec] sm:$0xf]
        %v4693 = vld [vmem:[%s9 + $0x2f0] sm:$0xf]
        %v4694 = vld [vmem:[%s9 + $0x2f4] sm:$0xf]
        %v4695 = vld [vmem:[%s9 + $0x2f8] sm:$0xf]
        %v4696 = vld [vmem:[%s9 + $0x2fc] sm:$0xf]
        %v4697 = vld [vmem:[%s9 + $0x300] sm:$0xf]
        %v4698 = vld [vmem:[%s9 + $0x304] sm:$0xf]
        %v4699 = vld [vmem:[%s9 + $0x308] sm:$0xf]
        %v4700 = vld [vmem:[%s9 + $0x30c] sm:$0xf]
        %v4701 = vld [vmem:[%s9 + $0x310] sm:$0xf]
        %v4702 = vld [vmem:[%s9 + $0x314] sm:$0xf]
        %v4703 = vld [vmem:[%s9 + $0x318] sm:$0xf]
        %v4704 = vld [vmem:[%s9 + $0x31c] sm:$0xf]
        %v4705 = vld [vmem:[%s9 + $0x320] sm:$0xf]
        %v4706 = vld [vmem:[%s9 + $0x324] sm:$0xf]
        %v4707 = vld [vmem:[%s9 + $0x328] sm:$0xf]
        %v4708 = vld [vmem:[%s9 + $0x32c] sm:$0xf]
        %v4709 = vld [vmem:[%s9 + $0x330] sm:$0xf]
        %v4710 = vld [vmem:[%s9 + $0x334] sm:$0xf]
        %v4711 = vld [vmem:[%s9 + $0x338] sm:$0xf]
        %v4712 = vld [vmem:[%s9 + $0x33c] sm:$0xf]
        %v4713 = vld [vmem:[%s9 + $0x340] sm:$0xf]
        %v4714 = vld [vmem:[%s9 + $0x344] sm:$0xf]
        %v4715 = vld [vmem:[%s9 + $0x348] sm:$0xf]
        %v4716 = vld [vmem:[%s9 + $0x34c] sm:$0xf]
        %v4717 = vld [vmem:[%s9 + $0x350] sm:$0xf]
        %v4718 = vld [vmem:[%s9 + $0x354] sm:$0xf]
        %v4719 = vld [vmem:[%s9 + $0x358] sm:$0xf]
        %v4720 = vld [vmem:[%s9 + $0x35c] sm:$0xf]
        %v4721 = vld [vmem:[%s9 + $0x360] sm:$0xf]
        %v4722 = vld [vmem:[%s9 + $0x364] sm:$0xf]
        %v4723 = vld [vmem:[%s9 + $0x368] sm:$0xf]
        %v4724 = vld [vmem:[%s9 + $0x36c] sm:$0xf]
        %v4725 = vld [vmem:[%s9 + $0x370] sm:$0xf]
        %v4726 = vld [vmem:[%s9 + $0x374] sm:$0xf]
        %v4727 = vld [vmem:[%s9 + $0x378] sm:$0xf]
        %v4728 = vld [vmem:[%s9 + $0x37c] sm:$0xf]
        %v4729 = vld [vmem:[%s9 + $0x380] sm:$0xf]
        %v4730 = vld [vmem:[%s9 + $0x384] sm:$0xf]
        %v4731 = vld [vmem:[%s9 + $0x388] sm:$0xf]
        %v4732 = vld [vmem:[%s9 + $0x38c] sm:$0xf]
        %v4733 = vld [vmem:[%s9 + $0x390] sm:$0xf]
        %v4734 = vld [vmem:[%s9 + $0x394] sm:$0xf]
        %v4735 = vld [vmem:[%s9 + $0x398] sm:$0xf]
        %v4736 = vld [vmem:[%s9 + $0x39c] sm:$0xf]
        %v4737 = vld [vmem:[%s9 + $0x3a0] sm:$0xf]
        %v4738 = vld [vmem:[%s9 + $0x3a4] sm:$0xf]
        %v4739 = vld [vmem:[%s9 + $0x3a8] sm:$0xf]
        %v4740 = vld [vmem:[%s9 + $0x3ac] sm:$0xf]
        %v4741 = vld [vmem:[%s9 + $0x3b0] sm:$0xf]
        %v4742 = vld [vmem:[%s9 + $0x3b4] sm:$0xf]
        %v4743 = vld [vmem:[%s9 + $0x3b8] sm:$0xf]
        %v4744 = vld [vmem:[%s9 + $0x3bc] sm:$0xf]
        %v4745 = vld [vmem:[%s9 + $0x3c0] sm:$0xf]
        %v4746 = vld [vmem:[%s9 + $0x3c4] sm:$0xf]
        %v4747 = vld [vmem:[%s9 + $0x3c8] sm:$0xf]
        %v4748 = vld [vmem:[%s9 + $0x3cc] sm:$0xf]
        %v4749 = vld [vmem:[%s9 + $0x3d0] sm:$0xf]
        %v4750 = vld [vmem:[%s9 + $0x3d4] sm:$0xf]
        %v4751 = vld [vmem:[%s9 + $0x3d8] sm:$0xf]
        %v4752 = vld [vmem:[%s9 + $0x3dc] sm:$0xf]
        %v4753 = vld [vmem:[%s9 + $0x3e0] sm:$0xf]
        %v4754 = vld [vmem:[%s9 + $0x3e4] sm:$0xf]
        %v4755 = vld [vmem:[%s9 + $0x3e8] sm:$0xf]
        %v4756 = vld [vmem:[%s9 + $0x3ec] sm:$0xf]
        %v4757 = vld [vmem:[%s9 + $0x3f0] sm:$0xf]
        %v4758 = vld [vmem:[%s9 + $0x3f4] sm:$0xf]
        %v4759 = vld [vmem:[%s9 + $0x3f8] sm:$0xf]
        %v4760 = vld [vmem:[%s9 + $0x3fc] sm:$0xf]
        %v4761 = vld [vmem:[%s10] sm:$0x1]
        %v5018 = vunpack.c.l.b16 %v4505
        %v5019 = vunpack.c.l.b16 %v4506
        %v5020 = vunpack.c.l.b16 %v4507
        %v5021 = vunpack.c.l.b16 %v4508
        %v5022 = vunpack.c.l.b16 %v4509
        %v5023 = vunpack.c.l.b16 %v4510
        %v5024 = vunpack.c.l.b16 %v4511
        %v5025 = vunpack.c.l.b16 %v4512
        %v5026 = vunpack.c.l.b16 %v4513
        %v5027 = vunpack.c.l.b16 %v4514
        %v5028 = vunpack.c.l.b16 %v4515
        %v5029 = vunpack.c.l.b16 %v4516
        %v5030 = vunpack.c.l.b16 %v4517
        %v5031 = vunpack.c.l.b16 %v4518
        %v5032 = vunpack.c.l.b16 %v4519
        %v5033 = vunpack.c.l.b16 %v4520
        %v5034 = vunpack.c.l.b16 %v4521
        %v5035 = vunpack.c.l.b16 %v4522
        %v5036 = vunpack.c.l.b16 %v4523
        %v5037 = vunpack.c.l.b16 %v4524
        %v5038 = vunpack.c.l.b16 %v4525
        %v5039 = vunpack.c.l.b16 %v4526
        %v5040 = vunpack.c.l.b16 %v4527
        %v5041 = vunpack.c.l.b16 %v4528
        %v5042 = vunpack.c.l.b16 %v4529
        %v5043 = vunpack.c.l.b16 %v4530
        %v5044 = vunpack.c.l.b16 %v4531
        %v5045 = vunpack.c.l.b16 %v4532
        %v5046 = vunpack.c.l.b16 %v4533
        %v5047 = vunpack.c.l.b16 %v4534
        %v5048 = vunpack.c.l.b16 %v4535
        %v5049 = vunpack.c.l.b16 %v4536
        %v5050 = vunpack.c.l.b16 %v4537
        %v5051 = vunpack.c.l.b16 %v4538
        %v5052 = vunpack.c.l.b16 %v4539
        %v5053 = vunpack.c.l.b16 %v4540
        %v5054 = vunpack.c.l.b16 %v4541
        %v5055 = vunpack.c.l.b16 %v4542
        %v5056 = vunpack.c.l.b16 %v4543
        %v5057 = vunpack.c.l.b16 %v4544
        %v5058 = vunpack.c.l.b16 %v4545
        %v5059 = vunpack.c.l.b16 %v4546
        %v5060 = vunpack.c.l.b16 %v4547
        %v5061 = vunpack.c.l.b16 %v4548
        %v5062 = vunpack.c.l.b16 %v4549
        %v5063 = vunpack.c.l.b16 %v4550
        %v5064 = vunpack.c.l.b16 %v4551
        %v5065 = vunpack.c.l.b16 %v4552
        %v5066 = vunpack.c.l.b16 %v4553
        %v5067 = vunpack.c.l.b16 %v4554
        %v5068 = vunpack.c.l.b16 %v4555
        %v5069 = vunpack.c.l.b16 %v4556
        %v5070 = vunpack.c.l.b16 %v4557
        %v5071 = vunpack.c.l.b16 %v4558
        %v5072 = vunpack.c.l.b16 %v4559
        %v5073 = vunpack.c.l.b16 %v4560
        %v5074 = vunpack.c.l.b16 %v4561
        %v5075 = vunpack.c.l.b16 %v4562
        %v5076 = vunpack.c.l.b16 %v4563
        %v5077 = vunpack.c.l.b16 %v4564
        %v5078 = vunpack.c.l.b16 %v4565
        %v5079 = vunpack.c.l.b16 %v4566
        %v5080 = vunpack.c.l.b16 %v4567
        %v5081 = vunpack.c.l.b16 %v4568
        %v5082 = vunpack.c.l.b16 %v4569
        %v5083 = vunpack.c.l.b16 %v4570
        %v5084 = vunpack.c.l.b16 %v4571
        %v5085 = vunpack.c.l.b16 %v4572
        %v5086 = vunpack.c.l.b16 %v4573
        %v5087 = vunpack.c.l.b16 %v4574
        %v5088 = vunpack.c.l.b16 %v4575
        %v5089 = vunpack.c.l.b16 %v4576
        %v5090 = vunpack.c.l.b16 %v4577
        %v5091 = vunpack.c.l.b16 %v4578
        %v5092 = vunpack.c.l.b16 %v4579
        %v5093 = vunpack.c.l.b16 %v4580
        %v5094 = vunpack.c.l.b16 %v4581
        %v5095 = vunpack.c.l.b16 %v4582
        %v5096 = vunpack.c.l.b16 %v4583
        %v5097 = vunpack.c.l.b16 %v4584
        %v5098 = vunpack.c.l.b16 %v4585
        %v5099 = vunpack.c.l.b16 %v4586
        %v5100 = vunpack.c.l.b16 %v4587
        %v5101 = vunpack.c.l.b16 %v4588
        %v5102 = vunpack.c.l.b16 %v4589
        %v5103 = vunpack.c.l.b16 %v4590
        %v5104 = vunpack.c.l.b16 %v4591
        %v5105 = vunpack.c.l.b16 %v4592
        %v5106 = vunpack.c.l.b16 %v4593
        %v5107 = vunpack.c.l.b16 %v4594
        %v5108 = vunpack.c.l.b16 %v4595
        %v5109 = vunpack.c.l.b16 %v4596
        %v5110 = vunpack.c.l.b16 %v4597
        %v5111 = vunpack.c.l.b16 %v4598
        %v5112 = vunpack.c.l.b16 %v4599
        %v5113 = vunpack.c.l.b16 %v4600
        %v5114 = vunpack.c.l.b16 %v4601
        %v5115 = vunpack.c.l.b16 %v4602
        %v5116 = vunpack.c.l.b16 %v4603
        %v5117 = vunpack.c.l.b16 %v4604
        %v5118 = vunpack.c.l.b16 %v4605
        %v5119 = vunpack.c.l.b16 %v4606
        %v5120 = vunpack.c.l.b16 %v4607
        %v5121 = vunpack.c.l.b16 %v4608
        %v5122 = vunpack.c.l.b16 %v4609
        %v5123 = vunpack.c.l.b16 %v4610
        %v5124 = vunpack.c.l.b16 %v4611
        %v5125 = vunpack.c.l.b16 %v4612
        %v5126 = vunpack.c.l.b16 %v4613
        %v5127 = vunpack.c.l.b16 %v4614
        %v5128 = vunpack.c.l.b16 %v4615
        %v5129 = vunpack.c.l.b16 %v4616
        %v5130 = vunpack.c.l.b16 %v4617
        %v5131 = vunpack.c.l.b16 %v4618
        %v5132 = vunpack.c.l.b16 %v4619
        %v5133 = vunpack.c.l.b16 %v4620
        %v5134 = vunpack.c.l.b16 %v4621
        %v5135 = vunpack.c.l.b16 %v4622
        %v5136 = vunpack.c.l.b16 %v4623
        %v5137 = vunpack.c.l.b16 %v4624
        %v5138 = vunpack.c.l.b16 %v4625
        %v5139 = vunpack.c.l.b16 %v4626
        %v5140 = vunpack.c.l.b16 %v4627
        %v5141 = vunpack.c.l.b16 %v4628
        %v5142 = vunpack.c.l.b16 %v4629
        %v5143 = vunpack.c.l.b16 %v4630
        %v5144 = vunpack.c.l.b16 %v4631
        %v5145 = vunpack.c.l.b16 %v4632
        %v5146 = vunpack.c.l.b16 %v4633
        %v5147 = vunpack.c.l.b16 %v4634
        %v5148 = vunpack.c.l.b16 %v4635
        %v5149 = vunpack.c.l.b16 %v4636
        %v5150 = vunpack.c.l.b16 %v4637
        %v5151 = vunpack.c.l.b16 %v4638
        %v5152 = vunpack.c.l.b16 %v4639
        %v5153 = vunpack.c.l.b16 %v4640
        %v5154 = vunpack.c.l.b16 %v4641
        %v5155 = vunpack.c.l.b16 %v4642
        %v5156 = vunpack.c.l.b16 %v4643
        %v5157 = vunpack.c.l.b16 %v4644
        %v5158 = vunpack.c.l.b16 %v4645
        %v5159 = vunpack.c.l.b16 %v4646
        %v5160 = vunpack.c.l.b16 %v4647
        %v5161 = vunpack.c.l.b16 %v4648
        %v5162 = vunpack.c.l.b16 %v4649
        %v5163 = vunpack.c.l.b16 %v4650
        %v5164 = vunpack.c.l.b16 %v4651
        %v5165 = vunpack.c.l.b16 %v4652
        %v5166 = vunpack.c.l.b16 %v4653
        %v5167 = vunpack.c.l.b16 %v4654
        %v5168 = vunpack.c.l.b16 %v4655
        %v5169 = vunpack.c.l.b16 %v4656
        %v5170 = vunpack.c.l.b16 %v4657
        %v5171 = vunpack.c.l.b16 %v4658
        %v5172 = vunpack.c.l.b16 %v4659
        %v5173 = vunpack.c.l.b16 %v4660
        %v5174 = vunpack.c.l.b16 %v4661
        %v5175 = vunpack.c.l.b16 %v4662
        %v5176 = vunpack.c.l.b16 %v4663
        %v5177 = vunpack.c.l.b16 %v4664
        %v5178 = vunpack.c.l.b16 %v4665
        %v5179 = vunpack.c.l.b16 %v4666
        %v5180 = vunpack.c.l.b16 %v4667
        %v5181 = vunpack.c.l.b16 %v4668
        %v5182 = vunpack.c.l.b16 %v4669
        %v5183 = vunpack.c.l.b16 %v4670
        %v5184 = vunpack.c.l.b16 %v4671
        %v5185 = vunpack.c.l.b16 %v4672
        %v5186 = vunpack.c.l.b16 %v4673
        %v5187 = vunpack.c.l.b16 %v4674
        %v5188 = vunpack.c.l.b16 %v4675
        %v5189 = vunpack.c.l.b16 %v4676
        %v5190 = vunpack.c.l.b16 %v4677
        %v5191 = vunpack.c.l.b16 %v4678
        %v5192 = vunpack.c.l.b16 %v4679
        %v5193 = vunpack.c.l.b16 %v4680
        %v5194 = vunpack.c.l.b16 %v4681
        %v5195 = vunpack.c.l.b16 %v4682
        %v5196 = vunpack.c.l.b16 %v4683
        %v5197 = vunpack.c.l.b16 %v4684
        %v5198 = vunpack.c.l.b16 %v4685
        %v5199 = vunpack.c.l.b16 %v4686
        %v5200 = vunpack.c.l.b16 %v4687
        %v5201 = vunpack.c.l.b16 %v4688
        %v5202 = vunpack.c.l.b16 %v4689
        %v5203 = vunpack.c.l.b16 %v4690
        %v5204 = vunpack.c.l.b16 %v4691
        %v5205 = vunpack.c.l.b16 %v4692
        %v5206 = vunpack.c.l.b16 %v4693
        %v5207 = vunpack.c.l.b16 %v4694
        %v5208 = vunpack.c.l.b16 %v4695
        %v5209 = vunpack.c.l.b16 %v4696
        %v5210 = vunpack.c.l.b16 %v4697
        %v5211 = vunpack.c.l.b16 %v4698
        %v5212 = vunpack.c.l.b16 %v4699
        %v5213 = vunpack.c.l.b16 %v4700
        %v5214 = vunpack.c.l.b16 %v4701
        %v5215 = vunpack.c.l.b16 %v4702
        %v5216 = vunpack.c.l.b16 %v4703
        %v5217 = vunpack.c.l.b16 %v4704
        %v5218 = vunpack.c.l.b16 %v4705
        %v5219 = vunpack.c.l.b16 %v4706
        %v5220 = vunpack.c.l.b16 %v4707
        %v5221 = vunpack.c.l.b16 %v4708
        %v5222 = vunpack.c.l.b16 %v4709
        %v5223 = vunpack.c.l.b16 %v4710
        %v5224 = vunpack.c.l.b16 %v4711
        %v5225 = vunpack.c.l.b16 %v4712
        %v5226 = vunpack.c.l.b16 %v4713
        %v5227 = vunpack.c.l.b16 %v4714
        %v5228 = vunpack.c.l.b16 %v4715
        %v5229 = vunpack.c.l.b16 %v4716
        %v5230 = vunpack.c.l.b16 %v4717
        %v5231 = vunpack.c.l.b16 %v4718
        %v5232 = vunpack.c.l.b16 %v4719
        %v5233 = vunpack.c.l.b16 %v4720
        %v5234 = vunpack.c.l.b16 %v4721
        %v5235 = vunpack.c.l.b16 %v4722
        %v5236 = vunpack.c.l.b16 %v4723
        %v5237 = vunpack.c.l.b16 %v4724
        %v5238 = vunpack.c.l.b16 %v4725
        %v5239 = vunpack.c.l.b16 %v4726
        %v5240 = vunpack.c.l.b16 %v4727
        %v5241 = vunpack.c.l.b16 %v4728
        %v5242 = vunpack.c.l.b16 %v4729
        %v5243 = vunpack.c.l.b16 %v4730
        %v5244 = vunpack.c.l.b16 %v4731
        %v5245 = vunpack.c.l.b16 %v4732
        %v5246 = vunpack.c.l.b16 %v4733
        %v5247 = vunpack.c.l.b16 %v4734
        %v5248 = vunpack.c.l.b16 %v4735
        %v5249 = vunpack.c.l.b16 %v4736
        %v5250 = vunpack.c.l.b16 %v4737
        %v5251 = vunpack.c.l.b16 %v4738
        %v5252 = vunpack.c.l.b16 %v4739
        %v5253 = vunpack.c.l.b16 %v4740
        %v5254 = vunpack.c.l.b16 %v4741
        %v5255 = vunpack.c.l.b16 %v4742
        %v5256 = vunpack.c.l.b16 %v4743
        %v5257 = vunpack.c.l.b16 %v4744
        %v5258 = vunpack.c.l.b16 %v4745
        %v5259 = vunpack.c.l.b16 %v4746
        %v5260 = vunpack.c.l.b16 %v4747
        %v5261 = vunpack.c.l.b16 %v4748
        %v5262 = vunpack.c.l.b16 %v4749
        %v5263 = vunpack.c.l.b16 %v4750
        %v5264 = vunpack.c.l.b16 %v4751
        %v5265 = vunpack.c.l.b16 %v4752
        %v5266 = vunpack.c.l.b16 %v4753
        %v5267 = vunpack.c.l.b16 %v4754
        %v5268 = vunpack.c.l.b16 %v4755
        %v5269 = vunpack.c.l.b16 %v4756
        %v5270 = vunpack.c.l.b16 %v4757
        %v5271 = vunpack.c.l.b16 %v4758
        %v5272 = vunpack.c.l.b16 %v4759
        %v5273 = vunpack.c.l.b16 %v4760
        %v5274 = vpack.c.b16 %v5019, %v5018
        %v5275 = vpack.c.b16 %v5021, %v5020
        %v5276 = vpack.c.b16 %v5023, %v5022
        %v5277 = vpack.c.b16 %v5025, %v5024
        %v5278 = vpack.c.b16 %v5027, %v5026
        %v5279 = vpack.c.b16 %v5029, %v5028
        %v5280 = vpack.c.b16 %v5031, %v5030
        %v5281 = vpack.c.b16 %v5033, %v5032
        %v5282 = vpack.c.b16 %v5035, %v5034
        %v5283 = vpack.c.b16 %v5037, %v5036
        %v5284 = vpack.c.b16 %v5039, %v5038
        %v5285 = vpack.c.b16 %v5041, %v5040
        %v5286 = vpack.c.b16 %v5043, %v5042
        %v5287 = vpack.c.b16 %v5045, %v5044
        %v5288 = vpack.c.b16 %v5047, %v5046
        %v5289 = vpack.c.b16 %v5049, %v5048
        %v5290 = vpack.c.b16 %v5051, %v5050
        %v5291 = vpack.c.b16 %v5053, %v5052
        %v5292 = vpack.c.b16 %v5055, %v5054
        %v5293 = vpack.c.b16 %v5057, %v5056
        %v5294 = vpack.c.b16 %v5059, %v5058
        %v5295 = vpack.c.b16 %v5061, %v5060
        %v5296 = vpack.c.b16 %v5063, %v5062
        %v5297 = vpack.c.b16 %v5065, %v5064
        %v5298 = vpack.c.b16 %v5067, %v5066
        %v5299 = vpack.c.b16 %v5069, %v5068
        %v5300 = vpack.c.b16 %v5071, %v5070
        %v5301 = vpack.c.b16 %v5073, %v5072
        %v5302 = vpack.c.b16 %v5075, %v5074
        %v5303 = vpack.c.b16 %v5077, %v5076
        %v5304 = vpack.c.b16 %v5079, %v5078
        %v5305 = vpack.c.b16 %v5081, %v5080
        %v5306 = vpack.c.b16 %v5083, %v5082
        %v5307 = vpack.c.b16 %v5085, %v5084
        %v5308 = vpack.c.b16 %v5087, %v5086
        %v5309 = vpack.c.b16 %v5089, %v5088
        %v5310 = vpack.c.b16 %v5091, %v5090
        %v5311 = vpack.c.b16 %v5093, %v5092
        %v5312 = vpack.c.b16 %v5095, %v5094
        %v5313 = vpack.c.b16 %v5097, %v5096
        %v5314 = vpack.c.b16 %v5099, %v5098
        %v5315 = vpack.c.b16 %v5101, %v5100
        %v5316 = vpack.c.b16 %v5103, %v5102
        %v5317 = vpack.c.b16 %v5105, %v5104
        %v5318 = vpack.c.b16 %v5107, %v5106
        %v5319 = vpack.c.b16 %v5109, %v5108
        %v5320 = vpack.c.b16 %v5111, %v5110
        %v5321 = vpack.c.b16 %v5113, %v5112
        %v5322 = vpack.c.b16 %v5115, %v5114
        %v5323 = vpack.c.b16 %v5117, %v5116
        %v5324 = vpack.c.b16 %v5119, %v5118
        %v5325 = vpack.c.b16 %v5121, %v5120
        %v5326 = vpack.c.b16 %v5123, %v5122
        %v5327 = vpack.c.b16 %v5125, %v5124
        %v5328 = vpack.c.b16 %v5127, %v5126
        %v5329 = vpack.c.b16 %v5129, %v5128
        %v5330 = vpack.c.b16 %v5131, %v5130
        %v5331 = vpack.c.b16 %v5133, %v5132
        %v5332 = vpack.c.b16 %v5135, %v5134
        %v5333 = vpack.c.b16 %v5137, %v5136
        %v5334 = vpack.c.b16 %v5139, %v5138
        %v5335 = vpack.c.b16 %v5141, %v5140
        %v5336 = vpack.c.b16 %v5143, %v5142
        %v5337 = vpack.c.b16 %v5145, %v5144
        %v5338 = vpack.c.b16 %v5147, %v5146
        %v5339 = vpack.c.b16 %v5149, %v5148
        %v5340 = vpack.c.b16 %v5151, %v5150
        %v5341 = vpack.c.b16 %v5153, %v5152
        %v5342 = vpack.c.b16 %v5155, %v5154
        %v5343 = vpack.c.b16 %v5157, %v5156
        %v5344 = vpack.c.b16 %v5159, %v5158
        %v5345 = vpack.c.b16 %v5161, %v5160
        %v5346 = vpack.c.b16 %v5163, %v5162
        %v5347 = vpack.c.b16 %v5165, %v5164
        %v5348 = vpack.c.b16 %v5167, %v5166
        %v5349 = vpack.c.b16 %v5169, %v5168
        %v5350 = vpack.c.b16 %v5171, %v5170
        %v5351 = vpack.c.b16 %v5173, %v5172
        %v5352 = vpack.c.b16 %v5175, %v5174
        %v5353 = vpack.c.b16 %v5177, %v5176
        %v5354 = vpack.c.b16 %v5179, %v5178
        %v5355 = vpack.c.b16 %v5181, %v5180
        %v5356 = vpack.c.b16 %v5183, %v5182
        %v5357 = vpack.c.b16 %v5185, %v5184
        %v5358 = vpack.c.b16 %v5187, %v5186
        %v5359 = vpack.c.b16 %v5189, %v5188
        %v5360 = vpack.c.b16 %v5191, %v5190
        %v5361 = vpack.c.b16 %v5193, %v5192
        %v5362 = vpack.c.b16 %v5195, %v5194
        %v5363 = vpack.c.b16 %v5197, %v5196
        %v5364 = vpack.c.b16 %v5199, %v5198
        %v5365 = vpack.c.b16 %v5201, %v5200
        %v5366 = vpack.c.b16 %v5203, %v5202
        %v5367 = vpack.c.b16 %v5205, %v5204
        %v5368 = vpack.c.b16 %v5207, %v5206
        %v5369 = vpack.c.b16 %v5209, %v5208
        %v5370 = vpack.c.b16 %v5211, %v5210
        %v5371 = vpack.c.b16 %v5213, %v5212
        %v5372 = vpack.c.b16 %v5215, %v5214
        %v5373 = vpack.c.b16 %v5217, %v5216
        %v5374 = vpack.c.b16 %v5219, %v5218
        %v5375 = vpack.c.b16 %v5221, %v5220
        %v5376 = vpack.c.b16 %v5223, %v5222
        %v5377 = vpack.c.b16 %v5225, %v5224
        %v5378 = vpack.c.b16 %v5227, %v5226
        %v5379 = vpack.c.b16 %v5229, %v5228
        %v5380 = vpack.c.b16 %v5231, %v5230
        %v5381 = vpack.c.b16 %v5233, %v5232
        %v5382 = vpack.c.b16 %v5235, %v5234
        %v5383 = vpack.c.b16 %v5237, %v5236
        %v5384 = vpack.c.b16 %v5239, %v5238
        %v5385 = vpack.c.b16 %v5241, %v5240
        %v5386 = vpack.c.b16 %v5243, %v5242
        %v5387 = vpack.c.b16 %v5245, %v5244
        %v5388 = vpack.c.b16 %v5247, %v5246
        %v5389 = vpack.c.b16 %v5249, %v5248
        %v5390 = vpack.c.b16 %v5251, %v5250
        %v5391 = vpack.c.b16 %v5253, %v5252
        %v5392 = vpack.c.b16 %v5255, %v5254
        %v5393 = vpack.c.b16 %v5257, %v5256
        %v5394 = vpack.c.b16 %v5259, %v5258
        %v5395 = vpack.c.b16 %v5261, %v5260
        %v5396 = vpack.c.b16 %v5263, %v5262
        %v5397 = vpack.c.b16 %v5265, %v5264
        %v5398 = vpack.c.b16 %v5267, %v5266
        %v5399 = vpack.c.b16 %v5269, %v5268
        %v5400 = vpack.c.b16 %v5271, %v5270
        %v5401 = vpack.c.b16 %v5273, %v5272
        %5530 = vmatprep.subr.bf16.mxu0 0
        %5531 = vmatpush1.bf16.msra.mxu0 %v5281
        %5532 = vmatprep.subr.bf16.mxu0 0
        %5533 = vmatpush1.bf16.msra.mxu0 %v5280
        %5534 = vmatprep.subr.bf16.mxu0 0
        %5535 = vmatpush1.bf16.msra.mxu0 %v5279
        %5536 = vmatprep.subr.bf16.mxu0 0
        %5537 = vmatpush1.bf16.msra.mxu0 %v5278
        %5538 = vmatprep.subr.bf16.mxu0 0
        %5539 = vmatpush1.bf16.msra.mxu0 %v5277
        %5540 = vmatprep.subr.bf16.mxu0 0
        %5541 = vmatpush1.bf16.msra.mxu0 %v5276
        %5542 = vmatprep.subr.bf16.mxu0 0
        %5543 = vmatpush1.bf16.msra.mxu0 %v5275
        %5544 = vmatprep.subr.bf16.mxu0 0
        %5545 = vmatpush1.bf16.msra.mxu0 %v5274
        %5546 = vmatprep.subr.bf16.mxu0 0
        %5547 = vmatpush2.bf16.msra.mxu0 %v5289
        %5548 = vmatprep.subr.bf16.mxu0 0
        %5549 = vmatpush2.bf16.msra.mxu0 %v5288
        %5550 = vmatprep.subr.bf16.mxu0 0
        %5551 = vmatpush2.bf16.msra.mxu0 %v5287
        %5552 = vmatprep.subr.bf16.mxu0 0
        %5553 = vmatpush2.bf16.msra.mxu0 %v5286
        %5554 = vmatprep.subr.bf16.mxu0 0
        %5555 = vmatpush2.bf16.msra.mxu0 %v5285
        %5556 = vmatprep.subr.bf16.mxu0 0
        %5557 = vmatpush2.bf16.msra.mxu0 %v5284
        %5558 = vmatprep.subr.bf16.mxu0 0
        %5559 = vmatpush2.bf16.msra.mxu0 %v5283
        %5560 = vmatprep.subr.bf16.mxu0 0
        %5561 = vmatpush2.bf16.msra.mxu0 %v5282
        %5562 = vmatprep.mubr.bf16.mxu0 %v4490
        %5563 = vmatmul.mubr.bf16.gmra.mxu0 %v4489
        %v5564 = vpop.f32.mrf.mxu0
        %v5565 = vadd.f32 %v4761, %v5564
        %v5566 = vpop.f32.mrf.mxu0
        %v5567 = vpop.f32.mrf.mxu0
        %v5568 = vpop.f32.mrf.mxu0
        %5569 = vdwg.mxu0
        %5570 = vmatprep.subr.bf16.mxu0 0
        %5571 = vmatpush1.bf16.msra.mxu0 %v5297
        %5572 = vmatprep.subr.bf16.mxu0 0
        %5573 = vmatpush1.bf16.msra.mxu0 %v5296
        %5574 = vmatprep.subr.bf16.mxu0 0
        %5575 = vmatpush1.bf16.msra.mxu0 %v5295
        %5576 = vmatprep.subr.bf16.mxu0 0
        %5577 = vmatpush1.bf16.msra.mxu0 %v5294
        %5578 = vmatprep.subr.bf16.mxu0 0
        %5579 = vmatpush1.bf16.msra.mxu0 %v5293
        %5580 = vmatprep.subr.bf16.mxu0 0
        %5581 = vmatpush1.bf16.msra.mxu0 %v5292
        %5582 = vmatprep.subr.bf16.mxu0 0
        %5583 = vmatpush1.bf16.msra.mxu0 %v5291
        %5584 = vmatprep.subr.bf16.mxu0 0
        %5585 = vmatpush1.bf16.msra.mxu0 %v5290
        %5586 = vmatprep.subr.bf16.mxu0 0
        %5587 = vmatpush2.bf16.msra.mxu0 %v5305
        %5588 = vmatprep.subr.bf16.mxu0 0
        %5589 = vmatpush2.bf16.msra.mxu0 %v5304
        %5590 = vmatprep.subr.bf16.mxu0 0
        %5591 = vmatpush2.bf16.msra.mxu0 %v5303
        %5592 = vmatprep.subr.bf16.mxu0 0
        %5593 = vmatpush2.bf16.msra.mxu0 %v5302
        %5594 = vmatprep.subr.bf16.mxu0 0
        %5595 = vmatpush2.bf16.msra.mxu0 %v5301
        %5596 = vmatprep.subr.bf16.mxu0 0
        %5597 = vmatpush2.bf16.msra.mxu0 %v5300
        %5598 = vmatprep.subr.bf16.mxu0 0
        %5599 = vmatpush2.bf16.msra.mxu0 %v5299
        %5600 = vmatprep.subr.bf16.mxu0 0
        %5601 = vmatpush2.bf16.msra.mxu0 %v5298
        %5602 = vmatprep.mubr.bf16.mxu0 %v4492
        %5603 = vmatmul.mubr.bf16.gmra.mxu0 %v4491
        %v5604 = vpop.f32.mrf.mxu0
        %v5605 = vadd.f32 %v5565, %v5604
        %v5606 = vpop.f32.mrf.mxu0
        %v5607 = vpop.f32.mrf.mxu0
        %v5608 = vpop.f32.mrf.mxu0
        %5609 = vdwg.mxu0
        %5610 = vmatprep.subr.bf16.mxu0 0
        %5611 = vmatpush1.bf16.msra.mxu0 %v5313
        %5612 = vmatprep.subr.bf16.mxu0 0
        %5613 = vmatpush1.bf16.msra.mxu0 %v5312
        %5614 = vmatprep.subr.bf16.mxu0 0
        %5615 = vmatpush1.bf16.msra.mxu0 %v5311
        %5616 = vmatprep.subr.bf16.mxu0 0
        %5617 = vmatpush1.bf16.msra.mxu0 %v5310
        %5618 = vmatprep.subr.bf16.mxu0 0
        %5619 = vmatpush1.bf16.msra.mxu0 %v5309
        %5620 = vmatprep.subr.bf16.mxu0 0
        %5621 = vmatpush1.bf16.msra.mxu0 %v5308
        %5622 = vmatprep.subr.bf16.mxu0 0
        %5623 = vmatpush1.bf16.msra.mxu0 %v5307
        %5624 = vmatprep.subr.bf16.mxu0 0
        %5625 = vmatpush1.bf16.msra.mxu0 %v5306
        %5626 = vmatprep.subr.bf16.mxu0 0
        %5627 = vmatpush2.bf16.msra.mxu0 %v5321
        %5628 = vmatprep.subr.bf16.mxu0 0
        %5629 = vmatpush2.bf16.msra.mxu0 %v5320
        %5630 = vmatprep.subr.bf16.mxu0 0
        %5631 = vmatpush2.bf16.msra.mxu0 %v5319
        %5632 = vmatprep.subr.bf16.mxu0 0
        %5633 = vmatpush2.bf16.msra.mxu0 %v5318
        %5634 = vmatprep.subr.bf16.mxu0 0
        %5635 = vmatpush2.bf16.msra.mxu0 %v5317
        %5636 = vmatprep.subr.bf16.mxu0 0
        %5637 = vmatpush2.bf16.msra.mxu0 %v5316
        %5638 = vmatprep.subr.bf16.mxu0 0
        %5639 = vmatpush2.bf16.msra.mxu0 %v5315
        %5640 = vmatprep.subr.bf16.mxu0 0
        %5641 = vmatpush2.bf16.msra.mxu0 %v5314
        %5642 = vmatprep.mubr.bf16.mxu0 %v4494
        %5643 = vmatmul.mubr.bf16.gmra.mxu0 %v4493
        %v5644 = vpop.f32.mrf.mxu0
        %v5645 = vadd.f32 %v5605, %v5644
        %v5646 = vpop.f32.mrf.mxu0
        %v5647 = vpop.f32.mrf.mxu0
        %v5648 = vpop.f32.mrf.mxu0
        %5649 = vdwg.mxu0
        %5650 = vmatprep.subr.bf16.mxu0 0
        %5651 = vmatpush1.bf16.msra.mxu0 %v5329
        %5652 = vmatprep.subr.bf16.mxu0 0
        %5653 = vmatpush1.bf16.msra.mxu0 %v5328
        %5654 = vmatprep.subr.bf16.mxu0 0
        %5655 = vmatpush1.bf16.msra.mxu0 %v5327
        %5656 = vmatprep.subr.bf16.mxu0 0
        %5657 = vmatpush1.bf16.msra.mxu0 %v5326
        %5658 = vmatprep.subr.bf16.mxu0 0
        %5659 = vmatpush1.bf16.msra.mxu0 %v5325
        %5660 = vmatprep.subr.bf16.mxu0 0
        %5661 = vmatpush1.bf16.msra.mxu0 %v5324
        %5662 = vmatprep.subr.bf16.mxu0 0
        %5663 = vmatpush1.bf16.msra.mxu0 %v5323
        %5664 = vmatprep.subr.bf16.mxu0 0
        %5665 = vmatpush1.bf16.msra.mxu0 %v5322
        %5666 = vmatprep.subr.bf16.mxu0 0
        %5667 = vmatpush2.bf16.msra.mxu0 %v5337
        %5668 = vmatprep.subr.bf16.mxu0 0
        %5669 = vmatpush2.bf16.msra.mxu0 %v5336
        %5670 = vmatprep.subr.bf16.mxu0 0
        %5671 = vmatpush2.bf16.msra.mxu0 %v5335
        %5672 = vmatprep.subr.bf16.mxu0 0
        %5673 = vmatpush2.bf16.msra.mxu0 %v5334
        %5674 = vmatprep.subr.bf16.mxu0 0
        %5675 = vmatpush2.bf16.msra.mxu0 %v5333
        %5676 = vmatprep.subr.bf16.mxu0 0
        %5677 = vmatpush2.bf16.msra.mxu0 %v5332
        %5678 = vmatprep.subr.bf16.mxu0 0
        %5679 = vmatpush2.bf16.msra.mxu0 %v5331
        %5680 = vmatprep.subr.bf16.mxu0 0
        %5681 = vmatpush2.bf16.msra.mxu0 %v5330
        %5682 = vmatprep.mubr.bf16.mxu0 %v4496
        %5683 = vmatmul.mubr.bf16.gmra.mxu0 %v4495
        %v5684 = vpop.f32.mrf.mxu0
        %v5685 = vadd.f32 %v5645, %v5684
        %v5686 = vpop.f32.mrf.mxu0
        %v5687 = vpop.f32.mrf.mxu0
        %v5688 = vpop.f32.mrf.mxu0
        %5689 = vdwg.mxu0
        %5690 = vmatprep.subr.bf16.mxu0 0
        %5691 = vmatpush1.bf16.msra.mxu0 %v5345
        %5692 = vmatprep.subr.bf16.mxu0 0
        %5693 = vmatpush1.bf16.msra.mxu0 %v5344
        %5694 = vmatprep.subr.bf16.mxu0 0
        %5695 = vmatpush1.bf16.msra.mxu0 %v5343
        %5696 = vmatprep.subr.bf16.mxu0 0
        %5697 = vmatpush1.bf16.msra.mxu0 %v5342
        %5698 = vmatprep.subr.bf16.mxu0 0
        %5699 = vmatpush1.bf16.msra.mxu0 %v5341
        %5700 = vmatprep.subr.bf16.mxu0 0
        %5701 = vmatpush1.bf16.msra.mxu0 %v5340
        %5702 = vmatprep.subr.bf16.mxu0 0
        %5703 = vmatpush1.bf16.msra.mxu0 %v5339
        %5704 = vmatprep.subr.bf16.mxu0 0
        %5705 = vmatpush1.bf16.msra.mxu0 %v5338
        %5706 = vmatprep.subr.bf16.mxu0 0
        %5707 = vmatpush2.bf16.msra.mxu0 %v5353
        %5708 = vmatprep.subr.bf16.mxu0 0
        %5709 = vmatpush2.bf16.msra.mxu0 %v5352
        %5710 = vmatprep.subr.bf16.mxu0 0
        %5711 = vmatpush2.bf16.msra.mxu0 %v5351
        %5712 = vmatprep.subr.bf16.mxu0 0
        %5713 = vmatpush2.bf16.msra.mxu0 %v5350
        %5714 = vmatprep.subr.bf16.mxu0 0
        %5715 = vmatpush2.bf16.msra.mxu0 %v5349
        %5716 = vmatprep.subr.bf16.mxu0 0
        %5717 = vmatpush2.bf16.msra.mxu0 %v5348
        %5718 = vmatprep.subr.bf16.mxu0 0
        %5719 = vmatpush2.bf16.msra.mxu0 %v5347
        %5720 = vmatprep.subr.bf16.mxu0 0
        %5721 = vmatpush2.bf16.msra.mxu0 %v5346
        %5722 = vmatprep.mubr.bf16.mxu0 %v4498
        %5723 = vmatmul.mubr.bf16.gmra.mxu0 %v4497
        %v5724 = vpop.f32.mrf.mxu0
        %v5725 = vadd.f32 %v5685, %v5724
        %v5726 = vpop.f32.mrf.mxu0
        %v5727 = vpop.f32.mrf.mxu0
        %v5728 = vpop.f32.mrf.mxu0
        %5729 = vdwg.mxu0
        %5730 = vmatprep.subr.bf16.mxu0 0
        %5731 = vmatpush1.bf16.msra.mxu0 %v5361
        %5732 = vmatprep.subr.bf16.mxu0 0
        %5733 = vmatpush1.bf16.msra.mxu0 %v5360
        %5734 = vmatprep.subr.bf16.mxu0 0
        %5735 = vmatpush1.bf16.msra.mxu0 %v5359
        %5736 = vmatprep.subr.bf16.mxu0 0
        %5737 = vmatpush1.bf16.msra.mxu0 %v5358
        %5738 = vmatprep.subr.bf16.mxu0 0
        %5739 = vmatpush1.bf16.msra.mxu0 %v5357
        %5740 = vmatprep.subr.bf16.mxu0 0
        %5741 = vmatpush1.bf16.msra.mxu0 %v5356
        %5742 = vmatprep.subr.bf16.mxu0 0
        %5743 = vmatpush1.bf16.msra.mxu0 %v5355
        %5744 = vmatprep.subr.bf16.mxu0 0
        %5745 = vmatpush1.bf16.msra.mxu0 %v5354
        %5746 = vmatprep.subr.bf16.mxu0 0
        %5747 = vmatpush2.bf16.msra.mxu0 %v5369
        %5748 = vmatprep.subr.bf16.mxu0 0
        %5749 = vmatpush2.bf16.msra.mxu0 %v5368
        %5750 = vmatprep.subr.bf16.mxu0 0
        %5751 = vmatpush2.bf16.msra.mxu0 %v5367
        %5752 = vmatprep.subr.bf16.mxu0 0
        %5753 = vmatpush2.bf16.msra.mxu0 %v5366
        %5754 = vmatprep.subr.bf16.mxu0 0
        %5755 = vmatpush2.bf16.msra.mxu0 %v5365
        %5756 = vmatprep.subr.bf16.mxu0 0
        %5757 = vmatpush2.bf16.msra.mxu0 %v5364
        %5758 = vmatprep.subr.bf16.mxu0 0
        %5759 = vmatpush2.bf16.msra.mxu0 %v5363
        %5760 = vmatprep.subr.bf16.mxu0 0
        %5761 = vmatpush2.bf16.msra.mxu0 %v5362
        %5762 = vmatprep.mubr.bf16.mxu0 %v4500
        %5763 = vmatmul.mubr.bf16.gmra.mxu0 %v4499
        %v5764 = vpop.f32.mrf.mxu0
        %v5765 = vadd.f32 %v5725, %v5764
        %v5766 = vpop.f32.mrf.mxu0
        %v5767 = vpop.f32.mrf.mxu0
        %v5768 = vpop.f32.mrf.mxu0
        %5769 = vdwg.mxu0
        %5770 = vmatprep.subr.bf16.mxu0 0
        %5771 = vmatpush1.bf16.msra.mxu0 %v5377
        %5772 = vmatprep.subr.bf16.mxu0 0
        %5773 = vmatpush1.bf16.msra.mxu0 %v5376
        %5774 = vmatprep.subr.bf16.mxu0 0
        %5775 = vmatpush1.bf16.msra.mxu0 %v5375
        %5776 = vmatprep.subr.bf16.mxu0 0
        %5777 = vmatpush1.bf16.msra.mxu0 %v5374
        %5778 = vmatprep.subr.bf16.mxu0 0
        %5779 = vmatpush1.bf16.msra.mxu0 %v5373
        %5780 = vmatprep.subr.bf16.mxu0 0
        %5781 = vmatpush1.bf16.msra.mxu0 %v5372
        %5782 = vmatprep.subr.bf16.mxu0 0
        %5783 = vmatpush1.bf16.msra.mxu0 %v5371
        %5784 = vmatprep.subr.bf16.mxu0 0
        %5785 = vmatpush1.bf16.msra.mxu0 %v5370
        %5786 = vmatprep.subr.bf16.mxu0 0
        %5787 = vmatpush2.bf16.msra.mxu0 %v5385
        %5788 = vmatprep.subr.bf16.mxu0 0
        %5789 = vmatpush2.bf16.msra.mxu0 %v5384
        %5790 = vmatprep.subr.bf16.mxu0 0
        %5791 = vmatpush2.bf16.msra.mxu0 %v5383
        %5792 = vmatprep.subr.bf16.mxu0 0
        %5793 = vmatpush2.bf16.msra.mxu0 %v5382
        %5794 = vmatprep.subr.bf16.mxu0 0
        %5795 = vmatpush2.bf16.msra.mxu0 %v5381
        %5796 = vmatprep.subr.bf16.mxu0 0
        %5797 = vmatpush2.bf16.msra.mxu0 %v5380
        %5798 = vmatprep.subr.bf16.mxu0 0
        %5799 = vmatpush2.bf16.msra.mxu0 %v5379
        %5800 = vmatprep.subr.bf16.mxu0 0
        %5801 = vmatpush2.bf16.msra.mxu0 %v5378
        %5802 = vmatprep.mubr.bf16.mxu0 %v4502
        %5803 = vmatmul.mubr.bf16.gmra.mxu0 %v4501
        %v5804 = vpop.f32.mrf.mxu0
        %v5805 = vadd.f32 %v5765, %v5804
        %v5806 = vpop.f32.mrf.mxu0
        %v5807 = vpop.f32.mrf.mxu0
        %v5808 = vpop.f32.mrf.mxu0
        %5809 = vdwg.mxu0
        %5810 = vmatprep.subr.bf16.mxu0 0
        %5811 = vmatpush1.bf16.msra.mxu0 %v5393
        %5812 = vmatprep.subr.bf16.mxu0 0
        %5813 = vmatpush1.bf16.msra.mxu0 %v5392
        %5814 = vmatprep.subr.bf16.mxu0 0
        %5815 = vmatpush1.bf16.msra.mxu0 %v5391
        %5816 = vmatprep.subr.bf16.mxu0 0
        %5817 = vmatpush1.bf16.msra.mxu0 %v5390
        %5818 = vmatprep.subr.bf16.mxu0 0
        %5819 = vmatpush1.bf16.msra.mxu0 %v5389
        %5820 = vmatprep.subr.bf16.mxu0 0
        %5821 = vmatpush1.bf16.msra.mxu0 %v5388
        %5822 = vmatprep.subr.bf16.mxu0 0
        %5823 = vmatpush1.bf16.msra.mxu0 %v5387
        %5824 = vmatprep.subr.bf16.mxu0 0
        %5825 = vmatpush1.bf16.msra.mxu0 %v5386
        %5826 = vmatprep.subr.bf16.mxu0 0
        %5827 = vmatpush2.bf16.msra.mxu0 %v5401
        %5828 = vmatprep.subr.bf16.mxu0 0
        %5829 = vmatpush2.bf16.msra.mxu0 %v5400
        %5830 = vmatprep.subr.bf16.mxu0 0
        %5831 = vmatpush2.bf16.msra.mxu0 %v5399
        %5832 = vmatprep.subr.bf16.mxu0 0
        %5833 = vmatpush2.bf16.msra.mxu0 %v5398
        %5834 = vmatprep.subr.bf16.mxu0 0
        %5835 = vmatpush2.bf16.msra.mxu0 %v5397
        %5836 = vmatprep.subr.bf16.mxu0 0
        %5837 = vmatpush2.bf16.msra.mxu0 %v5396
        %5838 = vmatprep.subr.bf16.mxu0 0
        %5839 = vmatpush2.bf16.msra.mxu0 %v5395
        %5840 = vmatprep.subr.bf16.mxu0 0
        %5841 = vmatpush2.bf16.msra.mxu0 %v5394
        %5842 = vmatprep.mubr.bf16.mxu0 %v4504
        %5843 = vmatmul.mubr.bf16.gmra.mxu0 %v4503
        %v5844 = vpop.f32.mrf.mxu0
        %v5845 = vadd.f32 %v5805, %v5844
        %v5846 = vpop.f32.mrf.mxu0
        %v5847 = vpop.f32.mrf.mxu0
        %v5848 = vpop.f32.mrf.mxu0
        %5849 = vdwg.mxu0
        %v5850 = vmax.f32 %v5845, 0.0
        %v5851 = vpack.c.bf16 %v5850, %v5850
        %v5852 = vld [vmem:[%s11] sm:$0xf]
        %v5853 = vld [vmem:[%s11 + $0x4] sm:$0xf]
        %v5854 = vld [vmem:[%s11 + $0x8] sm:$0xf]
        %v5855 = vld [vmem:[%s11 + $0xc] sm:$0xf]
        %v5856 = vld [vmem:[%s11 + $0x10] sm:$0xf]
        %v5857 = vld [vmem:[%s11 + $0x14] sm:$0xf]
        %v5858 = vld [vmem:[%s11 + $0x18] sm:$0xf]
        %v5859 = vld [vmem:[%s11 + $0x1c] sm:$0xf]
        %v5860 = vld [vmem:[%s12] sm:$0x1]
        %v5869 = vunpack.c.l.b16 %v5852
        %v5870 = vunpack.c.l.b16 %v5853
        %v5871 = vunpack.c.l.b16 %v5854
        %v5872 = vunpack.c.l.b16 %v5855
        %v5873 = vunpack.c.l.b16 %v5856
        %v5874 = vunpack.c.l.b16 %v5857
        %v5875 = vunpack.c.l.b16 %v5858
        %v5876 = vunpack.c.l.b16 %v5859
        %v5877 = vpack.c.b16 %v5870, %v5869
        %v5878 = vpack.c.b16 %v5872, %v5871
        %v5879 = vpack.c.b16 %v5874, %v5873
        %v5880 = vpack.c.b16 %v5876, %v5875
        %v5886 = vsel %vm4452, %v5851, 0
        %5888 = vmatprep.subr.bf16.mxu0 0
        %5889 = vmatpush1.bf16.msra.mxu0 0
        %5890 = vmatprep.subr.bf16.mxu0 0
        %5891 = vmatpush1.bf16.msra.mxu0 0
        %5892 = vmatprep.subr.bf16.mxu0 0
        %5893 = vmatpush1.bf16.msra.mxu0 0
        %5894 = vmatprep.subr.bf16.mxu0 0
        %5895 = vmatpush1.bf16.msra.mxu0 0
        %5896 = vmatprep.subr.bf16.mxu0 0
        %5897 = vmatpush1.bf16.msra.mxu0 %v5880
        %5898 = vmatprep.subr.bf16.mxu0 0
        %5899 = vmatpush1.bf16.msra.mxu0 %v5879
        %5900 = vmatprep.subr.bf16.mxu0 0
        %5901 = vmatpush1.bf16.msra.mxu0 %v5878
        %5902 = vmatprep.subr.bf16.mxu0 0
        %5903 = vmatpush1.bf16.msra.mxu0 %v5877
        %5904 = vmatprep.subr.bf16.mxu0 0
        %5905 = vmatpush2.bf16.msra.mxu0 0
        %5906 = vmatprep.subr.bf16.mxu0 0
        %5907 = vmatpush2.bf16.msra.mxu0 0
        %5908 = vmatprep.subr.bf16.mxu0 0
        %5909 = vmatpush2.bf16.msra.mxu0 0
        %5910 = vmatprep.subr.bf16.mxu0 0
        %5911 = vmatpush2.bf16.msra.mxu0 0
        %5912 = vmatprep.subr.bf16.mxu0 0
        %5913 = vmatpush2.bf16.msra.mxu0 0
        %5914 = vmatprep.subr.bf16.mxu0 0
        %5915 = vmatpush2.bf16.msra.mxu0 0
        %5916 = vmatprep.subr.bf16.mxu0 0
        %5917 = vmatpush2.bf16.msra.mxu0 0
        %5918 = vmatprep.subr.bf16.mxu0 0
        %5919 = vmatpush2.bf16.msra.mxu0 0
        %5920 = vmatprep.mubr.bf16.mxu0 0
        %5921 = vmatmul.mubr.bf16.gmra.mxu0 %v5886
        %v5922 = vpop.f32.mrf.mxu0
        %v5923 = vadd.f32 %v5860, %v5922
        %v5924 = vpop.f32.mrf.mxu0
        %v5925 = vpop.f32.mrf.mxu0
        %v5926 = vpop.f32.mrf.mxu0
        %5927 = vdwg.mxu0
        %vm5928 = vcmask 40960
        %5929 = vst.msk [vmem:[%s432] sm:$0x1] %vm5928, %v5923
        %s5930 = sand.u32 %s313, 1
        %s5931 = scalar_lea.sflag [#allocation3], %s5930
        %s5932 = sand.u32 %s313, 1
        %s5933 = scalar_lea.vmem [#allocation2], %s5932
        // Predicated region
        $region73: #{forward_pallas.1} parent=71 // pred_check
          %p5934 = pneg %p323
        $region74: #{forward_pallas.1} parent=71 // pred_check_branch
          %5936 = sbr.rel (%p5934) target = $region76
        $region75: #{forward_pallas.1} parent=71 // pred_region
          %s5938 = ssub.s32 16, 16
          %5939 = vsyncadd %s5931, %s5938
          %s5940 = smul.addr %s27, 16
          %s5941 = scalar_lea.hbm %s13, %s5940
          %s5943 = sshll.u32 %s5933, 4
          %s5944 = int_to_ptr.vmem [resolvable:$true] %s5943
          %5946 = dma.vmem_to_hbm [thread:$0]  %s5944, 16, %s5941, %s5931
        $region76: #{forward_pallas.1} parent=71 // pred_fallthru
          _
      $region72: #{forward_pallas.1} parent=5 // pred_fallthru
        _
      %p5947 = scmp.le.s32.totalorder 2, %s22
      // Predicated region
      $region77: #{forward_pallas.1} parent=5 // pred_check
        %p5948 = pneg %p5947
      $region78: #{forward_pallas.1} parent=5 // pred_check_branch
        %5950 = sbr.rel (%p5948) target = $region80
      $region79: #{forward_pallas.1} parent=5 // pred_region
        %s5951 = ssub.s32 %s22, 2
        // Predicated region
        $region81: #{forward_pallas.1} parent=79 // pred_check
          %p5952 = pneg %p329
        $region82: #{forward_pallas.1} parent=79 // pred_check_branch
          %5954 = sbr.rel (%p5952) target = $region84
        $region83: #{forward_pallas.1} parent=79 // pred_region
          %s5955 = sand.u32 %s314, 1
          %s5956 = scalar_lea.sflag [#allocation3], %s5955
          %s5957 = sand.u32 %s314, 1
          %s5958 = scalar_lea.vmem [#allocation2], %s5957
          %5959 = dma.done %s5956, 16
        $region84: #{forward_pallas.1} parent=79 // pred_fallthru
          _
      $region80: #{forward_pallas.1} parent=5 // pred_fallthru
        _
    $region6: #{forward_pallas.1} parent=1 // loop_footer
      %s26 = sadd.s32 1, %s22
    $region7: #{forward_pallas.1} parent=1 // loop_footer_branch
      %21 = sbr.rel target = $region3
    $region8: #{forward_pallas.1} parent=1 // loop_exit
      _
    %5960 = vsyncpa [#allocation3], 1
    %s5961 = scalar_lea.sflag [#allocation3], 1
    %5962 = vsyncpa %s5961, 1

</llo_original>
